<compile_context>
chip_gen: v7x
topology: tpu7x:2x2x1
jax: 0.10.0
libtpu: 0.0.40
codegen_flags: <defaults>
</compile_context>

<pallas_src>
import functools

import jax
import jax.numpy as jnp
from jax.experimental import pallas as pl
from jax.experimental.pallas import tpu as pltpu

# ------------------------- small synthetic hyper-parameters -------------------
IDIM = 10            # vocab size; eos = IDIM - 1, padding_idx = 0
ODIM = 8             # mel channels
EMBED_DIM = 32
EUNITS = 32          # encoder output units (BiLSTM: 2 * EUNITS//2)
ECONV_LAYERS = 3
ECONV_CHANS = 32
ECONV_FILTS = 5
ADIM = 32            # attention dim
ACONV_CHANS = 8
ACONV_FILTS = 3      # location conv kernel = 2*ACONV_FILTS + 1
K_LOC = 2 * ACONV_FILTS + 1
DLAYERS = 2
DUNITS = 32
PRENET_LAYERS = 2
PRENET_UNITS = 16
POSTNET_LAYERS = 5
POSTNET_CHANS = 32
POSTNET_FILTS = 5
ZONEOUT = 0.1
DROPOUT = 0.5
BN_EPS = 1e-5

HALO = 8             # sublane-aligned left halo for the conv / attention scratches
CONV_W = 32          # shared conv-scratch width
assert EMBED_DIM == ECONV_CHANS == POSTNET_CHANS == CONV_W and ODIM <= CONV_W

_VMEM = pl.BlockSpec(memory_space=pltpu.MemorySpace.VMEM)


# =========================== the single fused kernel ===========================
def _taco2_kernel(emb_ref, ecw_ref, ecb_ref,
                  bl_wih_ref, bl_b_ref, bl_whh_ref,
                  aenc_w_ref, aenc_b_ref, loc_att_ref, gvec_w_ref, gvec_b_ref,
                  z0f_ref, pof_ref, pre0_b_ref, pre1_w_ref, pre1_b_ref,
                  ctxf_ref, l0_wih_x_ref, l0_b_ref, l1_cat_ref, l1_b_ref,
                  fp_wz_ref, fp_b_ref, ta_b_ref, drop_ref,
                  pnw_ref, pnb_ref,
                  out_ref,
                  cpad_ref, apad_ref,
                  *, T, T_PAD8, MAXLEN):
    f32 = jnp.float32

    # ------------------------ 1) encoder conv stack ------------------------
    # 3 x [conv1d(k=5, pad=2, bias-free) + folded BN + ReLU], eval-mode dropout = id.
    cpad_ref[...] = jnp.zeros_like(cpad_ref)
    h = emb_ref[...]                                              # (T, EMBED_DIM)
    pad_c = (ECONV_FILTS - 1) // 2
    for li in range(ECONV_LAYERS):
        cpad_ref[HALO:HALO + T, 0:ECONV_CHANS] = h                # aligned halo write
        acc = jnp.zeros((T, ECONV_CHANS), f32)
        for k in range(ECONV_FILTS):                              # K static MXU taps
            r0 = HALO - pad_c + k
            acc = acc + jnp.dot(cpad_ref[r0:r0 + T, :], ecw_ref[li, k],
                                preferred_element_type=f32)
        h = jnp.maximum(acc + ecb_ref[li], 0.0)

    # ------------------------ 2) bidirectional LSTM ------------------------
    Hb = EUNITS // 2
    # batched input projection for both directions in one MXU op
    xw = jnp.dot(h, bl_wih_ref[...], preferred_element_type=f32) + bl_b_ref[...]
    whh_bd = bl_whh_ref[...]                                      # (2Hb, 8Hb) block-diag

    def lstm_cell(g, c_prev, hd):
        sig = jax.nn.sigmoid(g)
        th = jnp.tanh(g)
        i = sig[:, 0:hd]
        f = sig[:, hd:2 * hd]
        gg = th[:, 2 * hd:3 * hd]
        o = sig[:, 3 * hd:4 * hd]
        c_new = f * c_prev + i * gg
        return o * jnp.tanh(c_new), c_new

    hf = jnp.zeros((1, Hb), f32)
    cf = jnp.zeros((1, Hb), f32)
    hb = jnp.zeros((1, Hb), f32)
    cb = jnp.zeros((1, Hb), f32)
    hf_list, hb_list = [], []
    for t in range(T):                                            # static, fully unrolled
        rec = jnp.dot(jnp.concatenate([hf, hb], axis=1), whh_bd,
                      preferred_element_type=f32)                 # 1 recurrent matmul/step
        gf = xw[t:t + 1, 0:4 * Hb] + rec[:, 0:4 * Hb]
        gb = xw[T - 1 - t:T - t, 4 * Hb:8 * Hb] + rec[:, 4 * Hb:8 * Hb]
        hf, cf = lstm_cell(gf, cf, Hb)
        hb, cb = lstm_cell(gb, cb, Hb)
        hf_list.append(hf)
        hb_list.append(hb)
    enc_valid = jnp.concatenate(
        [jnp.concatenate(hf_list, axis=0),
         jnp.concatenate(hb_list[::-1], axis=0)], axis=1)         # (T, EUNITS)
    if T_PAD8 > T:
        enc_h = jnp.concatenate(
            [enc_valid, jnp.zeros((T_PAD8 - T, EUNITS), f32)], axis=0)
    else:
        enc_h = enc_valid                                         # (T_PAD8, EUNITS)

    # -------------------- 3) decoder: loop-invariant setup --------------------
    pre_enc = jnp.dot(enc_h, aenc_w_ref[...],
                      preferred_element_type=f32) + aenc_b_ref[...]   # mlp_enc cache
    loc_att = loc_att_ref[...]                                    # (K_LOC, ADIM) pre-fused
    gvec_w = gvec_w_ref[...]
    gvec_b = gvec_b_ref[...]
    pof_w = pof_ref[...]
    pre0_b = pre0_b_ref[...]
    pre1_w = pre1_w_ref[...]
    pre1_b = pre1_b_ref[...]
    ta_b = ta_b_ref[...]
    fp_b = fp_b_ref[...]

    row_idx = jax.lax.broadcasted_iota(jnp.int32, (T_PAD8, 1), 0)
    valid = row_idx < T
    att_w0 = (row_idx == 0).astype(f32)                           # [1, 0, 0, ...]
    apad_ref[...] = jnp.zeros_like(apad_ref)                      # halo rows stay zero

    def zoneout_cell(g, h_prev, c_prev):
        sig = jax.nn.sigmoid(g)
        th = jnp.tanh(g)
        i = sig[:, 0:DUNITS]
        f = sig[:, DUNITS:2 * DUNITS]
        gg = th[:, 2 * DUNITS:3 * DUNITS]
        o = sig[:, 3 * DUNITS:4 * DUNITS]
        c_new = f * c_prev + i * gg
        h_new = o * jnp.tanh(c_new)
        # ZoneOutCell eval-mode blending: prob*old + (1-prob)*new
        return (ZONEOUT * h_prev + (1.0 - ZONEOUT) * h_new,
                ZONEOUT * c_prev + (1.0 - ZONEOUT) * c_new)

    G0 = 4 * DUNITS                                               # 128

    # ------------------------- 4) decoder time loop -------------------------
    def dec_step(t, carry):
        z0, c0, z1, c1, prev_out, att_w, trans = carry

        # fused z0 GEMM: [l0_whh | mlp_dec | ta(z) column]
        z0r = jnp.dot(z0, z0f_ref[...], preferred_element_type=f32)        # (1, 161)
        g0_hh = z0r[:, 0:G0]
        dec_proj = z0r[:, G0:G0 + ADIM]
        ta_z0 = z0r[:, G0 + ADIM:G0 + ADIM + 1]

        # --------------------------- AttForwardTA ---------------------------
        apad_ref[HALO:HALO + T_PAD8, :] = att_w                   # aligned store, halo = 0
        att_shift = apad_ref[HALO - 1:HALO - 1 + T_PAD8, :]       # att_w shifted right by 1
        conv_proj = jnp.zeros((T_PAD8, ADIM), f32)
        for k in range(K_LOC):                                    # loc_conv ∘ mlp_att fused
            r0 = HALO - ACONV_FILTS + k
            conv_proj = conv_proj + apad_ref[r0:r0 + T_PAD8, :] * loc_att[k:k + 1, :]
        zt = jnp.tanh(pre_enc + conv_proj + dec_proj)
        e = jnp.dot(zt, gvec_w, preferred_element_type=f32) + gvec_b       # (T_PAD8, 1)
        e = jnp.where(valid, e, -1e30)                            # fp32-safe pad mask
        p_att = jnp.exp(e - jnp.max(e, axis=0, keepdims=True))
        p_att = p_att / jnp.sum(p_att, axis=0, keepdims=True)     # exact softmax
        # forward attention with transition agent
        w = (trans * att_w + (1.0 - trans) * att_shift) * p_att
        w = jnp.where(valid, jnp.maximum(w, 1e-6), 0.0)           # clamp(1e-6) on valid rows
        w = w / jnp.sum(w, axis=0, keepdims=True)                 # F.normalize(p=1), exact
        # weighted context on the MXU
        ctx = jax.lax.dot_general(w, enc_h, (((0,), (0,)), ((), ())),
                                  preferred_element_type=f32)      # (1, EUNITS)

        # fused ctx GEMM: [l0_wih(ctx rows) | feat/prob(ctx rows) | ta(ctx) column]
        ctxr = jnp.dot(ctx, ctxf_ref[...], preferred_element_type=f32)     # (1, 138)
        g0_ctx = ctxr[:, 0:G0]
        fp_ctx = ctxr[:, G0:G0 + ODIM + 1]
        ta_ctx = ctxr[:, G0 + ODIM + 1:G0 + ODIM + 2]

        # fused prev_out GEMM: [prenet0 | ta(prev_out) column]
        por = jnp.dot(prev_out, pof_w, preferred_element_type=f32)         # (1, 17)
        pre0_pre = por[:, 0:PRENET_UNITS]
        ta_po = por[:, PRENET_UNITS:PRENET_UNITS + 1]

        # transition agent update (uses old z0, new ctx, previous output)
        trans_new = jax.nn.sigmoid(ta_ctx + ta_po + ta_z0 + ta_b)

        # ------------------------------ prenet ------------------------------
        # always-on dropout at inference; masks precomputed outside the kernel
        dmask = drop_ref[pl.ds(t, 1), :]
        x0 = jnp.maximum(pre0_pre + pre0_b, 0.0) * dmask[:, 0:PRENET_UNITS]
        x1 = jnp.maximum(jnp.dot(x0, pre1_w, preferred_element_type=f32) + pre1_b,
                         0.0) * dmask[:, PRENET_UNITS:2 * PRENET_UNITS]

        # --------------------- ZoneOut LSTM stack (eval) ---------------------
        g0 = (g0_ctx + g0_hh + l0_b_ref[...]
              + jnp.dot(x1, l0_wih_x_ref[...], preferred_element_type=f32))
        z0n, c0n = zoneout_cell(g0, z0, c0)
        g1 = (jnp.dot(jnp.concatenate([z0n, z1], axis=1), l1_cat_ref[...],
                      preferred_element_type=f32) + l1_b_ref[...])
        z1n, c1n = zoneout_cell(g1, z1, c1)

        # ---------------- fused feat_out / prob_out (use_concate) ----------------
        fp = jnp.dot(z1n, fp_wz_ref[...], preferred_element_type=f32) + fp_ctx + fp_b
        feat = fp[:, 0:ODIM]                                      # prev_out = raw feat
        # TODO(synk): sigmoid(fp[:, ODIM]) is the stop-token prob; data-dependent
        # early stop needs dynamic output shapes, so we run the full maxlen loop.
        out_ref[pl.ds(t, 1), :] = feat
        return (z0n, c0n, z1n, c1n, feat, w, trans_new)

    init = (jnp.zeros((1, DUNITS), f32), jnp.zeros((1, DUNITS), f32),
            jnp.zeros((1, DUNITS), f32), jnp.zeros((1, DUNITS), f32),
            jnp.zeros((1, ODIM), f32), att_w0, jnp.full((1, 1), 0.5, f32))
    jax.lax.fori_loop(0, MAXLEN, dec_step, init)

    # ------------------------ 5) residual Postnet ------------------------
    cpad_ref[...] = jnp.zeros_like(cpad_ref)                      # re-zero shared scratch
    before = out_ref[...]                                         # (MAXLEN, ODIM)
    h = before
    pad_p = (POSTNET_FILTS - 1) // 2
    for li in range(POSTNET_LAYERS):
        cin = h.shape[1]
        cpad_ref[HALO:HALO + MAXLEN, 0:cin] = h
        acc = jnp.zeros((MAXLEN, POSTNET_CHANS), f32)
        for k in range(POSTNET_FILTS):
            r0 = HALO - pad_p + k
            acc = acc + jnp.dot(cpad_ref[r0:r0 + MAXLEN, :], pnw_ref[li, k],
                                preferred_element_type=f32)
        acc = acc + pnb_ref[li]
        h = jnp.tanh(acc) if li < POSTNET_LAYERS - 1 else acc
    out_ref[...] = before + h[:, 0:ODIM]


def tacotron2_forward(p, text, key, maxlenratio=2.0):
    text_eos = jnp.concatenate([text, jnp.array([IDIM - 1], dtype=text.dtype)])  # append eos
    T = int(text_eos.shape[0])
    T_PAD8 = ((T + 7) // 8) * 8
    maxlen = int(T * maxlenratio)
    emb = jnp.take(p["embed"], text_eos, axis=0)                  # (T, EMBED_DIM)
    # always-on prenet dropout masks (scaled inverted-dropout), drawn once per forward
    drop_mask = (jax.random.bernoulli(key, 1.0 - DROPOUT,
                                      (maxlen, 2 * PRENET_UNITS)).astype(jnp.float32)
                 / (1.0 - DROPOUT))
    args = (emb, p["enc_conv_w"], p["enc_conv_b"],
            p["blstm_wih"], p["blstm_b"], p["blstm_whh"],
            p["att_enc_w"], p["att_enc_b"], p["loc_att_w"], p["gvec_w"], p["gvec_b"],
            p["z0f_w"], p["pof_w"], p["pre0_b"], p["pre1_w"], p["pre1_b"],
            p["ctxf_w"], p["l0_wih_x"], p["l0_b"], p["l1_cat_w"], p["l1_b"],
            p["fp_wz"], p["fp_b"], p["ta_b"], drop_mask,
            p["post_w"], p["post_b"])
    pad_rows = HALO + max(T, maxlen) + 8
    return pl.pallas_call(
        functools.partial(_taco2_kernel, T=T, T_PAD8=T_PAD8, MAXLEN=maxlen),
        out_shape=jax.ShapeDtypeStruct((maxlen, ODIM), jnp.float32),
        in_specs=[_VMEM] * len(args),
        out_specs=_VMEM,
        scratch_shapes=[pltpu.VMEM((pad_rows, CONV_W), jnp.float32),
                        pltpu.VMEM((HALO + T_PAD8 + 8, 1), jnp.float32)],
    )(*args)


# ------------------------------ parameter init ---------------------------------
def init_params(key):
    holder = [key]

    def nk():
        holder[0], sub = jax.random.split(holder[0])
        return sub

    def nrm(shape, scale=0.1):
        return (scale * jax.random.normal(nk(), shape)).astype(jnp.float32)

    def bn_fold(cout):
        gamma = 1.0 + nrm((1, cout))
        beta = nrm((1, cout), 0.05)
        mean = nrm((1, cout), 0.05)
        var = 1.0 + jnp.abs(nrm((1, cout)))
        scale = gamma / jnp.sqrt(var + BN_EPS)
        return scale, beta - mean * scale

    p = {}
    emb = nrm((IDIM, EMBED_DIM), 0.3)
    p["embed"] = emb.at[0].set(0.0)                               # padding_idx = 0

    # encoder convs, BN scale folded directly into the conv weights
    ecw, ecb = [], []
    cin = EMBED_DIM
    for _ in range(ECONV_LAYERS):
        w = nrm((ECONV_FILTS, cin, ECONV_CHANS))
        scale, shift = bn_fold(ECONV_CHANS)
        ecw.append(w * scale)
        ecb.append(shift.reshape(1, 1, ECONV_CHANS))
        cin = ECONV_CHANS
    p["enc_conv_w"] = jnp.stack(ecw)                              # (3, 5, 32, 32)
    p["enc_conv_b"] = jnp.concatenate(ecb, axis=0)                # (3, 1, 32)

    # BiLSTM: fwd|bwd input projections concatenated, block-diagonal recurrence
    H = EUNITS // 2
    wih_f, wih_b = nrm((ECONV_CHANS, 4 * H)), nrm((ECONV_CHANS, 4 * H))
    whh_f, whh_b = nrm((H, 4 * H)), nrm((H, 4 * H))
    b_f, b_b = nrm((1, 4 * H), 0.05), nrm((1, 4 * H), 0.05)       # b_ih + b_hh folded
    p["blstm_wih"] = jnp.concatenate([wih_f, wih_b], axis=1)      # (32, 128)
    p["blstm_b"] = jnp.concatenate([b_f, b_b], axis=1)            # (1, 128)
    whh_bd = jnp.zeros((2 * H, 8 * H), jnp.float32)
    whh_bd = whh_bd.at[0:H, 0:4 * H].set(whh_f).at[H:2 * H, 4 * H:8 * H].set(whh_b)
    p["blstm_whh"] = whh_bd                                       # (32, 128)

    # AttForwardTA
    p["att_enc_w"] = nrm((EUNITS, ADIM))
    p["att_enc_b"] = nrm((1, ADIM), 0.05)
    att_dec_w = nrm((DUNITS, ADIM))                               # bias=False
    att_att_w = nrm((ACONV_CHANS, ADIM))                          # bias=False
    loc_conv_w = nrm((K_LOC, 1, ACONV_CHANS))                     # Conv2d(1,C,(1,K)), no bias
    p["loc_att_w"] = jnp.dot(loc_conv_w[:, 0, :], att_att_w)      # pre-fused (K_LOC, ADIM)
    p["gvec_w"] = nrm((ADIM, 1))
    p["gvec_b"] = nrm((1, 1), 0.05)
    # mlp_ta input ordering: [context(E), prev_out(ODIM), dec_z(DUNITS)]
    ta_w = nrm((EUNITS + ODIM + DUNITS, 1))
    p["ta_b"] = nrm((1, 1), 0.05)

    # prenet
    pre0_w = nrm((ODIM, PRENET_UNITS))
    p["pre0_b"] = nrm((1, PRENET_UNITS), 0.05)
    p["pre1_w"] = nrm((PRENET_UNITS, PRENET_UNITS))
    p["pre1_b"] = nrm((1, PRENET_UNITS), 0.05)

    # decoder LSTM stack (xs = cat([att_c, prenet_out]) for layer 0)
    l0_wih = nrm((EUNITS + PRENET_UNITS, 4 * DUNITS))
    l0_whh = nrm((DUNITS, 4 * DUNITS))
    p["l0_b"] = nrm((1, 4 * DUNITS), 0.05)
    l1_wih = nrm((DUNITS, 4 * DUNITS))
    l1_whh = nrm((DUNITS, 4 * DUNITS))
    p["l1_b"] = nrm((1, 4 * DUNITS), 0.05)
    p["l0_wih_x"] = l0_wih[EUNITS:]                               # prenet rows (16, 128)
    p["l1_cat_w"] = jnp.concatenate([l1_wih, l1_whh], axis=0)     # (64, 128)

    # feat_out (bias-free) / prob_out over zcs = cat([z1, ctx])
    iunits = DUNITS + EUNITS
    feat_w = nrm((iunits, ODIM))
    prob_w = nrm((iunits, 1))
    prob_b = nrm((1, 1), 0.05)
    p["fp_wz"] = jnp.concatenate([feat_w[0:DUNITS], prob_w[0:DUNITS]], axis=1)   # (32, 9)
    p["fp_b"] = jnp.concatenate([jnp.zeros((1, ODIM), jnp.float32), prob_b], axis=1)

    # fused per-step GEMM blocks (large lane-aligned block first, tiny columns last)
    p["z0f_w"] = jnp.concatenate(
        [l0_whh, att_dec_w, ta_w[EUNITS + ODIM:EUNITS + ODIM + DUNITS]], axis=1)  # (32, 161)
    p["ctxf_w"] = jnp.concatenate(
        [l0_wih[0:EUNITS],
         jnp.concatenate([feat_w[DUNITS:], prob_w[DUNITS:]], axis=1),
         ta_w[0:EUNITS]], axis=1)                                                 # (32, 138)
    p["pof_w"] = jnp.concatenate([pre0_w, ta_w[EUNITS:EUNITS + ODIM]], axis=1)    # (8, 17)

    # postnet, BN folded, channel-padded to a uniform (32, 32) stack
    pnw = jnp.zeros((POSTNET_LAYERS, POSTNET_FILTS, POSTNET_CHANS, POSTNET_CHANS),
                    jnp.float32)
    pnb = jnp.zeros((POSTNET_LAYERS, 1, POSTNET_CHANS), jnp.float32)
    cin = ODIM
    for i in range(POSTNET_LAYERS):
        cout = ODIM if i == POSTNET_LAYERS - 1 else POSTNET_CHANS
        w = nrm((POSTNET_FILTS, cin, cout))
        scale, shift = bn_fold(cout)
        pnw = pnw.at[i, :, 0:cin, 0:cout].set(w * scale)
        pnb = pnb.at[i, 0, 0:cout].set(shift[0])
        cin = cout
    p["post_w"] = pnw                                             # (5, 5, 32, 32)
    p["post_b"] = pnb                                             # (5, 1, 32)
    return p


# ----------------------------------- main ---------------------------------------
if __name__ == "__main__":
    root = jax.random.PRNGKey(0)
    pkey, tkey, dkey = jax.random.split(root, 3)
    params = init_params(pkey)
    text = jax.random.randint(tkey, (8,), 1, IDIM - 1, dtype=jnp.int32)   # avoid pad(0)/eos

    fwd = jax.jit(tacotron2_forward, static_argnames=("maxlenratio",))
    outs = fwd(params, text, dkey, maxlenratio=2.0)
    outs = jax.block_until_ready(outs)

    expected_len = int((text.shape[0] + 1) * 2.0)
    assert outs.shape == (expected_len, ODIM), outs.shape
    assert bool(jnp.all(jnp.isfinite(outs)))
    print("KERNEL_OK")
</pallas_src>

<mosaic_0001>
module attributes {stable_mosaic.version = 11 : i64} {
  func.func @_taco2_kernel(%arg0: memref<9x32xf32, #tpu.memory_space<vmem>>, %arg1: memref<3x5x32x32xf32, #tpu.memory_space<vmem>>, %arg2: memref<3x1x32xf32, #tpu.memory_space<vmem>>, %arg3: memref<32x128xf32, #tpu.memory_space<vmem>>, %arg4: memref<1x128xf32, #tpu.memory_space<vmem>>, %arg5: memref<32x128xf32, #tpu.memory_space<vmem>>, %arg6: memref<32x32xf32, #tpu.memory_space<vmem>>, %arg7: memref<1x32xf32, #tpu.memory_space<vmem>>, %arg8: memref<7x32xf32, #tpu.memory_space<vmem>>, %arg9: memref<32x1xf32, #tpu.memory_space<vmem>>, %arg10: memref<1x1xf32, #tpu.memory_space<vmem>>, %arg11: memref<32x161xf32, #tpu.memory_space<vmem>>, %arg12: memref<8x17xf32, #tpu.memory_space<vmem>>, %arg13: memref<1x16xf32, #tpu.memory_space<vmem>>, %arg14: memref<16x16xf32, #tpu.memory_space<vmem>>, %arg15: memref<1x16xf32, #tpu.memory_space<vmem>>, %arg16: memref<32x138xf32, #tpu.memory_space<vmem>>, %arg17: memref<16x128xf32, #tpu.memory_space<vmem>>, %arg18: memref<1x128xf32, #tpu.memory_space<vmem>>, %arg19: memref<64x128xf32, #tpu.memory_space<vmem>>, %arg20: memref<1x128xf32, #tpu.memory_space<vmem>>, %arg21: memref<32x9xf32, #tpu.memory_space<vmem>>, %arg22: memref<1x9xf32, #tpu.memory_space<vmem>>, %arg23: memref<1x1xf32, #tpu.memory_space<vmem>>, %arg24: memref<18x32xf32, #tpu.memory_space<vmem>>, %arg25: memref<5x5x32x32xf32, #tpu.memory_space<vmem>>, %arg26: memref<5x1x32xf32, #tpu.memory_space<vmem>>, %arg27: memref<18x8xf32, #tpu.memory_space<vmem>>, %arg28: memref<34x32xf32, #tpu.memory_space<vmem>>, %arg29: memref<32x1xf32, #tpu.memory_space<vmem>>) attributes {dimension_semantics = [], scalar_prefetch = 0 : i64, scratch_operands = 2 : i64, tpu.core_type = #tpu.core_type<tc>} {
    %cst = arith.constant 0.000000e+00 : f32
    %0 = vector.broadcast %cst : f32 to vector<34x32xf32>
    %c0 = arith.constant 0 : index
    %c0_0 = arith.constant 0 : index
    %1 = vector.load %arg28[%c0, %c0_0] : memref<34x32xf32, #tpu.memory_space<vmem>>, vector<34x32xf32>
    tpu.vector_store %arg28[%c0, %c0_0], %0 {strides = array<i32>} : memref<34x32xf32, #tpu.memory_space<vmem>>, vector<34x32xf32>,
    %c0_1 = arith.constant 0 : index
    %c0_2 = arith.constant 0 : index
    %2 = vector.load %arg0[%c0_1, %c0_2] : memref<9x32xf32, #tpu.memory_space<vmem>>, vector<9x32xf32>
    %c8 = arith.constant 8 : index
    %c0_3 = arith.constant 0 : index
    %3 = vector.load %arg28[%c8, %c0_3] : memref<34x32xf32, #tpu.memory_space<vmem>>, vector<9x32xf32>
    tpu.vector_store %arg28[%c8, %c0_3], %2 {strides = array<i32>} : memref<34x32xf32, #tpu.memory_space<vmem>>, vector<9x32xf32>,
    %cst_4 = arith.constant 0.000000e+00 : f32
    %4 = vector.broadcast %cst_4 : f32 to vector<9x32xf32>
    %c6 = arith.constant 6 : index
    %c0_5 = arith.constant 0 : index
    %5 = vector.load %arg28[%c6, %c0_5] : memref<34x32xf32, #tpu.memory_space<vmem>>, vector<9x32xf32>
    %c0_6 = arith.constant 0 : index
    %c0_7 = arith.constant 0 : index
    %c0_8 = arith.constant 0 : index
    %c0_9 = arith.constant 0 : index
    %6 = vector.load %arg1[%c0_6, %c0_7, %c0_8, %c0_9] : memref<3x5x32x32xf32, #tpu.memory_space<vmem>>, vector<1x1x32x32xf32>
    %7 = vector.shape_cast %6 : vector<1x1x32x32xf32> to vector<32x32xf32>
    %cst_10 = arith.constant dense<0.000000e+00> : vector<9x32xf32>
    %8 = tpu.matmul %5, %7, %cst_10 {dimension_numbers = #tpu.dot_dimension_numbers<[1], [0], [0], [1], [0, 0, 1, 1], [], []>} : vector<9x32xf32>, vector<32x32xf32>, vector<9x32xf32> -> vector<9x32xf32>
    %9 = arith.addf %4, %8 : vector<9x32xf32>
    %c7 = arith.constant 7 : index
    %c0_11 = arith.constant 0 : index
    %10 = vector.load %arg28[%c7, %c0_11] : memref<34x32xf32, #tpu.memory_space<vmem>>, vector<9x32xf32>
    %c0_12 = arith.constant 0 : index
    %c1 = arith.constant 1 : index
    %c0_13 = arith.constant 0 : index
    %c0_14 = arith.constant 0 : index
    %11 = vector.load %arg1[%c0_12, %c1, %c0_13, %c0_14] : memref<3x5x32x32xf32, #tpu.memory_space<vmem>>, vector<1x1x32x32xf32>
    %12 = vector.shape_cast %11 : vector<1x1x32x32xf32> to vector<32x32xf32>
    %cst_15 = arith.constant dense<0.000000e+00> : vector<9x32xf32>
    %13 = tpu.matmul %10, %12, %cst_15 {dimension_numbers = #tpu.dot_dimension_numbers<[1], [0], [0], [1], [0, 0, 1, 1], [], []>} : vector<9x32xf32>, vector<32x32xf32>, vector<9x32xf32> -> vector<9x32xf32>
    %14 = arith.addf %9, %13 : vector<9x32xf32>
    %c8_16 = arith.constant 8 : index
    %c0_17 = arith.constant 0 : index
    %15 = vector.load %arg28[%c8_16, %c0_17] : memref<34x32xf32, #tpu.memory_space<vmem>>, vector<9x32xf32>
    %c0_18 = arith.constant 0 : index
    %c2 = arith.constant 2 : index
    %c0_19 = arith.constant 0 : index
    %c0_20 = arith.constant 0 : index
    %16 = vector.load %arg1[%c0_18, %c2, %c0_19, %c0_20] : memref<3x5x32x32xf32, #tpu.memory_space<vmem>>, vector<1x1x32x32xf32>
    %17 = vector.shape_cast %16 : vector<1x1x32x32xf32> to vector<32x32xf32>
    %cst_21 = arith.constant dense<0.000000e+00> : vector<9x32xf32>
    %18 = tpu.matmul %15, %17, %cst_21 {dimension_numbers = #tpu.dot_dimension_numbers<[1], [0], [0], [1], [0, 0, 1, 1], [], []>} : vector<9x32xf32>, vector<32x32xf32>, vector<9x32xf32> -> vector<9x32xf32>
    %19 = arith.addf %14, %18 : vector<9x32xf32>
    %c9 = arith.constant 9 : index
    %c0_22 = arith.constant 0 : index
    %20 = vector.load %arg28[%c9, %c0_22] : memref<34x32xf32, #tpu.memory_space<vmem>>, vector<9x32xf32>
    %c0_23 = arith.constant 0 : index
    %c3 = arith.constant 3 : index
    %c0_24 = arith.constant 0 : index
    %c0_25 = arith.constant 0 : index
    %21 = vector.load %arg1[%c0_23, %c3, %c0_24, %c0_25] : memref<3x5x32x32xf32, #tpu.memory_space<vmem>>, vector<1x1x32x32xf32>
    %22 = vector.shape_cast %21 : vector<1x1x32x32xf32> to vector<32x32xf32>
    %cst_26 = arith.constant dense<0.000000e+00> : vector<9x32xf32>
    %23 = tpu.matmul %20, %22, %cst_26 {dimension_numbers = #tpu.dot_dimension_numbers<[1], [0], [0], [1], [0, 0, 1, 1], [], []>} : vector<9x32xf32>, vector<32x32xf32>, vector<9x32xf32> -> vector<9x32xf32>
    %24 = arith.addf %19, %23 : vector<9x32xf32>
    %c10 = arith.constant 10 : index
    %c0_27 = arith.constant 0 : index
    %25 = vector.load %arg28[%c10, %c0_27] : memref<34x32xf32, #tpu.memory_space<vmem>>, vector<9x32xf32>
    %c0_28 = arith.constant 0 : index
    %c4 = arith.constant 4 : index
    %c0_29 = arith.constant 0 : index
    %c0_30 = arith.constant 0 : index
    %26 = vector.load %arg1[%c0_28, %c4, %c0_29, %c0_30] : memref<3x5x32x32xf32, #tpu.memory_space<vmem>>, vector<1x1x32x32xf32>
    %27 = vector.shape_cast %26 : vector<1x1x32x32xf32> to vector<32x32xf32>
    %cst_31 = arith.constant dense<0.000000e+00> : vector<9x32xf32>
    %28 = tpu.matmul %25, %27, %cst_31 {dimension_numbers = #tpu.dot_dimension_numbers<[1], [0], [0], [1], [0, 0, 1, 1], [], []>} : vector<9x32xf32>, vector<32x32xf32>, vector<9x32xf32> -> vector<9x32xf32>
    %29 = arith.addf %24, %28 : vector<9x32xf32>
    %c0_32 = arith.constant 0 : index
    %c0_33 = arith.constant 0 : index
    %c0_34 = arith.constant 0 : index
    %30 = vector.load %arg2[%c0_32, %c0_33, %c0_34] : memref<3x1x32xf32, #tpu.memory_space<vmem>>, vector<1x1x32xf32>
    %31 = vector.shape_cast %30 : vector<1x1x32xf32> to vector<1x32xf32>
    %32 = vector.broadcast %31 : vector<1x32xf32> to vector<9x32xf32>
    %33 = arith.addf %29, %32 : vector<9x32xf32>
    %cst_35 = arith.constant 0.000000e+00 : f32
    %34 = vector.broadcast %cst_35 : f32 to vector<9x32xf32>
    %35 = arith.maximumf %33, %34 : vector<9x32xf32>
    %c8_36 = arith.constant 8 : index
    %c0_37 = arith.constant 0 : index
    %36 = vector.load %arg28[%c8_36, %c0_37] : memref<34x32xf32, #tpu.memory_space<vmem>>, vector<9x32xf32>
    tpu.vector_store %arg28[%c8_36, %c0_37], %35 {strides = array<i32>} : memref<34x32xf32, #tpu.memory_space<vmem>>, vector<9x32xf32>,
    %cst_38 = arith.constant 0.000000e+00 : f32
    %37 = vector.broadcast %cst_38 : f32 to vector<9x32xf32>
    %c6_39 = arith.constant 6 : index
    %c0_40 = arith.constant 0 : index
    %38 = vector.load %arg28[%c6_39, %c0_40] : memref<34x32xf32, #tpu.memory_space<vmem>>, vector<9x32xf32>
    %c1_41 = arith.constant 1 : index
    %c0_42 = arith.constant 0 : index
    %c0_43 = arith.constant 0 : index
    %c0_44 = arith.constant 0 : index
    %39 = vector.load %arg1[%c1_41, %c0_42, %c0_43, %c0_44] : memref<3x5x32x32xf32, #tpu.memory_space<vmem>>, vector<1x1x32x32xf32>
    %40 = vector.shape_cast %39 : vector<1x1x32x32xf32> to vector<32x32xf32>
    %cst_45 = arith.constant dense<0.000000e+00> : vector<9x32xf32>
    %41 = tpu.matmul %38, %40, %cst_45 {dimension_numbers = #tpu.dot_dimension_numbers<[1], [0], [0], [1], [0, 0, 1, 1], [], []>} : vector<9x32xf32>, vector<32x32xf32>, vector<9x32xf32> -> vector<9x32xf32>
    %42 = arith.addf %37, %41 : vector<9x32xf32>
    %c7_46 = arith.constant 7 : index
    %c0_47 = arith.constant 0 : index
    %43 = vector.load %arg28[%c7_46, %c0_47] : memref<34x32xf32, #tpu.memory_space<vmem>>, vector<9x32xf32>
    %c1_48 = arith.constant 1 : index
    %c1_49 = arith.constant 1 : index
    %c0_50 = arith.constant 0 : index
    %c0_51 = arith.constant 0 : index
    %44 = vector.load %arg1[%c1_48, %c1_49, %c0_50, %c0_51] : memref<3x5x32x32xf32, #tpu.memory_space<vmem>>, vector<1x1x32x32xf32>
    %45 = vector.shape_cast %44 : vector<1x1x32x32xf32> to vector<32x32xf32>
    %cst_52 = arith.constant dense<0.000000e+00> : vector<9x32xf32>
    %46 = tpu.matmul %43, %45, %cst_52 {dimension_numbers = #tpu.dot_dimension_numbers<[1], [0], [0], [1], [0, 0, 1, 1], [], []>} : vector<9x32xf32>, vector<32x32xf32>, vector<9x32xf32> -> vector<9x32xf32>
    %47 = arith.addf %42, %46 : vector<9x32xf32>
    %c8_53 = arith.constant 8 : index
    %c0_54 = arith.constant 0 : index
    %48 = vector.load %arg28[%c8_53, %c0_54] : memref<34x32xf32, #tpu.memory_space<vmem>>, vector<9x32xf32>
    %c1_55 = arith.constant 1 : index
    %c2_56 = arith.constant 2 : index
    %c0_57 = arith.constant 0 : index
    %c0_58 = arith.constant 0 : index
    %49 = vector.load %arg1[%c1_55, %c2_56, %c0_57, %c0_58] : memref<3x5x32x32xf32, #tpu.memory_space<vmem>>, vector<1x1x32x32xf32>
    %50 = vector.shape_cast %49 : vector<1x1x32x32xf32> to vector<32x32xf32>
    %cst_59 = arith.constant dense<0.000000e+00> : vector<9x32xf32>
    %51 = tpu.matmul %48, %50, %cst_59 {dimension_numbers = #tpu.dot_dimension_numbers<[1], [0], [0], [1], [0, 0, 1, 1], [], []>} : vector<9x32xf32>, vector<32x32xf32>, vector<9x32xf32> -> vector<9x32xf32>
    %52 = arith.addf %47, %51 : vector<9x32xf32>
    %c9_60 = arith.constant 9 : index
    %c0_61 = arith.constant 0 : index
    %53 = vector.load %arg28[%c9_60, %c0_61] : memref<34x32xf32, #tpu.memory_space<vmem>>, vector<9x32xf32>
    %c1_62 = arith.constant 1 : index
    %c3_63 = arith.constant 3 : index
    %c0_64 = arith.constant 0 : index
    %c0_65 = arith.constant 0 : index
    %54 = vector.load %arg1[%c1_62, %c3_63, %c0_64, %c0_65] : memref<3x5x32x32xf32, #tpu.memory_space<vmem>>, vector<1x1x32x32xf32>
    %55 = vector.shape_cast %54 : vector<1x1x32x32xf32> to vector<32x32xf32>
    %cst_66 = arith.constant dense<0.000000e+00> : vector<9x32xf32>
    %56 = tpu.matmul %53, %55, %cst_66 {dimension_numbers = #tpu.dot_dimension_numbers<[1], [0], [0], [1], [0, 0, 1, 1], [], []>} : vector<9x32xf32>, vector<32x32xf32>, vector<9x32xf32> -> vector<9x32xf32>
    %57 = arith.addf %52, %56 : vector<9x32xf32>
    %c10_67 = arith.constant 10 : index
    %c0_68 = arith.constant 0 : index
    %58 = vector.load %arg28[%c10_67, %c0_68] : memref<34x32xf32, #tpu.memory_space<vmem>>, vector<9x32xf32>
    %c1_69 = arith.constant 1 : index
    %c4_70 = arith.constant 4 : index
    %c0_71 = arith.constant 0 : index
    %c0_72 = arith.constant 0 : index
    %59 = vector.load %arg1[%c1_69, %c4_70, %c0_71, %c0_72] : memref<3x5x32x32xf32, #tpu.memory_space<vmem>>, vector<1x1x32x32xf32>
    %60 = vector.shape_cast %59 : vector<1x1x32x32xf32> to vector<32x32xf32>
    %cst_73 = arith.constant dense<0.000000e+00> : vector<9x32xf32>
    %61 = tpu.matmul %58, %60, %cst_73 {dimension_numbers = #tpu.dot_dimension_numbers<[1], [0], [0], [1], [0, 0, 1, 1], [], []>} : vector<9x32xf32>, vector<32x32xf32>, vector<9x32xf32> -> vector<9x32xf32>
    %62 = arith.addf %57, %61 : vector<9x32xf32>
    %c1_74 = arith.constant 1 : index
    %c0_75 = arith.constant 0 : index
    %c0_76 = arith.constant 0 : index
    %63 = vector.load %arg2[%c1_74, %c0_75, %c0_76] : memref<3x1x32xf32, #tpu.memory_space<vmem>>, vector<1x1x32xf32>
    %64 = vector.shape_cast %63 : vector<1x1x32xf32> to vector<1x32xf32>
    %65 = vector.broadcast %64 : vector<1x32xf32> to vector<9x32xf32>
    %66 = arith.addf %62, %65 : vector<9x32xf32>
    %cst_77 = arith.constant 0.000000e+00 : f32
    %67 = vector.broadcast %cst_77 : f32 to vector<9x32xf32>
    %68 = arith.maximumf %66, %67 : vector<9x32xf32>
    %c8_78 = arith.constant 8 : index
    %c0_79 = arith.constant 0 : index
    %69 = vector.load %arg28[%c8_78, %c0_79] : memref<34x32xf32, #tpu.memory_space<vmem>>, vector<9x32xf32>
    tpu.vector_store %arg28[%c8_78, %c0_79], %68 {strides = array<i32>} : memref<34x32xf32, #tpu.memory_space<vmem>>, vector<9x32xf32>,
    %cst_80 = arith.constant 0.000000e+00 : f32
    %70 = vector.broadcast %cst_80 : f32 to vector<9x32xf32>
    %c6_81 = arith.constant 6 : index
    %c0_82 = arith.constant 0 : index
    %71 = vector.load %arg28[%c6_81, %c0_82] : memref<34x32xf32, #tpu.memory_space<vmem>>, vector<9x32xf32>
    %c2_83 = arith.constant 2 : index
    %c0_84 = arith.constant 0 : index
    %c0_85 = arith.constant 0 : index
    %c0_86 = arith.constant 0 : index
    %72 = vector.load %arg1[%c2_83, %c0_84, %c0_85, %c0_86] : memref<3x5x32x32xf32, #tpu.memory_space<vmem>>, vector<1x1x32x32xf32>
    %73 = vector.shape_cast %72 : vector<1x1x32x32xf32> to vector<32x32xf32>
    %cst_87 = arith.constant dense<0.000000e+00> : vector<9x32xf32>
    %74 = tpu.matmul %71, %73, %cst_87 {dimension_numbers = #tpu.dot_dimension_numbers<[1], [0], [0], [1], [0, 0, 1, 1], [], []>} : vector<9x32xf32>, vector<32x32xf32>, vector<9x32xf32> -> vector<9x32xf32>
    %75 = arith.addf %70, %74 : vector<9x32xf32>
    %c7_88 = arith.constant 7 : index
    %c0_89 = arith.constant 0 : index
    %76 = vector.load %arg28[%c7_88, %c0_89] : memref<34x32xf32, #tpu.memory_space<vmem>>, vector<9x32xf32>
    %c2_90 = arith.constant 2 : index
    %c1_91 = arith.constant 1 : index
    %c0_92 = arith.constant 0 : index
    %c0_93 = arith.constant 0 : index
    %77 = vector.load %arg1[%c2_90, %c1_91, %c0_92, %c0_93] : memref<3x5x32x32xf32, #tpu.memory_space<vmem>>, vector<1x1x32x32xf32>
    %78 = vector.shape_cast %77 : vector<1x1x32x32xf32> to vector<32x32xf32>
    %cst_94 = arith.constant dense<0.000000e+00> : vector<9x32xf32>
    %79 = tpu.matmul %76, %78, %cst_94 {dimension_numbers = #tpu.dot_dimension_numbers<[1], [0], [0], [1], [0, 0, 1, 1], [], []>} : vector<9x32xf32>, vector<32x32xf32>, vector<9x32xf32> -> vector<9x32xf32>
    %80 = arith.addf %75, %79 : vector<9x32xf32>
    %c8_95 = arith.constant 8 : index
    %c0_96 = arith.constant 0 : index
    %81 = vector.load %arg28[%c8_95, %c0_96] : memref<34x32xf32, #tpu.memory_space<vmem>>, vector<9x32xf32>
    %c2_97 = arith.constant 2 : index
    %c2_98 = arith.constant 2 : index
    %c0_99 = arith.constant 0 : index
    %c0_100 = arith.constant 0 : index
    %82 = vector.load %arg1[%c2_97, %c2_98, %c0_99, %c0_100] : memref<3x5x32x32xf32, #tpu.memory_space<vmem>>, vector<1x1x32x32xf32>
    %83 = vector.shape_cast %82 : vector<1x1x32x32xf32> to vector<32x32xf32>
    %cst_101 = arith.constant dense<0.000000e+00> : vector<9x32xf32>
    %84 = tpu.matmul %81, %83, %cst_101 {dimension_numbers = #tpu.dot_dimension_numbers<[1], [0], [0], [1], [0, 0, 1, 1], [], []>} : vector<9x32xf32>, vector<32x32xf32>, vector<9x32xf32> -> vector<9x32xf32>
    %85 = arith.addf %80, %84 : vector<9x32xf32>
    %c9_102 = arith.constant 9 : index
    %c0_103 = arith.constant 0 : index
    %86 = vector.load %arg28[%c9_102, %c0_103] : memref<34x32xf32, #tpu.memory_space<vmem>>, vector<9x32xf32>
    %c2_104 = arith.constant 2 : index
    %c3_105 = arith.constant 3 : index
    %c0_106 = arith.constant 0 : index
    %c0_107 = arith.constant 0 : index
    %87 = vector.load %arg1[%c2_104, %c3_105, %c0_106, %c0_107] : memref<3x5x32x32xf32, #tpu.memory_space<vmem>>, vector<1x1x32x32xf32>
    %88 = vector.shape_cast %87 : vector<1x1x32x32xf32> to vector<32x32xf32>
    %cst_108 = arith.constant dense<0.000000e+00> : vector<9x32xf32>
    %89 = tpu.matmul %86, %88, %cst_108 {dimension_numbers = #tpu.dot_dimension_numbers<[1], [0], [0], [1], [0, 0, 1, 1], [], []>} : vector<9x32xf32>, vector<32x32xf32>, vector<9x32xf32> -> vector<9x32xf32>
    %90 = arith.addf %85, %89 : vector<9x32xf32>
    %c10_109 = arith.constant 10 : index
    %c0_110 = arith.constant 0 : index
    %91 = vector.load %arg28[%c10_109, %c0_110] : memref<34x32xf32, #tpu.memory_space<vmem>>, vector<9x32xf32>
    %c2_111 = arith.constant 2 : index
    %c4_112 = arith.constant 4 : index
    %c0_113 = arith.constant 0 : index
    %c0_114 = arith.constant 0 : index
    %92 = vector.load %arg1[%c2_111, %c4_112, %c0_113, %c0_114] : memref<3x5x32x32xf32, #tpu.memory_space<vmem>>, vector<1x1x32x32xf32>
    %93 = vector.shape_cast %92 : vector<1x1x32x32xf32> to vector<32x32xf32>
    %cst_115 = arith.constant dense<0.000000e+00> : vector<9x32xf32>
    %94 = tpu.matmul %91, %93, %cst_115 {dimension_numbers = #tpu.dot_dimension_numbers<[1], [0], [0], [1], [0, 0, 1, 1], [], []>} : vector<9x32xf32>, vector<32x32xf32>, vector<9x32xf32> -> vector<9x32xf32>
    %95 = arith.addf %90, %94 : vector<9x32xf32>
    %c2_116 = arith.constant 2 : index
    %c0_117 = arith.constant 0 : index
    %c0_118 = arith.constant 0 : index
    %96 = vector.load %arg2[%c2_116, %c0_117, %c0_118] : memref<3x1x32xf32, #tpu.memory_space<vmem>>, vector<1x1x32xf32>
    %97 = vector.shape_cast %96 : vector<1x1x32xf32> to vector<1x32xf32>
    %98 = vector.broadcast %97 : vector<1x32xf32> to vector<9x32xf32>
    %99 = arith.addf %95, %98 : vector<9x32xf32>
    %cst_119 = arith.constant 0.000000e+00 : f32
    %100 = vector.broadcast %cst_119 : f32 to vector<9x32xf32>
    %101 = arith.maximumf %99, %100 : vector<9x32xf32>
    %c0_120 = arith.constant 0 : index
    %c0_121 = arith.constant 0 : index
    %102 = vector.load %arg3[%c0_120, %c0_121] : memref<32x128xf32, #tpu.memory_space<vmem>>, vector<32x128xf32>
    %cst_122 = arith.constant dense<0.000000e+00> : vector<9x128xf32>
    %103 = tpu.matmul %101, %102, %cst_122 {dimension_numbers = #tpu.dot_dimension_numbers<[1], [0], [0], [1], [0, 0, 1, 1], [], []>} : vector<9x32xf32>, vector<32x128xf32>, vector<9x128xf32> -> vector<9x128xf32>
    %c0_123 = arith.constant 0 : index
    %c0_124 = arith.constant 0 : index
    %104 = vector.load %arg4[%c0_123, %c0_124] : memref<1x128xf32, #tpu.memory_space<vmem>>, vector<1x128xf32>
    %105 = vector.broadcast %104 : vector<1x128xf32> to vector<9x128xf32>
    %106 = arith.addf %103, %105 : vector<9x128xf32>
    %c0_125 = arith.constant 0 : index
    %c0_126 = arith.constant 0 : index
    %107 = vector.load %arg5[%c0_125, %c0_126] : memref<32x128xf32, #tpu.memory_space<vmem>>, vector<32x128xf32>
    %cst_127 = arith.constant 0.000000e+00 : f32
    %108 = vector.broadcast %cst_127 : f32 to vector<1x16xf32>
    %cst_128 = arith.constant 0.000000e+00 : f32
    %109 = vector.broadcast %cst_128 : f32 to vector<1x16xf32>
    %cst_129 = arith.constant 0.000000e+00 : f32
    %110 = vector.broadcast %cst_129 : f32 to vector<1x16xf32>
    %cst_130 = arith.constant 0.000000e+00 : f32
    %111 = vector.broadcast %cst_130 : f32 to vector<1x16xf32>
    %112 = tpu.concatenate %108, %110 in 1 : vector<1x16xf32>, vector<1x16xf32> -> vector<1x32xf32>
    %cst_131 = arith.constant dense<0.000000e+00> : vector<1x128xf32>
    %113 = tpu.matmul %112, %107, %cst_131 {dimension_numbers = #tpu.dot_dimension_numbers<[1], [0], [0], [1], [0, 0, 1, 1], [], []>} : vector<1x32xf32>, vector<32x128xf32>, vector<1x128xf32> -> vector<1x128xf32>
    %114 = vector.extract_strided_slice %106 {offsets = [0, 0], sizes = [1, 64], strides = [1, 1]} : vector<9x128xf32> to vector<1x64xf32>
    %115 = vector.extract_strided_slice %113 {offsets = [0, 0], sizes = [1, 64], strides = [1, 1]} : vector<1x128xf32> to vector<1x64xf32>
    %116 = arith.addf %114, %115 : vector<1x64xf32>
    %117 = vector.extract_strided_slice %106 {offsets = [8, 64], sizes = [1, 64], strides = [1, 1]} : vector<9x128xf32> to vector<1x64xf32>
    %118 = vector.extract_strided_slice %113 {offsets = [0, 64], sizes = [1, 64], strides = [1, 1]} : vector<1x128xf32> to vector<1x64xf32>
    %119 = arith.addf %117, %118 : vector<1x64xf32>
    %120 = arith.negf %116 : vector<1x64xf32>
    %121 = math.exp %120 : vector<1x64xf32>
    %cst_132 = arith.constant 1.000000e+00 : f32
    %122 = vector.broadcast %cst_132 : f32 to vector<1x64xf32>
    %123 = arith.addf %122, %121 : vector<1x64xf32>
    %124 = arith.divf %122, %123 : vector<1x64xf32>
    %125 = math.tanh %116 : vector<1x64xf32>
    %126 = vector.extract_strided_slice %124 {offsets = [0, 0], sizes = [1, 16], strides = [1, 1]} : vector<1x64xf32> to vector<1x16xf32>
    %127 = vector.extract_strided_slice %124 {offsets = [0, 16], sizes = [1, 16], strides = [1, 1]} : vector<1x64xf32> to vector<1x16xf32>
    %128 = vector.extract_strided_slice %125 {offsets = [0, 32], sizes = [1, 16], strides = [1, 1]} : vector<1x64xf32> to vector<1x16xf32>
    %129 = vector.extract_strided_slice %124 {offsets = [0, 48], sizes = [1, 16], strides = [1, 1]} : vector<1x64xf32> to vector<1x16xf32>
    %130 = arith.mulf %127, %109 : vector<1x16xf32>
    %131 = arith.mulf %126, %128 : vector<1x16xf32>
    %132 = arith.addf %130, %131 : vector<1x16xf32>
    %133 = math.tanh %132 : vector<1x16xf32>
    %134 = arith.mulf %129, %133 : vector<1x16xf32>
    %135 = arith.negf %119 : vector<1x64xf32>
    %136 = math.exp %135 : vector<1x64xf32>
    %cst_133 = arith.constant 1.000000e+00 : f32
    %137 = vector.broadcast %cst_133 : f32 to vector<1x64xf32>
    %138 = arith.addf %137, %136 : vector<1x64xf32>
    %139 = arith.divf %137, %138 : vector<1x64xf32>
    %140 = math.tanh %119 : vector<1x64xf32>
    %141 = vector.extract_strided_slice %139 {offsets = [0, 0], sizes = [1, 16], strides = [1, 1]} : vector<1x64xf32> to vector<1x16xf32>
    %142 = vector.extract_strided_slice %139 {offsets = [0, 16], sizes = [1, 16], strides = [1, 1]} : vector<1x64xf32> to vector<1x16xf32>
    %143 = vector.extract_strided_slice %140 {offsets = [0, 32], sizes = [1, 16], strides = [1, 1]} : vector<1x64xf32> to vector<1x16xf32>
    %144 = vector.extract_strided_slice %139 {offsets = [0, 48], sizes = [1, 16], strides = [1, 1]} : vector<1x64xf32> to vector<1x16xf32>
    %145 = arith.mulf %142, %111 : vector<1x16xf32>
    %146 = arith.mulf %141, %143 : vector<1x16xf32>
    %147 = arith.addf %145, %146 : vector<1x16xf32>
    %148 = math.tanh %147 : vector<1x16xf32>
    %149 = arith.mulf %144, %148 : vector<1x16xf32>
    %150 = tpu.concatenate %134, %149 in 1 : vector<1x16xf32>, vector<1x16xf32> -> vector<1x32xf32>
    %cst_134 = arith.constant dense<0.000000e+00> : vector<1x128xf32>
    %151 = tpu.matmul %150, %107, %cst_134 {dimension_numbers = #tpu.dot_dimension_numbers<[1], [0], [0], [1], [0, 0, 1, 1], [], []>} : vector<1x32xf32>, vector<32x128xf32>, vector<1x128xf32> -> vector<1x128xf32>
    %152 = vector.extract_strided_slice %106 {offsets = [1, 0], sizes = [1, 64], strides = [1, 1]} : vector<9x128xf32> to vector<1x64xf32>
    %153 = vector.extract_strided_slice %151 {offsets = [0, 0], sizes = [1, 64], strides = [1, 1]} : vector<1x128xf32> to vector<1x64xf32>
    %154 = arith.addf %152, %153 : vector<1x64xf32>
    %155 = vector.extract_strided_slice %106 {offsets = [7, 64], sizes = [1, 64], strides = [1, 1]} : vector<9x128xf32> to vector<1x64xf32>
    %156 = vector.extract_strided_slice %151 {offsets = [0, 64], sizes = [1, 64], strides = [1, 1]} : vector<1x128xf32> to vector<1x64xf32>
    %157 = arith.addf %155, %156 : vector<1x64xf32>
    %158 = arith.negf %154 : vector<1x64xf32>
    %159 = math.exp %158 : vector<1x64xf32>
    %cst_135 = arith.constant 1.000000e+00 : f32
    %160 = vector.broadcast %cst_135 : f32 to vector<1x64xf32>
    %161 = arith.addf %160, %159 : vector<1x64xf32>
    %162 = arith.divf %160, %161 : vector<1x64xf32>
    %163 = math.tanh %154 : vector<1x64xf32>
    %164 = vector.extract_strided_slice %162 {offsets = [0, 0], sizes = [1, 16], strides = [1, 1]} : vector<1x64xf32> to vector<1x16xf32>
    %165 = vector.extract_strided_slice %162 {offsets = [0, 16], sizes = [1, 16], strides = [1, 1]} : vector<1x64xf32> to vector<1x16xf32>
    %166 = vector.extract_strided_slice %163 {offsets = [0, 32], sizes = [1, 16], strides = [1, 1]} : vector<1x64xf32> to vector<1x16xf32>
    %167 = vector.extract_strided_slice %162 {offsets = [0, 48], sizes = [1, 16], strides = [1, 1]} : vector<1x64xf32> to vector<1x16xf32>
    %168 = arith.mulf %165, %132 : vector<1x16xf32>
    %169 = arith.mulf %164, %166 : vector<1x16xf32>
    %170 = arith.addf %168, %169 : vector<1x16xf32>
    %171 = math.tanh %170 : vector<1x16xf32>
    %172 = arith.mulf %167, %171 : vector<1x16xf32>
    %173 = arith.negf %157 : vector<1x64xf32>
    %174 = math.exp %173 : vector<1x64xf32>
    %cst_136 = arith.constant 1.000000e+00 : f32
    %175 = vector.broadcast %cst_136 : f32 to vector<1x64xf32>
    %176 = arith.addf %175, %174 : vector<1x64xf32>
    %177 = arith.divf %175, %176 : vector<1x64xf32>
    %178 = math.tanh %157 : vector<1x64xf32>
    %179 = vector.extract_strided_slice %177 {offsets = [0, 0], sizes = [1, 16], strides = [1, 1]} : vector<1x64xf32> to vector<1x16xf32>
    %180 = vector.extract_strided_slice %177 {offsets = [0, 16], sizes = [1, 16], strides = [1, 1]} : vector<1x64xf32> to vector<1x16xf32>
    %181 = vector.extract_strided_slice %178 {offsets = [0, 32], sizes = [1, 16], strides = [1, 1]} : vector<1x64xf32> to vector<1x16xf32>
    %182 = vector.extract_strided_slice %177 {offsets = [0, 48], sizes = [1, 16], strides = [1, 1]} : vector<1x64xf32> to vector<1x16xf32>
    %183 = arith.mulf %180, %147 : vector<1x16xf32>
    %184 = arith.mulf %179, %181 : vector<1x16xf32>
    %185 = arith.addf %183, %184 : vector<1x16xf32>
    %186 = math.tanh %185 : vector<1x16xf32>
    %187 = arith.mulf %182, %186 : vector<1x16xf32>
    %188 = tpu.concatenate %172, %187 in 1 : vector<1x16xf32>, vector<1x16xf32> -> vector<1x32xf32>
    %cst_137 = arith.constant dense<0.000000e+00> : vector<1x128xf32>
    %189 = tpu.matmul %188, %107, %cst_137 {dimension_numbers = #tpu.dot_dimension_numbers<[1], [0], [0], [1], [0, 0, 1, 1], [], []>} : vector<1x32xf32>, vector<32x128xf32>, vector<1x128xf32> -> vector<1x128xf32>
    %190 = vector.extract_strided_slice %106 {offsets = [2, 0], sizes = [1, 64], strides = [1, 1]} : vector<9x128xf32> to vector<1x64xf32>
    %191 = vector.extract_strided_slice %189 {offsets = [0, 0], sizes = [1, 64], strides = [1, 1]} : vector<1x128xf32> to vector<1x64xf32>
    %192 = arith.addf %190, %191 : vector<1x64xf32>
    %193 = vector.extract_strided_slice %106 {offsets = [6, 64], sizes = [1, 64], strides = [1, 1]} : vector<9x128xf32> to vector<1x64xf32>
    %194 = vector.extract_strided_slice %189 {offsets = [0, 64], sizes = [1, 64], strides = [1, 1]} : vector<1x128xf32> to vector<1x64xf32>
    %195 = arith.addf %193, %194 : vector<1x64xf32>
    %196 = arith.negf %192 : vector<1x64xf32>
    %197 = math.exp %196 : vector<1x64xf32>
    %cst_138 = arith.constant 1.000000e+00 : f32
    %198 = vector.broadcast %cst_138 : f32 to vector<1x64xf32>
    %199 = arith.addf %198, %197 : vector<1x64xf32>
    %200 = arith.divf %198, %199 : vector<1x64xf32>
    %201 = math.tanh %192 : vector<1x64xf32>
    %202 = vector.extract_strided_slice %200 {offsets = [0, 0], sizes = [1, 16], strides = [1, 1]} : vector<1x64xf32> to vector<1x16xf32>
    %203 = vector.extract_strided_slice %200 {offsets = [0, 16], sizes = [1, 16], strides = [1, 1]} : vector<1x64xf32> to vector<1x16xf32>
    %204 = vector.extract_strided_slice %201 {offsets = [0, 32], sizes = [1, 16], strides = [1, 1]} : vector<1x64xf32> to vector<1x16xf32>
    %205 = vector.extract_strided_slice %200 {offsets = [0, 48], sizes = [1, 16], strides = [1, 1]} : vector<1x64xf32> to vector<1x16xf32>
    %206 = arith.mulf %203, %170 : vector<1x16xf32>
    %207 = arith.mulf %202, %204 : vector<1x16xf32>
    %208 = arith.addf %206, %207 : vector<1x16xf32>
    %209 = math.tanh %208 : vector<1x16xf32>
    %210 = arith.mulf %205, %209 : vector<1x16xf32>
    %211 = arith.negf %195 : vector<1x64xf32>
    %212 = math.exp %211 : vector<1x64xf32>
    %cst_139 = arith.constant 1.000000e+00 : f32
    %213 = vector.broadcast %cst_139 : f32 to vector<1x64xf32>
    %214 = arith.addf %213, %212 : vector<1x64xf32>
    %215 = arith.divf %213, %214 : vector<1x64xf32>
    %216 = math.tanh %195 : vector<1x64xf32>
    %217 = vector.extract_strided_slice %215 {offsets = [0, 0], sizes = [1, 16], strides = [1, 1]} : vector<1x64xf32> to vector<1x16xf32>
    %218 = vector.extract_strided_slice %215 {offsets = [0, 16], sizes = [1, 16], strides = [1, 1]} : vector<1x64xf32> to vector<1x16xf32>
    %219 = vector.extract_strided_slice %216 {offsets = [0, 32], sizes = [1, 16], strides = [1, 1]} : vector<1x64xf32> to vector<1x16xf32>
    %220 = vector.extract_strided_slice %215 {offsets = [0, 48], sizes = [1, 16], strides = [1, 1]} : vector<1x64xf32> to vector<1x16xf32>
    %221 = arith.mulf %218, %185 : vector<1x16xf32>
    %222 = arith.mulf %217, %219 : vector<1x16xf32>
    %223 = arith.addf %221, %222 : vector<1x16xf32>
    %224 = math.tanh %223 : vector<1x16xf32>
    %225 = arith.mulf %220, %224 : vector<1x16xf32>
    %226 = tpu.concatenate %210, %225 in 1 : vector<1x16xf32>, vector<1x16xf32> -> vector<1x32xf32>
    %cst_140 = arith.constant dense<0.000000e+00> : vector<1x128xf32>
    %227 = tpu.matmul %226, %107, %cst_140 {dimension_numbers = #tpu.dot_dimension_numbers<[1], [0], [0], [1], [0, 0, 1, 1], [], []>} : vector<1x32xf32>, vector<32x128xf32>, vector<1x128xf32> -> vector<1x128xf32>
    %228 = vector.extract_strided_slice %106 {offsets = [3, 0], sizes = [1, 64], strides = [1, 1]} : vector<9x128xf32> to vector<1x64xf32>
    %229 = vector.extract_strided_slice %227 {offsets = [0, 0], sizes = [1, 64], strides = [1, 1]} : vector<1x128xf32> to vector<1x64xf32>
    %230 = arith.addf %228, %229 : vector<1x64xf32>
    %231 = vector.extract_strided_slice %106 {offsets = [5, 64], sizes = [1, 64], strides = [1, 1]} : vector<9x128xf32> to vector<1x64xf32>
    %232 = vector.extract_strided_slice %227 {offsets = [0, 64], sizes = [1, 64], strides = [1, 1]} : vector<1x128xf32> to vector<1x64xf32>
    %233 = arith.addf %231, %232 : vector<1x64xf32>
    %234 = arith.negf %230 : vector<1x64xf32>
    %235 = math.exp %234 : vector<1x64xf32>
    %cst_141 = arith.constant 1.000000e+00 : f32
    %236 = vector.broadcast %cst_141 : f32 to vector<1x64xf32>
    %237 = arith.addf %236, %235 : vector<1x64xf32>
    %238 = arith.divf %236, %237 : vector<1x64xf32>
    %239 = math.tanh %230 : vector<1x64xf32>
    %240 = vector.extract_strided_slice %238 {offsets = [0, 0], sizes = [1, 16], strides = [1, 1]} : vector<1x64xf32> to vector<1x16xf32>
    %241 = vector.extract_strided_slice %238 {offsets = [0, 16], sizes = [1, 16], strides = [1, 1]} : vector<1x64xf32> to vector<1x16xf32>
    %242 = vector.extract_strided_slice %239 {offsets = [0, 32], sizes = [1, 16], strides = [1, 1]} : vector<1x64xf32> to vector<1x16xf32>
    %243 = vector.extract_strided_slice %238 {offsets = [0, 48], sizes = [1, 16], strides = [1, 1]} : vector<1x64xf32> to vector<1x16xf32>
    %244 = arith.mulf %241, %208 : vector<1x16xf32>
    %245 = arith.mulf %240, %242 : vector<1x16xf32>
    %246 = arith.addf %244, %245 : vector<1x16xf32>
    %247 = math.tanh %246 : vector<1x16xf32>
    %248 = arith.mulf %243, %247 : vector<1x16xf32>
    %249 = arith.negf %233 : vector<1x64xf32>
    %250 = math.exp %249 : vector<1x64xf32>
    %cst_142 = arith.constant 1.000000e+00 : f32
    %251 = vector.broadcast %cst_142 : f32 to vector<1x64xf32>
    %252 = arith.addf %251, %250 : vector<1x64xf32>
    %253 = arith.divf %251, %252 : vector<1x64xf32>
    %254 = math.tanh %233 : vector<1x64xf32>
    %255 = vector.extract_strided_slice %253 {offsets = [0, 0], sizes = [1, 16], strides = [1, 1]} : vector<1x64xf32> to vector<1x16xf32>
    %256 = vector.extract_strided_slice %253 {offsets = [0, 16], sizes = [1, 16], strides = [1, 1]} : vector<1x64xf32> to vector<1x16xf32>
    %257 = vector.extract_strided_slice %254 {offsets = [0, 32], sizes = [1, 16], strides = [1, 1]} : vector<1x64xf32> to vector<1x16xf32>
    %258 = vector.extract_strided_slice %253 {offsets = [0, 48], sizes = [1, 16], strides = [1, 1]} : vector<1x64xf32> to vector<1x16xf32>
    %259 = arith.mulf %256, %223 : vector<1x16xf32>
    %260 = arith.mulf %255, %257 : vector<1x16xf32>
    %261 = arith.addf %259, %260 : vector<1x16xf32>
    %262 = math.tanh %261 : vector<1x16xf32>
    %263 = arith.mulf %258, %262 : vector<1x16xf32>
    %264 = tpu.concatenate %248, %263 in 1 : vector<1x16xf32>, vector<1x16xf32> -> vector<1x32xf32>
    %cst_143 = arith.constant dense<0.000000e+00> : vector<1x128xf32>
    %265 = tpu.matmul %264, %107, %cst_143 {dimension_numbers = #tpu.dot_dimension_numbers<[1], [0], [0], [1], [0, 0, 1, 1], [], []>} : vector<1x32xf32>, vector<32x128xf32>, vector<1x128xf32> -> vector<1x128xf32>
    %266 = vector.extract_strided_slice %106 {offsets = [4, 0], sizes = [1, 64], strides = [1, 1]} : vector<9x128xf32> to vector<1x64xf32>
    %267 = vector.extract_strided_slice %265 {offsets = [0, 0], sizes = [1, 64], strides = [1, 1]} : vector<1x128xf32> to vector<1x64xf32>
    %268 = arith.addf %266, %267 : vector<1x64xf32>
    %269 = vector.extract_strided_slice %106 {offsets = [4, 64], sizes = [1, 64], strides = [1, 1]} : vector<9x128xf32> to vector<1x64xf32>
    %270 = vector.extract_strided_slice %265 {offsets = [0, 64], sizes = [1, 64], strides = [1, 1]} : vector<1x128xf32> to vector<1x64xf32>
    %271 = arith.addf %269, %270 : vector<1x64xf32>
    %272 = arith.negf %268 : vector<1x64xf32>
    %273 = math.exp %272 : vector<1x64xf32>
    %cst_144 = arith.constant 1.000000e+00 : f32
    %274 = vector.broadcast %cst_144 : f32 to vector<1x64xf32>
    %275 = arith.addf %274, %273 : vector<1x64xf32>
    %276 = arith.divf %274, %275 : vector<1x64xf32>
    %277 = math.tanh %268 : vector<1x64xf32>
    %278 = vector.extract_strided_slice %276 {offsets = [0, 0], sizes = [1, 16], strides = [1, 1]} : vector<1x64xf32> to vector<1x16xf32>
    %279 = vector.extract_strided_slice %276 {offsets = [0, 16], sizes = [1, 16], strides = [1, 1]} : vector<1x64xf32> to vector<1x16xf32>
    %280 = vector.extract_strided_slice %277 {offsets = [0, 32], sizes = [1, 16], strides = [1, 1]} : vector<1x64xf32> to vector<1x16xf32>
    %281 = vector.extract_strided_slice %276 {offsets = [0, 48], sizes = [1, 16], strides = [1, 1]} : vector<1x64xf32> to vector<1x16xf32>
    %282 = arith.mulf %279, %246 : vector<1x16xf32>
    %283 = arith.mulf %278, %280 : vector<1x16xf32>
    %284 = arith.addf %282, %283 : vector<1x16xf32>
    %285 = math.tanh %284 : vector<1x16xf32>
    %286 = arith.mulf %281, %285 : vector<1x16xf32>
    %287 = arith.negf %271 : vector<1x64xf32>
    %288 = math.exp %287 : vector<1x64xf32>
    %cst_145 = arith.constant 1.000000e+00 : f32
    %289 = vector.broadcast %cst_145 : f32 to vector<1x64xf32>
    %290 = arith.addf %289, %288 : vector<1x64xf32>
    %291 = arith.divf %289, %290 : vector<1x64xf32>
    %292 = math.tanh %271 : vector<1x64xf32>
    %293 = vector.extract_strided_slice %291 {offsets = [0, 0], sizes = [1, 16], strides = [1, 1]} : vector<1x64xf32> to vector<1x16xf32>
    %294 = vector.extract_strided_slice %291 {offsets = [0, 16], sizes = [1, 16], strides = [1, 1]} : vector<1x64xf32> to vector<1x16xf32>
    %295 = vector.extract_strided_slice %292 {offsets = [0, 32], sizes = [1, 16], strides = [1, 1]} : vector<1x64xf32> to vector<1x16xf32>
    %296 = vector.extract_strided_slice %291 {offsets = [0, 48], sizes = [1, 16], strides = [1, 1]} : vector<1x64xf32> to vector<1x16xf32>
    %297 = arith.mulf %294, %261 : vector<1x16xf32>
    %298 = arith.mulf %293, %295 : vector<1x16xf32>
    %299 = arith.addf %297, %298 : vector<1x16xf32>
    %300 = math.tanh %299 : vector<1x16xf32>
    %301 = arith.mulf %296, %300 : vector<1x16xf32>
    %302 = tpu.concatenate %286, %301 in 1 : vector<1x16xf32>, vector<1x16xf32> -> vector<1x32xf32>
    %cst_146 = arith.constant dense<0.000000e+00> : vector<1x128xf32>
    %303 = tpu.matmul %302, %107, %cst_146 {dimension_numbers = #tpu.dot_dimension_numbers<[1], [0], [0], [1], [0, 0, 1, 1], [], []>} : vector<1x32xf32>, vector<32x128xf32>, vector<1x128xf32> -> vector<1x128xf32>
    %304 = vector.extract_strided_slice %106 {offsets = [5, 0], sizes = [1, 64], strides = [1, 1]} : vector<9x128xf32> to vector<1x64xf32>
    %305 = vector.extract_strided_slice %303 {offsets = [0, 0], sizes = [1, 64], strides = [1, 1]} : vector<1x128xf32> to vector<1x64xf32>
    %306 = arith.addf %304, %305 : vector<1x64xf32>
    %307 = vector.extract_strided_slice %106 {offsets = [3, 64], sizes = [1, 64], strides = [1, 1]} : vector<9x128xf32> to vector<1x64xf32>
    %308 = vector.extract_strided_slice %303 {offsets = [0, 64], sizes = [1, 64], strides = [1, 1]} : vector<1x128xf32> to vector<1x64xf32>
    %309 = arith.addf %307, %308 : vector<1x64xf32>
    %310 = arith.negf %306 : vector<1x64xf32>
    %311 = math.exp %310 : vector<1x64xf32>
    %cst_147 = arith.constant 1.000000e+00 : f32
    %312 = vector.broadcast %cst_147 : f32 to vector<1x64xf32>
    %313 = arith.addf %312, %311 : vector<1x64xf32>
    %314 = arith.divf %312, %313 : vector<1x64xf32>
    %315 = math.tanh %306 : vector<1x64xf32>
    %316 = vector.extract_strided_slice %314 {offsets = [0, 0], sizes = [1, 16], strides = [1, 1]} : vector<1x64xf32> to vector<1x16xf32>
    %317 = vector.extract_strided_slice %314 {offsets = [0, 16], sizes = [1, 16], strides = [1, 1]} : vector<1x64xf32> to vector<1x16xf32>
    %318 = vector.extract_strided_slice %315 {offsets = [0, 32], sizes = [1, 16], strides = [1, 1]} : vector<1x64xf32> to vector<1x16xf32>
    %319 = vector.extract_strided_slice %314 {offsets = [0, 48], sizes = [1, 16], strides = [1, 1]} : vector<1x64xf32> to vector<1x16xf32>
    %320 = arith.mulf %317, %284 : vector<1x16xf32>
    %321 = arith.mulf %316, %318 : vector<1x16xf32>
    %322 = arith.addf %320, %321 : vector<1x16xf32>
    %323 = math.tanh %322 : vector<1x16xf32>
    %324 = arith.mulf %319, %323 : vector<1x16xf32>
    %325 = arith.negf %309 : vector<1x64xf32>
    %326 = math.exp %325 : vector<1x64xf32>
    %cst_148 = arith.constant 1.000000e+00 : f32
    %327 = vector.broadcast %cst_148 : f32 to vector<1x64xf32>
    %328 = arith.addf %327, %326 : vector<1x64xf32>
    %329 = arith.divf %327, %328 : vector<1x64xf32>
    %330 = math.tanh %309 : vector<1x64xf32>
    %331 = vector.extract_strided_slice %329 {offsets = [0, 0], sizes = [1, 16], strides = [1, 1]} : vector<1x64xf32> to vector<1x16xf32>
    %332 = vector.extract_strided_slice %329 {offsets = [0, 16], sizes = [1, 16], strides = [1, 1]} : vector<1x64xf32> to vector<1x16xf32>
    %333 = vector.extract_strided_slice %330 {offsets = [0, 32], sizes = [1, 16], strides = [1, 1]} : vector<1x64xf32> to vector<1x16xf32>
    %334 = vector.extract_strided_slice %329 {offsets = [0, 48], sizes = [1, 16], strides = [1, 1]} : vector<1x64xf32> to vector<1x16xf32>
    %335 = arith.mulf %332, %299 : vector<1x16xf32>
    %336 = arith.mulf %331, %333 : vector<1x16xf32>
    %337 = arith.addf %335, %336 : vector<1x16xf32>
    %338 = math.tanh %337 : vector<1x16xf32>
    %339 = arith.mulf %334, %338 : vector<1x16xf32>
    %340 = tpu.concatenate %324, %339 in 1 : vector<1x16xf32>, vector<1x16xf32> -> vector<1x32xf32>
    %cst_149 = arith.constant dense<0.000000e+00> : vector<1x128xf32>
    %341 = tpu.matmul %340, %107, %cst_149 {dimension_numbers = #tpu.dot_dimension_numbers<[1], [0], [0], [1], [0, 0, 1, 1], [], []>} : vector<1x32xf32>, vector<32x128xf32>, vector<1x128xf32> -> vector<1x128xf32>
    %342 = vector.extract_strided_slice %106 {offsets = [6, 0], sizes = [1, 64], strides = [1, 1]} : vector<9x128xf32> to vector<1x64xf32>
    %343 = vector.extract_strided_slice %341 {offsets = [0, 0], sizes = [1, 64], strides = [1, 1]} : vector<1x128xf32> to vector<1x64xf32>
    %344 = arith.addf %342, %343 : vector<1x64xf32>
    %345 = vector.extract_strided_slice %106 {offsets = [2, 64], sizes = [1, 64], strides = [1, 1]} : vector<9x128xf32> to vector<1x64xf32>
    %346 = vector.extract_strided_slice %341 {offsets = [0, 64], sizes = [1, 64], strides = [1, 1]} : vector<1x128xf32> to vector<1x64xf32>
    %347 = arith.addf %345, %346 : vector<1x64xf32>
    %348 = arith.negf %344 : vector<1x64xf32>
    %349 = math.exp %348 : vector<1x64xf32>
    %cst_150 = arith.constant 1.000000e+00 : f32
    %350 = vector.broadcast %cst_150 : f32 to vector<1x64xf32>
    %351 = arith.addf %350, %349 : vector<1x64xf32>
    %352 = arith.divf %350, %351 : vector<1x64xf32>
    %353 = math.tanh %344 : vector<1x64xf32>
    %354 = vector.extract_strided_slice %352 {offsets = [0, 0], sizes = [1, 16], strides = [1, 1]} : vector<1x64xf32> to vector<1x16xf32>
    %355 = vector.extract_strided_slice %352 {offsets = [0, 16], sizes = [1, 16], strides = [1, 1]} : vector<1x64xf32> to vector<1x16xf32>
    %356 = vector.extract_strided_slice %353 {offsets = [0, 32], sizes = [1, 16], strides = [1, 1]} : vector<1x64xf32> to vector<1x16xf32>
    %357 = vector.extract_strided_slice %352 {offsets = [0, 48], sizes = [1, 16], strides = [1, 1]} : vector<1x64xf32> to vector<1x16xf32>
    %358 = arith.mulf %355, %322 : vector<1x16xf32>
    %359 = arith.mulf %354, %356 : vector<1x16xf32>
    %360 = arith.addf %358, %359 : vector<1x16xf32>
    %361 = math.tanh %360 : vector<1x16xf32>
    %362 = arith.mulf %357, %361 : vector<1x16xf32>
    %363 = arith.negf %347 : vector<1x64xf32>
    %364 = math.exp %363 : vector<1x64xf32>
    %cst_151 = arith.constant 1.000000e+00 : f32
    %365 = vector.broadcast %cst_151 : f32 to vector<1x64xf32>
    %366 = arith.addf %365, %364 : vector<1x64xf32>
    %367 = arith.divf %365, %366 : vector<1x64xf32>
    %368 = math.tanh %347 : vector<1x64xf32>
    %369 = vector.extract_strided_slice %367 {offsets = [0, 0], sizes = [1, 16], strides = [1, 1]} : vector<1x64xf32> to vector<1x16xf32>
    %370 = vector.extract_strided_slice %367 {offsets = [0, 16], sizes = [1, 16], strides = [1, 1]} : vector<1x64xf32> to vector<1x16xf32>
    %371 = vector.extract_strided_slice %368 {offsets = [0, 32], sizes = [1, 16], strides = [1, 1]} : vector<1x64xf32> to vector<1x16xf32>
    %372 = vector.extract_strided_slice %367 {offsets = [0, 48], sizes = [1, 16], strides = [1, 1]} : vector<1x64xf32> to vector<1x16xf32>
    %373 = arith.mulf %370, %337 : vector<1x16xf32>
    %374 = arith.mulf %369, %371 : vector<1x16xf32>
    %375 = arith.addf %373, %374 : vector<1x16xf32>
    %376 = math.tanh %375 : vector<1x16xf32>
    %377 = arith.mulf %372, %376 : vector<1x16xf32>
    %378 = tpu.concatenate %362, %377 in 1 : vector<1x16xf32>, vector<1x16xf32> -> vector<1x32xf32>
    %cst_152 = arith.constant dense<0.000000e+00> : vector<1x128xf32>
    %379 = tpu.matmul %378, %107, %cst_152 {dimension_numbers = #tpu.dot_dimension_numbers<[1], [0], [0], [1], [0, 0, 1, 1], [], []>} : vector<1x32xf32>, vector<32x128xf32>, vector<1x128xf32> -> vector<1x128xf32>
    %380 = vector.extract_strided_slice %106 {offsets = [7, 0], sizes = [1, 64], strides = [1, 1]} : vector<9x128xf32> to vector<1x64xf32>
    %381 = vector.extract_strided_slice %379 {offsets = [0, 0], sizes = [1, 64], strides = [1, 1]} : vector<1x128xf32> to vector<1x64xf32>
    %382 = arith.addf %380, %381 : vector<1x64xf32>
    %383 = vector.extract_strided_slice %106 {offsets = [1, 64], sizes = [1, 64], strides = [1, 1]} : vector<9x128xf32> to vector<1x64xf32>
    %384 = vector.extract_strided_slice %379 {offsets = [0, 64], sizes = [1, 64], strides = [1, 1]} : vector<1x128xf32> to vector<1x64xf32>
    %385 = arith.addf %383, %384 : vector<1x64xf32>
    %386 = arith.negf %382 : vector<1x64xf32>
    %387 = math.exp %386 : vector<1x64xf32>
    %cst_153 = arith.constant 1.000000e+00 : f32
    %388 = vector.broadcast %cst_153 : f32 to vector<1x64xf32>
    %389 = arith.addf %388, %387 : vector<1x64xf32>
    %390 = arith.divf %388, %389 : vector<1x64xf32>
    %391 = math.tanh %382 : vector<1x64xf32>
    %392 = vector.extract_strided_slice %390 {offsets = [0, 0], sizes = [1, 16], strides = [1, 1]} : vector<1x64xf32> to vector<1x16xf32>
    %393 = vector.extract_strided_slice %390 {offsets = [0, 16], sizes = [1, 16], strides = [1, 1]} : vector<1x64xf32> to vector<1x16xf32>
    %394 = vector.extract_strided_slice %391 {offsets = [0, 32], sizes = [1, 16], strides = [1, 1]} : vector<1x64xf32> to vector<1x16xf32>
    %395 = vector.extract_strided_slice %390 {offsets = [0, 48], sizes = [1, 16], strides = [1, 1]} : vector<1x64xf32> to vector<1x16xf32>
    %396 = arith.mulf %393, %360 : vector<1x16xf32>
    %397 = arith.mulf %392, %394 : vector<1x16xf32>
    %398 = arith.addf %396, %397 : vector<1x16xf32>
    %399 = math.tanh %398 : vector<1x16xf32>
    %400 = arith.mulf %395, %399 : vector<1x16xf32>
    %401 = arith.negf %385 : vector<1x64xf32>
    %402 = math.exp %401 : vector<1x64xf32>
    %cst_154 = arith.constant 1.000000e+00 : f32
    %403 = vector.broadcast %cst_154 : f32 to vector<1x64xf32>
    %404 = arith.addf %403, %402 : vector<1x64xf32>
    %405 = arith.divf %403, %404 : vector<1x64xf32>
    %406 = math.tanh %385 : vector<1x64xf32>
    %407 = vector.extract_strided_slice %405 {offsets = [0, 0], sizes = [1, 16], strides = [1, 1]} : vector<1x64xf32> to vector<1x16xf32>
    %408 = vector.extract_strided_slice %405 {offsets = [0, 16], sizes = [1, 16], strides = [1, 1]} : vector<1x64xf32> to vector<1x16xf32>
    %409 = vector.extract_strided_slice %406 {offsets = [0, 32], sizes = [1, 16], strides = [1, 1]} : vector<1x64xf32> to vector<1x16xf32>
    %410 = vector.extract_strided_slice %405 {offsets = [0, 48], sizes = [1, 16], strides = [1, 1]} : vector<1x64xf32> to vector<1x16xf32>
    %411 = arith.mulf %408, %375 : vector<1x16xf32>
    %412 = arith.mulf %407, %409 : vector<1x16xf32>
    %413 = arith.addf %411, %412 : vector<1x16xf32>
    %414 = math.tanh %413 : vector<1x16xf32>
    %415 = arith.mulf %410, %414 : vector<1x16xf32>
    %416 = tpu.concatenate %400, %415 in 1 : vector<1x16xf32>, vector<1x16xf32> -> vector<1x32xf32>
    %cst_155 = arith.constant dense<0.000000e+00> : vector<1x128xf32>
    %417 = tpu.matmul %416, %107, %cst_155 {dimension_numbers = #tpu.dot_dimension_numbers<[1], [0], [0], [1], [0, 0, 1, 1], [], []>} : vector<1x32xf32>, vector<32x128xf32>, vector<1x128xf32> -> vector<1x128xf32>
    %418 = vector.extract_strided_slice %106 {offsets = [8, 0], sizes = [1, 64], strides = [1, 1]} : vector<9x128xf32> to vector<1x64xf32>
    %419 = vector.extract_strided_slice %417 {offsets = [0, 0], sizes = [1, 64], strides = [1, 1]} : vector<1x128xf32> to vector<1x64xf32>
    %420 = arith.addf %418, %419 : vector<1x64xf32>
    %421 = vector.extract_strided_slice %106 {offsets = [0, 64], sizes = [1, 64], strides = [1, 1]} : vector<9x128xf32> to vector<1x64xf32>
    %422 = vector.extract_strided_slice %417 {offsets = [0, 64], sizes = [1, 64], strides = [1, 1]} : vector<1x128xf32> to vector<1x64xf32>
    %423 = arith.addf %421, %422 : vector<1x64xf32>
    %424 = arith.negf %420 : vector<1x64xf32>
    %425 = math.exp %424 : vector<1x64xf32>
    %cst_156 = arith.constant 1.000000e+00 : f32
    %426 = vector.broadcast %cst_156 : f32 to vector<1x64xf32>
    %427 = arith.addf %426, %425 : vector<1x64xf32>
    %428 = arith.divf %426, %427 : vector<1x64xf32>
    %429 = math.tanh %420 : vector<1x64xf32>
    %430 = vector.extract_strided_slice %428 {offsets = [0, 0], sizes = [1, 16], strides = [1, 1]} : vector<1x64xf32> to vector<1x16xf32>
    %431 = vector.extract_strided_slice %428 {offsets = [0, 16], sizes = [1, 16], strides = [1, 1]} : vector<1x64xf32> to vector<1x16xf32>
    %432 = vector.extract_strided_slice %429 {offsets = [0, 32], sizes = [1, 16], strides = [1, 1]} : vector<1x64xf32> to vector<1x16xf32>
    %433 = vector.extract_strided_slice %428 {offsets = [0, 48], sizes = [1, 16], strides = [1, 1]} : vector<1x64xf32> to vector<1x16xf32>
    %434 = arith.mulf %431, %398 : vector<1x16xf32>
    %435 = arith.mulf %430, %432 : vector<1x16xf32>
    %436 = arith.addf %434, %435 : vector<1x16xf32>
    %437 = math.tanh %436 : vector<1x16xf32>
    %438 = arith.mulf %433, %437 : vector<1x16xf32>
    %439 = arith.negf %423 : vector<1x64xf32>
    %440 = math.exp %439 : vector<1x64xf32>
    %cst_157 = arith.constant 1.000000e+00 : f32
    %441 = vector.broadcast %cst_157 : f32 to vector<1x64xf32>
    %442 = arith.addf %441, %440 : vector<1x64xf32>
    %443 = arith.divf %441, %442 : vector<1x64xf32>
    %444 = math.tanh %423 : vector<1x64xf32>
    %445 = vector.extract_strided_slice %443 {offsets = [0, 0], sizes = [1, 16], strides = [1, 1]} : vector<1x64xf32> to vector<1x16xf32>
    %446 = vector.extract_strided_slice %443 {offsets = [0, 16], sizes = [1, 16], strides = [1, 1]} : vector<1x64xf32> to vector<1x16xf32>
    %447 = vector.extract_strided_slice %444 {offsets = [0, 32], sizes = [1, 16], strides = [1, 1]} : vector<1x64xf32> to vector<1x16xf32>
    %448 = vector.extract_strided_slice %443 {offsets = [0, 48], sizes = [1, 16], strides = [1, 1]} : vector<1x64xf32> to vector<1x16xf32>
    %449 = arith.mulf %446, %413 : vector<1x16xf32>
    %450 = arith.mulf %445, %447 : vector<1x16xf32>
    %451 = arith.addf %449, %450 : vector<1x16xf32>
    %452 = math.tanh %451 : vector<1x16xf32>
    %453 = arith.mulf %448, %452 : vector<1x16xf32>
    %454 = tpu.concatenate %134, %172, %210, %248, %286, %324, %362, %400, %438 in 0 : vector<1x16xf32>, vector<1x16xf32>, vector<1x16xf32>, vector<1x16xf32>, vector<1x16xf32>, vector<1x16xf32>, vector<1x16xf32>, vector<1x16xf32>, vector<1x16xf32> -> vector<9x16xf32>
    %455 = tpu.concatenate %453, %415, %377, %339, %301, %263, %225, %187, %149 in 0 : vector<1x16xf32>, vector<1x16xf32>, vector<1x16xf32>, vector<1x16xf32>, vector<1x16xf32>, vector<1x16xf32>, vector<1x16xf32>, vector<1x16xf32>, vector<1x16xf32> -> vector<9x16xf32>
    %456 = tpu.concatenate %454, %455 in 1 : vector<9x16xf32>, vector<9x16xf32> -> vector<9x32xf32>
    %cst_158 = arith.constant 0.000000e+00 : f32
    %457 = vector.broadcast %cst_158 : f32 to vector<7x32xf32>
    %458 = tpu.concatenate %456, %457 in 0 : vector<9x32xf32>, vector<7x32xf32> -> vector<16x32xf32>
    %c0_159 = arith.constant 0 : index
    %c0_160 = arith.constant 0 : index
    %459 = vector.load %arg6[%c0_159, %c0_160] : memref<32x32xf32, #tpu.memory_space<vmem>>, vector<32x32xf32>
    %cst_161 = arith.constant dense<0.000000e+00> : vector<16x32xf32>
    %460 = tpu.matmul %458, %459, %cst_161 {dimension_numbers = #tpu.dot_dimension_numbers<[1], [0], [0], [1], [0, 0, 1, 1], [], []>} : vector<16x32xf32>, vector<32x32xf32>, vector<16x32xf32> -> vector<16x32xf32>
    %c0_162 = arith.constant 0 : index
    %c0_163 = arith.constant 0 : index
    %461 = vector.load %arg7[%c0_162, %c0_163] : memref<1x32xf32, #tpu.memory_space<vmem>>, vector<1x32xf32>
    %462 = vector.broadcast %461 : vector<1x32xf32> to vector<16x32xf32>
    %463 = arith.addf %460, %462 : vector<16x32xf32>
    %c0_164 = arith.constant 0 : index
    %c0_165 = arith.constant 0 : index
    %464 = vector.load %arg8[%c0_164, %c0_165] : memref<7x32xf32, #tpu.memory_space<vmem>>, vector<7x32xf32>
    %c0_166 = arith.constant 0 : index
    %c0_167 = arith.constant 0 : index
    %465 = vector.load %arg9[%c0_166, %c0_167] : memref<32x1xf32, #tpu.memory_space<vmem>>, vector<32x1xf32>
    %c0_168 = arith.constant 0 : index
    %c0_169 = arith.constant 0 : index
    %466 = vector.load %arg10[%c0_168, %c0_169] : memref<1x1xf32, #tpu.memory_space<vmem>>, vector<1x1xf32>
    %c0_170 = arith.constant 0 : index
    %c0_171 = arith.constant 0 : index
    %467 = vector.load %arg12[%c0_170, %c0_171] : memref<8x17xf32, #tpu.memory_space<vmem>>, vector<8x17xf32>
    %c0_172 = arith.constant 0 : index
    %c0_173 = arith.constant 0 : index
    %468 = vector.load %arg13[%c0_172, %c0_173] : memref<1x16xf32, #tpu.memory_space<vmem>>, vector<1x16xf32>
    %c0_174 = arith.constant 0 : index
    %c0_175 = arith.constant 0 : index
    %469 = vector.load %arg14[%c0_174, %c0_175] : memref<16x16xf32, #tpu.memory_space<vmem>>, vector<16x16xf32>
    %c0_176 = arith.constant 0 : index
    %c0_177 = arith.constant 0 : index
    %470 = vector.load %arg15[%c0_176, %c0_177] : memref<1x16xf32, #tpu.memory_space<vmem>>, vector<1x16xf32>
    %c0_178 = arith.constant 0 : index
    %c0_179 = arith.constant 0 : index
    %471 = vector.load %arg23[%c0_178, %c0_179] : memref<1x1xf32, #tpu.memory_space<vmem>>, vector<1x1xf32>
    %c0_180 = arith.constant 0 : index
    %c0_181 = arith.constant 0 : index
    %472 = vector.load %arg22[%c0_180, %c0_181] : memref<1x9xf32, #tpu.memory_space<vmem>>, vector<1x9xf32>
    %473 = tpu.iota {dimensions = array<i32: 0>} : vector<16x1xi32>
    %c9_i32 = arith.constant 9 : i32
    %474 = vector.broadcast %c9_i32 : i32 to vector<16x1xi32>
    %475 = arith.cmpi slt, %473, %474 : vector<16x1xi32>
    %c0_i32 = arith.constant 0 : i32
    %476 = vector.broadcast %c0_i32 : i32 to vector<16x1xi32>
    %477 = arith.cmpi eq, %473, %476 : vector<16x1xi32>
    %478 = arith.extui %477 : vector<16x1xi1> to vector<16x1xi32>
    %479 = arith.sitofp %478 : vector<16x1xi32> to vector<16x1xf32>
    %cst_182 = arith.constant 0.000000e+00 : f32
    %480 = vector.broadcast %cst_182 : f32 to vector<32x1xf32>
    %c0_183 = arith.constant 0 : index
    %c0_184 = arith.constant 0 : index
    %481 = vector.load %arg29[%c0_183, %c0_184] : memref<32x1xf32, #tpu.memory_space<vmem>>, vector<32x1xf32>
    tpu.vector_store %arg29[%c0_183, %c0_184], %480 {strides = array<i32>} : memref<32x1xf32, #tpu.memory_space<vmem>>, vector<32x1xf32>,
    %cst_185 = arith.constant 0.000000e+00 : f32
    %482 = vector.broadcast %cst_185 : f32 to vector<1x32xf32>
    %cst_186 = arith.constant 0.000000e+00 : f32
    %483 = vector.broadcast %cst_186 : f32 to vector<1x32xf32>
    %cst_187 = arith.constant 0.000000e+00 : f32
    %484 = vector.broadcast %cst_187 : f32 to vector<1x32xf32>
    %cst_188 = arith.constant 0.000000e+00 : f32
    %485 = vector.broadcast %cst_188 : f32 to vector<1x32xf32>
    %cst_189 = arith.constant 0.000000e+00 : f32
    %486 = vector.broadcast %cst_189 : f32 to vector<1x8xf32>
    %cst_190 = arith.constant 5.000000e-01 : f32
    %487 = vector.broadcast %cst_190 : f32 to vector<1x1xf32>
    %c0_i32_191 = arith.constant 0 : i32
    %c18_i32 = arith.constant 18 : i32
    %488 = arith.addi %c0_i32_191, %c18_i32 : i32
    %c1_i32 = arith.constant 1 : i32
    %489:7 = scf.for %arg30 = %c0_i32_191 to %488 step %c1_i32 iter_args(%arg31 = %482, %arg32 = %483, %arg33 = %484, %arg34 = %485, %arg35 = %486, %arg36 = %479, %arg37 = %487) -> (vector<1x32xf32>, vector<1x32xf32>, vector<1x32xf32>, vector<1x32xf32>, vector<1x8xf32>, vector<16x1xf32>, vector<1x1xf32>)  : i32 {
      %c0_405 = arith.constant 0 : index
      %c0_406 = arith.constant 0 : index
      %655 = vector.load %arg11[%c0_405, %c0_406] : memref<32x161xf32, #tpu.memory_space<vmem>>, vector<32x161xf32>
      %cst_407 = arith.constant dense<0.000000e+00> : vector<1x161xf32>
      %656 = tpu.matmul %arg31, %655, %cst_407 {dimension_numbers = #tpu.dot_dimension_numbers<[1], [0], [0], [1], [0, 0, 1, 1], [], []>} : vector<1x32xf32>, vector<32x161xf32>, vector<1x161xf32> -> vector<1x161xf32>
      %657 = vector.extract_strided_slice %656 {offsets = [0, 0], sizes = [1, 128], strides = [1, 1]} : vector<1x161xf32> to vector<1x128xf32>
      %658 = vector.extract_strided_slice %656 {offsets = [0, 128], sizes = [1, 32], strides = [1, 1]} : vector<1x161xf32> to vector<1x32xf32>
      %659 = vector.extract_strided_slice %656 {offsets = [0, 160], sizes = [1, 1], strides = [1, 1]} : vector<1x161xf32> to vector<1x1xf32>
      %c8_408 = arith.constant 8 : index
      %c0_409 = arith.constant 0 : index
      %660 = vector.load %arg29[%c8_408, %c0_409] : memref<32x1xf32, #tpu.memory_space<vmem>>, vector<16x1xf32>
      tpu.vector_store %arg29[%c8_408, %c0_409], %arg36 {strides = array<i32>} : memref<32x1xf32, #tpu.memory_space<vmem>>, vector<16x1xf32>,
      %c7_410 = arith.constant 7 : index
      %c0_411 = arith.constant 0 : index
      %661 = vector.load %arg29[%c7_410, %c0_411] : memref<32x1xf32, #tpu.memory_space<vmem>>, vector<16x1xf32>
      %cst_412 = arith.constant 0.000000e+00 : f32
      %662 = vector.broadcast %cst_412 : f32 to vector<16x32xf32>
      %c5 = arith.constant 5 : index
      %c0_413 = arith.constant 0 : index
      %663 = vector.load %arg29[%c5, %c0_413] : memref<32x1xf32, #tpu.memory_space<vmem>>, vector<16x1xf32>
      %664 = vector.extract_strided_slice %464 {offsets = [0, 0], sizes = [1, 32], strides = [1, 1]} : vector<7x32xf32> to vector<1x32xf32>
      %665 = vector.broadcast %663 : vector<16x1xf32> to vector<16x32xf32>
      %666 = vector.broadcast %664 : vector<1x32xf32> to vector<16x32xf32>
      %667 = arith.mulf %665, %666 : vector<16x32xf32>
      %668 = arith.addf %662, %667 : vector<16x32xf32>
      %c6_414 = arith.constant 6 : index
      %c0_415 = arith.constant 0 : index
      %669 = vector.load %arg29[%c6_414, %c0_415] : memref<32x1xf32, #tpu.memory_space<vmem>>, vector<16x1xf32>
      %670 = vector.extract_strided_slice %464 {offsets = [1, 0], sizes = [1, 32], strides = [1, 1]} : vector<7x32xf32> to vector<1x32xf32>
      %671 = vector.broadcast %669 : vector<16x1xf32> to vector<16x32xf32>
      %672 = vector.broadcast %670 : vector<1x32xf32> to vector<16x32xf32>
      %673 = arith.mulf %671, %672 : vector<16x32xf32>
      %674 = arith.addf %668, %673 : vector<16x32xf32>
      %c7_416 = arith.constant 7 : index
      %c0_417 = arith.constant 0 : index
      %675 = vector.load %arg29[%c7_416, %c0_417] : memref<32x1xf32, #tpu.memory_space<vmem>>, vector<16x1xf32>
      %676 = vector.extract_strided_slice %464 {offsets = [2, 0], sizes = [1, 32], strides = [1, 1]} : vector<7x32xf32> to vector<1x32xf32>
      %677 = vector.broadcast %675 : vector<16x1xf32> to vector<16x32xf32>
      %678 = vector.broadcast %676 : vector<1x32xf32> to vector<16x32xf32>
      %679 = arith.mulf %677, %678 : vector<16x32xf32>
      %680 = arith.addf %674, %679 : vector<16x32xf32>
      %c8_418 = arith.constant 8 : index
      %c0_419 = arith.constant 0 : index
      %681 = vector.load %arg29[%c8_418, %c0_419] : memref<32x1xf32, #tpu.memory_space<vmem>>, vector<16x1xf32>
      %682 = vector.extract_strided_slice %464 {offsets = [3, 0], sizes = [1, 32], strides = [1, 1]} : vector<7x32xf32> to vector<1x32xf32>
      %683 = vector.broadcast %681 : vector<16x1xf32> to vector<16x32xf32>
      %684 = vector.broadcast %682 : vector<1x32xf32> to vector<16x32xf32>
      %685 = arith.mulf %683, %684 : vector<16x32xf32>
      %686 = arith.addf %680, %685 : vector<16x32xf32>
      %c9_420 = arith.constant 9 : index
      %c0_421 = arith.constant 0 : index
      %687 = vector.load %arg29[%c9_420, %c0_421] : memref<32x1xf32, #tpu.memory_space<vmem>>, vector<16x1xf32>
      %688 = vector.extract_strided_slice %464 {offsets = [4, 0], sizes = [1, 32], strides = [1, 1]} : vector<7x32xf32> to vector<1x32xf32>
      %689 = vector.broadcast %687 : vector<16x1xf32> to vector<16x32xf32>
      %690 = vector.broadcast %688 : vector<1x32xf32> to vector<16x32xf32>
      %691 = arith.mulf %689, %690 : vector<16x32xf32>
      %692 = arith.addf %686, %691 : vector<16x32xf32>
      %c10_422 = arith.constant 10 : index
      %c0_423 = arith.constant 0 : index
      %693 = vector.load %arg29[%c10_422, %c0_423] : memref<32x1xf32, #tpu.memory_space<vmem>>, vector<16x1xf32>
      %694 = vector.extract_strided_slice %464 {offsets = [5, 0], sizes = [1, 32], strides = [1, 1]} : vector<7x32xf32> to vector<1x32xf32>
      %695 = vector.broadcast %693 : vector<16x1xf32> to vector<16x32xf32>
      %696 = vector.broadcast %694 : vector<1x32xf32> to vector<16x32xf32>
      %697 = arith.mulf %695, %696 : vector<16x32xf32>
      %698 = arith.addf %692, %697 : vector<16x32xf32>
      %c11 = arith.constant 11 : index
      %c0_424 = arith.constant 0 : index
      %699 = vector.load %arg29[%c11, %c0_424] : memref<32x1xf32, #tpu.memory_space<vmem>>, vector<16x1xf32>
      %700 = vector.extract_strided_slice %464 {offsets = [6, 0], sizes = [1, 32], strides = [1, 1]} : vector<7x32xf32> to vector<1x32xf32>
      %701 = vector.broadcast %699 : vector<16x1xf32> to vector<16x32xf32>
      %702 = vector.broadcast %700 : vector<1x32xf32> to vector<16x32xf32>
      %703 = arith.mulf %701, %702 : vector<16x32xf32>
      %704 = arith.addf %698, %703 : vector<16x32xf32>
      %705 = arith.addf %463, %704 : vector<16x32xf32>
      %706 = vector.broadcast %658 : vector<1x32xf32> to vector<16x32xf32>
      %707 = arith.addf %705, %706 : vector<16x32xf32>
      %708 = math.tanh %707 : vector<16x32xf32>
      %cst_425 = arith.constant dense<0.000000e+00> : vector<16x1xf32>
      %709 = tpu.matmul %708, %465, %cst_425 {dimension_numbers = #tpu.dot_dimension_numbers<[1], [0], [0], [1], [0, 0, 1, 1], [], []>} : vector<16x32xf32>, vector<32x1xf32>, vector<16x1xf32> -> vector<16x1xf32>
      %710 = vector.broadcast %466 : vector<1x1xf32> to vector<16x1xf32>
      %711 = arith.addf %709, %710 : vector<16x1xf32>
      %cst_426 = arith.constant -1.000000e+30 : f32
      %712 = vector.broadcast %cst_426 : f32 to vector<16x1xf32>
      %713 = arith.select %475, %711, %712 : vector<16x1xi1>, vector<16x1xf32>
      %cst_427 = arith.constant dense<0xFF800000> : vector<1xf32>
      %714 = vector.multi_reduction <maximumf>, %713, %cst_427 [0] : vector<16x1xf32> to vector<1xf32>
      %715 = vector.shape_cast %714 : vector<1xf32> to vector<1x1xf32>
      %716 = vector.broadcast %715 : vector<1x1xf32> to vector<16x1xf32>
      %717 = arith.subf %713, %716 : vector<16x1xf32>
      %718 = math.exp %717 : vector<16x1xf32>
      %cst_428 = arith.constant dense<0.000000e+00> : vector<1xf32>
      %719 = vector.multi_reduction <add>, %718, %cst_428 [0] : vector<16x1xf32> to vector<1xf32>
      %720 = vector.shape_cast %719 : vector<1xf32> to vector<1x1xf32>
      %721 = vector.broadcast %720 : vector<1x1xf32> to vector<16x1xf32>
      %722 = arith.divf %718, %721 : vector<16x1xf32>
      %723 = vector.broadcast %arg37 : vector<1x1xf32> to vector<16x1xf32>
      %724 = arith.mulf %723, %arg36 : vector<16x1xf32>
      %cst_429 = arith.constant 1.000000e+00 : f32
      %725 = vector.broadcast %cst_429 : f32 to vector<1x1xf32>
      %726 = arith.subf %725, %arg37 : vector<1x1xf32>
      %727 = vector.broadcast %726 : vector<1x1xf32> to vector<16x1xf32>
      %728 = arith.mulf %727, %661 : vector<16x1xf32>
      %729 = arith.addf %724, %728 : vector<16x1xf32>
      %730 = arith.mulf %729, %722 : vector<16x1xf32>
      %cst_430 = arith.constant 9.99999997E-7 : f32
      %731 = vector.broadcast %cst_430 : f32 to vector<16x1xf32>
      %732 = arith.maximumf %730, %731 : vector<16x1xf32>
      %cst_431 = arith.constant 0.000000e+00 : f32
      %733 = vector.broadcast %cst_431 : f32 to vector<16x1xf32>
      %734 = arith.select %475, %732, %733 : vector<16x1xi1>, vector<16x1xf32>
      %cst_432 = arith.constant dense<0.000000e+00> : vector<1xf32>
      %735 = vector.multi_reduction <add>, %734, %cst_432 [0] : vector<16x1xf32> to vector<1xf32>
      %736 = vector.shape_cast %735 : vector<1xf32> to vector<1x1xf32>
      %737 = vector.broadcast %736 : vector<1x1xf32> to vector<16x1xf32>
      %738 = arith.divf %734, %737 : vector<16x1xf32>
      %cst_433 = arith.constant dense<0.000000e+00> : vector<1x32xf32>
      %739 = tpu.matmul %738, %458, %cst_433 {dimension_numbers = #tpu.dot_dimension_numbers<[0], [0], [1], [1], [0, 1, 1, 1], [], []>} : vector<16x1xf32>, vector<16x32xf32>, vector<1x32xf32> -> vector<1x32xf32>
      %c0_434 = arith.constant 0 : index
      %c0_435 = arith.constant 0 : index
      %740 = vector.load %arg16[%c0_434, %c0_435] : memref<32x138xf32, #tpu.memory_space<vmem>>, vector<32x138xf32>
      %cst_436 = arith.constant dense<0.000000e+00> : vector<1x138xf32>
      %741 = tpu.matmul %739, %740, %cst_436 {dimension_numbers = #tpu.dot_dimension_numbers<[1], [0], [0], [1], [0, 0, 1, 1], [], []>} : vector<1x32xf32>, vector<32x138xf32>, vector<1x138xf32> -> vector<1x138xf32>
      %742 = vector.extract_strided_slice %741 {offsets = [0, 0], sizes = [1, 128], strides = [1, 1]} : vector<1x138xf32> to vector<1x128xf32>
      %743 = vector.extract_strided_slice %741 {offsets = [0, 128], sizes = [1, 9], strides = [1, 1]} : vector<1x138xf32> to vector<1x9xf32>
      %744 = vector.extract_strided_slice %741 {offsets = [0, 137], sizes = [1, 1], strides = [1, 1]} : vector<1x138xf32> to vector<1x1xf32>
      %cst_437 = arith.constant dense<0.000000e+00> : vector<1x17xf32>
      %745 = tpu.matmul %arg35, %467, %cst_437 {dimension_numbers = #tpu.dot_dimension_numbers<[1], [0], [0], [1], [0, 0, 1, 1], [], []>} : vector<1x8xf32>, vector<8x17xf32>, vector<1x17xf32> -> vector<1x17xf32>
      %746 = vector.extract_strided_slice %745 {offsets = [0, 0], sizes = [1, 16], strides = [1, 1]} : vector<1x17xf32> to vector<1x16xf32>
      %747 = vector.extract_strided_slice %745 {offsets = [0, 16], sizes = [1, 1], strides = [1, 1]} : vector<1x17xf32> to vector<1x1xf32>
      %748 = arith.addf %744, %747 : vector<1x1xf32>
      %749 = arith.addf %748, %659 : vector<1x1xf32>
      %750 = arith.addf %749, %471 : vector<1x1xf32>
      %751 = arith.negf %750 : vector<1x1xf32>
      %752 = math.exp %751 : vector<1x1xf32>
      %cst_438 = arith.constant 1.000000e+00 : f32
      %753 = vector.broadcast %cst_438 : f32 to vector<1x1xf32>
      %754 = arith.addf %753, %752 : vector<1x1xf32>
      %755 = arith.divf %753, %754 : vector<1x1xf32>
      %756 = arith.index_cast %arg30 : i32 to index
      %c0_439 = arith.constant 0 : index
      %757 = vector.load %arg24[%756, %c0_439] : memref<18x32xf32, #tpu.memory_space<vmem>>, vector<1x32xf32>
      %758 = arith.addf %746, %468 : vector<1x16xf32>
      %cst_440 = arith.constant 0.000000e+00 : f32
      %759 = vector.broadcast %cst_440 : f32 to vector<1x16xf32>
      %760 = arith.maximumf %758, %759 : vector<1x16xf32>
      %761 = vector.extract_strided_slice %757 {offsets = [0, 0], sizes = [1, 16], strides = [1, 1]} : vector<1x32xf32> to vector<1x16xf32>
      %762 = arith.mulf %760, %761 : vector<1x16xf32>
      %cst_441 = arith.constant dense<0.000000e+00> : vector<1x16xf32>
      %763 = tpu.matmul %762, %469, %cst_441 {dimension_numbers = #tpu.dot_dimension_numbers<[1], [0], [0], [1], [0, 0, 1, 1], [], []>} : vector<1x16xf32>, vector<16x16xf32>, vector<1x16xf32> -> vector<1x16xf32>
      %764 = arith.addf %763, %470 : vector<1x16xf32>
      %cst_442 = arith.constant 0.000000e+00 : f32
      %765 = vector.broadcast %cst_442 : f32 to vector<1x16xf32>
      %766 = arith.maximumf %764, %765 : vector<1x16xf32>
      %767 = vector.extract_strided_slice %757 {offsets = [0, 16], sizes = [1, 16], strides = [1, 1]} : vector<1x32xf32> to vector<1x16xf32>
      %768 = arith.mulf %766, %767 : vector<1x16xf32>
      %769 = arith.addf %742, %657 : vector<1x128xf32>
      %c0_443 = arith.constant 0 : index
      %c0_444 = arith.constant 0 : index
      %770 = vector.load %arg18[%c0_443, %c0_444] : memref<1x128xf32, #tpu.memory_space<vmem>>, vector<1x128xf32>
      %771 = arith.addf %769, %770 : vector<1x128xf32>
      %c0_445 = arith.constant 0 : index
      %c0_446 = arith.constant 0 : index
      %772 = vector.load %arg17[%c0_445, %c0_446] : memref<16x128xf32, #tpu.memory_space<vmem>>, vector<16x128xf32>
      %cst_447 = arith.constant dense<0.000000e+00> : vector<1x128xf32>
      %773 = tpu.matmul %768, %772, %cst_447 {dimension_numbers = #tpu.dot_dimension_numbers<[1], [0], [0], [1], [0, 0, 1, 1], [], []>} : vector<1x16xf32>, vector<16x128xf32>, vector<1x128xf32> -> vector<1x128xf32>
      %774 = arith.addf %771, %773 : vector<1x128xf32>
      %775 = arith.negf %774 : vector<1x128xf32>
      %776 = math.exp %775 : vector<1x128xf32>
      %cst_448 = arith.constant 1.000000e+00 : f32
      %777 = vector.broadcast %cst_448 : f32 to vector<1x128xf32>
      %778 = arith.addf %777, %776 : vector<1x128xf32>
      %779 = arith.divf %777, %778 : vector<1x128xf32>
      %780 = math.tanh %774 : vector<1x128xf32>
      %781 = vector.extract_strided_slice %779 {offsets = [0, 0], sizes = [1, 32], strides = [1, 1]} : vector<1x128xf32> to vector<1x32xf32>
      %782 = vector.extract_strided_slice %779 {offsets = [0, 32], sizes = [1, 32], strides = [1, 1]} : vector<1x128xf32> to vector<1x32xf32>
      %783 = vector.extract_strided_slice %780 {offsets = [0, 64], sizes = [1, 32], strides = [1, 1]} : vector<1x128xf32> to vector<1x32xf32>
      %784 = vector.extract_strided_slice %779 {offsets = [0, 96], sizes = [1, 32], strides = [1, 1]} : vector<1x128xf32> to vector<1x32xf32>
      %785 = arith.mulf %782, %arg32 : vector<1x32xf32>
      %786 = arith.mulf %781, %783 : vector<1x32xf32>
      %787 = arith.addf %785, %786 : vector<1x32xf32>
      %788 = math.tanh %787 : vector<1x32xf32>
      %789 = arith.mulf %784, %788 : vector<1x32xf32>
      %cst_449 = arith.constant 1.000000e-01 : f32
      %790 = vector.broadcast %cst_449 : f32 to vector<1x32xf32>
      %791 = arith.mulf %790, %arg31 : vector<1x32xf32>
      %cst_450 = arith.constant 0.899999976 : f32
      %792 = vector.broadcast %cst_450 : f32 to vector<1x32xf32>
      %793 = arith.mulf %792, %789 : vector<1x32xf32>
      %794 = arith.addf %791, %793 : vector<1x32xf32>
      %cst_451 = arith.constant 1.000000e-01 : f32
      %795 = vector.broadcast %cst_451 : f32 to vector<1x32xf32>
      %796 = arith.mulf %795, %arg32 : vector<1x32xf32>
      %cst_452 = arith.constant 0.899999976 : f32
      %797 = vector.broadcast %cst_452 : f32 to vector<1x32xf32>
      %798 = arith.mulf %797, %787 : vector<1x32xf32>
      %799 = arith.addf %796, %798 : vector<1x32xf32>
      %800 = tpu.concatenate %794, %arg33 in 1 : vector<1x32xf32>, vector<1x32xf32> -> vector<1x64xf32>
      %c0_453 = arith.constant 0 : index
      %c0_454 = arith.constant 0 : index
      %801 = vector.load %arg19[%c0_453, %c0_454] : memref<64x128xf32, #tpu.memory_space<vmem>>, vector<64x128xf32>
      %cst_455 = arith.constant dense<0.000000e+00> : vector<1x128xf32>
      %802 = tpu.matmul %800, %801, %cst_455 {dimension_numbers = #tpu.dot_dimension_numbers<[1], [0], [0], [1], [0, 0, 1, 1], [], []>} : vector<1x64xf32>, vector<64x128xf32>, vector<1x128xf32> -> vector<1x128xf32>
      %c0_456 = arith.constant 0 : index
      %c0_457 = arith.constant 0 : index
      %803 = vector.load %arg20[%c0_456, %c0_457] : memref<1x128xf32, #tpu.memory_space<vmem>>, vector<1x128xf32>
      %804 = arith.addf %802, %803 : vector<1x128xf32>
      %805 = arith.negf %804 : vector<1x128xf32>
      %806 = math.exp %805 : vector<1x128xf32>
      %cst_458 = arith.constant 1.000000e+00 : f32
      %807 = vector.broadcast %cst_458 : f32 to vector<1x128xf32>
      %808 = arith.addf %807, %806 : vector<1x128xf32>
      %809 = arith.divf %807, %808 : vector<1x128xf32>
      %810 = math.tanh %804 : vector<1x128xf32>
      %811 = vector.extract_strided_slice %809 {offsets = [0, 0], sizes = [1, 32], strides = [1, 1]} : vector<1x128xf32> to vector<1x32xf32>
      %812 = vector.extract_strided_slice %809 {offsets = [0, 32], sizes = [1, 32], strides = [1, 1]} : vector<1x128xf32> to vector<1x32xf32>
      %813 = vector.extract_strided_slice %810 {offsets = [0, 64], sizes = [1, 32], strides = [1, 1]} : vector<1x128xf32> to vector<1x32xf32>
      %814 = vector.extract_strided_slice %809 {offsets = [0, 96], sizes = [1, 32], strides = [1, 1]} : vector<1x128xf32> to vector<1x32xf32>
      %815 = arith.mulf %812, %arg34 : vector<1x32xf32>
      %816 = arith.mulf %811, %813 : vector<1x32xf32>
      %817 = arith.addf %815, %816 : vector<1x32xf32>
      %818 = math.tanh %817 : vector<1x32xf32>
      %819 = arith.mulf %814, %818 : vector<1x32xf32>
      %cst_459 = arith.constant 1.000000e-01 : f32
      %820 = vector.broadcast %cst_459 : f32 to vector<1x32xf32>
      %821 = arith.mulf %820, %arg33 : vector<1x32xf32>
      %cst_460 = arith.constant 0.899999976 : f32
      %822 = vector.broadcast %cst_460 : f32 to vector<1x32xf32>
      %823 = arith.mulf %822, %819 : vector<1x32xf32>
      %824 = arith.addf %821, %823 : vector<1x32xf32>
      %cst_461 = arith.constant 1.000000e-01 : f32
      %825 = vector.broadcast %cst_461 : f32 to vector<1x32xf32>
      %826 = arith.mulf %825, %arg34 : vector<1x32xf32>
      %cst_462 = arith.constant 0.899999976 : f32
      %827 = vector.broadcast %cst_462 : f32 to vector<1x32xf32>
      %828 = arith.mulf %827, %817 : vector<1x32xf32>
      %829 = arith.addf %826, %828 : vector<1x32xf32>
      %c0_463 = arith.constant 0 : index
      %c0_464 = arith.constant 0 : index
      %830 = vector.load %arg21[%c0_463, %c0_464] : memref<32x9xf32, #tpu.memory_space<vmem>>, vector<32x9xf32>
      %cst_465 = arith.constant dense<0.000000e+00> : vector<1x9xf32>
      %831 = tpu.matmul %824, %830, %cst_465 {dimension_numbers = #tpu.dot_dimension_numbers<[1], [0], [0], [1], [0, 0, 1, 1], [], []>} : vector<1x32xf32>, vector<32x9xf32>, vector<1x9xf32> -> vector<1x9xf32>
      %832 = arith.addf %831, %743 : vector<1x9xf32>
      %833 = arith.addf %832, %472 : vector<1x9xf32>
      %834 = vector.extract_strided_slice %833 {offsets = [0, 0], sizes = [1, 8], strides = [1, 1]} : vector<1x9xf32> to vector<1x8xf32>
      %835 = arith.index_cast %arg30 : i32 to index
      %c0_466 = arith.constant 0 : index
      %836 = vector.load %arg27[%835, %c0_466] : memref<18x8xf32, #tpu.memory_space<vmem>>, vector<1x8xf32>
      tpu.vector_store %arg27[%835, %c0_466], %834 {strides = array<i32>} : memref<18x8xf32, #tpu.memory_space<vmem>>, vector<1x8xf32>,
      scf.yield %794, %799, %824, %829, %834, %738, %755 : vector<1x32xf32>, vector<1x32xf32>, vector<1x32xf32>, vector<1x32xf32>, vector<1x8xf32>, vector<16x1xf32>, vector<1x1xf32>
    }
    %c18_i32_192 = arith.constant 18 : i32
    %cst_193 = arith.constant 0.000000e+00 : f32
    %490 = vector.broadcast %cst_193 : f32 to vector<34x32xf32>
    %c0_194 = arith.constant 0 : index
    %c0_195 = arith.constant 0 : index
    %491 = vector.load %arg28[%c0_194, %c0_195] : memref<34x32xf32, #tpu.memory_space<vmem>>, vector<34x32xf32>
    tpu.vector_store %arg28[%c0_194, %c0_195], %490 {strides = array<i32>} : memref<34x32xf32, #tpu.memory_space<vmem>>, vector<34x32xf32>,
    %c0_196 = arith.constant 0 : index
    %c0_197 = arith.constant 0 : index
    %492 = vector.load %arg27[%c0_196, %c0_197] : memref<18x8xf32, #tpu.memory_space<vmem>>, vector<18x8xf32>
    %c8_198 = arith.constant 8 : index
    %c0_199 = arith.constant 0 : index
    %493 = vector.load %arg28[%c8_198, %c0_199] : memref<34x32xf32, #tpu.memory_space<vmem>>, vector<18x8xf32>
    tpu.vector_store %arg28[%c8_198, %c0_199], %492 {strides = array<i32>} : memref<34x32xf32, #tpu.memory_space<vmem>>, vector<18x8xf32>,
    %cst_200 = arith.constant 0.000000e+00 : f32
    %494 = vector.broadcast %cst_200 : f32 to vector<18x32xf32>
    %c6_201 = arith.constant 6 : index
    %c0_202 = arith.constant 0 : index
    %495 = vector.load %arg28[%c6_201, %c0_202] : memref<34x32xf32, #tpu.memory_space<vmem>>, vector<18x32xf32>
    %c0_203 = arith.constant 0 : index
    %c0_204 = arith.constant 0 : index
    %c0_205 = arith.constant 0 : index
    %c0_206 = arith.constant 0 : index
    %496 = vector.load %arg25[%c0_203, %c0_204, %c0_205, %c0_206] : memref<5x5x32x32xf32, #tpu.memory_space<vmem>>, vector<1x1x32x32xf32>
    %497 = vector.shape_cast %496 : vector<1x1x32x32xf32> to vector<32x32xf32>
    %cst_207 = arith.constant dense<0.000000e+00> : vector<18x32xf32>
    %498 = tpu.matmul %495, %497, %cst_207 {dimension_numbers = #tpu.dot_dimension_numbers<[1], [0], [0], [1], [0, 0, 1, 1], [], []>} : vector<18x32xf32>, vector<32x32xf32>, vector<18x32xf32> -> vector<18x32xf32>
    %499 = arith.addf %494, %498 : vector<18x32xf32>
    %c7_208 = arith.constant 7 : index
    %c0_209 = arith.constant 0 : index
    %500 = vector.load %arg28[%c7_208, %c0_209] : memref<34x32xf32, #tpu.memory_space<vmem>>, vector<18x32xf32>
    %c0_210 = arith.constant 0 : index
    %c1_211 = arith.constant 1 : index
    %c0_212 = arith.constant 0 : index
    %c0_213 = arith.constant 0 : index
    %501 = vector.load %arg25[%c0_210, %c1_211, %c0_212, %c0_213] : memref<5x5x32x32xf32, #tpu.memory_space<vmem>>, vector<1x1x32x32xf32>
    %502 = vector.shape_cast %501 : vector<1x1x32x32xf32> to vector<32x32xf32>
    %cst_214 = arith.constant dense<0.000000e+00> : vector<18x32xf32>
    %503 = tpu.matmul %500, %502, %cst_214 {dimension_numbers = #tpu.dot_dimension_numbers<[1], [0], [0], [1], [0, 0, 1, 1], [], []>} : vector<18x32xf32>, vector<32x32xf32>, vector<18x32xf32> -> vector<18x32xf32>
    %504 = arith.addf %499, %503 : vector<18x32xf32>
    %c8_215 = arith.constant 8 : index
    %c0_216 = arith.constant 0 : index
    %505 = vector.load %arg28[%c8_215, %c0_216] : memref<34x32xf32, #tpu.memory_space<vmem>>, vector<18x32xf32>
    %c0_217 = arith.constant 0 : index
    %c2_218 = arith.constant 2 : index
    %c0_219 = arith.constant 0 : index
    %c0_220 = arith.constant 0 : index
    %506 = vector.load %arg25[%c0_217, %c2_218, %c0_219, %c0_220] : memref<5x5x32x32xf32, #tpu.memory_space<vmem>>, vector<1x1x32x32xf32>
    %507 = vector.shape_cast %506 : vector<1x1x32x32xf32> to vector<32x32xf32>
    %cst_221 = arith.constant dense<0.000000e+00> : vector<18x32xf32>
    %508 = tpu.matmul %505, %507, %cst_221 {dimension_numbers = #tpu.dot_dimension_numbers<[1], [0], [0], [1], [0, 0, 1, 1], [], []>} : vector<18x32xf32>, vector<32x32xf32>, vector<18x32xf32> -> vector<18x32xf32>
    %509 = arith.addf %504, %508 : vector<18x32xf32>
    %c9_222 = arith.constant 9 : index
    %c0_223 = arith.constant 0 : index
    %510 = vector.load %arg28[%c9_222, %c0_223] : memref<34x32xf32, #tpu.memory_space<vmem>>, vector<18x32xf32>
    %c0_224 = arith.constant 0 : index
    %c3_225 = arith.constant 3 : index
    %c0_226 = arith.constant 0 : index
    %c0_227 = arith.constant 0 : index
    %511 = vector.load %arg25[%c0_224, %c3_225, %c0_226, %c0_227] : memref<5x5x32x32xf32, #tpu.memory_space<vmem>>, vector<1x1x32x32xf32>
    %512 = vector.shape_cast %511 : vector<1x1x32x32xf32> to vector<32x32xf32>
    %cst_228 = arith.constant dense<0.000000e+00> : vector<18x32xf32>
    %513 = tpu.matmul %510, %512, %cst_228 {dimension_numbers = #tpu.dot_dimension_numbers<[1], [0], [0], [1], [0, 0, 1, 1], [], []>} : vector<18x32xf32>, vector<32x32xf32>, vector<18x32xf32> -> vector<18x32xf32>
    %514 = arith.addf %509, %513 : vector<18x32xf32>
    %c10_229 = arith.constant 10 : index
    %c0_230 = arith.constant 0 : index
    %515 = vector.load %arg28[%c10_229, %c0_230] : memref<34x32xf32, #tpu.memory_space<vmem>>, vector<18x32xf32>
    %c0_231 = arith.constant 0 : index
    %c4_232 = arith.constant 4 : index
    %c0_233 = arith.constant 0 : index
    %c0_234 = arith.constant 0 : index
    %516 = vector.load %arg25[%c0_231, %c4_232, %c0_233, %c0_234] : memref<5x5x32x32xf32, #tpu.memory_space<vmem>>, vector<1x1x32x32xf32>
    %517 = vector.shape_cast %516 : vector<1x1x32x32xf32> to vector<32x32xf32>
    %cst_235 = arith.constant dense<0.000000e+00> : vector<18x32xf32>
    %518 = tpu.matmul %515, %517, %cst_235 {dimension_numbers = #tpu.dot_dimension_numbers<[1], [0], [0], [1], [0, 0, 1, 1], [], []>} : vector<18x32xf32>, vector<32x32xf32>, vector<18x32xf32> -> vector<18x32xf32>
    %519 = arith.addf %514, %518 : vector<18x32xf32>
    %c0_236 = arith.constant 0 : index
    %c0_237 = arith.constant 0 : index
    %c0_238 = arith.constant 0 : index
    %520 = vector.load %arg26[%c0_236, %c0_237, %c0_238] : memref<5x1x32xf32, #tpu.memory_space<vmem>>, vector<1x1x32xf32>
    %521 = vector.shape_cast %520 : vector<1x1x32xf32> to vector<1x32xf32>
    %522 = vector.broadcast %521 : vector<1x32xf32> to vector<18x32xf32>
    %523 = arith.addf %519, %522 : vector<18x32xf32>
    %524 = math.tanh %523 : vector<18x32xf32>
    %c8_239 = arith.constant 8 : index
    %c0_240 = arith.constant 0 : index
    %525 = vector.load %arg28[%c8_239, %c0_240] : memref<34x32xf32, #tpu.memory_space<vmem>>, vector<18x32xf32>
    tpu.vector_store %arg28[%c8_239, %c0_240], %524 {strides = array<i32>} : memref<34x32xf32, #tpu.memory_space<vmem>>, vector<18x32xf32>,
    %cst_241 = arith.constant 0.000000e+00 : f32
    %526 = vector.broadcast %cst_241 : f32 to vector<18x32xf32>
    %c6_242 = arith.constant 6 : index
    %c0_243 = arith.constant 0 : index
    %527 = vector.load %arg28[%c6_242, %c0_243] : memref<34x32xf32, #tpu.memory_space<vmem>>, vector<18x32xf32>
    %c1_244 = arith.constant 1 : index
    %c0_245 = arith.constant 0 : index
    %c0_246 = arith.constant 0 : index
    %c0_247 = arith.constant 0 : index
    %528 = vector.load %arg25[%c1_244, %c0_245, %c0_246, %c0_247] : memref<5x5x32x32xf32, #tpu.memory_space<vmem>>, vector<1x1x32x32xf32>
    %529 = vector.shape_cast %528 : vector<1x1x32x32xf32> to vector<32x32xf32>
    %cst_248 = arith.constant dense<0.000000e+00> : vector<18x32xf32>
    %530 = tpu.matmul %527, %529, %cst_248 {dimension_numbers = #tpu.dot_dimension_numbers<[1], [0], [0], [1], [0, 0, 1, 1], [], []>} : vector<18x32xf32>, vector<32x32xf32>, vector<18x32xf32> -> vector<18x32xf32>
    %531 = arith.addf %526, %530 : vector<18x32xf32>
    %c7_249 = arith.constant 7 : index
    %c0_250 = arith.constant 0 : index
    %532 = vector.load %arg28[%c7_249, %c0_250] : memref<34x32xf32, #tpu.memory_space<vmem>>, vector<18x32xf32>
    %c1_251 = arith.constant 1 : index
    %c1_252 = arith.constant 1 : index
    %c0_253 = arith.constant 0 : index
    %c0_254 = arith.constant 0 : index
    %533 = vector.load %arg25[%c1_251, %c1_252, %c0_253, %c0_254] : memref<5x5x32x32xf32, #tpu.memory_space<vmem>>, vector<1x1x32x32xf32>
    %534 = vector.shape_cast %533 : vector<1x1x32x32xf32> to vector<32x32xf32>
    %cst_255 = arith.constant dense<0.000000e+00> : vector<18x32xf32>
    %535 = tpu.matmul %532, %534, %cst_255 {dimension_numbers = #tpu.dot_dimension_numbers<[1], [0], [0], [1], [0, 0, 1, 1], [], []>} : vector<18x32xf32>, vector<32x32xf32>, vector<18x32xf32> -> vector<18x32xf32>
    %536 = arith.addf %531, %535 : vector<18x32xf32>
    %c8_256 = arith.constant 8 : index
    %c0_257 = arith.constant 0 : index
    %537 = vector.load %arg28[%c8_256, %c0_257] : memref<34x32xf32, #tpu.memory_space<vmem>>, vector<18x32xf32>
    %c1_258 = arith.constant 1 : index
    %c2_259 = arith.constant 2 : index
    %c0_260 = arith.constant 0 : index
    %c0_261 = arith.constant 0 : index
    %538 = vector.load %arg25[%c1_258, %c2_259, %c0_260, %c0_261] : memref<5x5x32x32xf32, #tpu.memory_space<vmem>>, vector<1x1x32x32xf32>
    %539 = vector.shape_cast %538 : vector<1x1x32x32xf32> to vector<32x32xf32>
    %cst_262 = arith.constant dense<0.000000e+00> : vector<18x32xf32>
    %540 = tpu.matmul %537, %539, %cst_262 {dimension_numbers = #tpu.dot_dimension_numbers<[1], [0], [0], [1], [0, 0, 1, 1], [], []>} : vector<18x32xf32>, vector<32x32xf32>, vector<18x32xf32> -> vector<18x32xf32>
    %541 = arith.addf %536, %540 : vector<18x32xf32>
    %c9_263 = arith.constant 9 : index
    %c0_264 = arith.constant 0 : index
    %542 = vector.load %arg28[%c9_263, %c0_264] : memref<34x32xf32, #tpu.memory_space<vmem>>, vector<18x32xf32>
    %c1_265 = arith.constant 1 : index
    %c3_266 = arith.constant 3 : index
    %c0_267 = arith.constant 0 : index
    %c0_268 = arith.constant 0 : index
    %543 = vector.load %arg25[%c1_265, %c3_266, %c0_267, %c0_268] : memref<5x5x32x32xf32, #tpu.memory_space<vmem>>, vector<1x1x32x32xf32>
    %544 = vector.shape_cast %543 : vector<1x1x32x32xf32> to vector<32x32xf32>
    %cst_269 = arith.constant dense<0.000000e+00> : vector<18x32xf32>
    %545 = tpu.matmul %542, %544, %cst_269 {dimension_numbers = #tpu.dot_dimension_numbers<[1], [0], [0], [1], [0, 0, 1, 1], [], []>} : vector<18x32xf32>, vector<32x32xf32>, vector<18x32xf32> -> vector<18x32xf32>
    %546 = arith.addf %541, %545 : vector<18x32xf32>
    %c10_270 = arith.constant 10 : index
    %c0_271 = arith.constant 0 : index
    %547 = vector.load %arg28[%c10_270, %c0_271] : memref<34x32xf32, #tpu.memory_space<vmem>>, vector<18x32xf32>
    %c1_272 = arith.constant 1 : index
    %c4_273 = arith.constant 4 : index
    %c0_274 = arith.constant 0 : index
    %c0_275 = arith.constant 0 : index
    %548 = vector.load %arg25[%c1_272, %c4_273, %c0_274, %c0_275] : memref<5x5x32x32xf32, #tpu.memory_space<vmem>>, vector<1x1x32x32xf32>
    %549 = vector.shape_cast %548 : vector<1x1x32x32xf32> to vector<32x32xf32>
    %cst_276 = arith.constant dense<0.000000e+00> : vector<18x32xf32>
    %550 = tpu.matmul %547, %549, %cst_276 {dimension_numbers = #tpu.dot_dimension_numbers<[1], [0], [0], [1], [0, 0, 1, 1], [], []>} : vector<18x32xf32>, vector<32x32xf32>, vector<18x32xf32> -> vector<18x32xf32>
    %551 = arith.addf %546, %550 : vector<18x32xf32>
    %c1_277 = arith.constant 1 : index
    %c0_278 = arith.constant 0 : index
    %c0_279 = arith.constant 0 : index
    %552 = vector.load %arg26[%c1_277, %c0_278, %c0_279] : memref<5x1x32xf32, #tpu.memory_space<vmem>>, vector<1x1x32xf32>
    %553 = vector.shape_cast %552 : vector<1x1x32xf32> to vector<1x32xf32>
    %554 = vector.broadcast %553 : vector<1x32xf32> to vector<18x32xf32>
    %555 = arith.addf %551, %554 : vector<18x32xf32>
    %556 = math.tanh %555 : vector<18x32xf32>
    %c8_280 = arith.constant 8 : index
    %c0_281 = arith.constant 0 : index
    %557 = vector.load %arg28[%c8_280, %c0_281] : memref<34x32xf32, #tpu.memory_space<vmem>>, vector<18x32xf32>
    tpu.vector_store %arg28[%c8_280, %c0_281], %556 {strides = array<i32>} : memref<34x32xf32, #tpu.memory_space<vmem>>, vector<18x32xf32>,
    %cst_282 = arith.constant 0.000000e+00 : f32
    %558 = vector.broadcast %cst_282 : f32 to vector<18x32xf32>
    %c6_283 = arith.constant 6 : index
    %c0_284 = arith.constant 0 : index
    %559 = vector.load %arg28[%c6_283, %c0_284] : memref<34x32xf32, #tpu.memory_space<vmem>>, vector<18x32xf32>
    %c2_285 = arith.constant 2 : index
    %c0_286 = arith.constant 0 : index
    %c0_287 = arith.constant 0 : index
    %c0_288 = arith.constant 0 : index
    %560 = vector.load %arg25[%c2_285, %c0_286, %c0_287, %c0_288] : memref<5x5x32x32xf32, #tpu.memory_space<vmem>>, vector<1x1x32x32xf32>
    %561 = vector.shape_cast %560 : vector<1x1x32x32xf32> to vector<32x32xf32>
    %cst_289 = arith.constant dense<0.000000e+00> : vector<18x32xf32>
    %562 = tpu.matmul %559, %561, %cst_289 {dimension_numbers = #tpu.dot_dimension_numbers<[1], [0], [0], [1], [0, 0, 1, 1], [], []>} : vector<18x32xf32>, vector<32x32xf32>, vector<18x32xf32> -> vector<18x32xf32>
    %563 = arith.addf %558, %562 : vector<18x32xf32>
    %c7_290 = arith.constant 7 : index
    %c0_291 = arith.constant 0 : index
    %564 = vector.load %arg28[%c7_290, %c0_291] : memref<34x32xf32, #tpu.memory_space<vmem>>, vector<18x32xf32>
    %c2_292 = arith.constant 2 : index
    %c1_293 = arith.constant 1 : index
    %c0_294 = arith.constant 0 : index
    %c0_295 = arith.constant 0 : index
    %565 = vector.load %arg25[%c2_292, %c1_293, %c0_294, %c0_295] : memref<5x5x32x32xf32, #tpu.memory_space<vmem>>, vector<1x1x32x32xf32>
    %566 = vector.shape_cast %565 : vector<1x1x32x32xf32> to vector<32x32xf32>
    %cst_296 = arith.constant dense<0.000000e+00> : vector<18x32xf32>
    %567 = tpu.matmul %564, %566, %cst_296 {dimension_numbers = #tpu.dot_dimension_numbers<[1], [0], [0], [1], [0, 0, 1, 1], [], []>} : vector<18x32xf32>, vector<32x32xf32>, vector<18x32xf32> -> vector<18x32xf32>
    %568 = arith.addf %563, %567 : vector<18x32xf32>
    %c8_297 = arith.constant 8 : index
    %c0_298 = arith.constant 0 : index
    %569 = vector.load %arg28[%c8_297, %c0_298] : memref<34x32xf32, #tpu.memory_space<vmem>>, vector<18x32xf32>
    %c2_299 = arith.constant 2 : index
    %c2_300 = arith.constant 2 : index
    %c0_301 = arith.constant 0 : index
    %c0_302 = arith.constant 0 : index
    %570 = vector.load %arg25[%c2_299, %c2_300, %c0_301, %c0_302] : memref<5x5x32x32xf32, #tpu.memory_space<vmem>>, vector<1x1x32x32xf32>
    %571 = vector.shape_cast %570 : vector<1x1x32x32xf32> to vector<32x32xf32>
    %cst_303 = arith.constant dense<0.000000e+00> : vector<18x32xf32>
    %572 = tpu.matmul %569, %571, %cst_303 {dimension_numbers = #tpu.dot_dimension_numbers<[1], [0], [0], [1], [0, 0, 1, 1], [], []>} : vector<18x32xf32>, vector<32x32xf32>, vector<18x32xf32> -> vector<18x32xf32>
    %573 = arith.addf %568, %572 : vector<18x32xf32>
    %c9_304 = arith.constant 9 : index
    %c0_305 = arith.constant 0 : index
    %574 = vector.load %arg28[%c9_304, %c0_305] : memref<34x32xf32, #tpu.memory_space<vmem>>, vector<18x32xf32>
    %c2_306 = arith.constant 2 : index
    %c3_307 = arith.constant 3 : index
    %c0_308 = arith.constant 0 : index
    %c0_309 = arith.constant 0 : index
    %575 = vector.load %arg25[%c2_306, %c3_307, %c0_308, %c0_309] : memref<5x5x32x32xf32, #tpu.memory_space<vmem>>, vector<1x1x32x32xf32>
    %576 = vector.shape_cast %575 : vector<1x1x32x32xf32> to vector<32x32xf32>
    %cst_310 = arith.constant dense<0.000000e+00> : vector<18x32xf32>
    %577 = tpu.matmul %574, %576, %cst_310 {dimension_numbers = #tpu.dot_dimension_numbers<[1], [0], [0], [1], [0, 0, 1, 1], [], []>} : vector<18x32xf32>, vector<32x32xf32>, vector<18x32xf32> -> vector<18x32xf32>
    %578 = arith.addf %573, %577 : vector<18x32xf32>
    %c10_311 = arith.constant 10 : index
    %c0_312 = arith.constant 0 : index
    %579 = vector.load %arg28[%c10_311, %c0_312] : memref<34x32xf32, #tpu.memory_space<vmem>>, vector<18x32xf32>
    %c2_313 = arith.constant 2 : index
    %c4_314 = arith.constant 4 : index
    %c0_315 = arith.constant 0 : index
    %c0_316 = arith.constant 0 : index
    %580 = vector.load %arg25[%c2_313, %c4_314, %c0_315, %c0_316] : memref<5x5x32x32xf32, #tpu.memory_space<vmem>>, vector<1x1x32x32xf32>
    %581 = vector.shape_cast %580 : vector<1x1x32x32xf32> to vector<32x32xf32>
    %cst_317 = arith.constant dense<0.000000e+00> : vector<18x32xf32>
    %582 = tpu.matmul %579, %581, %cst_317 {dimension_numbers = #tpu.dot_dimension_numbers<[1], [0], [0], [1], [0, 0, 1, 1], [], []>} : vector<18x32xf32>, vector<32x32xf32>, vector<18x32xf32> -> vector<18x32xf32>
    %583 = arith.addf %578, %582 : vector<18x32xf32>
    %c2_318 = arith.constant 2 : index
    %c0_319 = arith.constant 0 : index
    %c0_320 = arith.constant 0 : index
    %584 = vector.load %arg26[%c2_318, %c0_319, %c0_320] : memref<5x1x32xf32, #tpu.memory_space<vmem>>, vector<1x1x32xf32>
    %585 = vector.shape_cast %584 : vector<1x1x32xf32> to vector<1x32xf32>
    %586 = vector.broadcast %585 : vector<1x32xf32> to vector<18x32xf32>
    %587 = arith.addf %583, %586 : vector<18x32xf32>
    %588 = math.tanh %587 : vector<18x32xf32>
    %c8_321 = arith.constant 8 : index
    %c0_322 = arith.constant 0 : index
    %589 = vector.load %arg28[%c8_321, %c0_322] : memref<34x32xf32, #tpu.memory_space<vmem>>, vector<18x32xf32>
    tpu.vector_store %arg28[%c8_321, %c0_322], %588 {strides = array<i32>} : memref<34x32xf32, #tpu.memory_space<vmem>>, vector<18x32xf32>,
    %cst_323 = arith.constant 0.000000e+00 : f32
    %590 = vector.broadcast %cst_323 : f32 to vector<18x32xf32>
    %c6_324 = arith.constant 6 : index
    %c0_325 = arith.constant 0 : index
    %591 = vector.load %arg28[%c6_324, %c0_325] : memref<34x32xf32, #tpu.memory_space<vmem>>, vector<18x32xf32>
    %c3_326 = arith.constant 3 : index
    %c0_327 = arith.constant 0 : index
    %c0_328 = arith.constant 0 : index
    %c0_329 = arith.constant 0 : index
    %592 = vector.load %arg25[%c3_326, %c0_327, %c0_328, %c0_329] : memref<5x5x32x32xf32, #tpu.memory_space<vmem>>, vector<1x1x32x32xf32>
    %593 = vector.shape_cast %592 : vector<1x1x32x32xf32> to vector<32x32xf32>
    %cst_330 = arith.constant dense<0.000000e+00> : vector<18x32xf32>
    %594 = tpu.matmul %591, %593, %cst_330 {dimension_numbers = #tpu.dot_dimension_numbers<[1], [0], [0], [1], [0, 0, 1, 1], [], []>} : vector<18x32xf32>, vector<32x32xf32>, vector<18x32xf32> -> vector<18x32xf32>
    %595 = arith.addf %590, %594 : vector<18x32xf32>
    %c7_331 = arith.constant 7 : index
    %c0_332 = arith.constant 0 : index
    %596 = vector.load %arg28[%c7_331, %c0_332] : memref<34x32xf32, #tpu.memory_space<vmem>>, vector<18x32xf32>
    %c3_333 = arith.constant 3 : index
    %c1_334 = arith.constant 1 : index
    %c0_335 = arith.constant 0 : index
    %c0_336 = arith.constant 0 : index
    %597 = vector.load %arg25[%c3_333, %c1_334, %c0_335, %c0_336] : memref<5x5x32x32xf32, #tpu.memory_space<vmem>>, vector<1x1x32x32xf32>
    %598 = vector.shape_cast %597 : vector<1x1x32x32xf32> to vector<32x32xf32>
    %cst_337 = arith.constant dense<0.000000e+00> : vector<18x32xf32>
    %599 = tpu.matmul %596, %598, %cst_337 {dimension_numbers = #tpu.dot_dimension_numbers<[1], [0], [0], [1], [0, 0, 1, 1], [], []>} : vector<18x32xf32>, vector<32x32xf32>, vector<18x32xf32> -> vector<18x32xf32>
    %600 = arith.addf %595, %599 : vector<18x32xf32>
    %c8_338 = arith.constant 8 : index
    %c0_339 = arith.constant 0 : index
    %601 = vector.load %arg28[%c8_338, %c0_339] : memref<34x32xf32, #tpu.memory_space<vmem>>, vector<18x32xf32>
    %c3_340 = arith.constant 3 : index
    %c2_341 = arith.constant 2 : index
    %c0_342 = arith.constant 0 : index
    %c0_343 = arith.constant 0 : index
    %602 = vector.load %arg25[%c3_340, %c2_341, %c0_342, %c0_343] : memref<5x5x32x32xf32, #tpu.memory_space<vmem>>, vector<1x1x32x32xf32>
    %603 = vector.shape_cast %602 : vector<1x1x32x32xf32> to vector<32x32xf32>
    %cst_344 = arith.constant dense<0.000000e+00> : vector<18x32xf32>
    %604 = tpu.matmul %601, %603, %cst_344 {dimension_numbers = #tpu.dot_dimension_numbers<[1], [0], [0], [1], [0, 0, 1, 1], [], []>} : vector<18x32xf32>, vector<32x32xf32>, vector<18x32xf32> -> vector<18x32xf32>
    %605 = arith.addf %600, %604 : vector<18x32xf32>
    %c9_345 = arith.constant 9 : index
    %c0_346 = arith.constant 0 : index
    %606 = vector.load %arg28[%c9_345, %c0_346] : memref<34x32xf32, #tpu.memory_space<vmem>>, vector<18x32xf32>
    %c3_347 = arith.constant 3 : index
    %c3_348 = arith.constant 3 : index
    %c0_349 = arith.constant 0 : index
    %c0_350 = arith.constant 0 : index
    %607 = vector.load %arg25[%c3_347, %c3_348, %c0_349, %c0_350] : memref<5x5x32x32xf32, #tpu.memory_space<vmem>>, vector<1x1x32x32xf32>
    %608 = vector.shape_cast %607 : vector<1x1x32x32xf32> to vector<32x32xf32>
    %cst_351 = arith.constant dense<0.000000e+00> : vector<18x32xf32>
    %609 = tpu.matmul %606, %608, %cst_351 {dimension_numbers = #tpu.dot_dimension_numbers<[1], [0], [0], [1], [0, 0, 1, 1], [], []>} : vector<18x32xf32>, vector<32x32xf32>, vector<18x32xf32> -> vector<18x32xf32>
    %610 = arith.addf %605, %609 : vector<18x32xf32>
    %c10_352 = arith.constant 10 : index
    %c0_353 = arith.constant 0 : index
    %611 = vector.load %arg28[%c10_352, %c0_353] : memref<34x32xf32, #tpu.memory_space<vmem>>, vector<18x32xf32>
    %c3_354 = arith.constant 3 : index
    %c4_355 = arith.constant 4 : index
    %c0_356 = arith.constant 0 : index
    %c0_357 = arith.constant 0 : index
    %612 = vector.load %arg25[%c3_354, %c4_355, %c0_356, %c0_357] : memref<5x5x32x32xf32, #tpu.memory_space<vmem>>, vector<1x1x32x32xf32>
    %613 = vector.shape_cast %612 : vector<1x1x32x32xf32> to vector<32x32xf32>
    %cst_358 = arith.constant dense<0.000000e+00> : vector<18x32xf32>
    %614 = tpu.matmul %611, %613, %cst_358 {dimension_numbers = #tpu.dot_dimension_numbers<[1], [0], [0], [1], [0, 0, 1, 1], [], []>} : vector<18x32xf32>, vector<32x32xf32>, vector<18x32xf32> -> vector<18x32xf32>
    %615 = arith.addf %610, %614 : vector<18x32xf32>
    %c3_359 = arith.constant 3 : index
    %c0_360 = arith.constant 0 : index
    %c0_361 = arith.constant 0 : index
    %616 = vector.load %arg26[%c3_359, %c0_360, %c0_361] : memref<5x1x32xf32, #tpu.memory_space<vmem>>, vector<1x1x32xf32>
    %617 = vector.shape_cast %616 : vector<1x1x32xf32> to vector<1x32xf32>
    %618 = vector.broadcast %617 : vector<1x32xf32> to vector<18x32xf32>
    %619 = arith.addf %615, %618 : vector<18x32xf32>
    %620 = math.tanh %619 : vector<18x32xf32>
    %c8_362 = arith.constant 8 : index
    %c0_363 = arith.constant 0 : index
    %621 = vector.load %arg28[%c8_362, %c0_363] : memref<34x32xf32, #tpu.memory_space<vmem>>, vector<18x32xf32>
    tpu.vector_store %arg28[%c8_362, %c0_363], %620 {strides = array<i32>} : memref<34x32xf32, #tpu.memory_space<vmem>>, vector<18x32xf32>,
    %cst_364 = arith.constant 0.000000e+00 : f32
    %622 = vector.broadcast %cst_364 : f32 to vector<18x32xf32>
    %c6_365 = arith.constant 6 : index
    %c0_366 = arith.constant 0 : index
    %623 = vector.load %arg28[%c6_365, %c0_366] : memref<34x32xf32, #tpu.memory_space<vmem>>, vector<18x32xf32>
    %c4_367 = arith.constant 4 : index
    %c0_368 = arith.constant 0 : index
    %c0_369 = arith.constant 0 : index
    %c0_370 = arith.constant 0 : index
    %624 = vector.load %arg25[%c4_367, %c0_368, %c0_369, %c0_370] : memref<5x5x32x32xf32, #tpu.memory_space<vmem>>, vector<1x1x32x32xf32>
    %625 = vector.shape_cast %624 : vector<1x1x32x32xf32> to vector<32x32xf32>
    %cst_371 = arith.constant dense<0.000000e+00> : vector<18x32xf32>
    %626 = tpu.matmul %623, %625, %cst_371 {dimension_numbers = #tpu.dot_dimension_numbers<[1], [0], [0], [1], [0, 0, 1, 1], [], []>} : vector<18x32xf32>, vector<32x32xf32>, vector<18x32xf32> -> vector<18x32xf32>
    %627 = arith.addf %622, %626 : vector<18x32xf32>
    %c7_372 = arith.constant 7 : index
    %c0_373 = arith.constant 0 : index
    %628 = vector.load %arg28[%c7_372, %c0_373] : memref<34x32xf32, #tpu.memory_space<vmem>>, vector<18x32xf32>
    %c4_374 = arith.constant 4 : index
    %c1_375 = arith.constant 1 : index
    %c0_376 = arith.constant 0 : index
    %c0_377 = arith.constant 0 : index
    %629 = vector.load %arg25[%c4_374, %c1_375, %c0_376, %c0_377] : memref<5x5x32x32xf32, #tpu.memory_space<vmem>>, vector<1x1x32x32xf32>
    %630 = vector.shape_cast %629 : vector<1x1x32x32xf32> to vector<32x32xf32>
    %cst_378 = arith.constant dense<0.000000e+00> : vector<18x32xf32>
    %631 = tpu.matmul %628, %630, %cst_378 {dimension_numbers = #tpu.dot_dimension_numbers<[1], [0], [0], [1], [0, 0, 1, 1], [], []>} : vector<18x32xf32>, vector<32x32xf32>, vector<18x32xf32> -> vector<18x32xf32>
    %632 = arith.addf %627, %631 : vector<18x32xf32>
    %c8_379 = arith.constant 8 : index
    %c0_380 = arith.constant 0 : index
    %633 = vector.load %arg28[%c8_379, %c0_380] : memref<34x32xf32, #tpu.memory_space<vmem>>, vector<18x32xf32>
    %c4_381 = arith.constant 4 : index
    %c2_382 = arith.constant 2 : index
    %c0_383 = arith.constant 0 : index
    %c0_384 = arith.constant 0 : index
    %634 = vector.load %arg25[%c4_381, %c2_382, %c0_383, %c0_384] : memref<5x5x32x32xf32, #tpu.memory_space<vmem>>, vector<1x1x32x32xf32>
    %635 = vector.shape_cast %634 : vector<1x1x32x32xf32> to vector<32x32xf32>
    %cst_385 = arith.constant dense<0.000000e+00> : vector<18x32xf32>
    %636 = tpu.matmul %633, %635, %cst_385 {dimension_numbers = #tpu.dot_dimension_numbers<[1], [0], [0], [1], [0, 0, 1, 1], [], []>} : vector<18x32xf32>, vector<32x32xf32>, vector<18x32xf32> -> vector<18x32xf32>
    %637 = arith.addf %632, %636 : vector<18x32xf32>
    %c9_386 = arith.constant 9 : index
    %c0_387 = arith.constant 0 : index
    %638 = vector.load %arg28[%c9_386, %c0_387] : memref<34x32xf32, #tpu.memory_space<vmem>>, vector<18x32xf32>
    %c4_388 = arith.constant 4 : index
    %c3_389 = arith.constant 3 : index
    %c0_390 = arith.constant 0 : index
    %c0_391 = arith.constant 0 : index
    %639 = vector.load %arg25[%c4_388, %c3_389, %c0_390, %c0_391] : memref<5x5x32x32xf32, #tpu.memory_space<vmem>>, vector<1x1x32x32xf32>
    %640 = vector.shape_cast %639 : vector<1x1x32x32xf32> to vector<32x32xf32>
    %cst_392 = arith.constant dense<0.000000e+00> : vector<18x32xf32>
    %641 = tpu.matmul %638, %640, %cst_392 {dimension_numbers = #tpu.dot_dimension_numbers<[1], [0], [0], [1], [0, 0, 1, 1], [], []>} : vector<18x32xf32>, vector<32x32xf32>, vector<18x32xf32> -> vector<18x32xf32>
    %642 = arith.addf %637, %641 : vector<18x32xf32>
    %c10_393 = arith.constant 10 : index
    %c0_394 = arith.constant 0 : index
    %643 = vector.load %arg28[%c10_393, %c0_394] : memref<34x32xf32, #tpu.memory_space<vmem>>, vector<18x32xf32>
    %c4_395 = arith.constant 4 : index
    %c4_396 = arith.constant 4 : index
    %c0_397 = arith.constant 0 : index
    %c0_398 = arith.constant 0 : index
    %644 = vector.load %arg25[%c4_395, %c4_396, %c0_397, %c0_398] : memref<5x5x32x32xf32, #tpu.memory_space<vmem>>, vector<1x1x32x32xf32>
    %645 = vector.shape_cast %644 : vector<1x1x32x32xf32> to vector<32x32xf32>
    %cst_399 = arith.constant dense<0.000000e+00> : vector<18x32xf32>
    %646 = tpu.matmul %643, %645, %cst_399 {dimension_numbers = #tpu.dot_dimension_numbers<[1], [0], [0], [1], [0, 0, 1, 1], [], []>} : vector<18x32xf32>, vector<32x32xf32>, vector<18x32xf32> -> vector<18x32xf32>
    %647 = arith.addf %642, %646 : vector<18x32xf32>
    %c4_400 = arith.constant 4 : index
    %c0_401 = arith.constant 0 : index
    %c0_402 = arith.constant 0 : index
    %648 = vector.load %arg26[%c4_400, %c0_401, %c0_402] : memref<5x1x32xf32, #tpu.memory_space<vmem>>, vector<1x1x32xf32>
    %649 = vector.shape_cast %648 : vector<1x1x32xf32> to vector<1x32xf32>
    %650 = vector.broadcast %649 : vector<1x32xf32> to vector<18x32xf32>
    %651 = arith.addf %647, %650 : vector<18x32xf32>
    %652 = vector.extract_strided_slice %651 {offsets = [0, 0], sizes = [18, 8], strides = [1, 1]} : vector<18x32xf32> to vector<18x8xf32>
    %653 = arith.addf %492, %652 : vector<18x8xf32>
    %c0_403 = arith.constant 0 : index
    %c0_404 = arith.constant 0 : index
    %654 = vector.load %arg27[%c0_403, %c0_404] : memref<18x8xf32, #tpu.memory_space<vmem>>, vector<18x8xf32>
    tpu.vector_store %arg27[%c0_403, %c0_404], %653 {strides = array<i32>} : memref<18x8xf32, #tpu.memory_space<vmem>>, vector<18x8xf32>,
    return
  }
}

</mosaic_0001>

<llo_original>
// kernel: tacotron2_forward.1
$region0: #{tacotron2_forward.1}
  #allocation0 [shape = 'u32[]', space=smem, size = 0x4, offset = 0x4, fixed_abs, tag = 'smem constant byte address 0x4 - core index']
  #allocation1 [shape = 'u32[144,128]{1,0:T(1,128)}', space=vmem, size = 0x12000, scoped, tag = 'internal scratch']
  #allocation2 [shape = 'f32[34,32]{1,0:T(8,128)}', space=vmem, size = 0x5000, scoped, tag = 'scratch operand']
  #allocation3 [shape = 'f32[32,1]{1,0:T(8,128)}', space=vmem, size = 0x4000, scoped, tag = 'scratch operand']
  #allocation4 [shape = 'f32[1,1]{1,0:T(1,128)S(1)}', space=vmem, size = 0x200, scoped, tag = 'scoped memory for tacotron2_forward.1']
  #allocation5 [shape = 'f32[1,1]{1,0:T(1,128)S(1)}', space=vmem, size = 0x200, scoped, tag = 'scoped memory for tacotron2_forward.1']
  %s0 = inlined_call_operand.vmem [shape: f32[9,32], index: 0, kind: input, shape index: {}]
  %s1 = inlined_call_operand.hbm [shape: f32[3,5,32,32], index: 1, kind: input, shape index: {}]
  %s2 = inlined_call_operand.vmem [shape: f32[3,1,32], index: 2, kind: input, shape index: {}]
  %s3 = inlined_call_operand.vmem [shape: f32[32,128], index: 3, kind: input, shape index: {}]
  %s4 = inlined_call_operand.vmem [shape: f32[1,128], index: 4, kind: input, shape index: {}]
  %s5 = inlined_call_operand.vmem [shape: f32[32,128], index: 5, kind: input, shape index: {}]
  %s6 = inlined_call_operand.vmem [shape: f32[32,32], index: 6, kind: input, shape index: {}]
  %s7 = inlined_call_operand.vmem [shape: f32[1,32], index: 7, kind: input, shape index: {}]
  %s8 = inlined_call_operand.vmem [shape: f32[7,32], index: 8, kind: input, shape index: {}]
  %s9 = inlined_call_operand.vmem [shape: f32[32,1], index: 9, kind: input, shape index: {}]
  %s10 = inlined_call_operand.<no memory space> [shape: f32[1,1], index: 10, kind: input, shape index: {}]
  %s11 = inlined_call_operand.vmem [shape: f32[32,161], index: 11, kind: input, shape index: {}]
  %s12 = inlined_call_operand.vmem [shape: f32[8,17], index: 12, kind: input, shape index: {}]
  %s13 = inlined_call_operand.vmem [shape: f32[1,16], index: 13, kind: input, shape index: {}]
  %s14 = inlined_call_operand.vmem [shape: f32[16,16], index: 14, kind: input, shape index: {}]
  %s15 = inlined_call_operand.vmem [shape: f32[1,16], index: 15, kind: input, shape index: {}]
  %s16 = inlined_call_operand.vmem [shape: f32[32,138], index: 16, kind: input, shape index: {}]
  %s17 = inlined_call_operand.vmem [shape: f32[16,128], index: 17, kind: input, shape index: {}]
  %s18 = inlined_call_operand.vmem [shape: f32[1,128], index: 18, kind: input, shape index: {}]
  %s19 = inlined_call_operand.vmem [shape: f32[64,128], index: 19, kind: input, shape index: {}]
  %s20 = inlined_call_operand.vmem [shape: f32[1,128], index: 20, kind: input, shape index: {}]
  %s21 = inlined_call_operand.vmem [shape: f32[32,9], index: 21, kind: input, shape index: {}]
  %s22 = inlined_call_operand.vmem [shape: f32[1,9], index: 22, kind: input, shape index: {}]
  %s23 = inlined_call_operand.<no memory space> [shape: f32[1,1], index: 23, kind: input, shape index: {}]
  %s24 = inlined_call_operand.vmem [shape: f32[18,32], index: 24, kind: input, shape index: {}]
  %s25 = inlined_call_operand.hbm [shape: f32[5,5,32,32], index: 25, kind: input, shape index: {}]
  %s26 = inlined_call_operand.vmem [shape: f32[5,1,32], index: 26, kind: input, shape index: {}]
  %s27 = inlined_call_operand.vmem [shape: f32[18,8], index: 27, kind: output, shape index: {}]
  %s28 = sld [smem:[#allocation0]]
  $region133: #{tacotron2_forward.1} parent=0
    _
  %s30 = ssub.s32 1, %s28
  %s31 = scalar_select 0, %s30, %s28
  %v32 = vstv %s10
  %33 = vst [vmem:[#allocation4] sm:$0x1] %v32
  %v34 = vstv %s23
  %35 = vst [vmem:[#allocation5] sm:$0x1] %v34
  $region1: #{tacotron2_forward.1} parent=0
    #allocation6 [shape = 'u8[245760]{0}', space=vmem, size = 0x3c000, scoped, tag = 'input window, operand 1, single buffered']
    #allocation7 [shape = 's32[1]{0}', space=sflag, size = 0x4, scoped, tag = 'scoped memory for tacotron2_forward.1']
    #allocation8 [shape = 'u8[409600]{0}', space=vmem, size = 0x64000, scoped, tag = 'input window, operand 25, single buffered']
    #allocation9 [shape = 's32[1]{0}', space=sflag, size = 0x4, scoped, tag = 'scoped memory for tacotron2_forward.1']
    %36 = vsyncpa [#allocation7], 0
    %37 = vsyncpa [#allocation9], 0
    // Predicated region
    $region2: #{tacotron2_forward.1} parent=1 // pred_check
      _
    $region3: #{tacotron2_forward.1} parent=1 // pred_check_branch
      %39 = sbr.rel (0) target = $region5
    $region4: #{tacotron2_forward.1} parent=1 // pred_region
      _
    $region5: #{tacotron2_forward.1} parent=1 // pred_fallthru
      _
    // Predicated region
    $region6: #{tacotron2_forward.1} parent=1 // pred_check
      _
    $region7: #{tacotron2_forward.1} parent=1 // pred_check_branch
      %41 = sbr.rel (0) target = $region9
    $region8: #{tacotron2_forward.1} parent=1 // pred_region
      %s43 = ssub.s32 7680, 7680
      %44 = vsyncadd [#allocation7], %s43
      %s45 = sshll.u32 [#allocation6], 4
      %s46 = int_to_ptr.vmem [resolvable:$true] %s45
      %51 = dma.hbm_to_vmem [thread:$0]  %s1, 7680, %s46, [#allocation7], 128, 128, 8
    $region9: #{tacotron2_forward.1} parent=1 // pred_fallthru
      _
    // Predicated region
    $region10: #{tacotron2_forward.1} parent=1 // pred_check
      _
    $region11: #{tacotron2_forward.1} parent=1 // pred_check_branch
      %53 = sbr.rel (0) target = $region13
    $region12: #{tacotron2_forward.1} parent=1 // pred_region
      _
    $region13: #{tacotron2_forward.1} parent=1 // pred_fallthru
      _
    // Predicated region
    $region14: #{tacotron2_forward.1} parent=1 // pred_check
      _
    $region15: #{tacotron2_forward.1} parent=1 // pred_check_branch
      %55 = sbr.rel (0) target = $region17
    $region16: #{tacotron2_forward.1} parent=1 // pred_region
      _
    $region17: #{tacotron2_forward.1} parent=1 // pred_fallthru
      _
    // Predicated region
    $region18: #{tacotron2_forward.1} parent=1 // pred_check
      _
    $region19: #{tacotron2_forward.1} parent=1 // pred_check_branch
      %57 = sbr.rel (0) target = $region21
    $region20: #{tacotron2_forward.1} parent=1 // pred_region
      _
    $region21: #{tacotron2_forward.1} parent=1 // pred_fallthru
      _
    // Predicated region
    $region22: #{tacotron2_forward.1} parent=1 // pred_check
      _
    $region23: #{tacotron2_forward.1} parent=1 // pred_check_branch
      %59 = sbr.rel (0) target = $region25
    $region24: #{tacotron2_forward.1} parent=1 // pred_region
      _
    $region25: #{tacotron2_forward.1} parent=1 // pred_fallthru
      _
    // Predicated region
    $region26: #{tacotron2_forward.1} parent=1 // pred_check
      _
    $region27: #{tacotron2_forward.1} parent=1 // pred_check_branch
      %61 = sbr.rel (0) target = $region29
    $region28: #{tacotron2_forward.1} parent=1 // pred_region
      _
    $region29: #{tacotron2_forward.1} parent=1 // pred_fallthru
      _
    // Predicated region
    $region30: #{tacotron2_forward.1} parent=1 // pred_check
      _
    $region31: #{tacotron2_forward.1} parent=1 // pred_check_branch
      %63 = sbr.rel (0) target = $region33
    $region32: #{tacotron2_forward.1} parent=1 // pred_region
      _
    $region33: #{tacotron2_forward.1} parent=1 // pred_fallthru
      _
    // Predicated region
    $region34: #{tacotron2_forward.1} parent=1 // pred_check
      _
    $region35: #{tacotron2_forward.1} parent=1 // pred_check_branch
      %65 = sbr.rel (0) target = $region37
    $region36: #{tacotron2_forward.1} parent=1 // pred_region
      _
    $region37: #{tacotron2_forward.1} parent=1 // pred_fallthru
      _
    // Predicated region
    $region38: #{tacotron2_forward.1} parent=1 // pred_check
      _
    $region39: #{tacotron2_forward.1} parent=1 // pred_check_branch
      %67 = sbr.rel (0) target = $region41
    $region40: #{tacotron2_forward.1} parent=1 // pred_region
      _
    $region41: #{tacotron2_forward.1} parent=1 // pred_fallthru
      _
    // Predicated region
    $region42: #{tacotron2_forward.1} parent=1 // pred_check
      _
    $region43: #{tacotron2_forward.1} parent=1 // pred_check_branch
      %69 = sbr.rel (0) target = $region45
    $region44: #{tacotron2_forward.1} parent=1 // pred_region
      _
    $region45: #{tacotron2_forward.1} parent=1 // pred_fallthru
      _
    // Predicated region
    $region46: #{tacotron2_forward.1} parent=1 // pred_check
      _
    $region47: #{tacotron2_forward.1} parent=1 // pred_check_branch
      %71 = sbr.rel (0) target = $region49
    $region48: #{tacotron2_forward.1} parent=1 // pred_region
      _
    $region49: #{tacotron2_forward.1} parent=1 // pred_fallthru
      _
    // Predicated region
    $region50: #{tacotron2_forward.1} parent=1 // pred_check
      _
    $region51: #{tacotron2_forward.1} parent=1 // pred_check_branch
      %73 = sbr.rel (0) target = $region53
    $region52: #{tacotron2_forward.1} parent=1 // pred_region
      _
    $region53: #{tacotron2_forward.1} parent=1 // pred_fallthru
      _
    // Predicated region
    $region54: #{tacotron2_forward.1} parent=1 // pred_check
      _
    $region55: #{tacotron2_forward.1} parent=1 // pred_check_branch
      %75 = sbr.rel (0) target = $region57
    $region56: #{tacotron2_forward.1} parent=1 // pred_region
      _
    $region57: #{tacotron2_forward.1} parent=1 // pred_fallthru
      _
    // Predicated region
    $region58: #{tacotron2_forward.1} parent=1 // pred_check
      _
    $region59: #{tacotron2_forward.1} parent=1 // pred_check_branch
      %77 = sbr.rel (0) target = $region61
    $region60: #{tacotron2_forward.1} parent=1 // pred_region
      _
    $region61: #{tacotron2_forward.1} parent=1 // pred_fallthru
      _
    // Predicated region
    $region62: #{tacotron2_forward.1} parent=1 // pred_check
      _
    $region63: #{tacotron2_forward.1} parent=1 // pred_check_branch
      %79 = sbr.rel (0) target = $region65
    $region64: #{tacotron2_forward.1} parent=1 // pred_region
      _
    $region65: #{tacotron2_forward.1} parent=1 // pred_fallthru
      _
    // Predicated region
    $region66: #{tacotron2_forward.1} parent=1 // pred_check
      _
    $region67: #{tacotron2_forward.1} parent=1 // pred_check_branch
      %81 = sbr.rel (0) target = $region69
    $region68: #{tacotron2_forward.1} parent=1 // pred_region
      _
    $region69: #{tacotron2_forward.1} parent=1 // pred_fallthru
      _
    // Predicated region
    $region70: #{tacotron2_forward.1} parent=1 // pred_check
      _
    $region71: #{tacotron2_forward.1} parent=1 // pred_check_branch
      %83 = sbr.rel (0) target = $region73
    $region72: #{tacotron2_forward.1} parent=1 // pred_region
      _
    $region73: #{tacotron2_forward.1} parent=1 // pred_fallthru
      _
    // Predicated region
    $region74: #{tacotron2_forward.1} parent=1 // pred_check
      _
    $region75: #{tacotron2_forward.1} parent=1 // pred_check_branch
      %85 = sbr.rel (0) target = $region77
    $region76: #{tacotron2_forward.1} parent=1 // pred_region
      _
    $region77: #{tacotron2_forward.1} parent=1 // pred_fallthru
      _
    // Predicated region
    $region78: #{tacotron2_forward.1} parent=1 // pred_check
      _
    $region79: #{tacotron2_forward.1} parent=1 // pred_check_branch
      %87 = sbr.rel (0) target = $region81
    $region80: #{tacotron2_forward.1} parent=1 // pred_region
      _
    $region81: #{tacotron2_forward.1} parent=1 // pred_fallthru
      _
    // Predicated region
    $region82: #{tacotron2_forward.1} parent=1 // pred_check
      _
    $region83: #{tacotron2_forward.1} parent=1 // pred_check_branch
      %89 = sbr.rel (0) target = $region85
    $region84: #{tacotron2_forward.1} parent=1 // pred_region
      _
    $region85: #{tacotron2_forward.1} parent=1 // pred_fallthru
      _
    // Predicated region
    $region86: #{tacotron2_forward.1} parent=1 // pred_check
      _
    $region87: #{tacotron2_forward.1} parent=1 // pred_check_branch
      %91 = sbr.rel (0) target = $region89
    $region88: #{tacotron2_forward.1} parent=1 // pred_region
      _
    $region89: #{tacotron2_forward.1} parent=1 // pred_fallthru
      _
    // Predicated region
    $region90: #{tacotron2_forward.1} parent=1 // pred_check
      _
    $region91: #{tacotron2_forward.1} parent=1 // pred_check_branch
      %93 = sbr.rel (0) target = $region93
    $region92: #{tacotron2_forward.1} parent=1 // pred_region
      _
    $region93: #{tacotron2_forward.1} parent=1 // pred_fallthru
      _
    // Predicated region
    $region94: #{tacotron2_forward.1} parent=1 // pred_check
      _
    $region95: #{tacotron2_forward.1} parent=1 // pred_check_branch
      %95 = sbr.rel (0) target = $region97
    $region96: #{tacotron2_forward.1} parent=1 // pred_region
      _
    $region97: #{tacotron2_forward.1} parent=1 // pred_fallthru
      _
    // Predicated region
    $region98: #{tacotron2_forward.1} parent=1 // pred_check
      _
    $region99: #{tacotron2_forward.1} parent=1 // pred_check_branch
      %97 = sbr.rel (0) target = $region101
    $region100: #{tacotron2_forward.1} parent=1 // pred_region
      _
    $region101: #{tacotron2_forward.1} parent=1 // pred_fallthru
      _
    // Predicated region
    $region102: #{tacotron2_forward.1} parent=1 // pred_check
      _
    $region103: #{tacotron2_forward.1} parent=1 // pred_check_branch
      %99 = sbr.rel (0) target = $region105
    $region104: #{tacotron2_forward.1} parent=1 // pred_region
      %s101 = ssub.s32 12800, 12800
      %102 = vsyncadd [#allocation9], %s101
      %s103 = sshll.u32 [#allocation8], 4
      %s104 = int_to_ptr.vmem [resolvable:$true] %s103
      %109 = dma.hbm_to_vmem [thread:$0]  %s25, 12800, %s104, [#allocation9], 128, 128, 8
    $region105: #{tacotron2_forward.1} parent=1 // pred_fallthru
      _
    // Predicated region
    $region106: #{tacotron2_forward.1} parent=1 // pred_check
      _
    $region107: #{tacotron2_forward.1} parent=1 // pred_check_branch
      %111 = sbr.rel (0) target = $region109
    $region108: #{tacotron2_forward.1} parent=1 // pred_region
      _
    $region109: #{tacotron2_forward.1} parent=1 // pred_fallthru
      _
    // Predicated region
    $region110: #{tacotron2_forward.1} parent=1 // pred_check
      _
    $region111: #{tacotron2_forward.1} parent=1 // pred_check_branch
      %113 = sbr.rel (0) target = $region113
    $region112: #{tacotron2_forward.1} parent=1 // pred_region
      %114 = dma.done [#allocation7], 7680
    $region113: #{tacotron2_forward.1} parent=1 // pred_fallthru
      _
    // Predicated region
    $region114: #{tacotron2_forward.1} parent=1 // pred_check
      _
    $region115: #{tacotron2_forward.1} parent=1 // pred_check_branch
      %116 = sbr.rel (0) target = $region117
    $region116: #{tacotron2_forward.1} parent=1 // pred_region
      %117 = dma.done [#allocation9], 12800
    $region117: #{tacotron2_forward.1} parent=1 // pred_fallthru
      _
    %vm118 = vcmask 261120
    %119 = vst.msk [vmem:[#allocation2] sm:$0xff] %vm118, 0.0
    %120 = vst.msk [vmem:[#allocation2 + $0x8] sm:$0xff] %vm118, 0.0
    %121 = vst.msk [vmem:[#allocation2 + $0x10] sm:$0xff] %vm118, 0.0
    %122 = vst.msk [vmem:[#allocation2 + $0x18] sm:$0xff] %vm118, 0.0
    %vm123 = vcmask 254976
    %124 = vst.msk [vmem:[#allocation2 + $0x20] sm:$0x3] %vm123, 0.0
    %v125 = vld [vmem:[%s0] sm:$0xff]
    %v126 = vld [vmem:[%s0 + $0x8] sm:$0x1]
    %127 = vst.msk [vmem:[#allocation2 + $0x8] sm:$0xff] %vm118, %v125
    %vm128 = vcmask 253952
    %129 = vst.msk [vmem:[#allocation2 + $0x10] sm:$0x1] %vm128, %v126
    %v130 = vld [vmem:[#allocation2 + $0x6] sm:$0xff]
    %v131 = vld [vmem:[#allocation2 + $0xe] sm:$0x1]
    %v132 = vld [vmem:[#allocation6] sm:$0xff]
    %v133 = vld [vmem:[#allocation6 + $0x8] sm:$0xff]
    %v134 = vld [vmem:[#allocation6 + $0x10] sm:$0xff]
    %v135 = vld [vmem:[#allocation6 + $0x18] sm:$0xff]
    %v136 = vld [vmem:[#allocation2 + $0x7] sm:$0xff]
    %v137 = vld [vmem:[#allocation2 + $0xf] sm:$0x1]
    %s138 = scalar_lea.vmem [#allocation6], 32
    %v139 = vld [vmem:[%s138] sm:$0xff]
    %v140 = vld [vmem:[%s138 + $0x8] sm:$0xff]
    %v141 = vld [vmem:[%s138 + $0x10] sm:$0xff]
    %v142 = vld [vmem:[%s138 + $0x18] sm:$0xff]
    %v144 = vsel %vm118, %v136, 0
    %v147 = vsel %vm118, %v137, 0
    %149 = vmatprep.subr.mxu0 0.0
    %150 = vmatpush1.msra.mxu0 %v139
    %151 = vmatprep.subr.mxu0 0.0
    %152 = vmatpush1.msra.mxu0 %v140
    %153 = vmatprep.subr.mxu0 0.0
    %154 = vmatpush1.msra.mxu0 %v141
    %155 = vmatprep.subr.mxu0 0.0
    %156 = vmatpush1.msra.mxu0 %v142
    %157 = vmatprep.subr.mxu0 0.0
    %158 = vmatpush1.msra.mxu0 0.0
    %159 = vmatprep.subr.mxu0 0.0
    %160 = vmatpush1.msra.mxu0 0.0
    %161 = vmatprep.subr.mxu0 0.0
    %162 = vmatpush1.msra.mxu0 0.0
    %163 = vmatprep.subr.mxu0 0.0
    %164 = vmatpush1.msra.mxu0 0.0
    %165 = vmatprep.subr.mxu0 0.0
    %166 = vmatpush1.msra.mxu0 0.0
    %167 = vmatprep.subr.mxu0 0.0
    %168 = vmatpush1.msra.mxu0 0.0
    %169 = vmatprep.subr.mxu0 0.0
    %170 = vmatpush1.msra.mxu0 0.0
    %171 = vmatprep.subr.mxu0 0.0
    %172 = vmatpush1.msra.mxu0 0.0
    %173 = vmatprep.subr.mxu0 0.0
    %174 = vmatpush1.msra.mxu0 0.0
    %175 = vmatprep.subr.mxu0 0.0
    %176 = vmatpush1.msra.mxu0 0.0
    %177 = vmatprep.subr.mxu0 0.0
    %178 = vmatpush1.msra.mxu0 0.0
    %179 = vmatprep.subr.mxu0 0.0
    %180 = vmatpush1.msra.mxu0 0.0
    %181 = vmatprep.subr.mxu0 0.0
    %182 = vmatpush1.msra.mxu0 0.0
    %183 = vmatprep.subr.mxu0 0.0
    %184 = vmatpush1.msra.mxu0 0.0
    %185 = vmatprep.subr.mxu0 0.0
    %186 = vmatpush1.msra.mxu0 0.0
    %187 = vmatprep.subr.mxu0 0.0
    %188 = vmatpush1.msra.mxu0 0.0
    %189 = vmatprep.subr.mxu0 0.0
    %190 = vmatpush1.msra.mxu0 0.0
    %191 = vmatprep.subr.mxu0 0.0
    %192 = vmatpush1.msra.mxu0 0.0
    %193 = vmatprep.subr.mxu0 0.0
    %194 = vmatpush1.msra.mxu0 0.0
    %195 = vmatprep.subr.mxu0 0.0
    %196 = vmatpush1.msra.mxu0 0.0
    %197 = vmatprep.subr.mxu0 0.0
    %198 = vmatpush1.msra.mxu0 0.0
    %199 = vmatprep.subr.mxu0 0.0
    %200 = vmatpush1.msra.mxu0 0.0
    %201 = vmatprep.subr.mxu0 0.0
    %202 = vmatpush1.msra.mxu0 0.0
    %203 = vmatprep.subr.mxu0 0.0
    %204 = vmatpush1.msra.mxu0 0.0
    %205 = vmatprep.subr.mxu0 0.0
    %206 = vmatpush1.msra.mxu0 0.0
    %207 = vmatprep.subr.mxu0 0.0
    %208 = vmatpush1.msra.mxu0 0.0
    %209 = vmatprep.subr.mxu0 0.0
    %210 = vmatpush1.msra.mxu0 0.0
    %211 = vmatprep.subr.mxu0 0.0
    %212 = vmatpush1.msra.mxu0 0.0
    %213 = vmatprep.mubr.f32.mxu0 0.0
    %214 = vmatmul.mubr.f32.gmra.mrb[0].mxu0 %v144
    %v215 = vpop.f32.mrb[0].mxu0
    %v216 = vadd.f32 0.0, %v215
    %v217 = vpop.f32.mrb[0].mxu0
    %218 = vmatprep.mubr.f32.mxu0 0.0
    %219 = vmatmul.mubr.f32.gmra.mrb[0].mxu0 %v147
    %v220 = vpop.f32.mrb[0].mxu0
    %v221 = vadd.f32 0.0, %v220
    %v222 = vpop.f32.mrb[0].mxu0
    %223 = vdwg.mxu0
    %v225 = vsel %vm118, %v130, 0
    %v228 = vsel %vm118, %v131, 0
    %230 = vmatprep.subr.mxu0 0.0
    %231 = vmatpush1.msra.mxu0 %v132
    %232 = vmatprep.subr.mxu0 0.0
    %233 = vmatpush1.msra.mxu0 %v133
    %234 = vmatprep.subr.mxu0 0.0
    %235 = vmatpush1.msra.mxu0 %v134
    %236 = vmatprep.subr.mxu0 0.0
    %237 = vmatpush1.msra.mxu0 %v135
    %238 = vmatprep.subr.mxu0 0.0
    %239 = vmatpush1.msra.mxu0 0.0
    %240 = vmatprep.subr.mxu0 0.0
    %241 = vmatpush1.msra.mxu0 0.0
    %242 = vmatprep.subr.mxu0 0.0
    %243 = vmatpush1.msra.mxu0 0.0
    %244 = vmatprep.subr.mxu0 0.0
    %245 = vmatpush1.msra.mxu0 0.0
    %246 = vmatprep.subr.mxu0 0.0
    %247 = vmatpush1.msra.mxu0 0.0
    %248 = vmatprep.subr.mxu0 0.0
    %249 = vmatpush1.msra.mxu0 0.0
    %250 = vmatprep.subr.mxu0 0.0
    %251 = vmatpush1.msra.mxu0 0.0
    %252 = vmatprep.subr.mxu0 0.0
    %253 = vmatpush1.msra.mxu0 0.0
    %254 = vmatprep.subr.mxu0 0.0
    %255 = vmatpush1.msra.mxu0 0.0
    %256 = vmatprep.subr.mxu0 0.0
    %257 = vmatpush1.msra.mxu0 0.0
    %258 = vmatprep.subr.mxu0 0.0
    %259 = vmatpush1.msra.mxu0 0.0
    %260 = vmatprep.subr.mxu0 0.0
    %261 = vmatpush1.msra.mxu0 0.0
    %262 = vmatprep.subr.mxu0 0.0
    %263 = vmatpush1.msra.mxu0 0.0
    %264 = vmatprep.subr.mxu0 0.0
    %265 = vmatpush1.msra.mxu0 0.0
    %266 = vmatprep.subr.mxu0 0.0
    %267 = vmatpush1.msra.mxu0 0.0
    %268 = vmatprep.subr.mxu0 0.0
    %269 = vmatpush1.msra.mxu0 0.0
    %270 = vmatprep.subr.mxu0 0.0
    %271 = vmatpush1.msra.mxu0 0.0
    %272 = vmatprep.subr.mxu0 0.0
    %273 = vmatpush1.msra.mxu0 0.0
    %274 = vmatprep.subr.mxu0 0.0
    %275 = vmatpush1.msra.mxu0 0.0
    %276 = vmatprep.subr.mxu0 0.0
    %277 = vmatpush1.msra.mxu0 0.0
    %278 = vmatprep.subr.mxu0 0.0
    %279 = vmatpush1.msra.mxu0 0.0
    %280 = vmatprep.subr.mxu0 0.0
    %281 = vmatpush1.msra.mxu0 0.0
    %282 = vmatprep.subr.mxu0 0.0
    %283 = vmatpush1.msra.mxu0 0.0
    %284 = vmatprep.subr.mxu0 0.0
    %285 = vmatpush1.msra.mxu0 0.0
    %286 = vmatprep.subr.mxu0 0.0
    %287 = vmatpush1.msra.mxu0 0.0
    %288 = vmatprep.subr.mxu0 0.0
    %289 = vmatpush1.msra.mxu0 0.0
    %290 = vmatprep.subr.mxu0 0.0
    %291 = vmatpush1.msra.mxu0 0.0
    %292 = vmatprep.subr.mxu0 0.0
    %293 = vmatpush1.msra.mxu0 0.0
    %294 = vmatprep.mubr.f32.mxu0 0.0
    %295 = vmatmul.mubr.f32.gmra.mrb[0].mxu0 %v225
    %v296 = vpop.f32.mrb[0].mxu0
    %v297 = vadd.f32 %v216, %v296
    %v298 = vpop.f32.mrb[0].mxu0
    %299 = vmatprep.mubr.f32.mxu0 0.0
    %300 = vmatmul.mubr.f32.gmra.mrb[0].mxu0 %v228
    %v301 = vpop.f32.mrb[0].mxu0
    %v302 = vadd.f32 %v221, %v301
    %v303 = vpop.f32.mrb[0].mxu0
    %304 = vdwg.mxu0
    %v305 = vld [vmem:[#allocation2 + $0x8] sm:$0xff]
    %v306 = vld [vmem:[#allocation2 + $0x10] sm:$0x1]
    %s307 = scalar_lea.vmem [#allocation6], 64
    %v308 = vld [vmem:[%s307] sm:$0xff]
    %v309 = vld [vmem:[%s307 + $0x8] sm:$0xff]
    %v310 = vld [vmem:[%s307 + $0x10] sm:$0xff]
    %v311 = vld [vmem:[%s307 + $0x18] sm:$0xff]
    %v313 = vsel %vm118, %v305, 0
    %v316 = vsel %vm118, %v306, 0
    %318 = vmatprep.subr.mxu0 0.0
    %319 = vmatpush1.msra.mxu0 %v308
    %320 = vmatprep.subr.mxu0 0.0
    %321 = vmatpush1.msra.mxu0 %v309
    %322 = vmatprep.subr.mxu0 0.0
    %323 = vmatpush1.msra.mxu0 %v310
    %324 = vmatprep.subr.mxu0 0.0
    %325 = vmatpush1.msra.mxu0 %v311
    %326 = vmatprep.subr.mxu0 0.0
    %327 = vmatpush1.msra.mxu0 0.0
    %328 = vmatprep.subr.mxu0 0.0
    %329 = vmatpush1.msra.mxu0 0.0
    %330 = vmatprep.subr.mxu0 0.0
    %331 = vmatpush1.msra.mxu0 0.0
    %332 = vmatprep.subr.mxu0 0.0
    %333 = vmatpush1.msra.mxu0 0.0
    %334 = vmatprep.subr.mxu0 0.0
    %335 = vmatpush1.msra.mxu0 0.0
    %336 = vmatprep.subr.mxu0 0.0
    %337 = vmatpush1.msra.mxu0 0.0
    %338 = vmatprep.subr.mxu0 0.0
    %339 = vmatpush1.msra.mxu0 0.0
    %340 = vmatprep.subr.mxu0 0.0
    %341 = vmatpush1.msra.mxu0 0.0
    %342 = vmatprep.subr.mxu0 0.0
    %343 = vmatpush1.msra.mxu0 0.0
    %344 = vmatprep.subr.mxu0 0.0
    %345 = vmatpush1.msra.mxu0 0.0
    %346 = vmatprep.subr.mxu0 0.0
    %347 = vmatpush1.msra.mxu0 0.0
    %348 = vmatprep.subr.mxu0 0.0
    %349 = vmatpush1.msra.mxu0 0.0
    %350 = vmatprep.subr.mxu0 0.0
    %351 = vmatpush1.msra.mxu0 0.0
    %352 = vmatprep.subr.mxu0 0.0
    %353 = vmatpush1.msra.mxu0 0.0
    %354 = vmatprep.subr.mxu0 0.0
    %355 = vmatpush1.msra.mxu0 0.0
    %356 = vmatprep.subr.mxu0 0.0
    %357 = vmatpush1.msra.mxu0 0.0
    %358 = vmatprep.subr.mxu0 0.0
    %359 = vmatpush1.msra.mxu0 0.0
    %360 = vmatprep.subr.mxu0 0.0
    %361 = vmatpush1.msra.mxu0 0.0
    %362 = vmatprep.subr.mxu0 0.0
    %363 = vmatpush1.msra.mxu0 0.0
    %364 = vmatprep.subr.mxu0 0.0
    %365 = vmatpush1.msra.mxu0 0.0
    %366 = vmatprep.subr.mxu0 0.0
    %367 = vmatpush1.msra.mxu0 0.0
    %368 = vmatprep.subr.mxu0 0.0
    %369 = vmatpush1.msra.mxu0 0.0
    %370 = vmatprep.subr.mxu0 0.0
    %371 = vmatpush1.msra.mxu0 0.0
    %372 = vmatprep.subr.mxu0 0.0
    %373 = vmatpush1.msra.mxu0 0.0
    %374 = vmatprep.subr.mxu0 0.0
    %375 = vmatpush1.msra.mxu0 0.0
    %376 = vmatprep.subr.mxu0 0.0
    %377 = vmatpush1.msra.mxu0 0.0
    %378 = vmatprep.subr.mxu0 0.0
    %379 = vmatpush1.msra.mxu0 0.0
    %380 = vmatprep.subr.mxu0 0.0
    %381 = vmatpush1.msra.mxu0 0.0
    %382 = vmatprep.mubr.f32.mxu0 0.0
    %383 = vmatmul.mubr.f32.gmra.mrb[0].mxu0 %v313
    %v384 = vpop.f32.mrb[0].mxu0
    %v385 = vadd.f32 0.0, %v384
    %v386 = vpop.f32.mrb[0].mxu0
    %387 = vmatprep.mubr.f32.mxu0 0.0
    %388 = vmatmul.mubr.f32.gmra.mrb[0].mxu0 %v316
    %v389 = vpop.f32.mrb[0].mxu0
    %v390 = vadd.f32 0.0, %v389
    %v391 = vpop.f32.mrb[0].mxu0
    %392 = vdwg.mxu0
    %v393 = vadd.f32 %v297, %v385
    %v394 = vadd.f32 %v302, %v390
    %v395 = vld [vmem:[#allocation2 + $0x9] sm:$0xff]
    %v396 = vld [vmem:[#allocation2 + $0x11] sm:$0x1]
    %s397 = scalar_lea.vmem [#allocation6], 96
    %v398 = vld [vmem:[%s397] sm:$0xff]
    %v399 = vld [vmem:[%s397 + $0x8] sm:$0xff]
    %v400 = vld [vmem:[%s397 + $0x10] sm:$0xff]
    %v401 = vld [vmem:[%s397 + $0x18] sm:$0xff]
    %v403 = vsel %vm118, %v395, 0
    %v406 = vsel %vm118, %v396, 0
    %408 = vmatprep.subr.mxu0 0.0
    %409 = vmatpush1.msra.mxu0 %v398
    %410 = vmatprep.subr.mxu0 0.0
    %411 = vmatpush1.msra.mxu0 %v399
    %412 = vmatprep.subr.mxu0 0.0
    %413 = vmatpush1.msra.mxu0 %v400
    %414 = vmatprep.subr.mxu0 0.0
    %415 = vmatpush1.msra.mxu0 %v401
    %416 = vmatprep.subr.mxu0 0.0
    %417 = vmatpush1.msra.mxu0 0.0
    %418 = vmatprep.subr.mxu0 0.0
    %419 = vmatpush1.msra.mxu0 0.0
    %420 = vmatprep.subr.mxu0 0.0
    %421 = vmatpush1.msra.mxu0 0.0
    %422 = vmatprep.subr.mxu0 0.0
    %423 = vmatpush1.msra.mxu0 0.0
    %424 = vmatprep.subr.mxu0 0.0
    %425 = vmatpush1.msra.mxu0 0.0
    %426 = vmatprep.subr.mxu0 0.0
    %427 = vmatpush1.msra.mxu0 0.0
    %428 = vmatprep.subr.mxu0 0.0
    %429 = vmatpush1.msra.mxu0 0.0
    %430 = vmatprep.subr.mxu0 0.0
    %431 = vmatpush1.msra.mxu0 0.0
    %432 = vmatprep.subr.mxu0 0.0
    %433 = vmatpush1.msra.mxu0 0.0
    %434 = vmatprep.subr.mxu0 0.0
    %435 = vmatpush1.msra.mxu0 0.0
    %436 = vmatprep.subr.mxu0 0.0
    %437 = vmatpush1.msra.mxu0 0.0
    %438 = vmatprep.subr.mxu0 0.0
    %439 = vmatpush1.msra.mxu0 0.0
    %440 = vmatprep.subr.mxu0 0.0
    %441 = vmatpush1.msra.mxu0 0.0
    %442 = vmatprep.subr.mxu0 0.0
    %443 = vmatpush1.msra.mxu0 0.0
    %444 = vmatprep.subr.mxu0 0.0
    %445 = vmatpush1.msra.mxu0 0.0
    %446 = vmatprep.subr.mxu0 0.0
    %447 = vmatpush1.msra.mxu0 0.0
    %448 = vmatprep.subr.mxu0 0.0
    %449 = vmatpush1.msra.mxu0 0.0
    %450 = vmatprep.subr.mxu0 0.0
    %451 = vmatpush1.msra.mxu0 0.0
    %452 = vmatprep.subr.mxu0 0.0
    %453 = vmatpush1.msra.mxu0 0.0
    %454 = vmatprep.subr.mxu0 0.0
    %455 = vmatpush1.msra.mxu0 0.0
    %456 = vmatprep.subr.mxu0 0.0
    %457 = vmatpush1.msra.mxu0 0.0
    %458 = vmatprep.subr.mxu0 0.0
    %459 = vmatpush1.msra.mxu0 0.0
    %460 = vmatprep.subr.mxu0 0.0
    %461 = vmatpush1.msra.mxu0 0.0
    %462 = vmatprep.subr.mxu0 0.0
    %463 = vmatpush1.msra.mxu0 0.0
    %464 = vmatprep.subr.mxu0 0.0
    %465 = vmatpush1.msra.mxu0 0.0
    %466 = vmatprep.subr.mxu0 0.0
    %467 = vmatpush1.msra.mxu0 0.0
    %468 = vmatprep.subr.mxu0 0.0
    %469 = vmatpush1.msra.mxu0 0.0
    %470 = vmatprep.subr.mxu0 0.0
    %471 = vmatpush1.msra.mxu0 0.0
    %472 = vmatprep.mubr.f32.mxu0 0.0
    %473 = vmatmul.mubr.f32.gmra.mrb[0].mxu0 %v403
    %v474 = vpop.f32.mrb[0].mxu0
    %v475 = vadd.f32 0.0, %v474
    %v476 = vpop.f32.mrb[0].mxu0
    %477 = vmatprep.mubr.f32.mxu0 0.0
    %478 = vmatmul.mubr.f32.gmra.mrb[0].mxu0 %v406
    %v479 = vpop.f32.mrb[0].mxu0
    %v480 = vadd.f32 0.0, %v479
    %v481 = vpop.f32.mrb[0].mxu0
    %482 = vdwg.mxu0
    %v483 = vadd.f32 %v393, %v475
    %v484 = vadd.f32 %v394, %v480
    %v485 = vld [vmem:[#allocation2 + $0xa] sm:$0xff]
    %v486 = vld [vmem:[#allocation2 + $0x12] sm:$0x1]
    %s487 = scalar_lea.vmem [#allocation6], 128
    %v488 = vld [vmem:[%s487] sm:$0xff]
    %v489 = vld [vmem:[%s487 + $0x8] sm:$0xff]
    %v490 = vld [vmem:[%s487 + $0x10] sm:$0xff]
    %v491 = vld [vmem:[%s487 + $0x18] sm:$0xff]
    %v493 = vsel %vm118, %v485, 0
    %v496 = vsel %vm118, %v486, 0
    %498 = vmatprep.subr.mxu0 0.0
    %499 = vmatpush1.msra.mxu0 %v488
    %500 = vmatprep.subr.mxu0 0.0
    %501 = vmatpush1.msra.mxu0 %v489
    %502 = vmatprep.subr.mxu0 0.0
    %503 = vmatpush1.msra.mxu0 %v490
    %504 = vmatprep.subr.mxu0 0.0
    %505 = vmatpush1.msra.mxu0 %v491
    %506 = vmatprep.subr.mxu0 0.0
    %507 = vmatpush1.msra.mxu0 0.0
    %508 = vmatprep.subr.mxu0 0.0
    %509 = vmatpush1.msra.mxu0 0.0
    %510 = vmatprep.subr.mxu0 0.0
    %511 = vmatpush1.msra.mxu0 0.0
    %512 = vmatprep.subr.mxu0 0.0
    %513 = vmatpush1.msra.mxu0 0.0
    %514 = vmatprep.subr.mxu0 0.0
    %515 = vmatpush1.msra.mxu0 0.0
    %516 = vmatprep.subr.mxu0 0.0
    %517 = vmatpush1.msra.mxu0 0.0
    %518 = vmatprep.subr.mxu0 0.0
    %519 = vmatpush1.msra.mxu0 0.0
    %520 = vmatprep.subr.mxu0 0.0
    %521 = vmatpush1.msra.mxu0 0.0
    %522 = vmatprep.subr.mxu0 0.0
    %523 = vmatpush1.msra.mxu0 0.0
    %524 = vmatprep.subr.mxu0 0.0
    %525 = vmatpush1.msra.mxu0 0.0
    %526 = vmatprep.subr.mxu0 0.0
    %527 = vmatpush1.msra.mxu0 0.0
    %528 = vmatprep.subr.mxu0 0.0
    %529 = vmatpush1.msra.mxu0 0.0
    %530 = vmatprep.subr.mxu0 0.0
    %531 = vmatpush1.msra.mxu0 0.0
    %532 = vmatprep.subr.mxu0 0.0
    %533 = vmatpush1.msra.mxu0 0.0
    %534 = vmatprep.subr.mxu0 0.0
    %535 = vmatpush1.msra.mxu0 0.0
    %536 = vmatprep.subr.mxu0 0.0
    %537 = vmatpush1.msra.mxu0 0.0
    %538 = vmatprep.subr.mxu0 0.0
    %539 = vmatpush1.msra.mxu0 0.0
    %540 = vmatprep.subr.mxu0 0.0
    %541 = vmatpush1.msra.mxu0 0.0
    %542 = vmatprep.subr.mxu0 0.0
    %543 = vmatpush1.msra.mxu0 0.0
    %544 = vmatprep.subr.mxu0 0.0
    %545 = vmatpush1.msra.mxu0 0.0
    %546 = vmatprep.subr.mxu0 0.0
    %547 = vmatpush1.msra.mxu0 0.0
    %548 = vmatprep.subr.mxu0 0.0
    %549 = vmatpush1.msra.mxu0 0.0
    %550 = vmatprep.subr.mxu0 0.0
    %551 = vmatpush1.msra.mxu0 0.0
    %552 = vmatprep.subr.mxu0 0.0
    %553 = vmatpush1.msra.mxu0 0.0
    %554 = vmatprep.subr.mxu0 0.0
    %555 = vmatpush1.msra.mxu0 0.0
    %556 = vmatprep.subr.mxu0 0.0
    %557 = vmatpush1.msra.mxu0 0.0
    %558 = vmatprep.subr.mxu0 0.0
    %559 = vmatpush1.msra.mxu0 0.0
    %560 = vmatprep.subr.mxu0 0.0
    %561 = vmatpush1.msra.mxu0 0.0
    %562 = vmatprep.mubr.f32.mxu0 0.0
    %563 = vmatmul.mubr.f32.gmra.mrb[0].mxu0 %v493
    %v564 = vpop.f32.mrb[0].mxu0
    %v565 = vadd.f32 0.0, %v564
    %v566 = vpop.f32.mrb[0].mxu0
    %567 = vmatprep.mubr.f32.mxu0 0.0
    %568 = vmatmul.mubr.f32.gmra.mrb[0].mxu0 %v496
    %v569 = vpop.f32.mrb[0].mxu0
    %v570 = vadd.f32 0.0, %v569
    %v571 = vpop.f32.mrb[0].mxu0
    %572 = vdwg.mxu0
    %v573 = vadd.f32 %v483, %v565
    %v574 = vadd.f32 %v484, %v570
    %v575 = vld [vmem:[%s2] sm:$0x1]
    %v577 = vlaneseq
    %v578 = vshrl.u32 %v577, 7
    %v579 = vsub.s32 0, %v578
    %v580 = vrot.slane %v575, %v579
    %v582 = vadd.f32 %v573, %v580
    %v583 = vadd.f32 %v574, %v580
    %v584 = vmax.f32 %v582, 0.0
    %v585 = vmax.f32 %v583, 0.0
    %586 = vst.msk [vmem:[#allocation2 + $0x8] sm:$0xff] %vm118, %v584
    %587 = vst.msk [vmem:[#allocation2 + $0x10] sm:$0x1] %vm128, %v585
    %v588 = vld [vmem:[#allocation2 + $0x6] sm:$0xff]
    %v589 = vld [vmem:[#allocation2 + $0xe] sm:$0x1]
    %s590 = scalar_lea.vmem [#allocation6], 160
    %v591 = vld [vmem:[%s590] sm:$0xff]
    %v592 = vld [vmem:[%s590 + $0x8] sm:$0xff]
    %v593 = vld [vmem:[%s590 + $0x10] sm:$0xff]
    %v594 = vld [vmem:[%s590 + $0x18] sm:$0xff]
    %v595 = vld [vmem:[#allocation2 + $0x7] sm:$0xff]
    %v596 = vld [vmem:[#allocation2 + $0xf] sm:$0x1]
    %s597 = scalar_lea.vmem [#allocation6], 192
    %v598 = vld [vmem:[%s597] sm:$0xff]
    %v599 = vld [vmem:[%s597 + $0x8] sm:$0xff]
    %v600 = vld [vmem:[%s597 + $0x10] sm:$0xff]
    %v601 = vld [vmem:[%s597 + $0x18] sm:$0xff]
    %v603 = vsel %vm118, %v595, 0
    %v606 = vsel %vm118, %v596, 0
    %608 = vmatprep.subr.mxu0 0.0
    %609 = vmatpush1.msra.mxu0 %v598
    %610 = vmatprep.subr.mxu0 0.0
    %611 = vmatpush1.msra.mxu0 %v599
    %612 = vmatprep.subr.mxu0 0.0
    %613 = vmatpush1.msra.mxu0 %v600
    %614 = vmatprep.subr.mxu0 0.0
    %615 = vmatpush1.msra.mxu0 %v601
    %616 = vmatprep.subr.mxu0 0.0
    %617 = vmatpush1.msra.mxu0 0.0
    %618 = vmatprep.subr.mxu0 0.0
    %619 = vmatpush1.msra.mxu0 0.0
    %620 = vmatprep.subr.mxu0 0.0
    %621 = vmatpush1.msra.mxu0 0.0
    %622 = vmatprep.subr.mxu0 0.0
    %623 = vmatpush1.msra.mxu0 0.0
    %624 = vmatprep.subr.mxu0 0.0
    %625 = vmatpush1.msra.mxu0 0.0
    %626 = vmatprep.subr.mxu0 0.0
    %627 = vmatpush1.msra.mxu0 0.0
    %628 = vmatprep.subr.mxu0 0.0
    %629 = vmatpush1.msra.mxu0 0.0
    %630 = vmatprep.subr.mxu0 0.0
    %631 = vmatpush1.msra.mxu0 0.0
    %632 = vmatprep.subr.mxu0 0.0
    %633 = vmatpush1.msra.mxu0 0.0
    %634 = vmatprep.subr.mxu0 0.0
    %635 = vmatpush1.msra.mxu0 0.0
    %636 = vmatprep.subr.mxu0 0.0
    %637 = vmatpush1.msra.mxu0 0.0
    %638 = vmatprep.subr.mxu0 0.0
    %639 = vmatpush1.msra.mxu0 0.0
    %640 = vmatprep.subr.mxu0 0.0
    %641 = vmatpush1.msra.mxu0 0.0
    %642 = vmatprep.subr.mxu0 0.0
    %643 = vmatpush1.msra.mxu0 0.0
    %644 = vmatprep.subr.mxu0 0.0
    %645 = vmatpush1.msra.mxu0 0.0
    %646 = vmatprep.subr.mxu0 0.0
    %647 = vmatpush1.msra.mxu0 0.0
    %648 = vmatprep.subr.mxu0 0.0
    %649 = vmatpush1.msra.mxu0 0.0
    %650 = vmatprep.subr.mxu0 0.0
    %651 = vmatpush1.msra.mxu0 0.0
    %652 = vmatprep.subr.mxu0 0.0
    %653 = vmatpush1.msra.mxu0 0.0
    %654 = vmatprep.subr.mxu0 0.0
    %655 = vmatpush1.msra.mxu0 0.0
    %656 = vmatprep.subr.mxu0 0.0
    %657 = vmatpush1.msra.mxu0 0.0
    %658 = vmatprep.subr.mxu0 0.0
    %659 = vmatpush1.msra.mxu0 0.0
    %660 = vmatprep.subr.mxu0 0.0
    %661 = vmatpush1.msra.mxu0 0.0
    %662 = vmatprep.subr.mxu0 0.0
    %663 = vmatpush1.msra.mxu0 0.0
    %664 = vmatprep.subr.mxu0 0.0
    %665 = vmatpush1.msra.mxu0 0.0
    %666 = vmatprep.subr.mxu0 0.0
    %667 = vmatpush1.msra.mxu0 0.0
    %668 = vmatprep.subr.mxu0 0.0
    %669 = vmatpush1.msra.mxu0 0.0
    %670 = vmatprep.subr.mxu0 0.0
    %671 = vmatpush1.msra.mxu0 0.0
    %672 = vmatprep.mubr.f32.mxu0 0.0
    %673 = vmatmul.mubr.f32.gmra.mrb[0].mxu0 %v603
    %v674 = vpop.f32.mrb[0].mxu0
    %v675 = vadd.f32 0.0, %v674
    %v676 = vpop.f32.mrb[0].mxu0
    %677 = vmatprep.mubr.f32.mxu0 0.0
    %678 = vmatmul.mubr.f32.gmra.mrb[0].mxu0 %v606
    %v679 = vpop.f32.mrb[0].mxu0
    %v680 = vadd.f32 0.0, %v679
    %v681 = vpop.f32.mrb[0].mxu0
    %682 = vdwg.mxu0
    %v684 = vsel %vm118, %v588, 0
    %v687 = vsel %vm118, %v589, 0
    %689 = vmatprep.subr.mxu0 0.0
    %690 = vmatpush1.msra.mxu0 %v591
    %691 = vmatprep.subr.mxu0 0.0
    %692 = vmatpush1.msra.mxu0 %v592
    %693 = vmatprep.subr.mxu0 0.0
    %694 = vmatpush1.msra.mxu0 %v593
    %695 = vmatprep.subr.mxu0 0.0
    %696 = vmatpush1.msra.mxu0 %v594
    %697 = vmatprep.subr.mxu0 0.0
    %698 = vmatpush1.msra.mxu0 0.0
    %699 = vmatprep.subr.mxu0 0.0
    %700 = vmatpush1.msra.mxu0 0.0
    %701 = vmatprep.subr.mxu0 0.0
    %702 = vmatpush1.msra.mxu0 0.0
    %703 = vmatprep.subr.mxu0 0.0
    %704 = vmatpush1.msra.mxu0 0.0
    %705 = vmatprep.subr.mxu0 0.0
    %706 = vmatpush1.msra.mxu0 0.0
    %707 = vmatprep.subr.mxu0 0.0
    %708 = vmatpush1.msra.mxu0 0.0
    %709 = vmatprep.subr.mxu0 0.0
    %710 = vmatpush1.msra.mxu0 0.0
    %711 = vmatprep.subr.mxu0 0.0
    %712 = vmatpush1.msra.mxu0 0.0
    %713 = vmatprep.subr.mxu0 0.0
    %714 = vmatpush1.msra.mxu0 0.0
    %715 = vmatprep.subr.mxu0 0.0
    %716 = vmatpush1.msra.mxu0 0.0
    %717 = vmatprep.subr.mxu0 0.0
    %718 = vmatpush1.msra.mxu0 0.0
    %719 = vmatprep.subr.mxu0 0.0
    %720 = vmatpush1.msra.mxu0 0.0
    %721 = vmatprep.subr.mxu0 0.0
    %722 = vmatpush1.msra.mxu0 0.0
    %723 = vmatprep.subr.mxu0 0.0
    %724 = vmatpush1.msra.mxu0 0.0
    %725 = vmatprep.subr.mxu0 0.0
    %726 = vmatpush1.msra.mxu0 0.0
    %727 = vmatprep.subr.mxu0 0.0
    %728 = vmatpush1.msra.mxu0 0.0
    %729 = vmatprep.subr.mxu0 0.0
    %730 = vmatpush1.msra.mxu0 0.0
    %731 = vmatprep.subr.mxu0 0.0
    %732 = vmatpush1.msra.mxu0 0.0
    %733 = vmatprep.subr.mxu0 0.0
    %734 = vmatpush1.msra.mxu0 0.0
    %735 = vmatprep.subr.mxu0 0.0
    %736 = vmatpush1.msra.mxu0 0.0
    %737 = vmatprep.subr.mxu0 0.0
    %738 = vmatpush1.msra.mxu0 0.0
    %739 = vmatprep.subr.mxu0 0.0
    %740 = vmatpush1.msra.mxu0 0.0
    %741 = vmatprep.subr.mxu0 0.0
    %742 = vmatpush1.msra.mxu0 0.0
    %743 = vmatprep.subr.mxu0 0.0
    %744 = vmatpush1.msra.mxu0 0.0
    %745 = vmatprep.subr.mxu0 0.0
    %746 = vmatpush1.msra.mxu0 0.0
    %747 = vmatprep.subr.mxu0 0.0
    %748 = vmatpush1.msra.mxu0 0.0
    %749 = vmatprep.subr.mxu0 0.0
    %750 = vmatpush1.msra.mxu0 0.0
    %751 = vmatprep.subr.mxu0 0.0
    %752 = vmatpush1.msra.mxu0 0.0
    %753 = vmatprep.mubr.f32.mxu0 0.0
    %754 = vmatmul.mubr.f32.gmra.mrb[0].mxu0 %v684
    %v755 = vpop.f32.mrb[0].mxu0
    %v756 = vadd.f32 %v675, %v755
    %v757 = vpop.f32.mrb[0].mxu0
    %758 = vmatprep.mubr.f32.mxu0 0.0
    %759 = vmatmul.mubr.f32.gmra.mrb[0].mxu0 %v687
    %v760 = vpop.f32.mrb[0].mxu0
    %v761 = vadd.f32 %v680, %v760
    %v762 = vpop.f32.mrb[0].mxu0
    %763 = vdwg.mxu0
    %v764 = vld [vmem:[#allocation2 + $0x8] sm:$0xff]
    %v765 = vld [vmem:[#allocation2 + $0x10] sm:$0x1]
    %s766 = scalar_lea.vmem [#allocation6], 224
    %v767 = vld [vmem:[%s766] sm:$0xff]
    %v768 = vld [vmem:[%s766 + $0x8] sm:$0xff]
    %v769 = vld [vmem:[%s766 + $0x10] sm:$0xff]
    %v770 = vld [vmem:[%s766 + $0x18] sm:$0xff]
    %v772 = vsel %vm118, %v764, 0
    %v775 = vsel %vm118, %v765, 0
    %777 = vmatprep.subr.mxu0 0.0
    %778 = vmatpush1.msra.mxu0 %v767
    %779 = vmatprep.subr.mxu0 0.0
    %780 = vmatpush1.msra.mxu0 %v768
    %781 = vmatprep.subr.mxu0 0.0
    %782 = vmatpush1.msra.mxu0 %v769
    %783 = vmatprep.subr.mxu0 0.0
    %784 = vmatpush1.msra.mxu0 %v770
    %785 = vmatprep.subr.mxu0 0.0
    %786 = vmatpush1.msra.mxu0 0.0
    %787 = vmatprep.subr.mxu0 0.0
    %788 = vmatpush1.msra.mxu0 0.0
    %789 = vmatprep.subr.mxu0 0.0
    %790 = vmatpush1.msra.mxu0 0.0
    %791 = vmatprep.subr.mxu0 0.0
    %792 = vmatpush1.msra.mxu0 0.0
    %793 = vmatprep.subr.mxu0 0.0
    %794 = vmatpush1.msra.mxu0 0.0
    %795 = vmatprep.subr.mxu0 0.0
    %796 = vmatpush1.msra.mxu0 0.0
    %797 = vmatprep.subr.mxu0 0.0
    %798 = vmatpush1.msra.mxu0 0.0
    %799 = vmatprep.subr.mxu0 0.0
    %800 = vmatpush1.msra.mxu0 0.0
    %801 = vmatprep.subr.mxu0 0.0
    %802 = vmatpush1.msra.mxu0 0.0
    %803 = vmatprep.subr.mxu0 0.0
    %804 = vmatpush1.msra.mxu0 0.0
    %805 = vmatprep.subr.mxu0 0.0
    %806 = vmatpush1.msra.mxu0 0.0
    %807 = vmatprep.subr.mxu0 0.0
    %808 = vmatpush1.msra.mxu0 0.0
    %809 = vmatprep.subr.mxu0 0.0
    %810 = vmatpush1.msra.mxu0 0.0
    %811 = vmatprep.subr.mxu0 0.0
    %812 = vmatpush1.msra.mxu0 0.0
    %813 = vmatprep.subr.mxu0 0.0
    %814 = vmatpush1.msra.mxu0 0.0
    %815 = vmatprep.subr.mxu0 0.0
    %816 = vmatpush1.msra.mxu0 0.0
    %817 = vmatprep.subr.mxu0 0.0
    %818 = vmatpush1.msra.mxu0 0.0
    %819 = vmatprep.subr.mxu0 0.0
    %820 = vmatpush1.msra.mxu0 0.0
    %821 = vmatprep.subr.mxu0 0.0
    %822 = vmatpush1.msra.mxu0 0.0
    %823 = vmatprep.subr.mxu0 0.0
    %824 = vmatpush1.msra.mxu0 0.0
    %825 = vmatprep.subr.mxu0 0.0
    %826 = vmatpush1.msra.mxu0 0.0
    %827 = vmatprep.subr.mxu0 0.0
    %828 = vmatpush1.msra.mxu0 0.0
    %829 = vmatprep.subr.mxu0 0.0
    %830 = vmatpush1.msra.mxu0 0.0
    %831 = vmatprep.subr.mxu0 0.0
    %832 = vmatpush1.msra.mxu0 0.0
    %833 = vmatprep.subr.mxu0 0.0
    %834 = vmatpush1.msra.mxu0 0.0
    %835 = vmatprep.subr.mxu0 0.0
    %836 = vmatpush1.msra.mxu0 0.0
    %837 = vmatprep.subr.mxu0 0.0
    %838 = vmatpush1.msra.mxu0 0.0
    %839 = vmatprep.subr.mxu0 0.0
    %840 = vmatpush1.msra.mxu0 0.0
    %841 = vmatprep.mubr.f32.mxu0 0.0
    %842 = vmatmul.mubr.f32.gmra.mrb[0].mxu0 %v772
    %v843 = vpop.f32.mrb[0].mxu0
    %v844 = vadd.f32 0.0, %v843
    %v845 = vpop.f32.mrb[0].mxu0
    %846 = vmatprep.mubr.f32.mxu0 0.0
    %847 = vmatmul.mubr.f32.gmra.mrb[0].mxu0 %v775
    %v848 = vpop.f32.mrb[0].mxu0
    %v849 = vadd.f32 0.0, %v848
    %v850 = vpop.f32.mrb[0].mxu0
    %851 = vdwg.mxu0
    %v852 = vadd.f32 %v756, %v844
    %v853 = vadd.f32 %v761, %v849
    %v854 = vld [vmem:[#allocation2 + $0x9] sm:$0xff]
    %v855 = vld [vmem:[#allocation2 + $0x11] sm:$0x1]
    %s856 = scalar_lea.vmem [#allocation6], 256
    %v857 = vld [vmem:[%s856] sm:$0xff]
    %v858 = vld [vmem:[%s856 + $0x8] sm:$0xff]
    %v859 = vld [vmem:[%s856 + $0x10] sm:$0xff]
    %v860 = vld [vmem:[%s856 + $0x18] sm:$0xff]
    %v862 = vsel %vm118, %v854, 0
    %v865 = vsel %vm118, %v855, 0
    %867 = vmatprep.subr.mxu0 0.0
    %868 = vmatpush1.msra.mxu0 %v857
    %869 = vmatprep.subr.mxu0 0.0
    %870 = vmatpush1.msra.mxu0 %v858
    %871 = vmatprep.subr.mxu0 0.0
    %872 = vmatpush1.msra.mxu0 %v859
    %873 = vmatprep.subr.mxu0 0.0
    %874 = vmatpush1.msra.mxu0 %v860
    %875 = vmatprep.subr.mxu0 0.0
    %876 = vmatpush1.msra.mxu0 0.0
    %877 = vmatprep.subr.mxu0 0.0
    %878 = vmatpush1.msra.mxu0 0.0
    %879 = vmatprep.subr.mxu0 0.0
    %880 = vmatpush1.msra.mxu0 0.0
    %881 = vmatprep.subr.mxu0 0.0
    %882 = vmatpush1.msra.mxu0 0.0
    %883 = vmatprep.subr.mxu0 0.0
    %884 = vmatpush1.msra.mxu0 0.0
    %885 = vmatprep.subr.mxu0 0.0
    %886 = vmatpush1.msra.mxu0 0.0
    %887 = vmatprep.subr.mxu0 0.0
    %888 = vmatpush1.msra.mxu0 0.0
    %889 = vmatprep.subr.mxu0 0.0
    %890 = vmatpush1.msra.mxu0 0.0
    %891 = vmatprep.subr.mxu0 0.0
    %892 = vmatpush1.msra.mxu0 0.0
    %893 = vmatprep.subr.mxu0 0.0
    %894 = vmatpush1.msra.mxu0 0.0
    %895 = vmatprep.subr.mxu0 0.0
    %896 = vmatpush1.msra.mxu0 0.0
    %897 = vmatprep.subr.mxu0 0.0
    %898 = vmatpush1.msra.mxu0 0.0
    %899 = vmatprep.subr.mxu0 0.0
    %900 = vmatpush1.msra.mxu0 0.0
    %901 = vmatprep.subr.mxu0 0.0
    %902 = vmatpush1.msra.mxu0 0.0
    %903 = vmatprep.subr.mxu0 0.0
    %904 = vmatpush1.msra.mxu0 0.0
    %905 = vmatprep.subr.mxu0 0.0
    %906 = vmatpush1.msra.mxu0 0.0
    %907 = vmatprep.subr.mxu0 0.0
    %908 = vmatpush1.msra.mxu0 0.0
    %909 = vmatprep.subr.mxu0 0.0
    %910 = vmatpush1.msra.mxu0 0.0
    %911 = vmatprep.subr.mxu0 0.0
    %912 = vmatpush1.msra.mxu0 0.0
    %913 = vmatprep.subr.mxu0 0.0
    %914 = vmatpush1.msra.mxu0 0.0
    %915 = vmatprep.subr.mxu0 0.0
    %916 = vmatpush1.msra.mxu0 0.0
    %917 = vmatprep.subr.mxu0 0.0
    %918 = vmatpush1.msra.mxu0 0.0
    %919 = vmatprep.subr.mxu0 0.0
    %920 = vmatpush1.msra.mxu0 0.0
    %921 = vmatprep.subr.mxu0 0.0
    %922 = vmatpush1.msra.mxu0 0.0
    %923 = vmatprep.subr.mxu0 0.0
    %924 = vmatpush1.msra.mxu0 0.0
    %925 = vmatprep.subr.mxu0 0.0
    %926 = vmatpush1.msra.mxu0 0.0
    %927 = vmatprep.subr.mxu0 0.0
    %928 = vmatpush1.msra.mxu0 0.0
    %929 = vmatprep.subr.mxu0 0.0
    %930 = vmatpush1.msra.mxu0 0.0
    %931 = vmatprep.mubr.f32.mxu0 0.0
    %932 = vmatmul.mubr.f32.gmra.mrb[0].mxu0 %v862
    %v933 = vpop.f32.mrb[0].mxu0
    %v934 = vadd.f32 0.0, %v933
    %v935 = vpop.f32.mrb[0].mxu0
    %936 = vmatprep.mubr.f32.mxu0 0.0
    %937 = vmatmul.mubr.f32.gmra.mrb[0].mxu0 %v865
    %v938 = vpop.f32.mrb[0].mxu0
    %v939 = vadd.f32 0.0, %v938
    %v940 = vpop.f32.mrb[0].mxu0
    %941 = vdwg.mxu0
    %v942 = vadd.f32 %v852, %v934
    %v943 = vadd.f32 %v853, %v939
    %v944 = vld [vmem:[#allocation2 + $0xa] sm:$0xff]
    %v945 = vld [vmem:[#allocation2 + $0x12] sm:$0x1]
    %s946 = scalar_lea.vmem [#allocation6], 288
    %v947 = vld [vmem:[%s946] sm:$0xff]
    %v948 = vld [vmem:[%s946 + $0x8] sm:$0xff]
    %v949 = vld [vmem:[%s946 + $0x10] sm:$0xff]
    %v950 = vld [vmem:[%s946 + $0x18] sm:$0xff]
    %v952 = vsel %vm118, %v944, 0
    %v955 = vsel %vm118, %v945, 0
    %957 = vmatprep.subr.mxu0 0.0
    %958 = vmatpush1.msra.mxu0 %v947
    %959 = vmatprep.subr.mxu0 0.0
    %960 = vmatpush1.msra.mxu0 %v948
    %961 = vmatprep.subr.mxu0 0.0
    %962 = vmatpush1.msra.mxu0 %v949
    %963 = vmatprep.subr.mxu0 0.0
    %964 = vmatpush1.msra.mxu0 %v950
    %965 = vmatprep.subr.mxu0 0.0
    %966 = vmatpush1.msra.mxu0 0.0
    %967 = vmatprep.subr.mxu0 0.0
    %968 = vmatpush1.msra.mxu0 0.0
    %969 = vmatprep.subr.mxu0 0.0
    %970 = vmatpush1.msra.mxu0 0.0
    %971 = vmatprep.subr.mxu0 0.0
    %972 = vmatpush1.msra.mxu0 0.0
    %973 = vmatprep.subr.mxu0 0.0
    %974 = vmatpush1.msra.mxu0 0.0
    %975 = vmatprep.subr.mxu0 0.0
    %976 = vmatpush1.msra.mxu0 0.0
    %977 = vmatprep.subr.mxu0 0.0
    %978 = vmatpush1.msra.mxu0 0.0
    %979 = vmatprep.subr.mxu0 0.0
    %980 = vmatpush1.msra.mxu0 0.0
    %981 = vmatprep.subr.mxu0 0.0
    %982 = vmatpush1.msra.mxu0 0.0
    %983 = vmatprep.subr.mxu0 0.0
    %984 = vmatpush1.msra.mxu0 0.0
    %985 = vmatprep.subr.mxu0 0.0
    %986 = vmatpush1.msra.mxu0 0.0
    %987 = vmatprep.subr.mxu0 0.0
    %988 = vmatpush1.msra.mxu0 0.0
    %989 = vmatprep.subr.mxu0 0.0
    %990 = vmatpush1.msra.mxu0 0.0
    %991 = vmatprep.subr.mxu0 0.0
    %992 = vmatpush1.msra.mxu0 0.0
    %993 = vmatprep.subr.mxu0 0.0
    %994 = vmatpush1.msra.mxu0 0.0
    %995 = vmatprep.subr.mxu0 0.0
    %996 = vmatpush1.msra.mxu0 0.0
    %997 = vmatprep.subr.mxu0 0.0
    %998 = vmatpush1.msra.mxu0 0.0
    %999 = vmatprep.subr.mxu0 0.0
    %1000 = vmatpush1.msra.mxu0 0.0
    %1001 = vmatprep.subr.mxu0 0.0
    %1002 = vmatpush1.msra.mxu0 0.0
    %1003 = vmatprep.subr.mxu0 0.0
    %1004 = vmatpush1.msra.mxu0 0.0
    %1005 = vmatprep.subr.mxu0 0.0
    %1006 = vmatpush1.msra.mxu0 0.0
    %1007 = vmatprep.subr.mxu0 0.0
    %1008 = vmatpush1.msra.mxu0 0.0
    %1009 = vmatprep.subr.mxu0 0.0
    %1010 = vmatpush1.msra.mxu0 0.0
    %1011 = vmatprep.subr.mxu0 0.0
    %1012 = vmatpush1.msra.mxu0 0.0
    %1013 = vmatprep.subr.mxu0 0.0
    %1014 = vmatpush1.msra.mxu0 0.0
    %1015 = vmatprep.subr.mxu0 0.0
    %1016 = vmatpush1.msra.mxu0 0.0
    %1017 = vmatprep.subr.mxu0 0.0
    %1018 = vmatpush1.msra.mxu0 0.0
    %1019 = vmatprep.subr.mxu0 0.0
    %1020 = vmatpush1.msra.mxu0 0.0
    %1021 = vmatprep.mubr.f32.mxu0 0.0
    %1022 = vmatmul.mubr.f32.gmra.mrb[0].mxu0 %v952
    %v1023 = vpop.f32.mrb[0].mxu0
    %v1024 = vadd.f32 0.0, %v1023
    %v1025 = vpop.f32.mrb[0].mxu0
    %1026 = vmatprep.mubr.f32.mxu0 0.0
    %1027 = vmatmul.mubr.f32.gmra.mrb[0].mxu0 %v955
    %v1028 = vpop.f32.mrb[0].mxu0
    %v1029 = vadd.f32 0.0, %v1028
    %v1030 = vpop.f32.mrb[0].mxu0
    %1031 = vdwg.mxu0
    %v1032 = vadd.f32 %v942, %v1024
    %v1033 = vadd.f32 %v943, %v1029
    %s1034 = scalar_lea.vmem %s2, 1
    %v1035 = vld [vmem:[%s1034] sm:$0x1]
    %v1037 = vlaneseq
    %v1038 = vshrl.u32 %v1037, 7
    %v1039 = vsub.s32 0, %v1038
    %v1040 = vrot.slane %v1035, %v1039
    %v1042 = vadd.f32 %v1032, %v1040
    %v1043 = vadd.f32 %v1033, %v1040
    %v1044 = vmax.f32 %v1042, 0.0
    %v1045 = vmax.f32 %v1043, 0.0
    %1046 = vst.msk [vmem:[#allocation2 + $0x8] sm:$0xff] %vm118, %v1044
    %1047 = vst.msk [vmem:[#allocation2 + $0x10] sm:$0x1] %vm128, %v1045
    %v1048 = vld [vmem:[#allocation2 + $0x6] sm:$0xff]
    %v1049 = vld [vmem:[#allocation2 + $0xe] sm:$0x1]
    %s1050 = scalar_lea.vmem [#allocation6], 320
    %v1051 = vld [vmem:[%s1050] sm:$0xff]
    %v1052 = vld [vmem:[%s1050 + $0x8] sm:$0xff]
    %v1053 = vld [vmem:[%s1050 + $0x10] sm:$0xff]
    %v1054 = vld [vmem:[%s1050 + $0x18] sm:$0xff]
    %v1055 = vld [vmem:[#allocation2 + $0x7] sm:$0xff]
    %v1056 = vld [vmem:[#allocation2 + $0xf] sm:$0x1]
    %s1057 = scalar_lea.vmem [#allocation6], 352
    %v1058 = vld [vmem:[%s1057] sm:$0xff]
    %v1059 = vld [vmem:[%s1057 + $0x8] sm:$0xff]
    %v1060 = vld [vmem:[%s1057 + $0x10] sm:$0xff]
    %v1061 = vld [vmem:[%s1057 + $0x18] sm:$0xff]
    %v1063 = vsel %vm118, %v1055, 0
    %v1066 = vsel %vm118, %v1056, 0
    %1068 = vmatprep.subr.mxu0 0.0
    %1069 = vmatpush1.msra.mxu0 %v1058
    %1070 = vmatprep.subr.mxu0 0.0
    %1071 = vmatpush1.msra.mxu0 %v1059
    %1072 = vmatprep.subr.mxu0 0.0
    %1073 = vmatpush1.msra.mxu0 %v1060
    %1074 = vmatprep.subr.mxu0 0.0
    %1075 = vmatpush1.msra.mxu0 %v1061
    %1076 = vmatprep.subr.mxu0 0.0
    %1077 = vmatpush1.msra.mxu0 0.0
    %1078 = vmatprep.subr.mxu0 0.0
    %1079 = vmatpush1.msra.mxu0 0.0
    %1080 = vmatprep.subr.mxu0 0.0
    %1081 = vmatpush1.msra.mxu0 0.0
    %1082 = vmatprep.subr.mxu0 0.0
    %1083 = vmatpush1.msra.mxu0 0.0
    %1084 = vmatprep.subr.mxu0 0.0
    %1085 = vmatpush1.msra.mxu0 0.0
    %1086 = vmatprep.subr.mxu0 0.0
    %1087 = vmatpush1.msra.mxu0 0.0
    %1088 = vmatprep.subr.mxu0 0.0
    %1089 = vmatpush1.msra.mxu0 0.0
    %1090 = vmatprep.subr.mxu0 0.0
    %1091 = vmatpush1.msra.mxu0 0.0
    %1092 = vmatprep.subr.mxu0 0.0
    %1093 = vmatpush1.msra.mxu0 0.0
    %1094 = vmatprep.subr.mxu0 0.0
    %1095 = vmatpush1.msra.mxu0 0.0
    %1096 = vmatprep.subr.mxu0 0.0
    %1097 = vmatpush1.msra.mxu0 0.0
    %1098 = vmatprep.subr.mxu0 0.0
    %1099 = vmatpush1.msra.mxu0 0.0
    %1100 = vmatprep.subr.mxu0 0.0
    %1101 = vmatpush1.msra.mxu0 0.0
    %1102 = vmatprep.subr.mxu0 0.0
    %1103 = vmatpush1.msra.mxu0 0.0
    %1104 = vmatprep.subr.mxu0 0.0
    %1105 = vmatpush1.msra.mxu0 0.0
    %1106 = vmatprep.subr.mxu0 0.0
    %1107 = vmatpush1.msra.mxu0 0.0
    %1108 = vmatprep.subr.mxu0 0.0
    %1109 = vmatpush1.msra.mxu0 0.0
    %1110 = vmatprep.subr.mxu0 0.0
    %1111 = vmatpush1.msra.mxu0 0.0
    %1112 = vmatprep.subr.mxu0 0.0
    %1113 = vmatpush1.msra.mxu0 0.0
    %1114 = vmatprep.subr.mxu0 0.0
    %1115 = vmatpush1.msra.mxu0 0.0
    %1116 = vmatprep.subr.mxu0 0.0
    %1117 = vmatpush1.msra.mxu0 0.0
    %1118 = vmatprep.subr.mxu0 0.0
    %1119 = vmatpush1.msra.mxu0 0.0
    %1120 = vmatprep.subr.mxu0 0.0
    %1121 = vmatpush1.msra.mxu0 0.0
    %1122 = vmatprep.subr.mxu0 0.0
    %1123 = vmatpush1.msra.mxu0 0.0
    %1124 = vmatprep.subr.mxu0 0.0
    %1125 = vmatpush1.msra.mxu0 0.0
    %1126 = vmatprep.subr.mxu0 0.0
    %1127 = vmatpush1.msra.mxu0 0.0
    %1128 = vmatprep.subr.mxu0 0.0
    %1129 = vmatpush1.msra.mxu0 0.0
    %1130 = vmatprep.subr.mxu0 0.0
    %1131 = vmatpush1.msra.mxu0 0.0
    %1132 = vmatprep.mubr.f32.mxu0 0.0
    %1133 = vmatmul.mubr.f32.gmra.mrb[0].mxu0 %v1063
    %v1134 = vpop.f32.mrb[0].mxu0
    %v1135 = vadd.f32 0.0, %v1134
    %v1136 = vpop.f32.mrb[0].mxu0
    %1137 = vmatprep.mubr.f32.mxu0 0.0
    %1138 = vmatmul.mubr.f32.gmra.mrb[0].mxu0 %v1066
    %v1139 = vpop.f32.mrb[0].mxu0
    %v1140 = vadd.f32 0.0, %v1139
    %v1141 = vpop.f32.mrb[0].mxu0
    %1142 = vdwg.mxu0
    %v1144 = vsel %vm118, %v1048, 0
    %v1147 = vsel %vm118, %v1049, 0
    %1149 = vmatprep.subr.mxu0 0.0
    %1150 = vmatpush1.msra.mxu0 %v1051
    %1151 = vmatprep.subr.mxu0 0.0
    %1152 = vmatpush1.msra.mxu0 %v1052
    %1153 = vmatprep.subr.mxu0 0.0
    %1154 = vmatpush1.msra.mxu0 %v1053
    %1155 = vmatprep.subr.mxu0 0.0
    %1156 = vmatpush1.msra.mxu0 %v1054
    %1157 = vmatprep.subr.mxu0 0.0
    %1158 = vmatpush1.msra.mxu0 0.0
    %1159 = vmatprep.subr.mxu0 0.0
    %1160 = vmatpush1.msra.mxu0 0.0
    %1161 = vmatprep.subr.mxu0 0.0
    %1162 = vmatpush1.msra.mxu0 0.0
    %1163 = vmatprep.subr.mxu0 0.0
    %1164 = vmatpush1.msra.mxu0 0.0
    %1165 = vmatprep.subr.mxu0 0.0
    %1166 = vmatpush1.msra.mxu0 0.0
    %1167 = vmatprep.subr.mxu0 0.0
    %1168 = vmatpush1.msra.mxu0 0.0
    %1169 = vmatprep.subr.mxu0 0.0
    %1170 = vmatpush1.msra.mxu0 0.0
    %1171 = vmatprep.subr.mxu0 0.0
    %1172 = vmatpush1.msra.mxu0 0.0
    %1173 = vmatprep.subr.mxu0 0.0
    %1174 = vmatpush1.msra.mxu0 0.0
    %1175 = vmatprep.subr.mxu0 0.0
    %1176 = vmatpush1.msra.mxu0 0.0
    %1177 = vmatprep.subr.mxu0 0.0
    %1178 = vmatpush1.msra.mxu0 0.0
    %1179 = vmatprep.subr.mxu0 0.0
    %1180 = vmatpush1.msra.mxu0 0.0
    %1181 = vmatprep.subr.mxu0 0.0
    %1182 = vmatpush1.msra.mxu0 0.0
    %1183 = vmatprep.subr.mxu0 0.0
    %1184 = vmatpush1.msra.mxu0 0.0
    %1185 = vmatprep.subr.mxu0 0.0
    %1186 = vmatpush1.msra.mxu0 0.0
    %1187 = vmatprep.subr.mxu0 0.0
    %1188 = vmatpush1.msra.mxu0 0.0
    %1189 = vmatprep.subr.mxu0 0.0
    %1190 = vmatpush1.msra.mxu0 0.0
    %1191 = vmatprep.subr.mxu0 0.0
    %1192 = vmatpush1.msra.mxu0 0.0
    %1193 = vmatprep.subr.mxu0 0.0
    %1194 = vmatpush1.msra.mxu0 0.0
    %1195 = vmatprep.subr.mxu0 0.0
    %1196 = vmatpush1.msra.mxu0 0.0
    %1197 = vmatprep.subr.mxu0 0.0
    %1198 = vmatpush1.msra.mxu0 0.0
    %1199 = vmatprep.subr.mxu0 0.0
    %1200 = vmatpush1.msra.mxu0 0.0
    %1201 = vmatprep.subr.mxu0 0.0
    %1202 = vmatpush1.msra.mxu0 0.0
    %1203 = vmatprep.subr.mxu0 0.0
    %1204 = vmatpush1.msra.mxu0 0.0
    %1205 = vmatprep.subr.mxu0 0.0
    %1206 = vmatpush1.msra.mxu0 0.0
    %1207 = vmatprep.subr.mxu0 0.0
    %1208 = vmatpush1.msra.mxu0 0.0
    %1209 = vmatprep.subr.mxu0 0.0
    %1210 = vmatpush1.msra.mxu0 0.0
    %1211 = vmatprep.subr.mxu0 0.0
    %1212 = vmatpush1.msra.mxu0 0.0
    %1213 = vmatprep.mubr.f32.mxu0 0.0
    %1214 = vmatmul.mubr.f32.gmra.mrb[0].mxu0 %v1144
    %v1215 = vpop.f32.mrb[0].mxu0
    %v1216 = vadd.f32 %v1135, %v1215
    %v1217 = vpop.f32.mrb[0].mxu0
    %1218 = vmatprep.mubr.f32.mxu0 0.0
    %1219 = vmatmul.mubr.f32.gmra.mrb[0].mxu0 %v1147
    %v1220 = vpop.f32.mrb[0].mxu0
    %v1221 = vadd.f32 %v1140, %v1220
    %v1222 = vpop.f32.mrb[0].mxu0
    %1223 = vdwg.mxu0
    %v1224 = vld [vmem:[#allocation2 + $0x8] sm:$0xff]
    %v1225 = vld [vmem:[#allocation2 + $0x10] sm:$0x1]
    %s1226 = scalar_lea.vmem [#allocation6], 384
    %v1227 = vld [vmem:[%s1226] sm:$0xff]
    %v1228 = vld [vmem:[%s1226 + $0x8] sm:$0xff]
    %v1229 = vld [vmem:[%s1226 + $0x10] sm:$0xff]
    %v1230 = vld [vmem:[%s1226 + $0x18] sm:$0xff]
    %v1232 = vsel %vm118, %v1224, 0
    %v1235 = vsel %vm118, %v1225, 0
    %1237 = vmatprep.subr.mxu0 0.0
    %1238 = vmatpush1.msra.mxu0 %v1227
    %1239 = vmatprep.subr.mxu0 0.0
    %1240 = vmatpush1.msra.mxu0 %v1228
    %1241 = vmatprep.subr.mxu0 0.0
    %1242 = vmatpush1.msra.mxu0 %v1229
    %1243 = vmatprep.subr.mxu0 0.0
    %1244 = vmatpush1.msra.mxu0 %v1230
    %1245 = vmatprep.subr.mxu0 0.0
    %1246 = vmatpush1.msra.mxu0 0.0
    %1247 = vmatprep.subr.mxu0 0.0
    %1248 = vmatpush1.msra.mxu0 0.0
    %1249 = vmatprep.subr.mxu0 0.0
    %1250 = vmatpush1.msra.mxu0 0.0
    %1251 = vmatprep.subr.mxu0 0.0
    %1252 = vmatpush1.msra.mxu0 0.0
    %1253 = vmatprep.subr.mxu0 0.0
    %1254 = vmatpush1.msra.mxu0 0.0
    %1255 = vmatprep.subr.mxu0 0.0
    %1256 = vmatpush1.msra.mxu0 0.0
    %1257 = vmatprep.subr.mxu0 0.0
    %1258 = vmatpush1.msra.mxu0 0.0
    %1259 = vmatprep.subr.mxu0 0.0
    %1260 = vmatpush1.msra.mxu0 0.0
    %1261 = vmatprep.subr.mxu0 0.0
    %1262 = vmatpush1.msra.mxu0 0.0
    %1263 = vmatprep.subr.mxu0 0.0
    %1264 = vmatpush1.msra.mxu0 0.0
    %1265 = vmatprep.subr.mxu0 0.0
    %1266 = vmatpush1.msra.mxu0 0.0
    %1267 = vmatprep.subr.mxu0 0.0
    %1268 = vmatpush1.msra.mxu0 0.0
    %1269 = vmatprep.subr.mxu0 0.0
    %1270 = vmatpush1.msra.mxu0 0.0
    %1271 = vmatprep.subr.mxu0 0.0
    %1272 = vmatpush1.msra.mxu0 0.0
    %1273 = vmatprep.subr.mxu0 0.0
    %1274 = vmatpush1.msra.mxu0 0.0
    %1275 = vmatprep.subr.mxu0 0.0
    %1276 = vmatpush1.msra.mxu0 0.0
    %1277 = vmatprep.subr.mxu0 0.0
    %1278 = vmatpush1.msra.mxu0 0.0
    %1279 = vmatprep.subr.mxu0 0.0
    %1280 = vmatpush1.msra.mxu0 0.0
    %1281 = vmatprep.subr.mxu0 0.0
    %1282 = vmatpush1.msra.mxu0 0.0
    %1283 = vmatprep.subr.mxu0 0.0
    %1284 = vmatpush1.msra.mxu0 0.0
    %1285 = vmatprep.subr.mxu0 0.0
    %1286 = vmatpush1.msra.mxu0 0.0
    %1287 = vmatprep.subr.mxu0 0.0
    %1288 = vmatpush1.msra.mxu0 0.0
    %1289 = vmatprep.subr.mxu0 0.0
    %1290 = vmatpush1.msra.mxu0 0.0
    %1291 = vmatprep.subr.mxu0 0.0
    %1292 = vmatpush1.msra.mxu0 0.0
    %1293 = vmatprep.subr.mxu0 0.0
    %1294 = vmatpush1.msra.mxu0 0.0
    %1295 = vmatprep.subr.mxu0 0.0
    %1296 = vmatpush1.msra.mxu0 0.0
    %1297 = vmatprep.subr.mxu0 0.0
    %1298 = vmatpush1.msra.mxu0 0.0
    %1299 = vmatprep.subr.mxu0 0.0
    %1300 = vmatpush1.msra.mxu0 0.0
    %1301 = vmatprep.mubr.f32.mxu0 0.0
    %1302 = vmatmul.mubr.f32.gmra.mrb[0].mxu0 %v1232
    %v1303 = vpop.f32.mrb[0].mxu0
    %v1304 = vadd.f32 0.0, %v1303
    %v1305 = vpop.f32.mrb[0].mxu0
    %1306 = vmatprep.mubr.f32.mxu0 0.0
    %1307 = vmatmul.mubr.f32.gmra.mrb[0].mxu0 %v1235
    %v1308 = vpop.f32.mrb[0].mxu0
    %v1309 = vadd.f32 0.0, %v1308
    %v1310 = vpop.f32.mrb[0].mxu0
    %1311 = vdwg.mxu0
    %v1312 = vadd.f32 %v1216, %v1304
    %v1313 = vadd.f32 %v1221, %v1309
    %v1314 = vld [vmem:[#allocation2 + $0x9] sm:$0xff]
    %v1315 = vld [vmem:[#allocation2 + $0x11] sm:$0x1]
    %s1316 = scalar_lea.vmem [#allocation6], 416
    %v1317 = vld [vmem:[%s1316] sm:$0xff]
    %v1318 = vld [vmem:[%s1316 + $0x8] sm:$0xff]
    %v1319 = vld [vmem:[%s1316 + $0x10] sm:$0xff]
    %v1320 = vld [vmem:[%s1316 + $0x18] sm:$0xff]
    %v1322 = vsel %vm118, %v1314, 0
    %v1325 = vsel %vm118, %v1315, 0
    %1327 = vmatprep.subr.mxu0 0.0
    %1328 = vmatpush1.msra.mxu0 %v1317
    %1329 = vmatprep.subr.mxu0 0.0
    %1330 = vmatpush1.msra.mxu0 %v1318
    %1331 = vmatprep.subr.mxu0 0.0
    %1332 = vmatpush1.msra.mxu0 %v1319
    %1333 = vmatprep.subr.mxu0 0.0
    %1334 = vmatpush1.msra.mxu0 %v1320
    %1335 = vmatprep.subr.mxu0 0.0
    %1336 = vmatpush1.msra.mxu0 0.0
    %1337 = vmatprep.subr.mxu0 0.0
    %1338 = vmatpush1.msra.mxu0 0.0
    %1339 = vmatprep.subr.mxu0 0.0
    %1340 = vmatpush1.msra.mxu0 0.0
    %1341 = vmatprep.subr.mxu0 0.0
    %1342 = vmatpush1.msra.mxu0 0.0
    %1343 = vmatprep.subr.mxu0 0.0
    %1344 = vmatpush1.msra.mxu0 0.0
    %1345 = vmatprep.subr.mxu0 0.0
    %1346 = vmatpush1.msra.mxu0 0.0
    %1347 = vmatprep.subr.mxu0 0.0
    %1348 = vmatpush1.msra.mxu0 0.0
    %1349 = vmatprep.subr.mxu0 0.0
    %1350 = vmatpush1.msra.mxu0 0.0
    %1351 = vmatprep.subr.mxu0 0.0
    %1352 = vmatpush1.msra.mxu0 0.0
    %1353 = vmatprep.subr.mxu0 0.0
    %1354 = vmatpush1.msra.mxu0 0.0
    %1355 = vmatprep.subr.mxu0 0.0
    %1356 = vmatpush1.msra.mxu0 0.0
    %1357 = vmatprep.subr.mxu0 0.0
    %1358 = vmatpush1.msra.mxu0 0.0
    %1359 = vmatprep.subr.mxu0 0.0
    %1360 = vmatpush1.msra.mxu0 0.0
    %1361 = vmatprep.subr.mxu0 0.0
    %1362 = vmatpush1.msra.mxu0 0.0
    %1363 = vmatprep.subr.mxu0 0.0
    %1364 = vmatpush1.msra.mxu0 0.0
    %1365 = vmatprep.subr.mxu0 0.0
    %1366 = vmatpush1.msra.mxu0 0.0
    %1367 = vmatprep.subr.mxu0 0.0
    %1368 = vmatpush1.msra.mxu0 0.0
    %1369 = vmatprep.subr.mxu0 0.0
    %1370 = vmatpush1.msra.mxu0 0.0
    %1371 = vmatprep.subr.mxu0 0.0
    %1372 = vmatpush1.msra.mxu0 0.0
    %1373 = vmatprep.subr.mxu0 0.0
    %1374 = vmatpush1.msra.mxu0 0.0
    %1375 = vmatprep.subr.mxu0 0.0
    %1376 = vmatpush1.msra.mxu0 0.0
    %1377 = vmatprep.subr.mxu0 0.0
    %1378 = vmatpush1.msra.mxu0 0.0
    %1379 = vmatprep.subr.mxu0 0.0
    %1380 = vmatpush1.msra.mxu0 0.0
    %1381 = vmatprep.subr.mxu0 0.0
    %1382 = vmatpush1.msra.mxu0 0.0
    %1383 = vmatprep.subr.mxu0 0.0
    %1384 = vmatpush1.msra.mxu0 0.0
    %1385 = vmatprep.subr.mxu0 0.0
    %1386 = vmatpush1.msra.mxu0 0.0
    %1387 = vmatprep.subr.mxu0 0.0
    %1388 = vmatpush1.msra.mxu0 0.0
    %1389 = vmatprep.subr.mxu0 0.0
    %1390 = vmatpush1.msra.mxu0 0.0
    %1391 = vmatprep.mubr.f32.mxu0 0.0
    %1392 = vmatmul.mubr.f32.gmra.mrb[0].mxu0 %v1322
    %v1393 = vpop.f32.mrb[0].mxu0
    %v1394 = vadd.f32 0.0, %v1393
    %v1395 = vpop.f32.mrb[0].mxu0
    %1396 = vmatprep.mubr.f32.mxu0 0.0
    %1397 = vmatmul.mubr.f32.gmra.mrb[0].mxu0 %v1325
    %v1398 = vpop.f32.mrb[0].mxu0
    %v1399 = vadd.f32 0.0, %v1398
    %v1400 = vpop.f32.mrb[0].mxu0
    %1401 = vdwg.mxu0
    %v1402 = vadd.f32 %v1312, %v1394
    %v1403 = vadd.f32 %v1313, %v1399
    %v1404 = vld [vmem:[#allocation2 + $0xa] sm:$0xff]
    %v1405 = vld [vmem:[#allocation2 + $0x12] sm:$0x1]
    %s1406 = scalar_lea.vmem [#allocation6], 448
    %v1407 = vld [vmem:[%s1406] sm:$0xff]
    %v1408 = vld [vmem:[%s1406 + $0x8] sm:$0xff]
    %v1409 = vld [vmem:[%s1406 + $0x10] sm:$0xff]
    %v1410 = vld [vmem:[%s1406 + $0x18] sm:$0xff]
    %v1412 = vsel %vm118, %v1404, 0
    %v1415 = vsel %vm118, %v1405, 0
    %1417 = vmatprep.subr.mxu0 0.0
    %1418 = vmatpush1.msra.mxu0 %v1407
    %1419 = vmatprep.subr.mxu0 0.0
    %1420 = vmatpush1.msra.mxu0 %v1408
    %1421 = vmatprep.subr.mxu0 0.0
    %1422 = vmatpush1.msra.mxu0 %v1409
    %1423 = vmatprep.subr.mxu0 0.0
    %1424 = vmatpush1.msra.mxu0 %v1410
    %1425 = vmatprep.subr.mxu0 0.0
    %1426 = vmatpush1.msra.mxu0 0.0
    %1427 = vmatprep.subr.mxu0 0.0
    %1428 = vmatpush1.msra.mxu0 0.0
    %1429 = vmatprep.subr.mxu0 0.0
    %1430 = vmatpush1.msra.mxu0 0.0
    %1431 = vmatprep.subr.mxu0 0.0
    %1432 = vmatpush1.msra.mxu0 0.0
    %1433 = vmatprep.subr.mxu0 0.0
    %1434 = vmatpush1.msra.mxu0 0.0
    %1435 = vmatprep.subr.mxu0 0.0
    %1436 = vmatpush1.msra.mxu0 0.0
    %1437 = vmatprep.subr.mxu0 0.0
    %1438 = vmatpush1.msra.mxu0 0.0
    %1439 = vmatprep.subr.mxu0 0.0
    %1440 = vmatpush1.msra.mxu0 0.0
    %1441 = vmatprep.subr.mxu0 0.0
    %1442 = vmatpush1.msra.mxu0 0.0
    %1443 = vmatprep.subr.mxu0 0.0
    %1444 = vmatpush1.msra.mxu0 0.0
    %1445 = vmatprep.subr.mxu0 0.0
    %1446 = vmatpush1.msra.mxu0 0.0
    %1447 = vmatprep.subr.mxu0 0.0
    %1448 = vmatpush1.msra.mxu0 0.0
    %1449 = vmatprep.subr.mxu0 0.0
    %1450 = vmatpush1.msra.mxu0 0.0
    %1451 = vmatprep.subr.mxu0 0.0
    %1452 = vmatpush1.msra.mxu0 0.0
    %1453 = vmatprep.subr.mxu0 0.0
    %1454 = vmatpush1.msra.mxu0 0.0
    %1455 = vmatprep.subr.mxu0 0.0
    %1456 = vmatpush1.msra.mxu0 0.0
    %1457 = vmatprep.subr.mxu0 0.0
    %1458 = vmatpush1.msra.mxu0 0.0
    %1459 = vmatprep.subr.mxu0 0.0
    %1460 = vmatpush1.msra.mxu0 0.0
    %1461 = vmatprep.subr.mxu0 0.0
    %1462 = vmatpush1.msra.mxu0 0.0
    %1463 = vmatprep.subr.mxu0 0.0
    %1464 = vmatpush1.msra.mxu0 0.0
    %1465 = vmatprep.subr.mxu0 0.0
    %1466 = vmatpush1.msra.mxu0 0.0
    %1467 = vmatprep.subr.mxu0 0.0
    %1468 = vmatpush1.msra.mxu0 0.0
    %1469 = vmatprep.subr.mxu0 0.0
    %1470 = vmatpush1.msra.mxu0 0.0
    %1471 = vmatprep.subr.mxu0 0.0
    %1472 = vmatpush1.msra.mxu0 0.0
    %1473 = vmatprep.subr.mxu0 0.0
    %1474 = vmatpush1.msra.mxu0 0.0
    %1475 = vmatprep.subr.mxu0 0.0
    %1476 = vmatpush1.msra.mxu0 0.0
    %1477 = vmatprep.subr.mxu0 0.0
    %1478 = vmatpush1.msra.mxu0 0.0
    %1479 = vmatprep.subr.mxu0 0.0
    %1480 = vmatpush1.msra.mxu0 0.0
    %1481 = vmatprep.mubr.f32.mxu0 0.0
    %1482 = vmatmul.mubr.f32.gmra.mrb[0].mxu0 %v1412
    %v1483 = vpop.f32.mrb[0].mxu0
    %v1484 = vadd.f32 0.0, %v1483
    %v1485 = vpop.f32.mrb[0].mxu0
    %1486 = vmatprep.mubr.f32.mxu0 0.0
    %1487 = vmatmul.mubr.f32.gmra.mrb[0].mxu0 %v1415
    %v1488 = vpop.f32.mrb[0].mxu0
    %v1489 = vadd.f32 0.0, %v1488
    %v1490 = vpop.f32.mrb[0].mxu0
    %1491 = vdwg.mxu0
    %v1492 = vadd.f32 %v1402, %v1484
    %v1493 = vadd.f32 %v1403, %v1489
    %s1494 = scalar_lea.vmem %s2, 2
    %v1495 = vld [vmem:[%s1494] sm:$0x1]
    %v1497 = vlaneseq
    %v1498 = vshrl.u32 %v1497, 7
    %v1499 = vsub.s32 0, %v1498
    %v1500 = vrot.slane %v1495, %v1499
    %v1502 = vadd.f32 %v1492, %v1500
    %v1503 = vadd.f32 %v1493, %v1500
    %v1504 = vmax.f32 %v1502, 0.0
    %v1505 = vmax.f32 %v1503, 0.0
    %v1506 = vld [vmem:[%s3] sm:$0xff]
    %v1507 = vld [vmem:[%s3 + $0x8] sm:$0xff]
    %v1508 = vld [vmem:[%s3 + $0x10] sm:$0xff]
    %v1509 = vld [vmem:[%s3 + $0x18] sm:$0xff]
    %v1510 = vld [vmem:[%s4] sm:$0x1]
    %v1512 = vlaneseq
    %v1513 = vshrl.u32 %v1512, 7
    %v1514 = vsub.s32 0, %v1513
    %v1515 = vrot.slane %v1510, %v1514
    %v1518 = vsel %vm118, %v1504, 0
    %v1521 = vsel %vm118, %v1505, 0
    %1523 = vmatprep.subr.mxu0 0.0
    %1524 = vmatpush1.msra.mxu0 %v1506
    %1525 = vmatprep.subr.mxu0 0.0
    %1526 = vmatpush1.msra.mxu0 %v1507
    %1527 = vmatprep.subr.mxu0 0.0
    %1528 = vmatpush1.msra.mxu0 %v1508
    %1529 = vmatprep.subr.mxu0 0.0
    %1530 = vmatpush1.msra.mxu0 %v1509
    %1531 = vmatprep.subr.mxu0 0.0
    %1532 = vmatpush1.msra.mxu0 0.0
    %1533 = vmatprep.subr.mxu0 0.0
    %1534 = vmatpush1.msra.mxu0 0.0
    %1535 = vmatprep.subr.mxu0 0.0
    %1536 = vmatpush1.msra.mxu0 0.0
    %1537 = vmatprep.subr.mxu0 0.0
    %1538 = vmatpush1.msra.mxu0 0.0
    %1539 = vmatprep.subr.mxu0 0.0
    %1540 = vmatpush1.msra.mxu0 0.0
    %1541 = vmatprep.subr.mxu0 0.0
    %1542 = vmatpush1.msra.mxu0 0.0
    %1543 = vmatprep.subr.mxu0 0.0
    %1544 = vmatpush1.msra.mxu0 0.0
    %1545 = vmatprep.subr.mxu0 0.0
    %1546 = vmatpush1.msra.mxu0 0.0
    %1547 = vmatprep.subr.mxu0 0.0
    %1548 = vmatpush1.msra.mxu0 0.0
    %1549 = vmatprep.subr.mxu0 0.0
    %1550 = vmatpush1.msra.mxu0 0.0
    %1551 = vmatprep.subr.mxu0 0.0
    %1552 = vmatpush1.msra.mxu0 0.0
    %1553 = vmatprep.subr.mxu0 0.0
    %1554 = vmatpush1.msra.mxu0 0.0
    %1555 = vmatprep.subr.mxu0 0.0
    %1556 = vmatpush1.msra.mxu0 0.0
    %1557 = vmatprep.subr.mxu0 0.0
    %1558 = vmatpush1.msra.mxu0 0.0
    %1559 = vmatprep.subr.mxu0 0.0
    %1560 = vmatpush1.msra.mxu0 0.0
    %1561 = vmatprep.subr.mxu0 0.0
    %1562 = vmatpush1.msra.mxu0 0.0
    %1563 = vmatprep.subr.mxu0 0.0
    %1564 = vmatpush1.msra.mxu0 0.0
    %1565 = vmatprep.subr.mxu0 0.0
    %1566 = vmatpush1.msra.mxu0 0.0
    %1567 = vmatprep.subr.mxu0 0.0
    %1568 = vmatpush1.msra.mxu0 0.0
    %1569 = vmatprep.subr.mxu0 0.0
    %1570 = vmatpush1.msra.mxu0 0.0
    %1571 = vmatprep.subr.mxu0 0.0
    %1572 = vmatpush1.msra.mxu0 0.0
    %1573 = vmatprep.subr.mxu0 0.0
    %1574 = vmatpush1.msra.mxu0 0.0
    %1575 = vmatprep.subr.mxu0 0.0
    %1576 = vmatpush1.msra.mxu0 0.0
    %1577 = vmatprep.subr.mxu0 0.0
    %1578 = vmatpush1.msra.mxu0 0.0
    %1579 = vmatprep.subr.mxu0 0.0
    %1580 = vmatpush1.msra.mxu0 0.0
    %1581 = vmatprep.subr.mxu0 0.0
    %1582 = vmatpush1.msra.mxu0 0.0
    %1583 = vmatprep.subr.mxu0 0.0
    %1584 = vmatpush1.msra.mxu0 0.0
    %1585 = vmatprep.subr.mxu0 0.0
    %1586 = vmatpush1.msra.mxu0 0.0
    %1587 = vmatprep.mubr.f32.mxu0 0.0
    %1588 = vmatmul.mubr.f32.gmra.mrb[0].mxu0 %v1518
    %v1589 = vpop.f32.mrb[0].mxu0
    %v1590 = vadd.f32 %v1515, %v1589
    %v1591 = vpop.f32.mrb[0].mxu0
    %1592 = vmatprep.mubr.f32.mxu0 0.0
    %1593 = vmatmul.mubr.f32.gmra.mrb[0].mxu0 %v1521
    %v1594 = vpop.f32.mrb[0].mxu0
    %v1595 = vadd.f32 %v1515, %v1594
    %v1596 = vpop.f32.mrb[0].mxu0
    %1597 = vdwg.mxu0
    %v1598 = vld [vmem:[%s5] sm:$0xff]
    %v1599 = vld [vmem:[%s5 + $0x8] sm:$0xff]
    %v1600 = vld [vmem:[%s5 + $0x10] sm:$0xff]
    %v1601 = vld [vmem:[%s5 + $0x18] sm:$0xff]
    %v1603 = vsel %vm118, 0.0, 0
    %1605 = vmatprep.subr.mxu0 0.0
    %1606 = vmatpush1.msra.mxu0 %v1598
    %1607 = vmatprep.subr.mxu0 0.0
    %1608 = vmatpush1.msra.mxu0 %v1599
    %1609 = vmatprep.subr.mxu0 0.0
    %1610 = vmatpush1.msra.mxu0 %v1600
    %1611 = vmatprep.subr.mxu0 0.0
    %1612 = vmatpush1.msra.mxu0 %v1601
    %1613 = vmatprep.subr.mxu0 0.0
    %1614 = vmatpush1.msra.mxu0 0.0
    %1615 = vmatprep.subr.mxu0 0.0
    %1616 = vmatpush1.msra.mxu0 0.0
    %1617 = vmatprep.subr.mxu0 0.0
    %1618 = vmatpush1.msra.mxu0 0.0
    %1619 = vmatprep.subr.mxu0 0.0
    %1620 = vmatpush1.msra.mxu0 0.0
    %1621 = vmatprep.subr.mxu0 0.0
    %1622 = vmatpush1.msra.mxu0 0.0
    %1623 = vmatprep.subr.mxu0 0.0
    %1624 = vmatpush1.msra.mxu0 0.0
    %1625 = vmatprep.subr.mxu0 0.0
    %1626 = vmatpush1.msra.mxu0 0.0
    %1627 = vmatprep.subr.mxu0 0.0
    %1628 = vmatpush1.msra.mxu0 0.0
    %1629 = vmatprep.subr.mxu0 0.0
    %1630 = vmatpush1.msra.mxu0 0.0
    %1631 = vmatprep.subr.mxu0 0.0
    %1632 = vmatpush1.msra.mxu0 0.0
    %1633 = vmatprep.subr.mxu0 0.0
    %1634 = vmatpush1.msra.mxu0 0.0
    %1635 = vmatprep.subr.mxu0 0.0
    %1636 = vmatpush1.msra.mxu0 0.0
    %1637 = vmatprep.subr.mxu0 0.0
    %1638 = vmatpush1.msra.mxu0 0.0
    %1639 = vmatprep.subr.mxu0 0.0
    %1640 = vmatpush1.msra.mxu0 0.0
    %1641 = vmatprep.subr.mxu0 0.0
    %1642 = vmatpush1.msra.mxu0 0.0
    %1643 = vmatprep.subr.mxu0 0.0
    %1644 = vmatpush1.msra.mxu0 0.0
    %1645 = vmatprep.subr.mxu0 0.0
    %1646 = vmatpush1.msra.mxu0 0.0
    %1647 = vmatprep.subr.mxu0 0.0
    %1648 = vmatpush1.msra.mxu0 0.0
    %1649 = vmatprep.subr.mxu0 0.0
    %1650 = vmatpush1.msra.mxu0 0.0
    %1651 = vmatprep.subr.mxu0 0.0
    %1652 = vmatpush1.msra.mxu0 0.0
    %1653 = vmatprep.subr.mxu0 0.0
    %1654 = vmatpush1.msra.mxu0 0.0
    %1655 = vmatprep.subr.mxu0 0.0
    %1656 = vmatpush1.msra.mxu0 0.0
    %1657 = vmatprep.subr.mxu0 0.0
    %1658 = vmatpush1.msra.mxu0 0.0
    %1659 = vmatprep.subr.mxu0 0.0
    %1660 = vmatpush1.msra.mxu0 0.0
    %1661 = vmatprep.subr.mxu0 0.0
    %1662 = vmatpush1.msra.mxu0 0.0
    %1663 = vmatprep.subr.mxu0 0.0
    %1664 = vmatpush1.msra.mxu0 0.0
    %1665 = vmatprep.subr.mxu0 0.0
    %1666 = vmatpush1.msra.mxu0 0.0
    %1667 = vmatprep.subr.mxu0 0.0
    %1668 = vmatpush1.msra.mxu0 0.0
    %1669 = vmatprep.mubr.f32.mxu0 0.0
    %1670 = vmatmul.mubr.f32.gmra.mrb[0].mxu0 %v1603
    %v1671 = vpop.f32.mrb[0].mxu0
    %v1672 = vadd.f32 0.0, %v1671
    %v1673 = vpop.f32.mrb[0].mxu0
    %1674 = vdwg.mxu0
    %v1675 = vadd.f32 %v1590, %v1672
    %v1676 = vadd.f32 %v1595, %v1672
    %v1677 = vxor.u32 %v1675, 2147483648
    %v1678 = vmul.f32 %v1677, 1.442695
    %v1679 = vpow.pop %v1678
    %v1680 = vadd.f32 %v1679, 1.0
    %v1681 = vrcp.pop %v1680
    %v1682 = vmul.f32 1.0, %v1681
    %v1683 = vtanh.pop %v1675
    %v1684 = vmul.f32 %v1682, 0.0
    %1686 = vrot.lane.b32.xlu0 %v1683, 96
    %v1687 = vpop.permute.xlu0 %1686
    %v1689 = vmul.f32 %v1682, %v1687
    %1691 = vrot.lane.b32.xlu0 %v1689, 16
    %v1692 = vpop.permute.xlu0 %1691
    %v1694 = vadd.f32 %v1684, %v1692
    %v1695 = vtanh.pop %v1694
    %1697 = vrot.lane.b32.xlu0 %v1695, 32
    %v1698 = vpop.permute.xlu0 %1697
    %v1700 = vmul.f32 %v1682, %v1698
    %v1701 = vxor.u32 %v1676, 2147483648
    %v1702 = vmul.f32 %v1701, 1.442695
    %v1703 = vpow.pop %v1702
    %v1704 = vadd.f32 %v1703, 1.0
    %v1705 = vrcp.pop %v1704
    %v1706 = vmul.f32 1.0, %v1705
    %v1707 = vtanh.pop %v1676
    %v1708 = vmul.f32 %v1706, 0.0
    %1710 = vrot.lane.b32.xlu0 %v1707, 96
    %v1711 = vpop.permute.xlu0 %1710
    %v1713 = vmul.f32 %v1706, %v1711
    %1715 = vrot.lane.b32.xlu0 %v1713, 16
    %v1716 = vpop.permute.xlu0 %1715
    %v1718 = vadd.f32 %v1708, %v1716
    %v1719 = vtanh.pop %v1718
    %1721 = vrot.lane.b32.xlu0 %v1719, 32
    %v1722 = vpop.permute.xlu0 %1721
    %v1724 = vmul.f32 %v1706, %v1722
    %1726 = vrot.lane.b32.xlu0 %v1700, 80
    %v1727 = vpop.permute.xlu0 %1726
    %1730 = vrot.lane.b32.xlu0 %v1724, 32
    %v1731 = vpop.permute.xlu0 %1730
    %vm1733 = vcmask 130048
    %v1734 = vsel %vm1733, %v1727, %v1731
    %v1736 = vsel %vm118, %v1734, 0
    %1738 = vmatprep.subr.mxu0 0.0
    %1739 = vmatpush1.msra.mxu0 %v1598
    %1740 = vmatprep.subr.mxu0 0.0
    %1741 = vmatpush1.msra.mxu0 %v1599
    %1742 = vmatprep.subr.mxu0 0.0
    %1743 = vmatpush1.msra.mxu0 %v1600
    %1744 = vmatprep.subr.mxu0 0.0
    %1745 = vmatpush1.msra.mxu0 %v1601
    %1746 = vmatprep.subr.mxu0 0.0
    %1747 = vmatpush1.msra.mxu0 0.0
    %1748 = vmatprep.subr.mxu0 0.0
    %1749 = vmatpush1.msra.mxu0 0.0
    %1750 = vmatprep.subr.mxu0 0.0
    %1751 = vmatpush1.msra.mxu0 0.0
    %1752 = vmatprep.subr.mxu0 0.0
    %1753 = vmatpush1.msra.mxu0 0.0
    %1754 = vmatprep.subr.mxu0 0.0
    %1755 = vmatpush1.msra.mxu0 0.0
    %1756 = vmatprep.subr.mxu0 0.0
    %1757 = vmatpush1.msra.mxu0 0.0
    %1758 = vmatprep.subr.mxu0 0.0
    %1759 = vmatpush1.msra.mxu0 0.0
    %1760 = vmatprep.subr.mxu0 0.0
    %1761 = vmatpush1.msra.mxu0 0.0
    %1762 = vmatprep.subr.mxu0 0.0
    %1763 = vmatpush1.msra.mxu0 0.0
    %1764 = vmatprep.subr.mxu0 0.0
    %1765 = vmatpush1.msra.mxu0 0.0
    %1766 = vmatprep.subr.mxu0 0.0
    %1767 = vmatpush1.msra.mxu0 0.0
    %1768 = vmatprep.subr.mxu0 0.0
    %1769 = vmatpush1.msra.mxu0 0.0
    %1770 = vmatprep.subr.mxu0 0.0
    %1771 = vmatpush1.msra.mxu0 0.0
    %1772 = vmatprep.subr.mxu0 0.0
    %1773 = vmatpush1.msra.mxu0 0.0
    %1774 = vmatprep.subr.mxu0 0.0
    %1775 = vmatpush1.msra.mxu0 0.0
    %1776 = vmatprep.subr.mxu0 0.0
    %1777 = vmatpush1.msra.mxu0 0.0
    %1778 = vmatprep.subr.mxu0 0.0
    %1779 = vmatpush1.msra.mxu0 0.0
    %1780 = vmatprep.subr.mxu0 0.0
    %1781 = vmatpush1.msra.mxu0 0.0
    %1782 = vmatprep.subr.mxu0 0.0
    %1783 = vmatpush1.msra.mxu0 0.0
    %1784 = vmatprep.subr.mxu0 0.0
    %1785 = vmatpush1.msra.mxu0 0.0
    %1786 = vmatprep.subr.mxu0 0.0
    %1787 = vmatpush1.msra.mxu0 0.0
    %1788 = vmatprep.subr.mxu0 0.0
    %1789 = vmatpush1.msra.mxu0 0.0
    %1790 = vmatprep.subr.mxu0 0.0
    %1791 = vmatpush1.msra.mxu0 0.0
    %1792 = vmatprep.subr.mxu0 0.0
    %1793 = vmatpush1.msra.mxu0 0.0
    %1794 = vmatprep.subr.mxu0 0.0
    %1795 = vmatpush1.msra.mxu0 0.0
    %1796 = vmatprep.subr.mxu0 0.0
    %1797 = vmatpush1.msra.mxu0 0.0
    %1798 = vmatprep.subr.mxu0 0.0
    %1799 = vmatpush1.msra.mxu0 0.0
    %1800 = vmatprep.subr.mxu0 0.0
    %1801 = vmatpush1.msra.mxu0 0.0
    %1802 = vmatprep.mubr.f32.mxu0 0.0
    %1803 = vmatmul.mubr.f32.gmra.mrb[0].mxu0 %v1736
    %v1804 = vpop.f32.mrb[0].mxu0
    %v1805 = vadd.f32 0.0, %v1804
    %v1806 = vpop.f32.mrb[0].mxu0
    %1807 = vdwg.mxu0
    %v1809 = vrot.slane %v1805, 7
    %v1811 = vadd.f32 %v1590, %v1809
    %v1812 = vrot.slane %v1805, 1
    %v1814 = vadd.f32 %v1590, %v1812
    %v1815 = vxor.u32 %v1811, 2147483648
    %v1816 = vmul.f32 %v1815, 1.442695
    %v1817 = vpow.pop %v1816
    %v1818 = vadd.f32 %v1817, 1.0
    %v1819 = vrcp.pop %v1818
    %v1820 = vmul.f32 1.0, %v1819
    %v1821 = vtanh.pop %v1811
    %v1823 = vrot.slane %v1694, 7
    %v1825 = vmul.f32 %v1820, %v1823
    %1827 = vrot.lane.b32.xlu0 %v1821, 96
    %v1828 = vpop.permute.xlu0 %1827
    %v1830 = vmul.f32 %v1820, %v1828
    %1832 = vrot.lane.b32.xlu0 %v1830, 16
    %v1833 = vpop.permute.xlu0 %1832
    %v1835 = vadd.f32 %v1825, %v1833
    %v1836 = vtanh.pop %v1835
    %1838 = vrot.lane.b32.xlu0 %v1836, 32
    %v1839 = vpop.permute.xlu0 %1838
    %v1841 = vmul.f32 %v1820, %v1839
    %v1842 = vxor.u32 %v1814, 2147483648
    %v1843 = vmul.f32 %v1842, 1.442695
    %v1844 = vpow.pop %v1843
    %v1845 = vadd.f32 %v1844, 1.0
    %v1846 = vrcp.pop %v1845
    %v1847 = vmul.f32 1.0, %v1846
    %v1848 = vtanh.pop %v1814
    %v1850 = vrot.slane %v1718, 1
    %v1852 = vmul.f32 %v1847, %v1850
    %1854 = vrot.lane.b32.xlu0 %v1848, 96
    %v1855 = vpop.permute.xlu0 %1854
    %v1857 = vmul.f32 %v1847, %v1855
    %1859 = vrot.lane.b32.xlu0 %v1857, 16
    %v1860 = vpop.permute.xlu0 %1859
    %v1862 = vadd.f32 %v1852, %v1860
    %v1863 = vtanh.pop %v1862
    %1865 = vrot.lane.b32.xlu0 %v1863, 32
    %v1866 = vpop.permute.xlu0 %1865
    %v1868 = vmul.f32 %v1847, %v1866
    %1870 = vrot.lane.b32.xlu0 %v1841, 80
    %v1871 = vpop.permute.xlu0 %1870
    %v1874 = vrot.slane %v1868, 6
    %1875 = vrot.lane.b32.xlu0 %v1874, 32
    %v1876 = vpop.permute.xlu0 %1875
    %v1878 = vsel %vm1733, %v1871, %v1876
    %v1880 = vrot.slane %v1878, 1
    %v1881 = vsel %vm118, %v1880, 0
    %1883 = vmatprep.subr.mxu0 0.0
    %1884 = vmatpush1.msra.mxu0 %v1598
    %1885 = vmatprep.subr.mxu0 0.0
    %1886 = vmatpush1.msra.mxu0 %v1599
    %1887 = vmatprep.subr.mxu0 0.0
    %1888 = vmatpush1.msra.mxu0 %v1600
    %1889 = vmatprep.subr.mxu0 0.0
    %1890 = vmatpush1.msra.mxu0 %v1601
    %1891 = vmatprep.subr.mxu0 0.0
    %1892 = vmatpush1.msra.mxu0 0.0
    %1893 = vmatprep.subr.mxu0 0.0
    %1894 = vmatpush1.msra.mxu0 0.0
    %1895 = vmatprep.subr.mxu0 0.0
    %1896 = vmatpush1.msra.mxu0 0.0
    %1897 = vmatprep.subr.mxu0 0.0
    %1898 = vmatpush1.msra.mxu0 0.0
    %1899 = vmatprep.subr.mxu0 0.0
    %1900 = vmatpush1.msra.mxu0 0.0
    %1901 = vmatprep.subr.mxu0 0.0
    %1902 = vmatpush1.msra.mxu0 0.0
    %1903 = vmatprep.subr.mxu0 0.0
    %1904 = vmatpush1.msra.mxu0 0.0
    %1905 = vmatprep.subr.mxu0 0.0
    %1906 = vmatpush1.msra.mxu0 0.0
    %1907 = vmatprep.subr.mxu0 0.0
    %1908 = vmatpush1.msra.mxu0 0.0
    %1909 = vmatprep.subr.mxu0 0.0
    %1910 = vmatpush1.msra.mxu0 0.0
    %1911 = vmatprep.subr.mxu0 0.0
    %1912 = vmatpush1.msra.mxu0 0.0
    %1913 = vmatprep.subr.mxu0 0.0
    %1914 = vmatpush1.msra.mxu0 0.0
    %1915 = vmatprep.subr.mxu0 0.0
    %1916 = vmatpush1.msra.mxu0 0.0
    %1917 = vmatprep.subr.mxu0 0.0
    %1918 = vmatpush1.msra.mxu0 0.0
    %1919 = vmatprep.subr.mxu0 0.0
    %1920 = vmatpush1.msra.mxu0 0.0
    %1921 = vmatprep.subr.mxu0 0.0
    %1922 = vmatpush1.msra.mxu0 0.0
    %1923 = vmatprep.subr.mxu0 0.0
    %1924 = vmatpush1.msra.mxu0 0.0
    %1925 = vmatprep.subr.mxu0 0.0
    %1926 = vmatpush1.msra.mxu0 0.0
    %1927 = vmatprep.subr.mxu0 0.0
    %1928 = vmatpush1.msra.mxu0 0.0
    %1929 = vmatprep.subr.mxu0 0.0
    %1930 = vmatpush1.msra.mxu0 0.0
    %1931 = vmatprep.subr.mxu0 0.0
    %1932 = vmatpush1.msra.mxu0 0.0
    %1933 = vmatprep.subr.mxu0 0.0
    %1934 = vmatpush1.msra.mxu0 0.0
    %1935 = vmatprep.subr.mxu0 0.0
    %1936 = vmatpush1.msra.mxu0 0.0
    %1937 = vmatprep.subr.mxu0 0.0
    %1938 = vmatpush1.msra.mxu0 0.0
    %1939 = vmatprep.subr.mxu0 0.0
    %1940 = vmatpush1.msra.mxu0 0.0
    %1941 = vmatprep.subr.mxu0 0.0
    %1942 = vmatpush1.msra.mxu0 0.0
    %1943 = vmatprep.subr.mxu0 0.0
    %1944 = vmatpush1.msra.mxu0 0.0
    %1945 = vmatprep.subr.mxu0 0.0
    %1946 = vmatpush1.msra.mxu0 0.0
    %1947 = vmatprep.mubr.f32.mxu0 0.0
    %1948 = vmatmul.mubr.f32.gmra.mrb[0].mxu0 %v1881
    %v1949 = vpop.f32.mrb[0].mxu0
    %v1950 = vadd.f32 0.0, %v1949
    %v1951 = vpop.f32.mrb[0].mxu0
    %1952 = vdwg.mxu0
    %v1954 = vrot.slane %v1950, 6
    %v1956 = vadd.f32 %v1590, %v1954
    %v1957 = vrot.slane %v1950, 2
    %v1959 = vadd.f32 %v1590, %v1957
    %v1960 = vxor.u32 %v1956, 2147483648
    %v1961 = vmul.f32 %v1960, 1.442695
    %v1962 = vpow.pop %v1961
    %v1963 = vadd.f32 %v1962, 1.0
    %v1964 = vrcp.pop %v1963
    %v1965 = vmul.f32 1.0, %v1964
    %v1966 = vtanh.pop %v1956
    %v1968 = vrot.slane %v1835, 7
    %v1970 = vmul.f32 %v1965, %v1968
    %1972 = vrot.lane.b32.xlu0 %v1966, 96
    %v1973 = vpop.permute.xlu0 %1972
    %v1975 = vmul.f32 %v1965, %v1973
    %1977 = vrot.lane.b32.xlu0 %v1975, 16
    %v1978 = vpop.permute.xlu0 %1977
    %v1980 = vadd.f32 %v1970, %v1978
    %v1981 = vtanh.pop %v1980
    %1983 = vrot.lane.b32.xlu0 %v1981, 32
    %v1984 = vpop.permute.xlu0 %1983
    %v1986 = vmul.f32 %v1965, %v1984
    %v1987 = vxor.u32 %v1959, 2147483648
    %v1988 = vmul.f32 %v1987, 1.442695
    %v1989 = vpow.pop %v1988
    %v1990 = vadd.f32 %v1989, 1.0
    %v1991 = vrcp.pop %v1990
    %v1992 = vmul.f32 1.0, %v1991
    %v1993 = vtanh.pop %v1959
    %v1995 = vrot.slane %v1862, 1
    %v1997 = vmul.f32 %v1992, %v1995
    %1999 = vrot.lane.b32.xlu0 %v1993, 96
    %v2000 = vpop.permute.xlu0 %1999
    %v2002 = vmul.f32 %v1992, %v2000
    %2004 = vrot.lane.b32.xlu0 %v2002, 16
    %v2005 = vpop.permute.xlu0 %2004
    %v2007 = vadd.f32 %v1997, %v2005
    %v2008 = vtanh.pop %v2007
    %2010 = vrot.lane.b32.xlu0 %v2008, 32
    %v2011 = vpop.permute.xlu0 %2010
    %v2013 = vmul.f32 %v1992, %v2011
    %2015 = vrot.lane.b32.xlu0 %v1986, 80
    %v2016 = vpop.permute.xlu0 %2015
    %v2019 = vrot.slane %v2013, 4
    %2020 = vrot.lane.b32.xlu0 %v2019, 32
    %v2021 = vpop.permute.xlu0 %2020
    %v2023 = vsel %vm1733, %v2016, %v2021
    %v2025 = vrot.slane %v2023, 2
    %v2026 = vsel %vm118, %v2025, 0
    %2028 = vmatprep.subr.mxu0 0.0
    %2029 = vmatpush1.msra.mxu0 %v1598
    %2030 = vmatprep.subr.mxu0 0.0
    %2031 = vmatpush1.msra.mxu0 %v1599
    %2032 = vmatprep.subr.mxu0 0.0
    %2033 = vmatpush1.msra.mxu0 %v1600
    %2034 = vmatprep.subr.mxu0 0.0
    %2035 = vmatpush1.msra.mxu0 %v1601
    %2036 = vmatprep.subr.mxu0 0.0
    %2037 = vmatpush1.msra.mxu0 0.0
    %2038 = vmatprep.subr.mxu0 0.0
    %2039 = vmatpush1.msra.mxu0 0.0
    %2040 = vmatprep.subr.mxu0 0.0
    %2041 = vmatpush1.msra.mxu0 0.0
    %2042 = vmatprep.subr.mxu0 0.0
    %2043 = vmatpush1.msra.mxu0 0.0
    %2044 = vmatprep.subr.mxu0 0.0
    %2045 = vmatpush1.msra.mxu0 0.0
    %2046 = vmatprep.subr.mxu0 0.0
    %2047 = vmatpush1.msra.mxu0 0.0
    %2048 = vmatprep.subr.mxu0 0.0
    %2049 = vmatpush1.msra.mxu0 0.0
    %2050 = vmatprep.subr.mxu0 0.0
    %2051 = vmatpush1.msra.mxu0 0.0
    %2052 = vmatprep.subr.mxu0 0.0
    %2053 = vmatpush1.msra.mxu0 0.0
    %2054 = vmatprep.subr.mxu0 0.0
    %2055 = vmatpush1.msra.mxu0 0.0
    %2056 = vmatprep.subr.mxu0 0.0
    %2057 = vmatpush1.msra.mxu0 0.0
    %2058 = vmatprep.subr.mxu0 0.0
    %2059 = vmatpush1.msra.mxu0 0.0
    %2060 = vmatprep.subr.mxu0 0.0
    %2061 = vmatpush1.msra.mxu0 0.0
    %2062 = vmatprep.subr.mxu0 0.0
    %2063 = vmatpush1.msra.mxu0 0.0
    %2064 = vmatprep.subr.mxu0 0.0
    %2065 = vmatpush1.msra.mxu0 0.0
    %2066 = vmatprep.subr.mxu0 0.0
    %2067 = vmatpush1.msra.mxu0 0.0
    %2068 = vmatprep.subr.mxu0 0.0
    %2069 = vmatpush1.msra.mxu0 0.0
    %2070 = vmatprep.subr.mxu0 0.0
    %2071 = vmatpush1.msra.mxu0 0.0
    %2072 = vmatprep.subr.mxu0 0.0
    %2073 = vmatpush1.msra.mxu0 0.0
    %2074 = vmatprep.subr.mxu0 0.0
    %2075 = vmatpush1.msra.mxu0 0.0
    %2076 = vmatprep.subr.mxu0 0.0
    %2077 = vmatpush1.msra.mxu0 0.0
    %2078 = vmatprep.subr.mxu0 0.0
    %2079 = vmatpush1.msra.mxu0 0.0
    %2080 = vmatprep.subr.mxu0 0.0
    %2081 = vmatpush1.msra.mxu0 0.0
    %2082 = vmatprep.subr.mxu0 0.0
    %2083 = vmatpush1.msra.mxu0 0.0
    %2084 = vmatprep.subr.mxu0 0.0
    %2085 = vmatpush1.msra.mxu0 0.0
    %2086 = vmatprep.subr.mxu0 0.0
    %2087 = vmatpush1.msra.mxu0 0.0
    %2088 = vmatprep.subr.mxu0 0.0
    %2089 = vmatpush1.msra.mxu0 0.0
    %2090 = vmatprep.subr.mxu0 0.0
    %2091 = vmatpush1.msra.mxu0 0.0
    %2092 = vmatprep.mubr.f32.mxu0 0.0
    %2093 = vmatmul.mubr.f32.gmra.mrb[0].mxu0 %v2026
    %v2094 = vpop.f32.mrb[0].mxu0
    %v2095 = vadd.f32 0.0, %v2094
    %v2096 = vpop.f32.mrb[0].mxu0
    %2097 = vdwg.mxu0
    %v2099 = vrot.slane %v2095, 5
    %v2101 = vadd.f32 %v1590, %v2099
    %v2102 = vrot.slane %v2095, 3
    %v2104 = vadd.f32 %v1590, %v2102
    %v2105 = vxor.u32 %v2101, 2147483648
    %v2106 = vmul.f32 %v2105, 1.442695
    %v2107 = vpow.pop %v2106
    %v2108 = vadd.f32 %v2107, 1.0
    %v2109 = vrcp.pop %v2108
    %v2110 = vmul.f32 1.0, %v2109
    %v2111 = vtanh.pop %v2101
    %v2113 = vrot.slane %v1980, 7
    %v2115 = vmul.f32 %v2110, %v2113
    %2117 = vrot.lane.b32.xlu0 %v2111, 96
    %v2118 = vpop.permute.xlu0 %2117
    %v2120 = vmul.f32 %v2110, %v2118
    %2122 = vrot.lane.b32.xlu0 %v2120, 16
    %v2123 = vpop.permute.xlu0 %2122
    %v2125 = vadd.f32 %v2115, %v2123
    %v2126 = vtanh.pop %v2125
    %2128 = vrot.lane.b32.xlu0 %v2126, 32
    %v2129 = vpop.permute.xlu0 %2128
    %v2131 = vmul.f32 %v2110, %v2129
    %v2132 = vxor.u32 %v2104, 2147483648
    %v2133 = vmul.f32 %v2132, 1.442695
    %v2134 = vpow.pop %v2133
    %v2135 = vadd.f32 %v2134, 1.0
    %v2136 = vrcp.pop %v2135
    %v2137 = vmul.f32 1.0, %v2136
    %v2138 = vtanh.pop %v2104
    %v2140 = vrot.slane %v2007, 1
    %v2142 = vmul.f32 %v2137, %v2140
    %2144 = vrot.lane.b32.xlu0 %v2138, 96
    %v2145 = vpop.permute.xlu0 %2144
    %v2147 = vmul.f32 %v2137, %v2145
    %2149 = vrot.lane.b32.xlu0 %v2147, 16
    %v2150 = vpop.permute.xlu0 %2149
    %v2152 = vadd.f32 %v2142, %v2150
    %v2153 = vtanh.pop %v2152
    %2155 = vrot.lane.b32.xlu0 %v2153, 32
    %v2156 = vpop.permute.xlu0 %2155
    %v2158 = vmul.f32 %v2137, %v2156
    %2160 = vrot.lane.b32.xlu0 %v2131, 80
    %v2161 = vpop.permute.xlu0 %2160
    %v2164 = vrot.slane %v2158, 2
    %2165 = vrot.lane.b32.xlu0 %v2164, 32
    %v2166 = vpop.permute.xlu0 %2165
    %v2168 = vsel %vm1733, %v2161, %v2166
    %v2170 = vrot.slane %v2168, 3
    %v2171 = vsel %vm118, %v2170, 0
    %2173 = vmatprep.subr.mxu0 0.0
    %2174 = vmatpush1.msra.mxu0 %v1598
    %2175 = vmatprep.subr.mxu0 0.0
    %2176 = vmatpush1.msra.mxu0 %v1599
    %2177 = vmatprep.subr.mxu0 0.0
    %2178 = vmatpush1.msra.mxu0 %v1600
    %2179 = vmatprep.subr.mxu0 0.0
    %2180 = vmatpush1.msra.mxu0 %v1601
    %2181 = vmatprep.subr.mxu0 0.0
    %2182 = vmatpush1.msra.mxu0 0.0
    %2183 = vmatprep.subr.mxu0 0.0
    %2184 = vmatpush1.msra.mxu0 0.0
    %2185 = vmatprep.subr.mxu0 0.0
    %2186 = vmatpush1.msra.mxu0 0.0
    %2187 = vmatprep.subr.mxu0 0.0
    %2188 = vmatpush1.msra.mxu0 0.0
    %2189 = vmatprep.subr.mxu0 0.0
    %2190 = vmatpush1.msra.mxu0 0.0
    %2191 = vmatprep.subr.mxu0 0.0
    %2192 = vmatpush1.msra.mxu0 0.0
    %2193 = vmatprep.subr.mxu0 0.0
    %2194 = vmatpush1.msra.mxu0 0.0
    %2195 = vmatprep.subr.mxu0 0.0
    %2196 = vmatpush1.msra.mxu0 0.0
    %2197 = vmatprep.subr.mxu0 0.0
    %2198 = vmatpush1.msra.mxu0 0.0
    %2199 = vmatprep.subr.mxu0 0.0
    %2200 = vmatpush1.msra.mxu0 0.0
    %2201 = vmatprep.subr.mxu0 0.0
    %2202 = vmatpush1.msra.mxu0 0.0
    %2203 = vmatprep.subr.mxu0 0.0
    %2204 = vmatpush1.msra.mxu0 0.0
    %2205 = vmatprep.subr.mxu0 0.0
    %2206 = vmatpush1.msra.mxu0 0.0
    %2207 = vmatprep.subr.mxu0 0.0
    %2208 = vmatpush1.msra.mxu0 0.0
    %2209 = vmatprep.subr.mxu0 0.0
    %2210 = vmatpush1.msra.mxu0 0.0
    %2211 = vmatprep.subr.mxu0 0.0
    %2212 = vmatpush1.msra.mxu0 0.0
    %2213 = vmatprep.subr.mxu0 0.0
    %2214 = vmatpush1.msra.mxu0 0.0
    %2215 = vmatprep.subr.mxu0 0.0
    %2216 = vmatpush1.msra.mxu0 0.0
    %2217 = vmatprep.subr.mxu0 0.0
    %2218 = vmatpush1.msra.mxu0 0.0
    %2219 = vmatprep.subr.mxu0 0.0
    %2220 = vmatpush1.msra.mxu0 0.0
    %2221 = vmatprep.subr.mxu0 0.0
    %2222 = vmatpush1.msra.mxu0 0.0
    %2223 = vmatprep.subr.mxu0 0.0
    %2224 = vmatpush1.msra.mxu0 0.0
    %2225 = vmatprep.subr.mxu0 0.0
    %2226 = vmatpush1.msra.mxu0 0.0
    %2227 = vmatprep.subr.mxu0 0.0
    %2228 = vmatpush1.msra.mxu0 0.0
    %2229 = vmatprep.subr.mxu0 0.0
    %2230 = vmatpush1.msra.mxu0 0.0
    %2231 = vmatprep.subr.mxu0 0.0
    %2232 = vmatpush1.msra.mxu0 0.0
    %2233 = vmatprep.subr.mxu0 0.0
    %2234 = vmatpush1.msra.mxu0 0.0
    %2235 = vmatprep.subr.mxu0 0.0
    %2236 = vmatpush1.msra.mxu0 0.0
    %2237 = vmatprep.mubr.f32.mxu0 0.0
    %2238 = vmatmul.mubr.f32.gmra.mrb[0].mxu0 %v2171
    %v2239 = vpop.f32.mrb[0].mxu0
    %v2240 = vadd.f32 0.0, %v2239
    %v2241 = vpop.f32.mrb[0].mxu0
    %2242 = vdwg.mxu0
    %v2244 = vrot.slane %v2240, 4
    %v2246 = vadd.f32 %v1590, %v2244
    %v2247 = vxor.u32 %v2246, 2147483648
    %v2248 = vmul.f32 %v2247, 1.442695
    %v2249 = vpow.pop %v2248
    %v2250 = vadd.f32 %v2249, 1.0
    %v2251 = vrcp.pop %v2250
    %v2252 = vmul.f32 1.0, %v2251
    %v2253 = vtanh.pop %v2246
    %v2255 = vrot.slane %v2125, 7
    %v2257 = vmul.f32 %v2252, %v2255
    %2259 = vrot.lane.b32.xlu0 %v2253, 96
    %v2260 = vpop.permute.xlu0 %2259
    %v2262 = vmul.f32 %v2252, %v2260
    %2264 = vrot.lane.b32.xlu0 %v2262, 16
    %v2265 = vpop.permute.xlu0 %2264
    %v2267 = vadd.f32 %v2257, %v2265
    %v2268 = vtanh.pop %v2267
    %2270 = vrot.lane.b32.xlu0 %v2268, 32
    %v2271 = vpop.permute.xlu0 %2270
    %v2273 = vmul.f32 %v2252, %v2271
    %v2275 = vrot.slane %v2152, 1
    %v2277 = vmul.f32 %v2252, %v2275
    %v2278 = vadd.f32 %v2277, %v2265
    %v2279 = vtanh.pop %v2278
    %2281 = vrot.lane.b32.xlu0 %v2279, 32
    %v2282 = vpop.permute.xlu0 %2281
    %v2284 = vmul.f32 %v2252, %v2282
    %2286 = vrot.lane.b32.xlu0 %v2273, 80
    %v2287 = vpop.permute.xlu0 %2286
    %2290 = vrot.lane.b32.xlu0 %v2284, 32
    %v2291 = vpop.permute.xlu0 %2290
    %v2293 = vsel %vm1733, %v2287, %v2291
    %v2295 = vrot.slane %v2293, 4
    %v2296 = vsel %vm118, %v2295, 0
    %2298 = vmatprep.subr.mxu0 0.0
    %2299 = vmatpush1.msra.mxu0 %v1598
    %2300 = vmatprep.subr.mxu0 0.0
    %2301 = vmatpush1.msra.mxu0 %v1599
    %2302 = vmatprep.subr.mxu0 0.0
    %2303 = vmatpush1.msra.mxu0 %v1600
    %2304 = vmatprep.subr.mxu0 0.0
    %2305 = vmatpush1.msra.mxu0 %v1601
    %2306 = vmatprep.subr.mxu0 0.0
    %2307 = vmatpush1.msra.mxu0 0.0
    %2308 = vmatprep.subr.mxu0 0.0
    %2309 = vmatpush1.msra.mxu0 0.0
    %2310 = vmatprep.subr.mxu0 0.0
    %2311 = vmatpush1.msra.mxu0 0.0
    %2312 = vmatprep.subr.mxu0 0.0
    %2313 = vmatpush1.msra.mxu0 0.0
    %2314 = vmatprep.subr.mxu0 0.0
    %2315 = vmatpush1.msra.mxu0 0.0
    %2316 = vmatprep.subr.mxu0 0.0
    %2317 = vmatpush1.msra.mxu0 0.0
    %2318 = vmatprep.subr.mxu0 0.0
    %2319 = vmatpush1.msra.mxu0 0.0
    %2320 = vmatprep.subr.mxu0 0.0
    %2321 = vmatpush1.msra.mxu0 0.0
    %2322 = vmatprep.subr.mxu0 0.0
    %2323 = vmatpush1.msra.mxu0 0.0
    %2324 = vmatprep.subr.mxu0 0.0
    %2325 = vmatpush1.msra.mxu0 0.0
    %2326 = vmatprep.subr.mxu0 0.0
    %2327 = vmatpush1.msra.mxu0 0.0
    %2328 = vmatprep.subr.mxu0 0.0
    %2329 = vmatpush1.msra.mxu0 0.0
    %2330 = vmatprep.subr.mxu0 0.0
    %2331 = vmatpush1.msra.mxu0 0.0
    %2332 = vmatprep.subr.mxu0 0.0
    %2333 = vmatpush1.msra.mxu0 0.0
    %2334 = vmatprep.subr.mxu0 0.0
    %2335 = vmatpush1.msra.mxu0 0.0
    %2336 = vmatprep.subr.mxu0 0.0
    %2337 = vmatpush1.msra.mxu0 0.0
    %2338 = vmatprep.subr.mxu0 0.0
    %2339 = vmatpush1.msra.mxu0 0.0
    %2340 = vmatprep.subr.mxu0 0.0
    %2341 = vmatpush1.msra.mxu0 0.0
    %2342 = vmatprep.subr.mxu0 0.0
    %2343 = vmatpush1.msra.mxu0 0.0
    %2344 = vmatprep.subr.mxu0 0.0
    %2345 = vmatpush1.msra.mxu0 0.0
    %2346 = vmatprep.subr.mxu0 0.0
    %2347 = vmatpush1.msra.mxu0 0.0
    %2348 = vmatprep.subr.mxu0 0.0
    %2349 = vmatpush1.msra.mxu0 0.0
    %2350 = vmatprep.subr.mxu0 0.0
    %2351 = vmatpush1.msra.mxu0 0.0
    %2352 = vmatprep.subr.mxu0 0.0
    %2353 = vmatpush1.msra.mxu0 0.0
    %2354 = vmatprep.subr.mxu0 0.0
    %2355 = vmatpush1.msra.mxu0 0.0
    %2356 = vmatprep.subr.mxu0 0.0
    %2357 = vmatpush1.msra.mxu0 0.0
    %2358 = vmatprep.subr.mxu0 0.0
    %2359 = vmatpush1.msra.mxu0 0.0
    %2360 = vmatprep.subr.mxu0 0.0
    %2361 = vmatpush1.msra.mxu0 0.0
    %2362 = vmatprep.mubr.f32.mxu0 0.0
    %2363 = vmatmul.mubr.f32.gmra.mrb[0].mxu0 %v2296
    %v2364 = vpop.f32.mrb[0].mxu0
    %v2365 = vadd.f32 0.0, %v2364
    %v2366 = vpop.f32.mrb[0].mxu0
    %2367 = vdwg.mxu0
    %v2369 = vrot.slane %v2365, 3
    %v2371 = vadd.f32 %v1590, %v2369
    %v2372 = vrot.slane %v2365, 5
    %v2374 = vadd.f32 %v1590, %v2372
    %v2375 = vxor.u32 %v2371, 2147483648
    %v2376 = vmul.f32 %v2375, 1.442695
    %v2377 = vpow.pop %v2376
    %v2378 = vadd.f32 %v2377, 1.0
    %v2379 = vrcp.pop %v2378
    %v2380 = vmul.f32 1.0, %v2379
    %v2381 = vtanh.pop %v2371
    %v2383 = vrot.slane %v2267, 7
    %v2385 = vmul.f32 %v2380, %v2383
    %2387 = vrot.lane.b32.xlu0 %v2381, 96
    %v2388 = vpop.permute.xlu0 %2387
    %v2390 = vmul.f32 %v2380, %v2388
    %2392 = vrot.lane.b32.xlu0 %v2390, 16
    %v2393 = vpop.permute.xlu0 %2392
    %v2395 = vadd.f32 %v2385, %v2393
    %v2396 = vtanh.pop %v2395
    %2398 = vrot.lane.b32.xlu0 %v2396, 32
    %v2399 = vpop.permute.xlu0 %2398
    %v2401 = vmul.f32 %v2380, %v2399
    %v2402 = vxor.u32 %v2374, 2147483648
    %v2403 = vmul.f32 %v2402, 1.442695
    %v2404 = vpow.pop %v2403
    %v2405 = vadd.f32 %v2404, 1.0
    %v2406 = vrcp.pop %v2405
    %v2407 = vmul.f32 1.0, %v2406
    %v2408 = vtanh.pop %v2374
    %v2410 = vrot.slane %v2278, 1
    %v2412 = vmul.f32 %v2407, %v2410
    %2414 = vrot.lane.b32.xlu0 %v2408, 96
    %v2415 = vpop.permute.xlu0 %2414
    %v2417 = vmul.f32 %v2407, %v2415
    %2419 = vrot.lane.b32.xlu0 %v2417, 16
    %v2420 = vpop.permute.xlu0 %2419
    %v2422 = vadd.f32 %v2412, %v2420
    %v2423 = vtanh.pop %v2422
    %2425 = vrot.lane.b32.xlu0 %v2423, 32
    %v2426 = vpop.permute.xlu0 %2425
    %v2428 = vmul.f32 %v2407, %v2426
    %2430 = vrot.lane.b32.xlu0 %v2401, 80
    %v2431 = vpop.permute.xlu0 %2430
    %v2434 = vrot.slane %v2428, 6
    %2435 = vrot.lane.b32.xlu0 %v2434, 32
    %v2436 = vpop.permute.xlu0 %2435
    %v2438 = vsel %vm1733, %v2431, %v2436
    %v2440 = vrot.slane %v2438, 5
    %v2441 = vsel %vm118, %v2440, 0
    %2443 = vmatprep.subr.mxu0 0.0
    %2444 = vmatpush1.msra.mxu0 %v1598
    %2445 = vmatprep.subr.mxu0 0.0
    %2446 = vmatpush1.msra.mxu0 %v1599
    %2447 = vmatprep.subr.mxu0 0.0
    %2448 = vmatpush1.msra.mxu0 %v1600
    %2449 = vmatprep.subr.mxu0 0.0
    %2450 = vmatpush1.msra.mxu0 %v1601
    %2451 = vmatprep.subr.mxu0 0.0
    %2452 = vmatpush1.msra.mxu0 0.0
    %2453 = vmatprep.subr.mxu0 0.0
    %2454 = vmatpush1.msra.mxu0 0.0
    %2455 = vmatprep.subr.mxu0 0.0
    %2456 = vmatpush1.msra.mxu0 0.0
    %2457 = vmatprep.subr.mxu0 0.0
    %2458 = vmatpush1.msra.mxu0 0.0
    %2459 = vmatprep.subr.mxu0 0.0
    %2460 = vmatpush1.msra.mxu0 0.0
    %2461 = vmatprep.subr.mxu0 0.0
    %2462 = vmatpush1.msra.mxu0 0.0
    %2463 = vmatprep.subr.mxu0 0.0
    %2464 = vmatpush1.msra.mxu0 0.0
    %2465 = vmatprep.subr.mxu0 0.0
    %2466 = vmatpush1.msra.mxu0 0.0
    %2467 = vmatprep.subr.mxu0 0.0
    %2468 = vmatpush1.msra.mxu0 0.0
    %2469 = vmatprep.subr.mxu0 0.0
    %2470 = vmatpush1.msra.mxu0 0.0
    %2471 = vmatprep.subr.mxu0 0.0
    %2472 = vmatpush1.msra.mxu0 0.0
    %2473 = vmatprep.subr.mxu0 0.0
    %2474 = vmatpush1.msra.mxu0 0.0
    %2475 = vmatprep.subr.mxu0 0.0
    %2476 = vmatpush1.msra.mxu0 0.0
    %2477 = vmatprep.subr.mxu0 0.0
    %2478 = vmatpush1.msra.mxu0 0.0
    %2479 = vmatprep.subr.mxu0 0.0
    %2480 = vmatpush1.msra.mxu0 0.0
    %2481 = vmatprep.subr.mxu0 0.0
    %2482 = vmatpush1.msra.mxu0 0.0
    %2483 = vmatprep.subr.mxu0 0.0
    %2484 = vmatpush1.msra.mxu0 0.0
    %2485 = vmatprep.subr.mxu0 0.0
    %2486 = vmatpush1.msra.mxu0 0.0
    %2487 = vmatprep.subr.mxu0 0.0
    %2488 = vmatpush1.msra.mxu0 0.0
    %2489 = vmatprep.subr.mxu0 0.0
    %2490 = vmatpush1.msra.mxu0 0.0
    %2491 = vmatprep.subr.mxu0 0.0
    %2492 = vmatpush1.msra.mxu0 0.0
    %2493 = vmatprep.subr.mxu0 0.0
    %2494 = vmatpush1.msra.mxu0 0.0
    %2495 = vmatprep.subr.mxu0 0.0
    %2496 = vmatpush1.msra.mxu0 0.0
    %2497 = vmatprep.subr.mxu0 0.0
    %2498 = vmatpush1.msra.mxu0 0.0
    %2499 = vmatprep.subr.mxu0 0.0
    %2500 = vmatpush1.msra.mxu0 0.0
    %2501 = vmatprep.subr.mxu0 0.0
    %2502 = vmatpush1.msra.mxu0 0.0
    %2503 = vmatprep.subr.mxu0 0.0
    %2504 = vmatpush1.msra.mxu0 0.0
    %2505 = vmatprep.subr.mxu0 0.0
    %2506 = vmatpush1.msra.mxu0 0.0
    %2507 = vmatprep.mubr.f32.mxu0 0.0
    %2508 = vmatmul.mubr.f32.gmra.mrb[0].mxu0 %v2441
    %v2509 = vpop.f32.mrb[0].mxu0
    %v2510 = vadd.f32 0.0, %v2509
    %v2511 = vpop.f32.mrb[0].mxu0
    %2512 = vdwg.mxu0
    %v2514 = vrot.slane %v2510, 2
    %v2516 = vadd.f32 %v1590, %v2514
    %v2517 = vrot.slane %v2510, 6
    %v2519 = vadd.f32 %v1590, %v2517
    %v2520 = vxor.u32 %v2516, 2147483648
    %v2521 = vmul.f32 %v2520, 1.442695
    %v2522 = vpow.pop %v2521
    %v2523 = vadd.f32 %v2522, 1.0
    %v2524 = vrcp.pop %v2523
    %v2525 = vmul.f32 1.0, %v2524
    %v2526 = vtanh.pop %v2516
    %v2528 = vrot.slane %v2395, 7
    %v2530 = vmul.f32 %v2525, %v2528
    %2532 = vrot.lane.b32.xlu0 %v2526, 96
    %v2533 = vpop.permute.xlu0 %2532
    %v2535 = vmul.f32 %v2525, %v2533
    %2537 = vrot.lane.b32.xlu0 %v2535, 16
    %v2538 = vpop.permute.xlu0 %2537
    %v2540 = vadd.f32 %v2530, %v2538
    %v2541 = vtanh.pop %v2540
    %2543 = vrot.lane.b32.xlu0 %v2541, 32
    %v2544 = vpop.permute.xlu0 %2543
    %v2546 = vmul.f32 %v2525, %v2544
    %v2547 = vxor.u32 %v2519, 2147483648
    %v2548 = vmul.f32 %v2547, 1.442695
    %v2549 = vpow.pop %v2548
    %v2550 = vadd.f32 %v2549, 1.0
    %v2551 = vrcp.pop %v2550
    %v2552 = vmul.f32 1.0, %v2551
    %v2553 = vtanh.pop %v2519
    %v2555 = vrot.slane %v2422, 1
    %v2557 = vmul.f32 %v2552, %v2555
    %2559 = vrot.lane.b32.xlu0 %v2553, 96
    %v2560 = vpop.permute.xlu0 %2559
    %v2562 = vmul.f32 %v2552, %v2560
    %2564 = vrot.lane.b32.xlu0 %v2562, 16
    %v2565 = vpop.permute.xlu0 %2564
    %v2567 = vadd.f32 %v2557, %v2565
    %v2568 = vtanh.pop %v2567
    %2570 = vrot.lane.b32.xlu0 %v2568, 32
    %v2571 = vpop.permute.xlu0 %2570
    %v2573 = vmul.f32 %v2552, %v2571
    %2575 = vrot.lane.b32.xlu0 %v2546, 80
    %v2576 = vpop.permute.xlu0 %2575
    %v2579 = vrot.slane %v2573, 4
    %2580 = vrot.lane.b32.xlu0 %v2579, 32
    %v2581 = vpop.permute.xlu0 %2580
    %v2583 = vsel %vm1733, %v2576, %v2581
    %v2585 = vrot.slane %v2583, 6
    %v2586 = vsel %vm118, %v2585, 0
    %2588 = vmatprep.subr.mxu0 0.0
    %2589 = vmatpush1.msra.mxu0 %v1598
    %2590 = vmatprep.subr.mxu0 0.0
    %2591 = vmatpush1.msra.mxu0 %v1599
    %2592 = vmatprep.subr.mxu0 0.0
    %2593 = vmatpush1.msra.mxu0 %v1600
    %2594 = vmatprep.subr.mxu0 0.0
    %2595 = vmatpush1.msra.mxu0 %v1601
    %2596 = vmatprep.subr.mxu0 0.0
    %2597 = vmatpush1.msra.mxu0 0.0
    %2598 = vmatprep.subr.mxu0 0.0
    %2599 = vmatpush1.msra.mxu0 0.0
    %2600 = vmatprep.subr.mxu0 0.0
    %2601 = vmatpush1.msra.mxu0 0.0
    %2602 = vmatprep.subr.mxu0 0.0
    %2603 = vmatpush1.msra.mxu0 0.0
    %2604 = vmatprep.subr.mxu0 0.0
    %2605 = vmatpush1.msra.mxu0 0.0
    %2606 = vmatprep.subr.mxu0 0.0
    %2607 = vmatpush1.msra.mxu0 0.0
    %2608 = vmatprep.subr.mxu0 0.0
    %2609 = vmatpush1.msra.mxu0 0.0
    %2610 = vmatprep.subr.mxu0 0.0
    %2611 = vmatpush1.msra.mxu0 0.0
    %2612 = vmatprep.subr.mxu0 0.0
    %2613 = vmatpush1.msra.mxu0 0.0
    %2614 = vmatprep.subr.mxu0 0.0
    %2615 = vmatpush1.msra.mxu0 0.0
    %2616 = vmatprep.subr.mxu0 0.0
    %2617 = vmatpush1.msra.mxu0 0.0
    %2618 = vmatprep.subr.mxu0 0.0
    %2619 = vmatpush1.msra.mxu0 0.0
    %2620 = vmatprep.subr.mxu0 0.0
    %2621 = vmatpush1.msra.mxu0 0.0
    %2622 = vmatprep.subr.mxu0 0.0
    %2623 = vmatpush1.msra.mxu0 0.0
    %2624 = vmatprep.subr.mxu0 0.0
    %2625 = vmatpush1.msra.mxu0 0.0
    %2626 = vmatprep.subr.mxu0 0.0
    %2627 = vmatpush1.msra.mxu0 0.0
    %2628 = vmatprep.subr.mxu0 0.0
    %2629 = vmatpush1.msra.mxu0 0.0
    %2630 = vmatprep.subr.mxu0 0.0
    %2631 = vmatpush1.msra.mxu0 0.0
    %2632 = vmatprep.subr.mxu0 0.0
    %2633 = vmatpush1.msra.mxu0 0.0
    %2634 = vmatprep.subr.mxu0 0.0
    %2635 = vmatpush1.msra.mxu0 0.0
    %2636 = vmatprep.subr.mxu0 0.0
    %2637 = vmatpush1.msra.mxu0 0.0
    %2638 = vmatprep.subr.mxu0 0.0
    %2639 = vmatpush1.msra.mxu0 0.0
    %2640 = vmatprep.subr.mxu0 0.0
    %2641 = vmatpush1.msra.mxu0 0.0
    %2642 = vmatprep.subr.mxu0 0.0
    %2643 = vmatpush1.msra.mxu0 0.0
    %2644 = vmatprep.subr.mxu0 0.0
    %2645 = vmatpush1.msra.mxu0 0.0
    %2646 = vmatprep.subr.mxu0 0.0
    %2647 = vmatpush1.msra.mxu0 0.0
    %2648 = vmatprep.subr.mxu0 0.0
    %2649 = vmatpush1.msra.mxu0 0.0
    %2650 = vmatprep.subr.mxu0 0.0
    %2651 = vmatpush1.msra.mxu0 0.0
    %2652 = vmatprep.mubr.f32.mxu0 0.0
    %2653 = vmatmul.mubr.f32.gmra.mrb[0].mxu0 %v2586
    %v2654 = vpop.f32.mrb[0].mxu0
    %v2655 = vadd.f32 0.0, %v2654
    %v2656 = vpop.f32.mrb[0].mxu0
    %2657 = vdwg.mxu0
    %v2659 = vrot.slane %v2655, 1
    %v2661 = vadd.f32 %v1590, %v2659
    %v2662 = vrot.slane %v2655, 7
    %v2664 = vadd.f32 %v1590, %v2662
    %v2665 = vxor.u32 %v2661, 2147483648
    %v2666 = vmul.f32 %v2665, 1.442695
    %v2667 = vpow.pop %v2666
    %v2668 = vadd.f32 %v2667, 1.0
    %v2669 = vrcp.pop %v2668
    %v2670 = vmul.f32 1.0, %v2669
    %v2671 = vtanh.pop %v2661
    %v2673 = vrot.slane %v2540, 7
    %v2675 = vmul.f32 %v2670, %v2673
    %2677 = vrot.lane.b32.xlu0 %v2671, 96
    %v2678 = vpop.permute.xlu0 %2677
    %v2680 = vmul.f32 %v2670, %v2678
    %2682 = vrot.lane.b32.xlu0 %v2680, 16
    %v2683 = vpop.permute.xlu0 %2682
    %v2685 = vadd.f32 %v2675, %v2683
    %v2686 = vtanh.pop %v2685
    %2688 = vrot.lane.b32.xlu0 %v2686, 32
    %v2689 = vpop.permute.xlu0 %2688
    %v2691 = vmul.f32 %v2670, %v2689
    %v2692 = vxor.u32 %v2664, 2147483648
    %v2693 = vmul.f32 %v2692, 1.442695
    %v2694 = vpow.pop %v2693
    %v2695 = vadd.f32 %v2694, 1.0
    %v2696 = vrcp.pop %v2695
    %v2697 = vmul.f32 1.0, %v2696
    %v2698 = vtanh.pop %v2664
    %v2700 = vrot.slane %v2567, 1
    %v2702 = vmul.f32 %v2697, %v2700
    %2704 = vrot.lane.b32.xlu0 %v2698, 96
    %v2705 = vpop.permute.xlu0 %2704
    %v2707 = vmul.f32 %v2697, %v2705
    %2709 = vrot.lane.b32.xlu0 %v2707, 16
    %v2710 = vpop.permute.xlu0 %2709
    %v2712 = vadd.f32 %v2702, %v2710
    %v2713 = vtanh.pop %v2712
    %2715 = vrot.lane.b32.xlu0 %v2713, 32
    %v2716 = vpop.permute.xlu0 %2715
    %v2718 = vmul.f32 %v2697, %v2716
    %2720 = vrot.lane.b32.xlu0 %v2691, 80
    %v2721 = vpop.permute.xlu0 %2720
    %v2724 = vrot.slane %v2718, 2
    %2725 = vrot.lane.b32.xlu0 %v2724, 32
    %v2726 = vpop.permute.xlu0 %2725
    %v2728 = vsel %vm1733, %v2721, %v2726
    %v2730 = vrot.slane %v2728, 7
    %v2731 = vsel %vm118, %v2730, 0
    %2733 = vmatprep.subr.mxu0 0.0
    %2734 = vmatpush1.msra.mxu0 %v1598
    %2735 = vmatprep.subr.mxu0 0.0
    %2736 = vmatpush1.msra.mxu0 %v1599
    %2737 = vmatprep.subr.mxu0 0.0
    %2738 = vmatpush1.msra.mxu0 %v1600
    %2739 = vmatprep.subr.mxu0 0.0
    %2740 = vmatpush1.msra.mxu0 %v1601
    %2741 = vmatprep.subr.mxu0 0.0
    %2742 = vmatpush1.msra.mxu0 0.0
    %2743 = vmatprep.subr.mxu0 0.0
    %2744 = vmatpush1.msra.mxu0 0.0
    %2745 = vmatprep.subr.mxu0 0.0
    %2746 = vmatpush1.msra.mxu0 0.0
    %2747 = vmatprep.subr.mxu0 0.0
    %2748 = vmatpush1.msra.mxu0 0.0
    %2749 = vmatprep.subr.mxu0 0.0
    %2750 = vmatpush1.msra.mxu0 0.0
    %2751 = vmatprep.subr.mxu0 0.0
    %2752 = vmatpush1.msra.mxu0 0.0
    %2753 = vmatprep.subr.mxu0 0.0
    %2754 = vmatpush1.msra.mxu0 0.0
    %2755 = vmatprep.subr.mxu0 0.0
    %2756 = vmatpush1.msra.mxu0 0.0
    %2757 = vmatprep.subr.mxu0 0.0
    %2758 = vmatpush1.msra.mxu0 0.0
    %2759 = vmatprep.subr.mxu0 0.0
    %2760 = vmatpush1.msra.mxu0 0.0
    %2761 = vmatprep.subr.mxu0 0.0
    %2762 = vmatpush1.msra.mxu0 0.0
    %2763 = vmatprep.subr.mxu0 0.0
    %2764 = vmatpush1.msra.mxu0 0.0
    %2765 = vmatprep.subr.mxu0 0.0
    %2766 = vmatpush1.msra.mxu0 0.0
    %2767 = vmatprep.subr.mxu0 0.0
    %2768 = vmatpush1.msra.mxu0 0.0
    %2769 = vmatprep.subr.mxu0 0.0
    %2770 = vmatpush1.msra.mxu0 0.0
    %2771 = vmatprep.subr.mxu0 0.0
    %2772 = vmatpush1.msra.mxu0 0.0
    %2773 = vmatprep.subr.mxu0 0.0
    %2774 = vmatpush1.msra.mxu0 0.0
    %2775 = vmatprep.subr.mxu0 0.0
    %2776 = vmatpush1.msra.mxu0 0.0
    %2777 = vmatprep.subr.mxu0 0.0
    %2778 = vmatpush1.msra.mxu0 0.0
    %2779 = vmatprep.subr.mxu0 0.0
    %2780 = vmatpush1.msra.mxu0 0.0
    %2781 = vmatprep.subr.mxu0 0.0
    %2782 = vmatpush1.msra.mxu0 0.0
    %2783 = vmatprep.subr.mxu0 0.0
    %2784 = vmatpush1.msra.mxu0 0.0
    %2785 = vmatprep.subr.mxu0 0.0
    %2786 = vmatpush1.msra.mxu0 0.0
    %2787 = vmatprep.subr.mxu0 0.0
    %2788 = vmatpush1.msra.mxu0 0.0
    %2789 = vmatprep.subr.mxu0 0.0
    %2790 = vmatpush1.msra.mxu0 0.0
    %2791 = vmatprep.subr.mxu0 0.0
    %2792 = vmatpush1.msra.mxu0 0.0
    %2793 = vmatprep.subr.mxu0 0.0
    %2794 = vmatpush1.msra.mxu0 0.0
    %2795 = vmatprep.subr.mxu0 0.0
    %2796 = vmatpush1.msra.mxu0 0.0
    %2797 = vmatprep.mubr.f32.mxu0 0.0
    %2798 = vmatmul.mubr.f32.gmra.mrb[0].mxu0 %v2731
    %v2799 = vpop.f32.mrb[0].mxu0
    %v2800 = vadd.f32 0.0, %v2799
    %v2801 = vpop.f32.mrb[0].mxu0
    %2802 = vdwg.mxu0
    %v2803 = vadd.f32 %v1595, %v2800
    %v2804 = vadd.f32 %v1590, %v2800
    %v2805 = vxor.u32 %v2803, 2147483648
    %v2806 = vmul.f32 %v2805, 1.442695
    %v2807 = vpow.pop %v2806
    %v2808 = vadd.f32 %v2807, 1.0
    %v2809 = vrcp.pop %v2808
    %v2810 = vmul.f32 1.0, %v2809
    %v2811 = vtanh.pop %v2803
    %v2813 = vrot.slane %v2685, 7
    %v2815 = vmul.f32 %v2810, %v2813
    %2817 = vrot.lane.b32.xlu0 %v2811, 96
    %v2818 = vpop.permute.xlu0 %2817
    %v2820 = vmul.f32 %v2810, %v2818
    %2822 = vrot.lane.b32.xlu0 %v2820, 16
    %v2823 = vpop.permute.xlu0 %2822
    %v2825 = vadd.f32 %v2815, %v2823
    %v2826 = vtanh.pop %v2825
    %2828 = vrot.lane.b32.xlu0 %v2826, 32
    %v2829 = vpop.permute.xlu0 %2828
    %v2831 = vmul.f32 %v2810, %v2829
    %v2832 = vxor.u32 %v2804, 2147483648
    %v2833 = vmul.f32 %v2832, 1.442695
    %v2834 = vpow.pop %v2833
    %v2835 = vadd.f32 %v2834, 1.0
    %v2836 = vrcp.pop %v2835
    %v2837 = vmul.f32 1.0, %v2836
    %v2838 = vtanh.pop %v2804
    %v2840 = vrot.slane %v2712, 1
    %v2842 = vmul.f32 %v2837, %v2840
    %2844 = vrot.lane.b32.xlu0 %v2838, 96
    %v2845 = vpop.permute.xlu0 %2844
    %v2847 = vmul.f32 %v2837, %v2845
    %2849 = vrot.lane.b32.xlu0 %v2847, 16
    %v2850 = vpop.permute.xlu0 %2849
    %v2852 = vadd.f32 %v2842, %v2850
    %v2853 = vtanh.pop %v2852
    %2855 = vrot.lane.b32.xlu0 %v2853, 32
    %v2856 = vpop.permute.xlu0 %2855
    %v2858 = vmul.f32 %v2837, %v2856
    %vm2859 = vcmask 1040384
    %v2860 = vsel %vm2859, %v1700, %v1841
    %vm2861 = vcmask 1041408
    %v2862 = vsel %vm2861, %v2860, %v1986
    %vm2863 = vcmask 1042432
    %v2864 = vsel %vm2863, %v2862, %v2131
    %vm2865 = vcmask 1043456
    %v2866 = vsel %vm2865, %v2864, %v2273
    %vm2867 = vcmask 1044480
    %v2868 = vsel %vm2867, %v2866, %v2401
    %vm2869 = vcmask 1045504
    %v2870 = vsel %vm2869, %v2868, %v2546
    %vm2871 = vcmask 1046528
    %v2872 = vsel %vm2871, %v2870, %v2691
    %v2873 = vsel %vm2859, %v2858, %v2718
    %v2874 = vsel %vm2861, %v2873, %v2573
    %v2875 = vsel %vm2863, %v2874, %v2428
    %v2876 = vsel %vm2865, %v2875, %v2284
    %v2877 = vsel %vm2867, %v2876, %v2158
    %v2878 = vsel %vm2869, %v2877, %v2013
    %v2879 = vsel %vm2871, %v2878, %v1868
    %2882 = vrot.lane.b32.xlu0 %v2872, 80
    %v2883 = vpop.permute.xlu0 %2882
    %2884 = vrot.lane.b32.xlu0 %v2831, 80
    %v2885 = vpop.permute.xlu0 %2884
    %2889 = vrot.lane.b32.xlu0 %v2879, 32
    %v2890 = vpop.permute.xlu0 %2889
    %v2892 = vsel %vm1733, %v2883, %v2890
    %v2893 = vsel %vm1733, %v2885, %v1731
    %v2894 = vsel %vm2859, %v2893, 0.0
    %v2895 = vld [vmem:[%s6] sm:$0xff]
    %v2896 = vld [vmem:[%s6 + $0x8] sm:$0xff]
    %v2897 = vld [vmem:[%s6 + $0x10] sm:$0xff]
    %v2898 = vld [vmem:[%s6 + $0x18] sm:$0xff]
    %v2899 = vld [vmem:[%s7] sm:$0x1]
    %v2901 = vlaneseq
    %v2902 = vshrl.u32 %v2901, 7
    %v2903 = vsub.s32 0, %v2902
    %v2904 = vrot.slane %v2899, %v2903
    %v2907 = vsel %vm118, %v2892, 0
    %v2910 = vsel %vm118, %v2894, 0
    %2912 = vmatprep.subr.mxu0 0.0
    %2913 = vmatpush1.msra.mxu0 %v2895
    %2914 = vmatprep.subr.mxu0 0.0
    %2915 = vmatpush1.msra.mxu0 %v2896
    %2916 = vmatprep.subr.mxu0 0.0
    %2917 = vmatpush1.msra.mxu0 %v2897
    %2918 = vmatprep.subr.mxu0 0.0
    %2919 = vmatpush1.msra.mxu0 %v2898
    %2920 = vmatprep.subr.mxu0 0.0
    %2921 = vmatpush1.msra.mxu0 0.0
    %2922 = vmatprep.subr.mxu0 0.0
    %2923 = vmatpush1.msra.mxu0 0.0
    %2924 = vmatprep.subr.mxu0 0.0
    %2925 = vmatpush1.msra.mxu0 0.0
    %2926 = vmatprep.subr.mxu0 0.0
    %2927 = vmatpush1.msra.mxu0 0.0
    %2928 = vmatprep.subr.mxu0 0.0
    %2929 = vmatpush1.msra.mxu0 0.0
    %2930 = vmatprep.subr.mxu0 0.0
    %2931 = vmatpush1.msra.mxu0 0.0
    %2932 = vmatprep.subr.mxu0 0.0
    %2933 = vmatpush1.msra.mxu0 0.0
    %2934 = vmatprep.subr.mxu0 0.0
    %2935 = vmatpush1.msra.mxu0 0.0
    %2936 = vmatprep.subr.mxu0 0.0
    %2937 = vmatpush1.msra.mxu0 0.0
    %2938 = vmatprep.subr.mxu0 0.0
    %2939 = vmatpush1.msra.mxu0 0.0
    %2940 = vmatprep.subr.mxu0 0.0
    %2941 = vmatpush1.msra.mxu0 0.0
    %2942 = vmatprep.subr.mxu0 0.0
    %2943 = vmatpush1.msra.mxu0 0.0
    %2944 = vmatprep.subr.mxu0 0.0
    %2945 = vmatpush1.msra.mxu0 0.0
    %2946 = vmatprep.subr.mxu0 0.0
    %2947 = vmatpush1.msra.mxu0 0.0
    %2948 = vmatprep.subr.mxu0 0.0
    %2949 = vmatpush1.msra.mxu0 0.0
    %2950 = vmatprep.subr.mxu0 0.0
    %2951 = vmatpush1.msra.mxu0 0.0
    %2952 = vmatprep.subr.mxu0 0.0
    %2953 = vmatpush1.msra.mxu0 0.0
    %2954 = vmatprep.subr.mxu0 0.0
    %2955 = vmatpush1.msra.mxu0 0.0
    %2956 = vmatprep.subr.mxu0 0.0
    %2957 = vmatpush1.msra.mxu0 0.0
    %2958 = vmatprep.subr.mxu0 0.0
    %2959 = vmatpush1.msra.mxu0 0.0
    %2960 = vmatprep.subr.mxu0 0.0
    %2961 = vmatpush1.msra.mxu0 0.0
    %2962 = vmatprep.subr.mxu0 0.0
    %2963 = vmatpush1.msra.mxu0 0.0
    %2964 = vmatprep.subr.mxu0 0.0
    %2965 = vmatpush1.msra.mxu0 0.0
    %2966 = vmatprep.subr.mxu0 0.0
    %2967 = vmatpush1.msra.mxu0 0.0
    %2968 = vmatprep.subr.mxu0 0.0
    %2969 = vmatpush1.msra.mxu0 0.0
    %2970 = vmatprep.subr.mxu0 0.0
    %2971 = vmatpush1.msra.mxu0 0.0
    %2972 = vmatprep.subr.mxu0 0.0
    %2973 = vmatpush1.msra.mxu0 0.0
    %2974 = vmatprep.subr.mxu0 0.0
    %2975 = vmatpush1.msra.mxu0 0.0
    %2976 = vmatprep.mubr.f32.mxu0 0.0
    %2977 = vmatmul.mubr.f32.gmra.mrb[0].mxu0 %v2907
    %v2978 = vpop.f32.mrb[0].mxu0
    %v2979 = vadd.f32 %v2904, %v2978
    %v2980 = vpop.f32.mrb[0].mxu0
    %2981 = vmatprep.mubr.f32.mxu0 0.0
    %2982 = vmatmul.mubr.f32.gmra.mrb[0].mxu0 %v2910
    %v2983 = vpop.f32.mrb[0].mxu0
    %v2984 = vadd.f32 %v2904, %v2983
    %v2985 = vpop.f32.mrb[0].mxu0
    %2986 = vdwg.mxu0
    %v2987 = vld [vmem:[%s8] sm:$0x7f]
    %v2988 = vld [vmem:[%s9] sm:$0xff]
    %v2989 = vld [vmem:[%s9 + $0x8] sm:$0xff]
    %v2990 = vld [vmem:[%s9 + $0x10] sm:$0xff]
    %v2991 = vld [vmem:[%s9 + $0x18] sm:$0xff]
    %v2992 = vld [vmem:[#allocation4] sm:$0x1]
    %v2993 = vld [vmem:[%s12] sm:$0xff]
    %v2994 = vld [vmem:[%s13] sm:$0x1]
    %v2995 = vld [vmem:[%s14] sm:$0xff]
    %v2996 = vld [vmem:[%s14 + $0x8] sm:$0xff]
    %v2997 = vld [vmem:[%s15] sm:$0x1]
    %v2998 = vld [vmem:[#allocation5] sm:$0x1]
    %v2999 = vld [vmem:[%s22] sm:$0x1]
    %v3000 = vlaneseq
    %v3001 = vshrl.u32 %v3000, 7
    %v3002 = vadd.s32 %v3001, 8
    %vm3003 = vcmp.lt.s32.totalorder %v3001, 9
    %vm3004 = vcmp.lt.s32.totalorder %v3002, 9
    %vm3005 = vcmp.eq.s32.totalorder %v3001, 0
    %vm3006 = vcmp.eq.s32.totalorder %v3002, 0
    %v3007 = vsel %vm3005, 1, 0
    %v3008 = vsel %vm3006, 1, 0
    %v3009 = vcvt.s32.f32 %v3007
    %v3010 = vcvt.s32.f32 %v3008
    %vm3011 = vcmask 7168
    %3012 = vst.msk [vmem:[#allocation3] sm:$0xff] %vm3011, 0.0
    %3013 = vst.msk [vmem:[#allocation3 + $0x8] sm:$0xff] %vm3011, 0.0
    %3014 = vst.msk [vmem:[#allocation3 + $0x10] sm:$0xff] %vm3011, 0.0
    %3015 = vst.msk [vmem:[#allocation3 + $0x18] sm:$0xff] %vm3011, 0.0
    loop: start=0, step=1, limit=18
    $region118: #{tacotron2_forward.1} parent=1 // loop_pre_header
      _
    $region119: #{tacotron2_forward.1} parent=1 // loop_header
      %s3017 = sphi 0, %s3021
      %p3018 = scmp.ge.s32.totalorder %s3017, 18
      %v3022 = vphi 0.0, %v3921
      %v3023 = vphi 0.0, %v3924
      %v3024 = vphi 0.0, %v4043
      %v3025 = vphi 0.0, %v4046
      %v3026 = vphi 0.0, %v4126
      %v3027 = vphi %v3009, %v3441
      %v3028 = vphi %v3010, %v3443
      %v3029 = vphi 0.5, %v3731
    $region120: #{tacotron2_forward.1} parent=1 // loop_header_branch
      %3020 = sbr.rel (%p3018) target = $region124
    $region121: #{tacotron2_forward.1} parent=1 // loop_body
      %v3030 = vld [vmem:[%s11] sm:$0xff]
      %v3031 = vld [vmem:[%s11 + $0x8] sm:$0xff]
      %v3032 = vld [vmem:[%s11 + $0x10] sm:$0xff]
      %v3033 = vld [vmem:[%s11 + $0x18] sm:$0xff]
      %v3034 = vld [vmem:[%s11 + $0x20] sm:$0xff]
      %v3035 = vld [vmem:[%s11 + $0x28] sm:$0xff]
      %v3036 = vld [vmem:[%s11 + $0x30] sm:$0xff]
      %v3037 = vld [vmem:[%s11 + $0x38] sm:$0xff]
      %3039 = vrot.lane.b32.xlu0 %v3022, 32
      %v3040 = vpop.permute.xlu0 %3039
      %v3041 = vsel %vm118, %v3040, 0
      %3043 = vmatprep.subr.mxu0 %v3031
      %3044 = vmatpush1.msra.mxu0 %v3030
      %3045 = vmatprep.subr.mxu0 %v3033
      %3046 = vmatpush1.msra.mxu0 %v3032
      %3047 = vmatprep.subr.mxu0 %v3035
      %3048 = vmatpush1.msra.mxu0 %v3034
      %3049 = vmatprep.subr.mxu0 %v3037
      %3050 = vmatpush1.msra.mxu0 %v3036
      %3051 = vmatprep.subr.mxu0 0.0
      %3052 = vmatpush1.msra.mxu0 0.0
      %3053 = vmatprep.subr.mxu0 0.0
      %3054 = vmatpush1.msra.mxu0 0.0
      %3055 = vmatprep.subr.mxu0 0.0
      %3056 = vmatpush1.msra.mxu0 0.0
      %3057 = vmatprep.subr.mxu0 0.0
      %3058 = vmatpush1.msra.mxu0 0.0
      %3059 = vmatprep.subr.mxu0 0.0
      %3060 = vmatpush1.msra.mxu0 0.0
      %3061 = vmatprep.subr.mxu0 0.0
      %3062 = vmatpush1.msra.mxu0 0.0
      %3063 = vmatprep.subr.mxu0 0.0
      %3064 = vmatpush1.msra.mxu0 0.0
      %3065 = vmatprep.subr.mxu0 0.0
      %3066 = vmatpush1.msra.mxu0 0.0
      %3067 = vmatprep.subr.mxu0 0.0
      %3068 = vmatpush1.msra.mxu0 0.0
      %3069 = vmatprep.subr.mxu0 0.0
      %3070 = vmatpush1.msra.mxu0 0.0
      %3071 = vmatprep.subr.mxu0 0.0
      %3072 = vmatpush1.msra.mxu0 0.0
      %3073 = vmatprep.subr.mxu0 0.0
      %3074 = vmatpush1.msra.mxu0 0.0
      %3075 = vmatprep.subr.mxu0 0.0
      %3076 = vmatpush1.msra.mxu0 0.0
      %3077 = vmatprep.subr.mxu0 0.0
      %3078 = vmatpush1.msra.mxu0 0.0
      %3079 = vmatprep.subr.mxu0 0.0
      %3080 = vmatpush1.msra.mxu0 0.0
      %3081 = vmatprep.subr.mxu0 0.0
      %3082 = vmatpush1.msra.mxu0 0.0
      %3083 = vmatprep.subr.mxu0 0.0
      %3084 = vmatpush1.msra.mxu0 0.0
      %3085 = vmatprep.subr.mxu0 0.0
      %3086 = vmatpush1.msra.mxu0 0.0
      %3087 = vmatprep.subr.mxu0 0.0
      %3088 = vmatpush1.msra.mxu0 0.0
      %3089 = vmatprep.subr.mxu0 0.0
      %3090 = vmatpush1.msra.mxu0 0.0
      %3091 = vmatprep.subr.mxu0 0.0
      %3092 = vmatpush1.msra.mxu0 0.0
      %3093 = vmatprep.subr.mxu0 0.0
      %3094 = vmatpush1.msra.mxu0 0.0
      %3095 = vmatprep.subr.mxu0 0.0
      %3096 = vmatpush1.msra.mxu0 0.0
      %3097 = vmatprep.subr.mxu0 0.0
      %3098 = vmatpush1.msra.mxu0 0.0
      %3099 = vmatprep.subr.mxu0 0.0
      %3100 = vmatpush1.msra.mxu0 0.0
      %3101 = vmatprep.subr.mxu0 0.0
      %3102 = vmatpush1.msra.mxu0 0.0
      %3103 = vmatprep.subr.mxu0 0.0
      %3104 = vmatpush1.msra.mxu0 0.0
      %3105 = vmatprep.subr.mxu0 0.0
      %3106 = vmatpush1.msra.mxu0 0.0
      %3107 = vmatprep.mubr.f32.mxu0 0.0
      %3108 = vmatmul.mubr.f32.gmra.mrb[0].mxu0 %v3041
      %v3109 = vpop.f32.mrb[0].mxu0
      %v3110 = vadd.f32 0.0, %v3109
      %v3111 = vpop.f32.mrb[0].mxu0
      %v3112 = vadd.f32 0.0, %v3111
      %3113 = vdwg.mxu0
      %3114 = vst.msk [vmem:[#allocation3 + $0x8] sm:$0xff] %vm3011, %v3027
      %3115 = vst.msk [vmem:[#allocation3 + $0x10] sm:$0xff] %vm3011, %v3028
      %v3116 = vld [vmem:[#allocation3 + $0x7] sm:$0xff]
      %v3117 = vld [vmem:[#allocation3 + $0xf] sm:$0xff]
      %v3118 = vld [vmem:[#allocation3 + $0x5] sm:$0xff]
      %v3119 = vld [vmem:[#allocation3 + $0xd] sm:$0xff]
      %3121 = vset.pattern.permute.xlu0 0
      %3122 = vperm.xlu0 %3121, %v3118
      %v3123 = vpop.permute.xlu0 %3122
      %3126 = vset.pattern.permute.xlu0 0
      %3127 = vperm.xlu0 %3126, %v3119
      %v3128 = vpop.permute.xlu0 %3127
      %v3130 = vlaneseq
      %v3131 = vshrl.u32 %v3130, 7
      %v3132 = vsub.s32 0, %v3131
      %v3133 = vrot.slane %v2987, %v3132
      %v3134 = vmul.f32 %v3123, %v3133
      %v3135 = vmul.f32 %v3128, %v3133
      %v3136 = vadd.f32 %v3134, 0.0
      %v3137 = vadd.f32 %v3135, 0.0
      %v3138 = vld [vmem:[#allocation3 + $0x6] sm:$0xff]
      %v3139 = vld [vmem:[#allocation3 + $0xe] sm:$0xff]
      %3141 = vset.pattern.permute.xlu0 0
      %3142 = vperm.xlu0 %3141, %v3138
      %v3143 = vpop.permute.xlu0 %3142
      %3146 = vset.pattern.permute.xlu0 0
      %3147 = vperm.xlu0 %3146, %v3139
      %v3148 = vpop.permute.xlu0 %3147
      %v3150 = vlaneseq
      %v3151 = vshrl.u32 %v3150, 7
      %v3152 = vsub.s32 1, %v3151
      %v3153 = vrot.slane %v2987, %v3152
      %v3154 = vmul.f32 %v3143, %v3153
      %v3155 = vmul.f32 %v3148, %v3153
      %v3156 = vadd.f32 %v3136, %v3154
      %v3157 = vadd.f32 %v3137, %v3155
      %3159 = vset.pattern.permute.xlu0 0
      %3160 = vperm.xlu0 %3159, %v3116
      %v3161 = vpop.permute.xlu0 %3160
      %3164 = vset.pattern.permute.xlu0 0
      %3165 = vperm.xlu0 %3164, %v3117
      %v3166 = vpop.permute.xlu0 %3165
      %v3168 = vlaneseq
      %v3169 = vshrl.u32 %v3168, 7
      %v3170 = vsub.s32 2, %v3169
      %v3171 = vrot.slane %v2987, %v3170
      %v3172 = vmul.f32 %v3161, %v3171
      %v3173 = vmul.f32 %v3166, %v3171
      %v3174 = vadd.f32 %v3156, %v3172
      %v3175 = vadd.f32 %v3157, %v3173
      %v3176 = vld [vmem:[#allocation3 + $0x8] sm:$0xff]
      %v3177 = vld [vmem:[#allocation3 + $0x10] sm:$0xff]
      %3179 = vset.pattern.permute.xlu0 0
      %3180 = vperm.xlu0 %3179, %v3176
      %v3181 = vpop.permute.xlu0 %3180
      %3184 = vset.pattern.permute.xlu0 0
      %3185 = vperm.xlu0 %3184, %v3177
      %v3186 = vpop.permute.xlu0 %3185
      %v3188 = vlaneseq
      %v3189 = vshrl.u32 %v3188, 7
      %v3190 = vsub.s32 3, %v3189
      %v3191 = vrot.slane %v2987, %v3190
      %v3192 = vmul.f32 %v3181, %v3191
      %v3193 = vmul.f32 %v3186, %v3191
      %v3194 = vadd.f32 %v3174, %v3192
      %v3195 = vadd.f32 %v3175, %v3193
      %v3196 = vld [vmem:[#allocation3 + $0x9] sm:$0xff]
      %v3197 = vld [vmem:[#allocation3 + $0x11] sm:$0xff]
      %3199 = vset.pattern.permute.xlu0 0
      %3200 = vperm.xlu0 %3199, %v3196
      %v3201 = vpop.permute.xlu0 %3200
      %3204 = vset.pattern.permute.xlu0 0
      %3205 = vperm.xlu0 %3204, %v3197
      %v3206 = vpop.permute.xlu0 %3205
      %v3208 = vlaneseq
      %v3209 = vshrl.u32 %v3208, 7
      %v3210 = vsub.s32 4, %v3209
      %v3211 = vrot.slane %v2987, %v3210
      %v3212 = vmul.f32 %v3201, %v3211
      %v3213 = vmul.f32 %v3206, %v3211
      %v3214 = vadd.f32 %v3194, %v3212
      %v3215 = vadd.f32 %v3195, %v3213
      %v3216 = vld [vmem:[#allocation3 + $0xa] sm:$0xff]
      %v3217 = vld [vmem:[#allocation3 + $0x12] sm:$0xff]
      %3219 = vset.pattern.permute.xlu0 0
      %3220 = vperm.xlu0 %3219, %v3216
      %v3221 = vpop.permute.xlu0 %3220
      %3224 = vset.pattern.permute.xlu0 0
      %3225 = vperm.xlu0 %3224, %v3217
      %v3226 = vpop.permute.xlu0 %3225
      %v3228 = vlaneseq
      %v3229 = vshrl.u32 %v3228, 7
      %v3230 = vsub.s32 5, %v3229
      %v3231 = vrot.slane %v2987, %v3230
      %v3232 = vmul.f32 %v3221, %v3231
      %v3233 = vmul.f32 %v3226, %v3231
      %v3234 = vadd.f32 %v3214, %v3232
      %v3235 = vadd.f32 %v3215, %v3233
      %v3236 = vld [vmem:[#allocation3 + $0xb] sm:$0xff]
      %v3237 = vld [vmem:[#allocation3 + $0x13] sm:$0xff]
      %3239 = vset.pattern.permute.xlu0 0
      %3240 = vperm.xlu0 %3239, %v3236
      %v3241 = vpop.permute.xlu0 %3240
      %3244 = vset.pattern.permute.xlu0 0
      %3245 = vperm.xlu0 %3244, %v3237
      %v3246 = vpop.permute.xlu0 %3245
      %v3248 = vlaneseq
      %v3249 = vshrl.u32 %v3248, 7
      %v3250 = vsub.s32 6, %v3249
      %v3251 = vrot.slane %v2987, %v3250
      %v3252 = vmul.f32 %v3241, %v3251
      %v3253 = vmul.f32 %v3246, %v3251
      %v3254 = vadd.f32 %v3234, %v3252
      %v3255 = vadd.f32 %v3235, %v3253
      %v3256 = vadd.f32 %v2979, %v3254
      %v3257 = vadd.f32 %v2984, %v3255
      %v3258 = vlaneseq
      %v3259 = vshrl.u32 %v3258, 7
      %v3260 = vsub.s32 0, %v3259
      %v3261 = vrot.slane %v3112, %v3260
      %v3262 = vadd.f32 %v3256, %v3261
      %v3263 = vadd.f32 %v3257, %v3261
      %v3264 = vtanh.pop %v3262
      %v3265 = vtanh.pop %v3263
      %v3267 = vlaneseq
      %v3268 = vshrl.u32 %v3267, 7
      %v3269 = vsub.s32 0, %v3268
      %v3270 = vrot.slane %v2992, %v3269
      %v3273 = vsel %vm118, %v3264, 0
      %v3276 = vsel %vm118, %v3265, 0
      %3278 = vmatprep.subr.mxu0 0.0
      %3279 = vmatpush1.msra.mxu0 %v2988
      %3280 = vmatprep.subr.mxu0 0.0
      %3281 = vmatpush1.msra.mxu0 %v2989
      %3282 = vmatprep.subr.mxu0 0.0
      %3283 = vmatpush1.msra.mxu0 %v2990
      %3284 = vmatprep.subr.mxu0 0.0
      %3285 = vmatpush1.msra.mxu0 %v2991
      %3286 = vmatprep.subr.mxu0 0.0
      %3287 = vmatpush1.msra.mxu0 0.0
      %3288 = vmatprep.subr.mxu0 0.0
      %3289 = vmatpush1.msra.mxu0 0.0
      %3290 = vmatprep.subr.mxu0 0.0
      %3291 = vmatpush1.msra.mxu0 0.0
      %3292 = vmatprep.subr.mxu0 0.0
      %3293 = vmatpush1.msra.mxu0 0.0
      %3294 = vmatprep.subr.mxu0 0.0
      %3295 = vmatpush1.msra.mxu0 0.0
      %3296 = vmatprep.subr.mxu0 0.0
      %3297 = vmatpush1.msra.mxu0 0.0
      %3298 = vmatprep.subr.mxu0 0.0
      %3299 = vmatpush1.msra.mxu0 0.0
      %3300 = vmatprep.subr.mxu0 0.0
      %3301 = vmatpush1.msra.mxu0 0.0
      %3302 = vmatprep.subr.mxu0 0.0
      %3303 = vmatpush1.msra.mxu0 0.0
      %3304 = vmatprep.subr.mxu0 0.0
      %3305 = vmatpush1.msra.mxu0 0.0
      %3306 = vmatprep.subr.mxu0 0.0
      %3307 = vmatpush1.msra.mxu0 0.0
      %3308 = vmatprep.subr.mxu0 0.0
      %3309 = vmatpush1.msra.mxu0 0.0
      %3310 = vmatprep.subr.mxu0 0.0
      %3311 = vmatpush1.msra.mxu0 0.0
      %3312 = vmatprep.subr.mxu0 0.0
      %3313 = vmatpush1.msra.mxu0 0.0
      %3314 = vmatprep.subr.mxu0 0.0
      %3315 = vmatpush1.msra.mxu0 0.0
      %3316 = vmatprep.subr.mxu0 0.0
      %3317 = vmatpush1.msra.mxu0 0.0
      %3318 = vmatprep.subr.mxu0 0.0
      %3319 = vmatpush1.msra.mxu0 0.0
      %3320 = vmatprep.subr.mxu0 0.0
      %3321 = vmatpush1.msra.mxu0 0.0
      %3322 = vmatprep.subr.mxu0 0.0
      %3323 = vmatpush1.msra.mxu0 0.0
      %3324 = vmatprep.subr.mxu0 0.0
      %3325 = vmatpush1.msra.mxu0 0.0
      %3326 = vmatprep.subr.mxu0 0.0
      %3327 = vmatpush1.msra.mxu0 0.0
      %3328 = vmatprep.subr.mxu0 0.0
      %3329 = vmatpush1.msra.mxu0 0.0
      %3330 = vmatprep.subr.mxu0 0.0
      %3331 = vmatpush1.msra.mxu0 0.0
      %3332 = vmatprep.subr.mxu0 0.0
      %3333 = vmatpush1.msra.mxu0 0.0
      %3334 = vmatprep.subr.mxu0 0.0
      %3335 = vmatpush1.msra.mxu0 0.0
      %3336 = vmatprep.subr.mxu0 0.0
      %3337 = vmatpush1.msra.mxu0 0.0
      %3338 = vmatprep.subr.mxu0 0.0
      %3339 = vmatpush1.msra.mxu0 0.0
      %3340 = vmatprep.subr.mxu0 0.0
      %3341 = vmatpush1.msra.mxu0 0.0
      %3342 = vmatprep.mubr.f32.mxu0 0.0
      %3343 = vmatmul.mubr.f32.gmra.mrb[0].mxu0 %v3273
      %v3344 = vpop.f32.mrb[0].mxu0
      %v3345 = vadd.f32 %v3270, %v3344
      %v3346 = vpop.f32.mrb[0].mxu0
      %3347 = vmatprep.mubr.f32.mxu0 0.0
      %3348 = vmatmul.mubr.f32.gmra.mrb[0].mxu0 %v3276
      %v3349 = vpop.f32.mrb[0].mxu0
      %v3350 = vadd.f32 %v3270, %v3349
      %v3351 = vpop.f32.mrb[0].mxu0
      %3352 = vdwg.mxu0
      %v3353 = vsel %vm3003, %v3345, -1e+30
      %v3354 = vsel %vm3004, %v3350, -1e+30
      %v3355 = vsel %vm3011, %v3353, -inf
      %v3356 = vsel %vm3011, %v3354, -inf
      %v3357 = vmax.f32 %v3355, %v3356
      %v3358 = vrot.slane %v3357, 4
      %v3359 = vmax.f32 %v3357, %v3358
      %v3360 = vrot.slane %v3359, 2
      %v3361 = vmax.f32 %v3359, %v3360
      %v3362 = vrot.slane %v3361, 1
      %v3363 = vmax.f32 %v3361, %v3362
      %v3364 = vsub.f32 %v3353, %v3363
      %v3365 = vsub.f32 %v3354, %v3363
      %v3366 = vmul.f32 %v3364, 1.442695
      %v3367 = vpow.pop %v3366
      %v3368 = vmul.f32 %v3365, 1.442695
      %v3369 = vpow.pop %v3368
      %v3370 = vsel %vm3011, %v3367, 0.0
      %v3371 = vsel %vm3011, %v3369, 0.0
      %v3372 = vadd.f32 %v3370, %v3371
      %v3373 = vrot.slane %v3372, 4
      %v3374 = vadd.f32 %v3372, %v3373
      %v3375 = vrot.slane %v3374, 2
      %v3376 = vadd.f32 %v3374, %v3375
      %v3377 = vrot.slane %v3376, 1
      %v3378 = vadd.f32 %v3376, %v3377
      %v3379 = vrcp.pop %v3378
      %v3380 = vmul.f32 %v3367, %v3379
      %v3381 = vmul.f32 %v3369, %v3379
      %v3382 = vlaneseq
      %v3383 = vshrl.u32 %v3382, 7
      %v3384 = vsub.s32 0, %v3383
      %v3385 = vrot.slane %v3029, %v3384
      %3388 = vrot.lane.b32.xlu0 %v3027, 9
      %v3389 = vpop.permute.xlu0 %3388
      %3390 = vrot.lane.b32.xlu0 %v3028, 9
      %v3391 = vpop.permute.xlu0 %3390
      %v3394 = vmul.f32 %v3385, %v3389
      %v3395 = vmul.f32 %v3385, %v3391
      %v3396 = vsub.f32 1.0, %v3029
      %v3397 = vlaneseq
      %v3398 = vshrl.u32 %v3397, 7
      %v3399 = vsub.s32 0, %v3398
      %v3400 = vrot.slane %v3396, %v3399
      %3401 = vrot.lane.b32.xlu0 %v3116, 9
      %v3402 = vpop.permute.xlu0 %3401
      %3403 = vrot.lane.b32.xlu0 %v3117, 9
      %v3404 = vpop.permute.xlu0 %3403
      %v3407 = vmul.f32 %v3400, %v3402
      %v3408 = vmul.f32 %v3400, %v3404
      %v3409 = vadd.f32 %v3394, %v3407
      %v3410 = vadd.f32 %v3395, %v3408
      %3413 = vrot.lane.b32.xlu0 %v3380, 9
      %v3414 = vpop.permute.xlu0 %3413
      %3415 = vrot.lane.b32.xlu0 %v3381, 9
      %v3416 = vpop.permute.xlu0 %3415
      %v3419 = vmul.f32 %v3409, %v3414
      %v3420 = vmul.f32 %v3410, %v3416
      %v3421 = vmax.f32 %v3419, 1e-06
      %v3422 = vmax.f32 %v3420, 1e-06
      %v3423 = vsel %vm3003, %v3421, 0.0
      %v3424 = vsel %vm3004, %v3422, 0.0
      %vm3425 = vcmask 80968
      %v3426 = vsel %vm3425, %v3423, 0.0
      %v3427 = vsel %vm3425, %v3424, 0.0
      %v3428 = vadd.f32 %v3426, %v3427
      %v3429 = vrot.slane %v3428, 4
      %v3430 = vadd.f32 %v3428, %v3429
      %v3431 = vrot.slane %v3430, 2
      %v3432 = vadd.f32 %v3430, %v3431
      %v3433 = vrot.slane %v3432, 1
      %v3434 = vadd.f32 %v3432, %v3433
      %v3435 = vrcp.pop %v3434
      %v3436 = vmul.f32 %v3423, %v3435
      %v3437 = vmul.f32 %v3424, %v3435
      %3440 = vrot.lane.b32.xlu0 %v3436, 119
      %v3441 = vpop.permute.xlu0 %3440
      %3442 = vrot.lane.b32.xlu0 %v3437, 119
      %v3443 = vpop.permute.xlu0 %3442
      %3446 = vxpose.xlu0.b32.start [1/16] %v3441, 128
      %3447 = vxpose.xlu0.b32.cont [2/16] %v3443, 128
      %3448 = vxpose.xlu0.b32.cont [3/16] 0.0, 128
      %3449 = vxpose.xlu0.b32.cont [4/16] 0.0, 128
      %3450 = vxpose.xlu0.b32.cont [5/16] 0.0, 128
      %3451 = vxpose.xlu0.b32.cont [6/16] 0.0, 128
      %3452 = vxpose.xlu0.b32.cont [7/16] 0.0, 128
      %3453 = vxpose.xlu0.b32.cont [8/16] 0.0, 128
      %3454 = vxpose.xlu0.b32.cont [9/16] 0.0, 128
      %3455 = vxpose.xlu0.b32.cont [10/16] 0.0, 128
      %3456 = vxpose.xlu0.b32.cont [11/16] 0.0, 128
      %3457 = vxpose.xlu0.b32.cont [12/16] 0.0, 128
      %3458 = vxpose.xlu0.b32.cont [13/16] 0.0, 128
      %3459 = vxpose.xlu0.b32.cont [14/16] 0.0, 128
      %3460 = vxpose.xlu0.b32.cont [15/16] 0.0, 128
      %3461 = vxpose.xlu0.b32.end [16/16] 0.0, 128
      %v3462 = vpop.trf.xlu0
      %v3463 = vpop.trf.xlu0
      %v3464 = vpop.trf.xlu0
      %v3465 = vpop.trf.xlu0
      %v3466 = vpop.trf.xlu0
      %v3467 = vpop.trf.xlu0
      %v3468 = vpop.trf.xlu0
      %v3469 = vpop.trf.xlu0
      %v3470 = vpop.trf.xlu0
      %v3471 = vpop.trf.xlu0
      %v3472 = vpop.trf.xlu0
      %v3473 = vpop.trf.xlu0
      %v3474 = vpop.trf.xlu0
      %v3475 = vpop.trf.xlu0
      %v3476 = vpop.trf.xlu0
      %v3477 = vpop.trf.xlu0
      %v3479 = vsel %vm1733, %v3462, 0
      %3481 = vmatprep.subr.mxu0 0.0
      %3482 = vmatpush1.msra.mxu0 %v2892
      %3483 = vmatprep.subr.mxu0 0.0
      %3484 = vmatpush1.msra.mxu0 %v2894
      %3485 = vmatprep.subr.mxu0 0.0
      %3486 = vmatpush1.msra.mxu0 0.0
      %3487 = vmatprep.subr.mxu0 0.0
      %3488 = vmatpush1.msra.mxu0 0.0
      %3489 = vmatprep.subr.mxu0 0.0
      %3490 = vmatpush1.msra.mxu0 0.0
      %3491 = vmatprep.subr.mxu0 0.0
      %3492 = vmatpush1.msra.mxu0 0.0
      %3493 = vmatprep.subr.mxu0 0.0
      %3494 = vmatpush1.msra.mxu0 0.0
      %3495 = vmatprep.subr.mxu0 0.0
      %3496 = vmatpush1.msra.mxu0 0.0
      %3497 = vmatprep.subr.mxu0 0.0
      %3498 = vmatpush1.msra.mxu0 0.0
      %3499 = vmatprep.subr.mxu0 0.0
      %3500 = vmatpush1.msra.mxu0 0.0
      %3501 = vmatprep.subr.mxu0 0.0
      %3502 = vmatpush1.msra.mxu0 0.0
      %3503 = vmatprep.subr.mxu0 0.0
      %3504 = vmatpush1.msra.mxu0 0.0
      %3505 = vmatprep.subr.mxu0 0.0
      %3506 = vmatpush1.msra.mxu0 0.0
      %3507 = vmatprep.subr.mxu0 0.0
      %3508 = vmatpush1.msra.mxu0 0.0
      %3509 = vmatprep.subr.mxu0 0.0
      %3510 = vmatpush1.msra.mxu0 0.0
      %3511 = vmatprep.subr.mxu0 0.0
      %3512 = vmatpush1.msra.mxu0 0.0
      %3513 = vmatprep.subr.mxu0 0.0
      %3514 = vmatpush1.msra.mxu0 0.0
      %3515 = vmatprep.subr.mxu0 0.0
      %3516 = vmatpush1.msra.mxu0 0.0
      %3517 = vmatprep.subr.mxu0 0.0
      %3518 = vmatpush1.msra.mxu0 0.0
      %3519 = vmatprep.subr.mxu0 0.0
      %3520 = vmatpush1.msra.mxu0 0.0
      %3521 = vmatprep.subr.mxu0 0.0
      %3522 = vmatpush1.msra.mxu0 0.0
      %3523 = vmatprep.subr.mxu0 0.0
      %3524 = vmatpush1.msra.mxu0 0.0
      %3525 = vmatprep.subr.mxu0 0.0
      %3526 = vmatpush1.msra.mxu0 0.0
      %3527 = vmatprep.subr.mxu0 0.0
      %3528 = vmatpush1.msra.mxu0 0.0
      %3529 = vmatprep.subr.mxu0 0.0
      %3530 = vmatpush1.msra.mxu0 0.0
      %3531 = vmatprep.subr.mxu0 0.0
      %3532 = vmatpush1.msra.mxu0 0.0
      %3533 = vmatprep.subr.mxu0 0.0
      %3534 = vmatpush1.msra.mxu0 0.0
      %3535 = vmatprep.subr.mxu0 0.0
      %3536 = vmatpush1.msra.mxu0 0.0
      %3537 = vmatprep.subr.mxu0 0.0
      %3538 = vmatpush1.msra.mxu0 0.0
      %3539 = vmatprep.subr.mxu0 0.0
      %3540 = vmatpush1.msra.mxu0 0.0
      %3541 = vmatprep.subr.mxu0 0.0
      %3542 = vmatpush1.msra.mxu0 0.0
      %3543 = vmatprep.subr.mxu0 0.0
      %3544 = vmatpush1.msra.mxu0 0.0
      %3545 = vmatprep.mubr.f32.mxu0 0.0
      %3546 = vmatmul.mubr.f32.gmra.mrb[0].mxu0 %v3479
      %v3547 = vpop.f32.mrb[0].mxu0
      %v3548 = vadd.f32 0.0, %v3547
      %v3549 = vpop.f32.mrb[0].mxu0
      %3550 = vdwg.mxu0
      %v3551 = vld [vmem:[%s16] sm:$0xff]
      %v3552 = vld [vmem:[%s16 + $0x8] sm:$0xff]
      %v3553 = vld [vmem:[%s16 + $0x10] sm:$0xff]
      %v3554 = vld [vmem:[%s16 + $0x18] sm:$0xff]
      %v3555 = vld [vmem:[%s16 + $0x20] sm:$0xff]
      %v3556 = vld [vmem:[%s16 + $0x28] sm:$0xff]
      %v3557 = vld [vmem:[%s16 + $0x30] sm:$0xff]
      %v3558 = vld [vmem:[%s16 + $0x38] sm:$0xff]
      %v3560 = vsel %vm118, %v3548, 0
      %3562 = vmatprep.subr.mxu0 %v3552
      %3563 = vmatpush1.msra.mxu0 %v3551
      %3564 = vmatprep.subr.mxu0 %v3554
      %3565 = vmatpush1.msra.mxu0 %v3553
      %3566 = vmatprep.subr.mxu0 %v3556
      %3567 = vmatpush1.msra.mxu0 %v3555
      %3568 = vmatprep.subr.mxu0 %v3558
      %3569 = vmatpush1.msra.mxu0 %v3557
      %3570 = vmatprep.subr.mxu0 0.0
      %3571 = vmatpush1.msra.mxu0 0.0
      %3572 = vmatprep.subr.mxu0 0.0
      %3573 = vmatpush1.msra.mxu0 0.0
      %3574 = vmatprep.subr.mxu0 0.0
      %3575 = vmatpush1.msra.mxu0 0.0
      %3576 = vmatprep.subr.mxu0 0.0
      %3577 = vmatpush1.msra.mxu0 0.0
      %3578 = vmatprep.subr.mxu0 0.0
      %3579 = vmatpush1.msra.mxu0 0.0
      %3580 = vmatprep.subr.mxu0 0.0
      %3581 = vmatpush1.msra.mxu0 0.0
      %3582 = vmatprep.subr.mxu0 0.0
      %3583 = vmatpush1.msra.mxu0 0.0
      %3584 = vmatprep.subr.mxu0 0.0
      %3585 = vmatpush1.msra.mxu0 0.0
      %3586 = vmatprep.subr.mxu0 0.0
      %3587 = vmatpush1.msra.mxu0 0.0
      %3588 = vmatprep.subr.mxu0 0.0
      %3589 = vmatpush1.msra.mxu0 0.0
      %3590 = vmatprep.subr.mxu0 0.0
      %3591 = vmatpush1.msra.mxu0 0.0
      %3592 = vmatprep.subr.mxu0 0.0
      %3593 = vmatpush1.msra.mxu0 0.0
      %3594 = vmatprep.subr.mxu0 0.0
      %3595 = vmatpush1.msra.mxu0 0.0
      %3596 = vmatprep.subr.mxu0 0.0
      %3597 = vmatpush1.msra.mxu0 0.0
      %3598 = vmatprep.subr.mxu0 0.0
      %3599 = vmatpush1.msra.mxu0 0.0
      %3600 = vmatprep.subr.mxu0 0.0
      %3601 = vmatpush1.msra.mxu0 0.0
      %3602 = vmatprep.subr.mxu0 0.0
      %3603 = vmatpush1.msra.mxu0 0.0
      %3604 = vmatprep.subr.mxu0 0.0
      %3605 = vmatpush1.msra.mxu0 0.0
      %3606 = vmatprep.subr.mxu0 0.0
      %3607 = vmatpush1.msra.mxu0 0.0
      %3608 = vmatprep.subr.mxu0 0.0
      %3609 = vmatpush1.msra.mxu0 0.0
      %3610 = vmatprep.subr.mxu0 0.0
      %3611 = vmatpush1.msra.mxu0 0.0
      %3612 = vmatprep.subr.mxu0 0.0
      %3613 = vmatpush1.msra.mxu0 0.0
      %3614 = vmatprep.subr.mxu0 0.0
      %3615 = vmatpush1.msra.mxu0 0.0
      %3616 = vmatprep.subr.mxu0 0.0
      %3617 = vmatpush1.msra.mxu0 0.0
      %3618 = vmatprep.subr.mxu0 0.0
      %3619 = vmatpush1.msra.mxu0 0.0
      %3620 = vmatprep.subr.mxu0 0.0
      %3621 = vmatpush1.msra.mxu0 0.0
      %3622 = vmatprep.subr.mxu0 0.0
      %3623 = vmatpush1.msra.mxu0 0.0
      %3624 = vmatprep.subr.mxu0 0.0
      %3625 = vmatpush1.msra.mxu0 0.0
      %3626 = vmatprep.mubr.f32.mxu0 0.0
      %3627 = vmatmul.mubr.f32.gmra.mrb[0].mxu0 %v3560
      %v3628 = vpop.f32.mrb[0].mxu0
      %v3629 = vadd.f32 0.0, %v3628
      %v3630 = vpop.f32.mrb[0].mxu0
      %v3631 = vadd.f32 0.0, %v3630
      %3632 = vdwg.mxu0
      %vm3633 = vcmask 64512
      %v3635 = vsel %vm3633, %v3026, 0
      %3637 = vmatprep.subr.mxu0 0.0
      %3638 = vmatpush1.msra.mxu0 %v2993
      %3639 = vmatprep.subr.mxu0 0.0
      %3640 = vmatpush1.msra.mxu0 0.0
      %3641 = vmatprep.subr.mxu0 0.0
      %3642 = vmatpush1.msra.mxu0 0.0
      %3643 = vmatprep.subr.mxu0 0.0
      %3644 = vmatpush1.msra.mxu0 0.0
      %3645 = vmatprep.subr.mxu0 0.0
      %3646 = vmatpush1.msra.mxu0 0.0
      %3647 = vmatprep.subr.mxu0 0.0
      %3648 = vmatpush1.msra.mxu0 0.0
      %3649 = vmatprep.subr.mxu0 0.0
      %3650 = vmatpush1.msra.mxu0 0.0
      %3651 = vmatprep.subr.mxu0 0.0
      %3652 = vmatpush1.msra.mxu0 0.0
      %3653 = vmatprep.subr.mxu0 0.0
      %3654 = vmatpush1.msra.mxu0 0.0
      %3655 = vmatprep.subr.mxu0 0.0
      %3656 = vmatpush1.msra.mxu0 0.0
      %3657 = vmatprep.subr.mxu0 0.0
      %3658 = vmatpush1.msra.mxu0 0.0
      %3659 = vmatprep.subr.mxu0 0.0
      %3660 = vmatpush1.msra.mxu0 0.0
      %3661 = vmatprep.subr.mxu0 0.0
      %3662 = vmatpush1.msra.mxu0 0.0
      %3663 = vmatprep.subr.mxu0 0.0
      %3664 = vmatpush1.msra.mxu0 0.0
      %3665 = vmatprep.subr.mxu0 0.0
      %3666 = vmatpush1.msra.mxu0 0.0
      %3667 = vmatprep.subr.mxu0 0.0
      %3668 = vmatpush1.msra.mxu0 0.0
      %3669 = vmatprep.subr.mxu0 0.0
      %3670 = vmatpush1.msra.mxu0 0.0
      %3671 = vmatprep.subr.mxu0 0.0
      %3672 = vmatpush1.msra.mxu0 0.0
      %3673 = vmatprep.subr.mxu0 0.0
      %3674 = vmatpush1.msra.mxu0 0.0
      %3675 = vmatprep.subr.mxu0 0.0
      %3676 = vmatpush1.msra.mxu0 0.0
      %3677 = vmatprep.subr.mxu0 0.0
      %3678 = vmatpush1.msra.mxu0 0.0
      %3679 = vmatprep.subr.mxu0 0.0
      %3680 = vmatpush1.msra.mxu0 0.0
      %3681 = vmatprep.subr.mxu0 0.0
      %3682 = vmatpush1.msra.mxu0 0.0
      %3683 = vmatprep.subr.mxu0 0.0
      %3684 = vmatpush1.msra.mxu0 0.0
      %3685 = vmatprep.subr.mxu0 0.0
      %3686 = vmatpush1.msra.mxu0 0.0
      %3687 = vmatprep.subr.mxu0 0.0
      %3688 = vmatpush1.msra.mxu0 0.0
      %3689 = vmatprep.subr.mxu0 0.0
      %3690 = vmatpush1.msra.mxu0 0.0
      %3691 = vmatprep.subr.mxu0 0.0
      %3692 = vmatpush1.msra.mxu0 0.0
      %3693 = vmatprep.subr.mxu0 0.0
      %3694 = vmatpush1.msra.mxu0 0.0
      %3695 = vmatprep.subr.mxu0 0.0
      %3696 = vmatpush1.msra.mxu0 0.0
      %3697 = vmatprep.subr.mxu0 0.0
      %3698 = vmatpush1.msra.mxu0 0.0
      %3699 = vmatprep.subr.mxu0 0.0
      %3700 = vmatpush1.msra.mxu0 0.0
      %3701 = vmatprep.mubr.f32.mxu0 0.0
      %3702 = vmatmul.mubr.f32.gmra.mrb[0].mxu0 %v3635
      %v3703 = vpop.f32.mrb[0].mxu0
      %v3704 = vadd.f32 0.0, %v3703
      %v3705 = vpop.f32.mrb[0].mxu0
      %3706 = vdwg.mxu0
      %3708 = vrot.lane.b32.xlu0 %v3704, 121
      %v3709 = vpop.permute.xlu0 %3708
      %v3711 = vadd.f32 %v3631, %v3709
      %3713 = vrot.lane.b32.xlu0 %v3112, 105
      %v3714 = vpop.permute.xlu0 %3713
      %v3716 = vadd.f32 %v3711, %v3714
      %v3718 = vlaneseq
      %v3719 = vshrl.u32 %v3718, 7
      %v3720 = vsub.s32 0, %v3719
      %v3721 = vrot.slane %v2998, %v3720
      %3722 = vrot.lane.b32.xlu0 %v3721, 9
      %v3723 = vpop.permute.xlu0 %3722
      %v3725 = vadd.f32 %v3716, %v3723
      %v3726 = vxor.u32 %v3725, 2147483648
      %v3727 = vmul.f32 %v3726, 1.442695
      %v3728 = vpow.pop %v3727
      %v3729 = vadd.f32 %v3728, 1.0
      %v3730 = vrcp.pop %v3729
      %v3731 = vmul.f32 1.0, %v3730
      %s3732 = scalar_lea.vmem %s24, %s3017
      %v3733 = vld [vmem:[%s3732] sm:$0x1]
      %v3734 = vadd.f32 %v3704, %v2994
      %v3735 = vmax.f32 %v3734, 0.0
      %v3736 = vmul.f32 %v3735, %v3733
      %v3738 = vsel %vm1733, %v3736, 0
      %3740 = vmatprep.subr.mxu0 0.0
      %3741 = vmatpush1.msra.mxu0 %v2995
      %3742 = vmatprep.subr.mxu0 0.0
      %3743 = vmatpush1.msra.mxu0 %v2996
      %3744 = vmatprep.subr.mxu0 0.0
      %3745 = vmatpush1.msra.mxu0 0.0
      %3746 = vmatprep.subr.mxu0 0.0
      %3747 = vmatpush1.msra.mxu0 0.0
      %3748 = vmatprep.subr.mxu0 0.0
      %3749 = vmatpush1.msra.mxu0 0.0
      %3750 = vmatprep.subr.mxu0 0.0
      %3751 = vmatpush1.msra.mxu0 0.0
      %3752 = vmatprep.subr.mxu0 0.0
      %3753 = vmatpush1.msra.mxu0 0.0
      %3754 = vmatprep.subr.mxu0 0.0
      %3755 = vmatpush1.msra.mxu0 0.0
      %3756 = vmatprep.subr.mxu0 0.0
      %3757 = vmatpush1.msra.mxu0 0.0
      %3758 = vmatprep.subr.mxu0 0.0
      %3759 = vmatpush1.msra.mxu0 0.0
      %3760 = vmatprep.subr.mxu0 0.0
      %3761 = vmatpush1.msra.mxu0 0.0
      %3762 = vmatprep.subr.mxu0 0.0
      %3763 = vmatpush1.msra.mxu0 0.0
      %3764 = vmatprep.subr.mxu0 0.0
      %3765 = vmatpush1.msra.mxu0 0.0
      %3766 = vmatprep.subr.mxu0 0.0
      %3767 = vmatpush1.msra.mxu0 0.0
      %3768 = vmatprep.subr.mxu0 0.0
      %3769 = vmatpush1.msra.mxu0 0.0
      %3770 = vmatprep.subr.mxu0 0.0
      %3771 = vmatpush1.msra.mxu0 0.0
      %3772 = vmatprep.subr.mxu0 0.0
      %3773 = vmatpush1.msra.mxu0 0.0
      %3774 = vmatprep.subr.mxu0 0.0
      %3775 = vmatpush1.msra.mxu0 0.0
      %3776 = vmatprep.subr.mxu0 0.0
      %3777 = vmatpush1.msra.mxu0 0.0
      %3778 = vmatprep.subr.mxu0 0.0
      %3779 = vmatpush1.msra.mxu0 0.0
      %3780 = vmatprep.subr.mxu0 0.0
      %3781 = vmatpush1.msra.mxu0 0.0
      %3782 = vmatprep.subr.mxu0 0.0
      %3783 = vmatpush1.msra.mxu0 0.0
      %3784 = vmatprep.subr.mxu0 0.0
      %3785 = vmatpush1.msra.mxu0 0.0
      %3786 = vmatprep.subr.mxu0 0.0
      %3787 = vmatpush1.msra.mxu0 0.0
      %3788 = vmatprep.subr.mxu0 0.0
      %3789 = vmatpush1.msra.mxu0 0.0
      %3790 = vmatprep.subr.mxu0 0.0
      %3791 = vmatpush1.msra.mxu0 0.0
      %3792 = vmatprep.subr.mxu0 0.0
      %3793 = vmatpush1.msra.mxu0 0.0
      %3794 = vmatprep.subr.mxu0 0.0
      %3795 = vmatpush1.msra.mxu0 0.0
      %3796 = vmatprep.subr.mxu0 0.0
      %3797 = vmatpush1.msra.mxu0 0.0
      %3798 = vmatprep.subr.mxu0 0.0
      %3799 = vmatpush1.msra.mxu0 0.0
      %3800 = vmatprep.subr.mxu0 0.0
      %3801 = vmatpush1.msra.mxu0 0.0
      %3802 = vmatprep.subr.mxu0 0.0
      %3803 = vmatpush1.msra.mxu0 0.0
      %3804 = vmatprep.mubr.f32.mxu0 0.0
      %3805 = vmatmul.mubr.f32.gmra.mrb[0].mxu0 %v3738
      %v3806 = vpop.f32.mrb[0].mxu0
      %v3807 = vadd.f32 %v2997, %v3806
      %v3808 = vpop.f32.mrb[0].mxu0
      %3809 = vdwg.mxu0
      %v3810 = vmax.f32 %v3807, 0.0
      %3812 = vrot.lane.b32.xlu0 %v3733, 112
      %v3813 = vpop.permute.xlu0 %3812
      %v3815 = vmul.f32 %v3810, %v3813
      %v3816 = vadd.f32 %v3629, %v3110
      %v3817 = vld [vmem:[%s18] sm:$0x1]
      %v3818 = vadd.f32 %v3816, %v3817
      %v3819 = vld [vmem:[%s17] sm:$0xff]
      %v3820 = vld [vmem:[%s17 + $0x8] sm:$0xff]
      %v3822 = vsel %vm1733, %v3815, 0
      %3824 = vmatprep.subr.mxu0 0.0
      %3825 = vmatpush1.msra.mxu0 %v3819
      %3826 = vmatprep.subr.mxu0 0.0
      %3827 = vmatpush1.msra.mxu0 %v3820
      %3828 = vmatprep.subr.mxu0 0.0
      %3829 = vmatpush1.msra.mxu0 0.0
      %3830 = vmatprep.subr.mxu0 0.0
      %3831 = vmatpush1.msra.mxu0 0.0
      %3832 = vmatprep.subr.mxu0 0.0
      %3833 = vmatpush1.msra.mxu0 0.0
      %3834 = vmatprep.subr.mxu0 0.0
      %3835 = vmatpush1.msra.mxu0 0.0
      %3836 = vmatprep.subr.mxu0 0.0
      %3837 = vmatpush1.msra.mxu0 0.0
      %3838 = vmatprep.subr.mxu0 0.0
      %3839 = vmatpush1.msra.mxu0 0.0
      %3840 = vmatprep.subr.mxu0 0.0
      %3841 = vmatpush1.msra.mxu0 0.0
      %3842 = vmatprep.subr.mxu0 0.0
      %3843 = vmatpush1.msra.mxu0 0.0
      %3844 = vmatprep.subr.mxu0 0.0
      %3845 = vmatpush1.msra.mxu0 0.0
      %3846 = vmatprep.subr.mxu0 0.0
      %3847 = vmatpush1.msra.mxu0 0.0
      %3848 = vmatprep.subr.mxu0 0.0
      %3849 = vmatpush1.msra.mxu0 0.0
      %3850 = vmatprep.subr.mxu0 0.0
      %3851 = vmatpush1.msra.mxu0 0.0
      %3852 = vmatprep.subr.mxu0 0.0
      %3853 = vmatpush1.msra.mxu0 0.0
      %3854 = vmatprep.subr.mxu0 0.0
      %3855 = vmatpush1.msra.mxu0 0.0
      %3856 = vmatprep.subr.mxu0 0.0
      %3857 = vmatpush1.msra.mxu0 0.0
      %3858 = vmatprep.subr.mxu0 0.0
      %3859 = vmatpush1.msra.mxu0 0.0
      %3860 = vmatprep.subr.mxu0 0.0
      %3861 = vmatpush1.msra.mxu0 0.0
      %3862 = vmatprep.subr.mxu0 0.0
      %3863 = vmatpush1.msra.mxu0 0.0
      %3864 = vmatprep.subr.mxu0 0.0
      %3865 = vmatpush1.msra.mxu0 0.0
      %3866 = vmatprep.subr.mxu0 0.0
      %3867 = vmatpush1.msra.mxu0 0.0
      %3868 = vmatprep.subr.mxu0 0.0
      %3869 = vmatpush1.msra.mxu0 0.0
      %3870 = vmatprep.subr.mxu0 0.0
      %3871 = vmatpush1.msra.mxu0 0.0
      %3872 = vmatprep.subr.mxu0 0.0
      %3873 = vmatpush1.msra.mxu0 0.0
      %3874 = vmatprep.subr.mxu0 0.0
      %3875 = vmatpush1.msra.mxu0 0.0
      %3876 = vmatprep.subr.mxu0 0.0
      %3877 = vmatpush1.msra.mxu0 0.0
      %3878 = vmatprep.subr.mxu0 0.0
      %3879 = vmatpush1.msra.mxu0 0.0
      %3880 = vmatprep.subr.mxu0 0.0
      %3881 = vmatpush1.msra.mxu0 0.0
      %3882 = vmatprep.subr.mxu0 0.0
      %3883 = vmatpush1.msra.mxu0 0.0
      %3884 = vmatprep.subr.mxu0 0.0
      %3885 = vmatpush1.msra.mxu0 0.0
      %3886 = vmatprep.subr.mxu0 0.0
      %3887 = vmatpush1.msra.mxu0 0.0
      %3888 = vmatprep.mubr.f32.mxu0 0.0
      %3889 = vmatmul.mubr.f32.gmra.mrb[0].mxu0 %v3822
      %v3890 = vpop.f32.mrb[0].mxu0
      %v3891 = vadd.f32 0.0, %v3890
      %v3892 = vpop.f32.mrb[0].mxu0
      %3893 = vdwg.mxu0
      %v3894 = vadd.f32 %v3818, %v3891
      %v3895 = vxor.u32 %v3894, 2147483648
      %v3896 = vmul.f32 %v3895, 1.442695
      %v3897 = vpow.pop %v3896
      %v3898 = vadd.f32 %v3897, 1.0
      %v3899 = vrcp.pop %v3898
      %v3900 = vmul.f32 1.0, %v3899
      %v3901 = vtanh.pop %v3894
      %v3902 = vmul.f32 %v3900, %v3023
      %3904 = vrot.lane.b32.xlu0 %v3901, 64
      %v3905 = vpop.permute.xlu0 %3904
      %v3907 = vmul.f32 %v3900, %v3905
      %3909 = vrot.lane.b32.xlu0 %v3907, 32
      %v3910 = vpop.permute.xlu0 %3909
      %v3912 = vadd.f32 %v3902, %v3910
      %v3913 = vtanh.pop %v3912
      %3915 = vrot.lane.b32.xlu0 %v3913, 64
      %v3916 = vpop.permute.xlu0 %3915
      %v3918 = vmul.f32 %v3900, %v3916
      %v3919 = vmul.f32 %v3022, 0.1
      %v3920 = vmul.f32 %v3918, 0.9
      %v3921 = vadd.f32 %v3919, %v3920
      %v3922 = vmul.f32 %v3023, 0.1
      %v3923 = vmul.f32 %v3912, 0.9
      %v3924 = vadd.f32 %v3922, %v3923
      %3926 = vrot.lane.b32.xlu0 %v3921, 32
      %v3927 = vpop.permute.xlu0 %3926
      %3930 = vrot.lane.b32.xlu0 %v3024, 64
      %v3931 = vpop.permute.xlu0 %3930
      %v3933 = vsel %vm118, %v3927, %v3931
      %v3934 = vld [vmem:[%s19] sm:$0xff]
      %v3935 = vld [vmem:[%s19 + $0x8] sm:$0xff]
      %v3936 = vld [vmem:[%s19 + $0x10] sm:$0xff]
      %v3937 = vld [vmem:[%s19 + $0x18] sm:$0xff]
      %v3938 = vld [vmem:[%s19 + $0x20] sm:$0xff]
      %v3939 = vld [vmem:[%s19 + $0x28] sm:$0xff]
      %v3940 = vld [vmem:[%s19 + $0x30] sm:$0xff]
      %v3941 = vld [vmem:[%s19 + $0x38] sm:$0xff]
      %v3942 = vld [vmem:[%s20] sm:$0x1]
      %vm3943 = vcmask 523264
      %v3945 = vsel %vm3943, %v3933, 0
      %3947 = vmatprep.subr.mxu0 0.0
      %3948 = vmatpush1.msra.mxu0 %v3934
      %3949 = vmatprep.subr.mxu0 0.0
      %3950 = vmatpush1.msra.mxu0 %v3935
      %3951 = vmatprep.subr.mxu0 0.0
      %3952 = vmatpush1.msra.mxu0 %v3936
      %3953 = vmatprep.subr.mxu0 0.0
      %3954 = vmatpush1.msra.mxu0 %v3937
      %3955 = vmatprep.subr.mxu0 0.0
      %3956 = vmatpush1.msra.mxu0 %v3938
      %3957 = vmatprep.subr.mxu0 0.0
      %3958 = vmatpush1.msra.mxu0 %v3939
      %3959 = vmatprep.subr.mxu0 0.0
      %3960 = vmatpush1.msra.mxu0 %v3940
      %3961 = vmatprep.subr.mxu0 0.0
      %3962 = vmatpush1.msra.mxu0 %v3941
      %3963 = vmatprep.subr.mxu0 0.0
      %3964 = vmatpush1.msra.mxu0 0.0
      %3965 = vmatprep.subr.mxu0 0.0
      %3966 = vmatpush1.msra.mxu0 0.0
      %3967 = vmatprep.subr.mxu0 0.0
      %3968 = vmatpush1.msra.mxu0 0.0
      %3969 = vmatprep.subr.mxu0 0.0
      %3970 = vmatpush1.msra.mxu0 0.0
      %3971 = vmatprep.subr.mxu0 0.0
      %3972 = vmatpush1.msra.mxu0 0.0
      %3973 = vmatprep.subr.mxu0 0.0
      %3974 = vmatpush1.msra.mxu0 0.0
      %3975 = vmatprep.subr.mxu0 0.0
      %3976 = vmatpush1.msra.mxu0 0.0
      %3977 = vmatprep.subr.mxu0 0.0
      %3978 = vmatpush1.msra.mxu0 0.0
      %3979 = vmatprep.subr.mxu0 0.0
      %3980 = vmatpush1.msra.mxu0 0.0
      %3981 = vmatprep.subr.mxu0 0.0
      %3982 = vmatpush1.msra.mxu0 0.0
      %3983 = vmatprep.subr.mxu0 0.0
      %3984 = vmatpush1.msra.mxu0 0.0
      %3985 = vmatprep.subr.mxu0 0.0
      %3986 = vmatpush1.msra.mxu0 0.0
      %3987 = vmatprep.subr.mxu0 0.0
      %3988 = vmatpush1.msra.mxu0 0.0
      %3989 = vmatprep.subr.mxu0 0.0
      %3990 = vmatpush1.msra.mxu0 0.0
      %3991 = vmatprep.subr.mxu0 0.0
      %3992 = vmatpush1.msra.mxu0 0.0
      %3993 = vmatprep.subr.mxu0 0.0
      %3994 = vmatpush1.msra.mxu0 0.0
      %3995 = vmatprep.subr.mxu0 0.0
      %3996 = vmatpush1.msra.mxu0 0.0
      %3997 = vmatprep.subr.mxu0 0.0
      %3998 = vmatpush1.msra.mxu0 0.0
      %3999 = vmatprep.subr.mxu0 0.0
      %4000 = vmatpush1.msra.mxu0 0.0
      %4001 = vmatprep.subr.mxu0 0.0
      %4002 = vmatpush1.msra.mxu0 0.0
      %4003 = vmatprep.subr.mxu0 0.0
      %4004 = vmatpush1.msra.mxu0 0.0
      %4005 = vmatprep.subr.mxu0 0.0
      %4006 = vmatpush1.msra.mxu0 0.0
      %4007 = vmatprep.subr.mxu0 0.0
      %4008 = vmatpush1.msra.mxu0 0.0
      %4009 = vmatprep.subr.mxu0 0.0
      %4010 = vmatpush1.msra.mxu0 0.0
      %4011 = vmatprep.mubr.f32.mxu0 0.0
      %4012 = vmatmul.mubr.f32.gmra.mrb[0].mxu0 %v3945
      %v4013 = vpop.f32.mrb[0].mxu0
      %v4014 = vadd.f32 %v3942, %v4013
      %v4015 = vpop.f32.mrb[0].mxu0
      %4016 = vdwg.mxu0
      %v4017 = vxor.u32 %v4014, 2147483648
      %v4018 = vmul.f32 %v4017, 1.442695
      %v4019 = vpow.pop %v4018
      %v4020 = vadd.f32 %v4019, 1.0
      %v4021 = vrcp.pop %v4020
      %v4022 = vmul.f32 1.0, %v4021
      %v4023 = vtanh.pop %v4014
      %v4024 = vmul.f32 %v4022, %v3025
      %4026 = vrot.lane.b32.xlu0 %v4023, 64
      %v4027 = vpop.permute.xlu0 %4026
      %v4029 = vmul.f32 %v4022, %v4027
      %4031 = vrot.lane.b32.xlu0 %v4029, 32
      %v4032 = vpop.permute.xlu0 %4031
      %v4034 = vadd.f32 %v4024, %v4032
      %v4035 = vtanh.pop %v4034
      %4037 = vrot.lane.b32.xlu0 %v4035, 64
      %v4038 = vpop.permute.xlu0 %4037
      %v4040 = vmul.f32 %v4022, %v4038
      %v4041 = vmul.f32 %v3024, 0.1
      %v4042 = vmul.f32 %v4040, 0.9
      %v4043 = vadd.f32 %v4041, %v4042
      %v4044 = vmul.f32 %v3025, 0.1
      %v4045 = vmul.f32 %v4034, 0.9
      %v4046 = vadd.f32 %v4044, %v4045
      %v4047 = vld [vmem:[%s21] sm:$0xff]
      %v4048 = vld [vmem:[%s21 + $0x8] sm:$0xff]
      %v4049 = vld [vmem:[%s21 + $0x10] sm:$0xff]
      %v4050 = vld [vmem:[%s21 + $0x18] sm:$0xff]
      %4052 = vrot.lane.b32.xlu0 %v4043, 32
      %v4053 = vpop.permute.xlu0 %4052
      %v4054 = vsel %vm118, %v4053, 0
      %4056 = vmatprep.subr.mxu0 0.0
      %4057 = vmatpush1.msra.mxu0 %v4047
      %4058 = vmatprep.subr.mxu0 0.0
      %4059 = vmatpush1.msra.mxu0 %v4048
      %4060 = vmatprep.subr.mxu0 0.0
      %4061 = vmatpush1.msra.mxu0 %v4049
      %4062 = vmatprep.subr.mxu0 0.0
      %4063 = vmatpush1.msra.mxu0 %v4050
      %4064 = vmatprep.subr.mxu0 0.0
      %4065 = vmatpush1.msra.mxu0 0.0
      %4066 = vmatprep.subr.mxu0 0.0
      %4067 = vmatpush1.msra.mxu0 0.0
      %4068 = vmatprep.subr.mxu0 0.0
      %4069 = vmatpush1.msra.mxu0 0.0
      %4070 = vmatprep.subr.mxu0 0.0
      %4071 = vmatpush1.msra.mxu0 0.0
      %4072 = vmatprep.subr.mxu0 0.0
      %4073 = vmatpush1.msra.mxu0 0.0
      %4074 = vmatprep.subr.mxu0 0.0
      %4075 = vmatpush1.msra.mxu0 0.0
      %4076 = vmatprep.subr.mxu0 0.0
      %4077 = vmatpush1.msra.mxu0 0.0
      %4078 = vmatprep.subr.mxu0 0.0
      %4079 = vmatpush1.msra.mxu0 0.0
      %4080 = vmatprep.subr.mxu0 0.0
      %4081 = vmatpush1.msra.mxu0 0.0
      %4082 = vmatprep.subr.mxu0 0.0
      %4083 = vmatpush1.msra.mxu0 0.0
      %4084 = vmatprep.subr.mxu0 0.0
      %4085 = vmatpush1.msra.mxu0 0.0
      %4086 = vmatprep.subr.mxu0 0.0
      %4087 = vmatpush1.msra.mxu0 0.0
      %4088 = vmatprep.subr.mxu0 0.0
      %4089 = vmatpush1.msra.mxu0 0.0
      %4090 = vmatprep.subr.mxu0 0.0
      %4091 = vmatpush1.msra.mxu0 0.0
      %4092 = vmatprep.subr.mxu0 0.0
      %4093 = vmatpush1.msra.mxu0 0.0
      %4094 = vmatprep.subr.mxu0 0.0
      %4095 = vmatpush1.msra.mxu0 0.0
      %4096 = vmatprep.subr.mxu0 0.0
      %4097 = vmatpush1.msra.mxu0 0.0
      %4098 = vmatprep.subr.mxu0 0.0
      %4099 = vmatpush1.msra.mxu0 0.0
      %4100 = vmatprep.subr.mxu0 0.0
      %4101 = vmatpush1.msra.mxu0 0.0
      %4102 = vmatprep.subr.mxu0 0.0
      %4103 = vmatpush1.msra.mxu0 0.0
      %4104 = vmatprep.subr.mxu0 0.0
      %4105 = vmatpush1.msra.mxu0 0.0
      %4106 = vmatprep.subr.mxu0 0.0
      %4107 = vmatpush1.msra.mxu0 0.0
      %4108 = vmatprep.subr.mxu0 0.0
      %4109 = vmatpush1.msra.mxu0 0.0
      %4110 = vmatprep.subr.mxu0 0.0
      %4111 = vmatpush1.msra.mxu0 0.0
      %4112 = vmatprep.subr.mxu0 0.0
      %4113 = vmatpush1.msra.mxu0 0.0
      %4114 = vmatprep.subr.mxu0 0.0
      %4115 = vmatpush1.msra.mxu0 0.0
      %4116 = vmatprep.subr.mxu0 0.0
      %4117 = vmatpush1.msra.mxu0 0.0
      %4118 = vmatprep.subr.mxu0 0.0
      %4119 = vmatpush1.msra.mxu0 0.0
      %4120 = vmatprep.mubr.f32.mxu0 0.0
      %4121 = vmatmul.mubr.f32.gmra.mrb[0].mxu0 %v4054
      %v4122 = vpop.f32.mrb[0].mxu0
      %v4123 = vadd.f32 %v3631, %v4122
      %v4124 = vpop.f32.mrb[0].mxu0
      %4125 = vdwg.mxu0
      %v4126 = vadd.f32 %v4123, %v2999
      %s4127 = scalar_lea.vmem %s27, %s3017
      %vm4128 = vcmask 57344
      %4129 = vst.msk [vmem:[%s4127] sm:$0x1] %vm4128, %v4126
    $region122: #{tacotron2_forward.1} parent=1 // loop_footer
      %s3021 = sadd.s32 1, %s3017
    $region123: #{tacotron2_forward.1} parent=1 // loop_footer_branch
      %3016 = sbr.rel target = $region119
    $region124: #{tacotron2_forward.1} parent=1 // loop_exit
      _
    %4130 = vst.msk [vmem:[#allocation2] sm:$0xff] %vm118, 0.0
    %4131 = vst.msk [vmem:[#allocation2 + $0x8] sm:$0xff] %vm118, 0.0
    %4132 = vst.msk [vmem:[#allocation2 + $0x10] sm:$0xff] %vm118, 0.0
    %4133 = vst.msk [vmem:[#allocation2 + $0x18] sm:$0xff] %vm118, 0.0
    %4134 = vst.msk [vmem:[#allocation2 + $0x20] sm:$0x3] %vm123, 0.0
    %v4135 = vld [vmem:[%s27] sm:$0xff]
    %v4136 = vld [vmem:[%s27 + $0x8] sm:$0xff]
    %v4137 = vld [vmem:[%s27 + $0x10] sm:$0x3]
    %vm4138 = vcmask 64512
    %4139 = vst.msk [vmem:[#allocation2 + $0x8] sm:$0xff] %vm4138, %v4135
    %4140 = vst.msk [vmem:[#allocation2 + $0x10] sm:$0xff] %vm4138, %v4136
    %vm4141 = vcmask 58368
    %4142 = vst.msk [vmem:[#allocation2 + $0x18] sm:$0x3] %vm4141, %v4137
    %v4143 = vld [vmem:[#allocation2 + $0x6] sm:$0xff]
    %v4144 = vld [vmem:[#allocation2 + $0xe] sm:$0xff]
    %v4145 = vld [vmem:[#allocation2 + $0x16] sm:$0x3]
    %v4146 = vld [vmem:[#allocation8] sm:$0xff]
    %v4147 = vld [vmem:[#allocation8 + $0x8] sm:$0xff]
    %v4148 = vld [vmem:[#allocation8 + $0x10] sm:$0xff]
    %v4149 = vld [vmem:[#allocation8 + $0x18] sm:$0xff]
    %v4150 = vld [vmem:[#allocation2 + $0x7] sm:$0xff]
    %v4151 = vld [vmem:[#allocation2 + $0xf] sm:$0xff]
    %v4152 = vld [vmem:[#allocation2 + $0x17] sm:$0x3]
    %s4153 = scalar_lea.vmem [#allocation8], 32
    %v4154 = vld [vmem:[%s4153] sm:$0xff]
    %v4155 = vld [vmem:[%s4153 + $0x8] sm:$0xff]
    %v4156 = vld [vmem:[%s4153 + $0x10] sm:$0xff]
    %v4157 = vld [vmem:[%s4153 + $0x18] sm:$0xff]
    %v4159 = vsel %vm118, %v4150, 0
    %v4162 = vsel %vm118, %v4151, 0
    %v4165 = vsel %vm118, %v4152, 0
    %4167 = vmatprep.subr.mxu0 0.0
    %4168 = vmatpush1.msra.mxu0 %v4154
    %4169 = vmatprep.subr.mxu0 0.0
    %4170 = vmatpush1.msra.mxu0 %v4155
    %4171 = vmatprep.subr.mxu0 0.0
    %4172 = vmatpush1.msra.mxu0 %v4156
    %4173 = vmatprep.subr.mxu0 0.0
    %4174 = vmatpush1.msra.mxu0 %v4157
    %4175 = vmatprep.subr.mxu0 0.0
    %4176 = vmatpush1.msra.mxu0 0.0
    %4177 = vmatprep.subr.mxu0 0.0
    %4178 = vmatpush1.msra.mxu0 0.0
    %4179 = vmatprep.subr.mxu0 0.0
    %4180 = vmatpush1.msra.mxu0 0.0
    %4181 = vmatprep.subr.mxu0 0.0
    %4182 = vmatpush1.msra.mxu0 0.0
    %4183 = vmatprep.subr.mxu0 0.0
    %4184 = vmatpush1.msra.mxu0 0.0
    %4185 = vmatprep.subr.mxu0 0.0
    %4186 = vmatpush1.msra.mxu0 0.0
    %4187 = vmatprep.subr.mxu0 0.0
    %4188 = vmatpush1.msra.mxu0 0.0
    %4189 = vmatprep.subr.mxu0 0.0
    %4190 = vmatpush1.msra.mxu0 0.0
    %4191 = vmatprep.subr.mxu0 0.0
    %4192 = vmatpush1.msra.mxu0 0.0
    %4193 = vmatprep.subr.mxu0 0.0
    %4194 = vmatpush1.msra.mxu0 0.0
    %4195 = vmatprep.subr.mxu0 0.0
    %4196 = vmatpush1.msra.mxu0 0.0
    %4197 = vmatprep.subr.mxu0 0.0
    %4198 = vmatpush1.msra.mxu0 0.0
    %4199 = vmatprep.subr.mxu0 0.0
    %4200 = vmatpush1.msra.mxu0 0.0
    %4201 = vmatprep.subr.mxu0 0.0
    %4202 = vmatpush1.msra.mxu0 0.0
    %4203 = vmatprep.subr.mxu0 0.0
    %4204 = vmatpush1.msra.mxu0 0.0
    %4205 = vmatprep.subr.mxu0 0.0
    %4206 = vmatpush1.msra.mxu0 0.0
    %4207 = vmatprep.subr.mxu0 0.0
    %4208 = vmatpush1.msra.mxu0 0.0
    %4209 = vmatprep.subr.mxu0 0.0
    %4210 = vmatpush1.msra.mxu0 0.0
    %4211 = vmatprep.subr.mxu0 0.0
    %4212 = vmatpush1.msra.mxu0 0.0
    %4213 = vmatprep.subr.mxu0 0.0
    %4214 = vmatpush1.msra.mxu0 0.0
    %4215 = vmatprep.subr.mxu0 0.0
    %4216 = vmatpush1.msra.mxu0 0.0
    %4217 = vmatprep.subr.mxu0 0.0
    %4218 = vmatpush1.msra.mxu0 0.0
    %4219 = vmatprep.subr.mxu0 0.0
    %4220 = vmatpush1.msra.mxu0 0.0
    %4221 = vmatprep.subr.mxu0 0.0
    %4222 = vmatpush1.msra.mxu0 0.0
    %4223 = vmatprep.subr.mxu0 0.0
    %4224 = vmatpush1.msra.mxu0 0.0
    %4225 = vmatprep.subr.mxu0 0.0
    %4226 = vmatpush1.msra.mxu0 0.0
    %4227 = vmatprep.subr.mxu0 0.0
    %4228 = vmatpush1.msra.mxu0 0.0
    %4229 = vmatprep.subr.mxu0 0.0
    %4230 = vmatpush1.msra.mxu0 0.0
    %4231 = vmatprep.mubr.f32.mxu0 0.0
    %4232 = vmatmul.mubr.f32.gmra.mrb[0].mxu0 %v4159
    %v4233 = vpop.f32.mrb[0].mxu0
    %v4234 = vadd.f32 0.0, %v4233
    %v4235 = vpop.f32.mrb[0].mxu0
    %4236 = vmatprep.mubr.f32.mxu0 0.0
    %4237 = vmatmul.mubr.f32.gmra.mrb[0].mxu0 %v4162
    %v4238 = vpop.f32.mrb[0].mxu0
    %v4239 = vadd.f32 0.0, %v4238
    %v4240 = vpop.f32.mrb[0].mxu0
    %4241 = vmatprep.mubr.f32.mxu0 0.0
    %4242 = vmatmul.mubr.f32.gmra.mrb[0].mxu0 %v4165
    %v4243 = vpop.f32.mrb[0].mxu0
    %v4244 = vadd.f32 0.0, %v4243
    %v4245 = vpop.f32.mrb[0].mxu0
    %4246 = vdwg.mxu0
    %v4248 = vsel %vm118, %v4143, 0
    %v4251 = vsel %vm118, %v4144, 0
    %v4254 = vsel %vm118, %v4145, 0
    %4256 = vmatprep.subr.mxu0 0.0
    %4257 = vmatpush1.msra.mxu0 %v4146
    %4258 = vmatprep.subr.mxu0 0.0
    %4259 = vmatpush1.msra.mxu0 %v4147
    %4260 = vmatprep.subr.mxu0 0.0
    %4261 = vmatpush1.msra.mxu0 %v4148
    %4262 = vmatprep.subr.mxu0 0.0
    %4263 = vmatpush1.msra.mxu0 %v4149
    %4264 = vmatprep.subr.mxu0 0.0
    %4265 = vmatpush1.msra.mxu0 0.0
    %4266 = vmatprep.subr.mxu0 0.0
    %4267 = vmatpush1.msra.mxu0 0.0
    %4268 = vmatprep.subr.mxu0 0.0
    %4269 = vmatpush1.msra.mxu0 0.0
    %4270 = vmatprep.subr.mxu0 0.0
    %4271 = vmatpush1.msra.mxu0 0.0
    %4272 = vmatprep.subr.mxu0 0.0
    %4273 = vmatpush1.msra.mxu0 0.0
    %4274 = vmatprep.subr.mxu0 0.0
    %4275 = vmatpush1.msra.mxu0 0.0
    %4276 = vmatprep.subr.mxu0 0.0
    %4277 = vmatpush1.msra.mxu0 0.0
    %4278 = vmatprep.subr.mxu0 0.0
    %4279 = vmatpush1.msra.mxu0 0.0
    %4280 = vmatprep.subr.mxu0 0.0
    %4281 = vmatpush1.msra.mxu0 0.0
    %4282 = vmatprep.subr.mxu0 0.0
    %4283 = vmatpush1.msra.mxu0 0.0
    %4284 = vmatprep.subr.mxu0 0.0
    %4285 = vmatpush1.msra.mxu0 0.0
    %4286 = vmatprep.subr.mxu0 0.0
    %4287 = vmatpush1.msra.mxu0 0.0
    %4288 = vmatprep.subr.mxu0 0.0
    %4289 = vmatpush1.msra.mxu0 0.0
    %4290 = vmatprep.subr.mxu0 0.0
    %4291 = vmatpush1.msra.mxu0 0.0
    %4292 = vmatprep.subr.mxu0 0.0
    %4293 = vmatpush1.msra.mxu0 0.0
    %4294 = vmatprep.subr.mxu0 0.0
    %4295 = vmatpush1.msra.mxu0 0.0
    %4296 = vmatprep.subr.mxu0 0.0
    %4297 = vmatpush1.msra.mxu0 0.0
    %4298 = vmatprep.subr.mxu0 0.0
    %4299 = vmatpush1.msra.mxu0 0.0
    %4300 = vmatprep.subr.mxu0 0.0
    %4301 = vmatpush1.msra.mxu0 0.0
    %4302 = vmatprep.subr.mxu0 0.0
    %4303 = vmatpush1.msra.mxu0 0.0
    %4304 = vmatprep.subr.mxu0 0.0
    %4305 = vmatpush1.msra.mxu0 0.0
    %4306 = vmatprep.subr.mxu0 0.0
    %4307 = vmatpush1.msra.mxu0 0.0
    %4308 = vmatprep.subr.mxu0 0.0
    %4309 = vmatpush1.msra.mxu0 0.0
    %4310 = vmatprep.subr.mxu0 0.0
    %4311 = vmatpush1.msra.mxu0 0.0
    %4312 = vmatprep.subr.mxu0 0.0
    %4313 = vmatpush1.msra.mxu0 0.0
    %4314 = vmatprep.subr.mxu0 0.0
    %4315 = vmatpush1.msra.mxu0 0.0
    %4316 = vmatprep.subr.mxu0 0.0
    %4317 = vmatpush1.msra.mxu0 0.0
    %4318 = vmatprep.subr.mxu0 0.0
    %4319 = vmatpush1.msra.mxu0 0.0
    %4320 = vmatprep.mubr.f32.mxu0 0.0
    %4321 = vmatmul.mubr.f32.gmra.mrb[0].mxu0 %v4248
    %v4322 = vpop.f32.mrb[0].mxu0
    %v4323 = vadd.f32 %v4234, %v4322
    %v4324 = vpop.f32.mrb[0].mxu0
    %4325 = vmatprep.mubr.f32.mxu0 0.0
    %4326 = vmatmul.mubr.f32.gmra.mrb[0].mxu0 %v4251
    %v4327 = vpop.f32.mrb[0].mxu0
    %v4328 = vadd.f32 %v4239, %v4327
    %v4329 = vpop.f32.mrb[0].mxu0
    %4330 = vmatprep.mubr.f32.mxu0 0.0
    %4331 = vmatmul.mubr.f32.gmra.mrb[0].mxu0 %v4254
    %v4332 = vpop.f32.mrb[0].mxu0
    %v4333 = vadd.f32 %v4244, %v4332
    %v4334 = vpop.f32.mrb[0].mxu0
    %4335 = vdwg.mxu0
    %v4336 = vld [vmem:[#allocation2 + $0x8] sm:$0xff]
    %v4337 = vld [vmem:[#allocation2 + $0x10] sm:$0xff]
    %v4338 = vld [vmem:[#allocation2 + $0x18] sm:$0x3]
    %s4339 = scalar_lea.vmem [#allocation8], 64
    %v4340 = vld [vmem:[%s4339] sm:$0xff]
    %v4341 = vld [vmem:[%s4339 + $0x8] sm:$0xff]
    %v4342 = vld [vmem:[%s4339 + $0x10] sm:$0xff]
    %v4343 = vld [vmem:[%s4339 + $0x18] sm:$0xff]
    %v4345 = vsel %vm118, %v4336, 0
    %v4348 = vsel %vm118, %v4337, 0
    %v4351 = vsel %vm118, %v4338, 0
    %4353 = vmatprep.subr.mxu0 0.0
    %4354 = vmatpush1.msra.mxu0 %v4340
    %4355 = vmatprep.subr.mxu0 0.0
    %4356 = vmatpush1.msra.mxu0 %v4341
    %4357 = vmatprep.subr.mxu0 0.0
    %4358 = vmatpush1.msra.mxu0 %v4342
    %4359 = vmatprep.subr.mxu0 0.0
    %4360 = vmatpush1.msra.mxu0 %v4343
    %4361 = vmatprep.subr.mxu0 0.0
    %4362 = vmatpush1.msra.mxu0 0.0
    %4363 = vmatprep.subr.mxu0 0.0
    %4364 = vmatpush1.msra.mxu0 0.0
    %4365 = vmatprep.subr.mxu0 0.0
    %4366 = vmatpush1.msra.mxu0 0.0
    %4367 = vmatprep.subr.mxu0 0.0
    %4368 = vmatpush1.msra.mxu0 0.0
    %4369 = vmatprep.subr.mxu0 0.0
    %4370 = vmatpush1.msra.mxu0 0.0
    %4371 = vmatprep.subr.mxu0 0.0
    %4372 = vmatpush1.msra.mxu0 0.0
    %4373 = vmatprep.subr.mxu0 0.0
    %4374 = vmatpush1.msra.mxu0 0.0
    %4375 = vmatprep.subr.mxu0 0.0
    %4376 = vmatpush1.msra.mxu0 0.0
    %4377 = vmatprep.subr.mxu0 0.0
    %4378 = vmatpush1.msra.mxu0 0.0
    %4379 = vmatprep.subr.mxu0 0.0
    %4380 = vmatpush1.msra.mxu0 0.0
    %4381 = vmatprep.subr.mxu0 0.0
    %4382 = vmatpush1.msra.mxu0 0.0
    %4383 = vmatprep.subr.mxu0 0.0
    %4384 = vmatpush1.msra.mxu0 0.0
    %4385 = vmatprep.subr.mxu0 0.0
    %4386 = vmatpush1.msra.mxu0 0.0
    %4387 = vmatprep.subr.mxu0 0.0
    %4388 = vmatpush1.msra.mxu0 0.0
    %4389 = vmatprep.subr.mxu0 0.0
    %4390 = vmatpush1.msra.mxu0 0.0
    %4391 = vmatprep.subr.mxu0 0.0
    %4392 = vmatpush1.msra.mxu0 0.0
    %4393 = vmatprep.subr.mxu0 0.0
    %4394 = vmatpush1.msra.mxu0 0.0
    %4395 = vmatprep.subr.mxu0 0.0
    %4396 = vmatpush1.msra.mxu0 0.0
    %4397 = vmatprep.subr.mxu0 0.0
    %4398 = vmatpush1.msra.mxu0 0.0
    %4399 = vmatprep.subr.mxu0 0.0
    %4400 = vmatpush1.msra.mxu0 0.0
    %4401 = vmatprep.subr.mxu0 0.0
    %4402 = vmatpush1.msra.mxu0 0.0
    %4403 = vmatprep.subr.mxu0 0.0
    %4404 = vmatpush1.msra.mxu0 0.0
    %4405 = vmatprep.subr.mxu0 0.0
    %4406 = vmatpush1.msra.mxu0 0.0
    %4407 = vmatprep.subr.mxu0 0.0
    %4408 = vmatpush1.msra.mxu0 0.0
    %4409 = vmatprep.subr.mxu0 0.0
    %4410 = vmatpush1.msra.mxu0 0.0
    %4411 = vmatprep.subr.mxu0 0.0
    %4412 = vmatpush1.msra.mxu0 0.0
    %4413 = vmatprep.subr.mxu0 0.0
    %4414 = vmatpush1.msra.mxu0 0.0
    %4415 = vmatprep.subr.mxu0 0.0
    %4416 = vmatpush1.msra.mxu0 0.0
    %4417 = vmatprep.mubr.f32.mxu0 0.0
    %4418 = vmatmul.mubr.f32.gmra.mrb[0].mxu0 %v4345
    %v4419 = vpop.f32.mrb[0].mxu0
    %v4420 = vadd.f32 0.0, %v4419
    %v4421 = vpop.f32.mrb[0].mxu0
    %4422 = vmatprep.mubr.f32.mxu0 0.0
    %4423 = vmatmul.mubr.f32.gmra.mrb[0].mxu0 %v4348
    %v4424 = vpop.f32.mrb[0].mxu0
    %v4425 = vadd.f32 0.0, %v4424
    %v4426 = vpop.f32.mrb[0].mxu0
    %4427 = vmatprep.mubr.f32.mxu0 0.0
    %4428 = vmatmul.mubr.f32.gmra.mrb[0].mxu0 %v4351
    %v4429 = vpop.f32.mrb[0].mxu0
    %v4430 = vadd.f32 0.0, %v4429
    %v4431 = vpop.f32.mrb[0].mxu0
    %4432 = vdwg.mxu0
    %v4433 = vadd.f32 %v4323, %v4420
    %v4434 = vadd.f32 %v4328, %v4425
    %v4435 = vadd.f32 %v4333, %v4430
    %v4436 = vld [vmem:[#allocation2 + $0x9] sm:$0xff]
    %v4437 = vld [vmem:[#allocation2 + $0x11] sm:$0xff]
    %v4438 = vld [vmem:[#allocation2 + $0x19] sm:$0x3]
    %s4439 = scalar_lea.vmem [#allocation8], 96
    %v4440 = vld [vmem:[%s4439] sm:$0xff]
    %v4441 = vld [vmem:[%s4439 + $0x8] sm:$0xff]
    %v4442 = vld [vmem:[%s4439 + $0x10] sm:$0xff]
    %v4443 = vld [vmem:[%s4439 + $0x18] sm:$0xff]
    %v4445 = vsel %vm118, %v4436, 0
    %v4448 = vsel %vm118, %v4437, 0
    %v4451 = vsel %vm118, %v4438, 0
    %4453 = vmatprep.subr.mxu0 0.0
    %4454 = vmatpush1.msra.mxu0 %v4440
    %4455 = vmatprep.subr.mxu0 0.0
    %4456 = vmatpush1.msra.mxu0 %v4441
    %4457 = vmatprep.subr.mxu0 0.0
    %4458 = vmatpush1.msra.mxu0 %v4442
    %4459 = vmatprep.subr.mxu0 0.0
    %4460 = vmatpush1.msra.mxu0 %v4443
    %4461 = vmatprep.subr.mxu0 0.0
    %4462 = vmatpush1.msra.mxu0 0.0
    %4463 = vmatprep.subr.mxu0 0.0
    %4464 = vmatpush1.msra.mxu0 0.0
    %4465 = vmatprep.subr.mxu0 0.0
    %4466 = vmatpush1.msra.mxu0 0.0
    %4467 = vmatprep.subr.mxu0 0.0
    %4468 = vmatpush1.msra.mxu0 0.0
    %4469 = vmatprep.subr.mxu0 0.0
    %4470 = vmatpush1.msra.mxu0 0.0
    %4471 = vmatprep.subr.mxu0 0.0
    %4472 = vmatpush1.msra.mxu0 0.0
    %4473 = vmatprep.subr.mxu0 0.0
    %4474 = vmatpush1.msra.mxu0 0.0
    %4475 = vmatprep.subr.mxu0 0.0
    %4476 = vmatpush1.msra.mxu0 0.0
    %4477 = vmatprep.subr.mxu0 0.0
    %4478 = vmatpush1.msra.mxu0 0.0
    %4479 = vmatprep.subr.mxu0 0.0
    %4480 = vmatpush1.msra.mxu0 0.0
    %4481 = vmatprep.subr.mxu0 0.0
    %4482 = vmatpush1.msra.mxu0 0.0
    %4483 = vmatprep.subr.mxu0 0.0
    %4484 = vmatpush1.msra.mxu0 0.0
    %4485 = vmatprep.subr.mxu0 0.0
    %4486 = vmatpush1.msra.mxu0 0.0
    %4487 = vmatprep.subr.mxu0 0.0
    %4488 = vmatpush1.msra.mxu0 0.0
    %4489 = vmatprep.subr.mxu0 0.0
    %4490 = vmatpush1.msra.mxu0 0.0
    %4491 = vmatprep.subr.mxu0 0.0
    %4492 = vmatpush1.msra.mxu0 0.0
    %4493 = vmatprep.subr.mxu0 0.0
    %4494 = vmatpush1.msra.mxu0 0.0
    %4495 = vmatprep.subr.mxu0 0.0
    %4496 = vmatpush1.msra.mxu0 0.0
    %4497 = vmatprep.subr.mxu0 0.0
    %4498 = vmatpush1.msra.mxu0 0.0
    %4499 = vmatprep.subr.mxu0 0.0
    %4500 = vmatpush1.msra.mxu0 0.0
    %4501 = vmatprep.subr.mxu0 0.0
    %4502 = vmatpush1.msra.mxu0 0.0
    %4503 = vmatprep.subr.mxu0 0.0
    %4504 = vmatpush1.msra.mxu0 0.0
    %4505 = vmatprep.subr.mxu0 0.0
    %4506 = vmatpush1.msra.mxu0 0.0
    %4507 = vmatprep.subr.mxu0 0.0
    %4508 = vmatpush1.msra.mxu0 0.0
    %4509 = vmatprep.subr.mxu0 0.0
    %4510 = vmatpush1.msra.mxu0 0.0
    %4511 = vmatprep.subr.mxu0 0.0
    %4512 = vmatpush1.msra.mxu0 0.0
    %4513 = vmatprep.subr.mxu0 0.0
    %4514 = vmatpush1.msra.mxu0 0.0
    %4515 = vmatprep.subr.mxu0 0.0
    %4516 = vmatpush1.msra.mxu0 0.0
    %4517 = vmatprep.mubr.f32.mxu0 0.0
    %4518 = vmatmul.mubr.f32.gmra.mrb[0].mxu0 %v4445
    %v4519 = vpop.f32.mrb[0].mxu0
    %v4520 = vadd.f32 0.0, %v4519
    %v4521 = vpop.f32.mrb[0].mxu0
    %4522 = vmatprep.mubr.f32.mxu0 0.0
    %4523 = vmatmul.mubr.f32.gmra.mrb[0].mxu0 %v4448
    %v4524 = vpop.f32.mrb[0].mxu0
    %v4525 = vadd.f32 0.0, %v4524
    %v4526 = vpop.f32.mrb[0].mxu0
    %4527 = vmatprep.mubr.f32.mxu0 0.0
    %4528 = vmatmul.mubr.f32.gmra.mrb[0].mxu0 %v4451
    %v4529 = vpop.f32.mrb[0].mxu0
    %v4530 = vadd.f32 0.0, %v4529
    %v4531 = vpop.f32.mrb[0].mxu0
    %4532 = vdwg.mxu0
    %v4533 = vadd.f32 %v4433, %v4520
    %v4534 = vadd.f32 %v4434, %v4525
    %v4535 = vadd.f32 %v4435, %v4530
    %v4536 = vld [vmem:[#allocation2 + $0xa] sm:$0xff]
    %v4537 = vld [vmem:[#allocation2 + $0x12] sm:$0xff]
    %v4538 = vld [vmem:[#allocation2 + $0x1a] sm:$0x3]
    %s4539 = scalar_lea.vmem [#allocation8], 128
    %v4540 = vld [vmem:[%s4539] sm:$0xff]
    %v4541 = vld [vmem:[%s4539 + $0x8] sm:$0xff]
    %v4542 = vld [vmem:[%s4539 + $0x10] sm:$0xff]
    %v4543 = vld [vmem:[%s4539 + $0x18] sm:$0xff]
    %v4545 = vsel %vm118, %v4536, 0
    %v4548 = vsel %vm118, %v4537, 0
    %v4551 = vsel %vm118, %v4538, 0
    %4553 = vmatprep.subr.mxu0 0.0
    %4554 = vmatpush1.msra.mxu0 %v4540
    %4555 = vmatprep.subr.mxu0 0.0
    %4556 = vmatpush1.msra.mxu0 %v4541
    %4557 = vmatprep.subr.mxu0 0.0
    %4558 = vmatpush1.msra.mxu0 %v4542
    %4559 = vmatprep.subr.mxu0 0.0
    %4560 = vmatpush1.msra.mxu0 %v4543
    %4561 = vmatprep.subr.mxu0 0.0
    %4562 = vmatpush1.msra.mxu0 0.0
    %4563 = vmatprep.subr.mxu0 0.0
    %4564 = vmatpush1.msra.mxu0 0.0
    %4565 = vmatprep.subr.mxu0 0.0
    %4566 = vmatpush1.msra.mxu0 0.0
    %4567 = vmatprep.subr.mxu0 0.0
    %4568 = vmatpush1.msra.mxu0 0.0
    %4569 = vmatprep.subr.mxu0 0.0
    %4570 = vmatpush1.msra.mxu0 0.0
    %4571 = vmatprep.subr.mxu0 0.0
    %4572 = vmatpush1.msra.mxu0 0.0
    %4573 = vmatprep.subr.mxu0 0.0
    %4574 = vmatpush1.msra.mxu0 0.0
    %4575 = vmatprep.subr.mxu0 0.0
    %4576 = vmatpush1.msra.mxu0 0.0
    %4577 = vmatprep.subr.mxu0 0.0
    %4578 = vmatpush1.msra.mxu0 0.0
    %4579 = vmatprep.subr.mxu0 0.0
    %4580 = vmatpush1.msra.mxu0 0.0
    %4581 = vmatprep.subr.mxu0 0.0
    %4582 = vmatpush1.msra.mxu0 0.0
    %4583 = vmatprep.subr.mxu0 0.0
    %4584 = vmatpush1.msra.mxu0 0.0
    %4585 = vmatprep.subr.mxu0 0.0
    %4586 = vmatpush1.msra.mxu0 0.0
    %4587 = vmatprep.subr.mxu0 0.0
    %4588 = vmatpush1.msra.mxu0 0.0
    %4589 = vmatprep.subr.mxu0 0.0
    %4590 = vmatpush1.msra.mxu0 0.0
    %4591 = vmatprep.subr.mxu0 0.0
    %4592 = vmatpush1.msra.mxu0 0.0
    %4593 = vmatprep.subr.mxu0 0.0
    %4594 = vmatpush1.msra.mxu0 0.0
    %4595 = vmatprep.subr.mxu0 0.0
    %4596 = vmatpush1.msra.mxu0 0.0
    %4597 = vmatprep.subr.mxu0 0.0
    %4598 = vmatpush1.msra.mxu0 0.0
    %4599 = vmatprep.subr.mxu0 0.0
    %4600 = vmatpush1.msra.mxu0 0.0
    %4601 = vmatprep.subr.mxu0 0.0
    %4602 = vmatpush1.msra.mxu0 0.0
    %4603 = vmatprep.subr.mxu0 0.0
    %4604 = vmatpush1.msra.mxu0 0.0
    %4605 = vmatprep.subr.mxu0 0.0
    %4606 = vmatpush1.msra.mxu0 0.0
    %4607 = vmatprep.subr.mxu0 0.0
    %4608 = vmatpush1.msra.mxu0 0.0
    %4609 = vmatprep.subr.mxu0 0.0
    %4610 = vmatpush1.msra.mxu0 0.0
    %4611 = vmatprep.subr.mxu0 0.0
    %4612 = vmatpush1.msra.mxu0 0.0
    %4613 = vmatprep.subr.mxu0 0.0
    %4614 = vmatpush1.msra.mxu0 0.0
    %4615 = vmatprep.subr.mxu0 0.0
    %4616 = vmatpush1.msra.mxu0 0.0
    %4617 = vmatprep.mubr.f32.mxu0 0.0
    %4618 = vmatmul.mubr.f32.gmra.mrb[0].mxu0 %v4545
    %v4619 = vpop.f32.mrb[0].mxu0
    %v4620 = vadd.f32 0.0, %v4619
    %v4621 = vpop.f32.mrb[0].mxu0
    %4622 = vmatprep.mubr.f32.mxu0 0.0
    %4623 = vmatmul.mubr.f32.gmra.mrb[0].mxu0 %v4548
    %v4624 = vpop.f32.mrb[0].mxu0
    %v4625 = vadd.f32 0.0, %v4624
    %v4626 = vpop.f32.mrb[0].mxu0
    %4627 = vmatprep.mubr.f32.mxu0 0.0
    %4628 = vmatmul.mubr.f32.gmra.mrb[0].mxu0 %v4551
    %v4629 = vpop.f32.mrb[0].mxu0
    %v4630 = vadd.f32 0.0, %v4629
    %v4631 = vpop.f32.mrb[0].mxu0
    %4632 = vdwg.mxu0
    %v4633 = vadd.f32 %v4533, %v4620
    %v4634 = vadd.f32 %v4534, %v4625
    %v4635 = vadd.f32 %v4535, %v4630
    %v4636 = vld [vmem:[%s26] sm:$0x1]
    %v4638 = vlaneseq
    %v4639 = vshrl.u32 %v4638, 7
    %v4640 = vsub.s32 0, %v4639
    %v4641 = vrot.slane %v4636, %v4640
    %v4643 = vadd.f32 %v4633, %v4641
    %v4644 = vadd.f32 %v4634, %v4641
    %v4645 = vadd.f32 %v4635, %v4641
    %v4646 = vtanh.pop %v4643
    %v4647 = vtanh.pop %v4644
    %v4648 = vtanh.pop %v4645
    %4649 = vst.msk [vmem:[#allocation2 + $0x8] sm:$0xff] %vm118, %v4646
    %4650 = vst.msk [vmem:[#allocation2 + $0x10] sm:$0xff] %vm118, %v4647
    %4651 = vst.msk [vmem:[#allocation2 + $0x18] sm:$0x3] %vm123, %v4648
    %v4652 = vld [vmem:[#allocation2 + $0x6] sm:$0xff]
    %v4653 = vld [vmem:[#allocation2 + $0xe] sm:$0xff]
    %v4654 = vld [vmem:[#allocation2 + $0x16] sm:$0x3]
    %s4655 = scalar_lea.vmem [#allocation8], 160
    %v4656 = vld [vmem:[%s4655] sm:$0xff]
    %v4657 = vld [vmem:[%s4655 + $0x8] sm:$0xff]
    %v4658 = vld [vmem:[%s4655 + $0x10] sm:$0xff]
    %v4659 = vld [vmem:[%s4655 + $0x18] sm:$0xff]
    %v4660 = vld [vmem:[#allocation2 + $0x7] sm:$0xff]
    %v4661 = vld [vmem:[#allocation2 + $0xf] sm:$0xff]
    %v4662 = vld [vmem:[#allocation2 + $0x17] sm:$0x3]
    %s4663 = scalar_lea.vmem [#allocation8], 192
    %v4664 = vld [vmem:[%s4663] sm:$0xff]
    %v4665 = vld [vmem:[%s4663 + $0x8] sm:$0xff]
    %v4666 = vld [vmem:[%s4663 + $0x10] sm:$0xff]
    %v4667 = vld [vmem:[%s4663 + $0x18] sm:$0xff]
    %v4669 = vsel %vm118, %v4660, 0
    %v4672 = vsel %vm118, %v4661, 0
    %v4675 = vsel %vm118, %v4662, 0
    %4677 = vmatprep.subr.mxu0 0.0
    %4678 = vmatpush1.msra.mxu0 %v4664
    %4679 = vmatprep.subr.mxu0 0.0
    %4680 = vmatpush1.msra.mxu0 %v4665
    %4681 = vmatprep.subr.mxu0 0.0
    %4682 = vmatpush1.msra.mxu0 %v4666
    %4683 = vmatprep.subr.mxu0 0.0
    %4684 = vmatpush1.msra.mxu0 %v4667
    %4685 = vmatprep.subr.mxu0 0.0
    %4686 = vmatpush1.msra.mxu0 0.0
    %4687 = vmatprep.subr.mxu0 0.0
    %4688 = vmatpush1.msra.mxu0 0.0
    %4689 = vmatprep.subr.mxu0 0.0
    %4690 = vmatpush1.msra.mxu0 0.0
    %4691 = vmatprep.subr.mxu0 0.0
    %4692 = vmatpush1.msra.mxu0 0.0
    %4693 = vmatprep.subr.mxu0 0.0
    %4694 = vmatpush1.msra.mxu0 0.0
    %4695 = vmatprep.subr.mxu0 0.0
    %4696 = vmatpush1.msra.mxu0 0.0
    %4697 = vmatprep.subr.mxu0 0.0
    %4698 = vmatpush1.msra.mxu0 0.0
    %4699 = vmatprep.subr.mxu0 0.0
    %4700 = vmatpush1.msra.mxu0 0.0
    %4701 = vmatprep.subr.mxu0 0.0
    %4702 = vmatpush1.msra.mxu0 0.0
    %4703 = vmatprep.subr.mxu0 0.0
    %4704 = vmatpush1.msra.mxu0 0.0
    %4705 = vmatprep.subr.mxu0 0.0
    %4706 = vmatpush1.msra.mxu0 0.0
    %4707 = vmatprep.subr.mxu0 0.0
    %4708 = vmatpush1.msra.mxu0 0.0
    %4709 = vmatprep.subr.mxu0 0.0
    %4710 = vmatpush1.msra.mxu0 0.0
    %4711 = vmatprep.subr.mxu0 0.0
    %4712 = vmatpush1.msra.mxu0 0.0
    %4713 = vmatprep.subr.mxu0 0.0
    %4714 = vmatpush1.msra.mxu0 0.0
    %4715 = vmatprep.subr.mxu0 0.0
    %4716 = vmatpush1.msra.mxu0 0.0
    %4717 = vmatprep.subr.mxu0 0.0
    %4718 = vmatpush1.msra.mxu0 0.0
    %4719 = vmatprep.subr.mxu0 0.0
    %4720 = vmatpush1.msra.mxu0 0.0
    %4721 = vmatprep.subr.mxu0 0.0
    %4722 = vmatpush1.msra.mxu0 0.0
    %4723 = vmatprep.subr.mxu0 0.0
    %4724 = vmatpush1.msra.mxu0 0.0
    %4725 = vmatprep.subr.mxu0 0.0
    %4726 = vmatpush1.msra.mxu0 0.0
    %4727 = vmatprep.subr.mxu0 0.0
    %4728 = vmatpush1.msra.mxu0 0.0
    %4729 = vmatprep.subr.mxu0 0.0
    %4730 = vmatpush1.msra.mxu0 0.0
    %4731 = vmatprep.subr.mxu0 0.0
    %4732 = vmatpush1.msra.mxu0 0.0
    %4733 = vmatprep.subr.mxu0 0.0
    %4734 = vmatpush1.msra.mxu0 0.0
    %4735 = vmatprep.subr.mxu0 0.0
    %4736 = vmatpush1.msra.mxu0 0.0
    %4737 = vmatprep.subr.mxu0 0.0
    %4738 = vmatpush1.msra.mxu0 0.0
    %4739 = vmatprep.subr.mxu0 0.0
    %4740 = vmatpush1.msra.mxu0 0.0
    %4741 = vmatprep.mubr.f32.mxu0 0.0
    %4742 = vmatmul.mubr.f32.gmra.mrb[0].mxu0 %v4669
    %v4743 = vpop.f32.mrb[0].mxu0
    %v4744 = vadd.f32 0.0, %v4743
    %v4745 = vpop.f32.mrb[0].mxu0
    %4746 = vmatprep.mubr.f32.mxu0 0.0
    %4747 = vmatmul.mubr.f32.gmra.mrb[0].mxu0 %v4672
    %v4748 = vpop.f32.mrb[0].mxu0
    %v4749 = vadd.f32 0.0, %v4748
    %v4750 = vpop.f32.mrb[0].mxu0
    %4751 = vmatprep.mubr.f32.mxu0 0.0
    %4752 = vmatmul.mubr.f32.gmra.mrb[0].mxu0 %v4675
    %v4753 = vpop.f32.mrb[0].mxu0
    %v4754 = vadd.f32 0.0, %v4753
    %v4755 = vpop.f32.mrb[0].mxu0
    %4756 = vdwg.mxu0
    %v4758 = vsel %vm118, %v4652, 0
    %v4761 = vsel %vm118, %v4653, 0
    %v4764 = vsel %vm118, %v4654, 0
    %4766 = vmatprep.subr.mxu0 0.0
    %4767 = vmatpush1.msra.mxu0 %v4656
    %4768 = vmatprep.subr.mxu0 0.0
    %4769 = vmatpush1.msra.mxu0 %v4657
    %4770 = vmatprep.subr.mxu0 0.0
    %4771 = vmatpush1.msra.mxu0 %v4658
    %4772 = vmatprep.subr.mxu0 0.0
    %4773 = vmatpush1.msra.mxu0 %v4659
    %4774 = vmatprep.subr.mxu0 0.0
    %4775 = vmatpush1.msra.mxu0 0.0
    %4776 = vmatprep.subr.mxu0 0.0
    %4777 = vmatpush1.msra.mxu0 0.0
    %4778 = vmatprep.subr.mxu0 0.0
    %4779 = vmatpush1.msra.mxu0 0.0
    %4780 = vmatprep.subr.mxu0 0.0
    %4781 = vmatpush1.msra.mxu0 0.0
    %4782 = vmatprep.subr.mxu0 0.0
    %4783 = vmatpush1.msra.mxu0 0.0
    %4784 = vmatprep.subr.mxu0 0.0
    %4785 = vmatpush1.msra.mxu0 0.0
    %4786 = vmatprep.subr.mxu0 0.0
    %4787 = vmatpush1.msra.mxu0 0.0
    %4788 = vmatprep.subr.mxu0 0.0
    %4789 = vmatpush1.msra.mxu0 0.0
    %4790 = vmatprep.subr.mxu0 0.0
    %4791 = vmatpush1.msra.mxu0 0.0
    %4792 = vmatprep.subr.mxu0 0.0
    %4793 = vmatpush1.msra.mxu0 0.0
    %4794 = vmatprep.subr.mxu0 0.0
    %4795 = vmatpush1.msra.mxu0 0.0
    %4796 = vmatprep.subr.mxu0 0.0
    %4797 = vmatpush1.msra.mxu0 0.0
    %4798 = vmatprep.subr.mxu0 0.0
    %4799 = vmatpush1.msra.mxu0 0.0
    %4800 = vmatprep.subr.mxu0 0.0
    %4801 = vmatpush1.msra.mxu0 0.0
    %4802 = vmatprep.subr.mxu0 0.0
    %4803 = vmatpush1.msra.mxu0 0.0
    %4804 = vmatprep.subr.mxu0 0.0
    %4805 = vmatpush1.msra.mxu0 0.0
    %4806 = vmatprep.subr.mxu0 0.0
    %4807 = vmatpush1.msra.mxu0 0.0
    %4808 = vmatprep.subr.mxu0 0.0
    %4809 = vmatpush1.msra.mxu0 0.0
    %4810 = vmatprep.subr.mxu0 0.0
    %4811 = vmatpush1.msra.mxu0 0.0
    %4812 = vmatprep.subr.mxu0 0.0
    %4813 = vmatpush1.msra.mxu0 0.0
    %4814 = vmatprep.subr.mxu0 0.0
    %4815 = vmatpush1.msra.mxu0 0.0
    %4816 = vmatprep.subr.mxu0 0.0
    %4817 = vmatpush1.msra.mxu0 0.0
    %4818 = vmatprep.subr.mxu0 0.0
    %4819 = vmatpush1.msra.mxu0 0.0
    %4820 = vmatprep.subr.mxu0 0.0
    %4821 = vmatpush1.msra.mxu0 0.0
    %4822 = vmatprep.subr.mxu0 0.0
    %4823 = vmatpush1.msra.mxu0 0.0
    %4824 = vmatprep.subr.mxu0 0.0
    %4825 = vmatpush1.msra.mxu0 0.0
    %4826 = vmatprep.subr.mxu0 0.0
    %4827 = vmatpush1.msra.mxu0 0.0
    %4828 = vmatprep.subr.mxu0 0.0
    %4829 = vmatpush1.msra.mxu0 0.0
    %4830 = vmatprep.mubr.f32.mxu0 0.0
    %4831 = vmatmul.mubr.f32.gmra.mrb[0].mxu0 %v4758
    %v4832 = vpop.f32.mrb[0].mxu0
    %v4833 = vadd.f32 %v4744, %v4832
    %v4834 = vpop.f32.mrb[0].mxu0
    %4835 = vmatprep.mubr.f32.mxu0 0.0
    %4836 = vmatmul.mubr.f32.gmra.mrb[0].mxu0 %v4761
    %v4837 = vpop.f32.mrb[0].mxu0
    %v4838 = vadd.f32 %v4749, %v4837
    %v4839 = vpop.f32.mrb[0].mxu0
    %4840 = vmatprep.mubr.f32.mxu0 0.0
    %4841 = vmatmul.mubr.f32.gmra.mrb[0].mxu0 %v4764
    %v4842 = vpop.f32.mrb[0].mxu0
    %v4843 = vadd.f32 %v4754, %v4842
    %v4844 = vpop.f32.mrb[0].mxu0
    %4845 = vdwg.mxu0
    %v4846 = vld [vmem:[#allocation2 + $0x8] sm:$0xff]
    %v4847 = vld [vmem:[#allocation2 + $0x10] sm:$0xff]
    %v4848 = vld [vmem:[#allocation2 + $0x18] sm:$0x3]
    %s4849 = scalar_lea.vmem [#allocation8], 224
    %v4850 = vld [vmem:[%s4849] sm:$0xff]
    %v4851 = vld [vmem:[%s4849 + $0x8] sm:$0xff]
    %v4852 = vld [vmem:[%s4849 + $0x10] sm:$0xff]
    %v4853 = vld [vmem:[%s4849 + $0x18] sm:$0xff]
    %v4855 = vsel %vm118, %v4846, 0
    %v4858 = vsel %vm118, %v4847, 0
    %v4861 = vsel %vm118, %v4848, 0
    %4863 = vmatprep.subr.mxu0 0.0
    %4864 = vmatpush1.msra.mxu0 %v4850
    %4865 = vmatprep.subr.mxu0 0.0
    %4866 = vmatpush1.msra.mxu0 %v4851
    %4867 = vmatprep.subr.mxu0 0.0
    %4868 = vmatpush1.msra.mxu0 %v4852
    %4869 = vmatprep.subr.mxu0 0.0
    %4870 = vmatpush1.msra.mxu0 %v4853
    %4871 = vmatprep.subr.mxu0 0.0
    %4872 = vmatpush1.msra.mxu0 0.0
    %4873 = vmatprep.subr.mxu0 0.0
    %4874 = vmatpush1.msra.mxu0 0.0
    %4875 = vmatprep.subr.mxu0 0.0
    %4876 = vmatpush1.msra.mxu0 0.0
    %4877 = vmatprep.subr.mxu0 0.0
    %4878 = vmatpush1.msra.mxu0 0.0
    %4879 = vmatprep.subr.mxu0 0.0
    %4880 = vmatpush1.msra.mxu0 0.0
    %4881 = vmatprep.subr.mxu0 0.0
    %4882 = vmatpush1.msra.mxu0 0.0
    %4883 = vmatprep.subr.mxu0 0.0
    %4884 = vmatpush1.msra.mxu0 0.0
    %4885 = vmatprep.subr.mxu0 0.0
    %4886 = vmatpush1.msra.mxu0 0.0
    %4887 = vmatprep.subr.mxu0 0.0
    %4888 = vmatpush1.msra.mxu0 0.0
    %4889 = vmatprep.subr.mxu0 0.0
    %4890 = vmatpush1.msra.mxu0 0.0
    %4891 = vmatprep.subr.mxu0 0.0
    %4892 = vmatpush1.msra.mxu0 0.0
    %4893 = vmatprep.subr.mxu0 0.0
    %4894 = vmatpush1.msra.mxu0 0.0
    %4895 = vmatprep.subr.mxu0 0.0
    %4896 = vmatpush1.msra.mxu0 0.0
    %4897 = vmatprep.subr.mxu0 0.0
    %4898 = vmatpush1.msra.mxu0 0.0
    %4899 = vmatprep.subr.mxu0 0.0
    %4900 = vmatpush1.msra.mxu0 0.0
    %4901 = vmatprep.subr.mxu0 0.0
    %4902 = vmatpush1.msra.mxu0 0.0
    %4903 = vmatprep.subr.mxu0 0.0
    %4904 = vmatpush1.msra.mxu0 0.0
    %4905 = vmatprep.subr.mxu0 0.0
    %4906 = vmatpush1.msra.mxu0 0.0
    %4907 = vmatprep.subr.mxu0 0.0
    %4908 = vmatpush1.msra.mxu0 0.0
    %4909 = vmatprep.subr.mxu0 0.0
    %4910 = vmatpush1.msra.mxu0 0.0
    %4911 = vmatprep.subr.mxu0 0.0
    %4912 = vmatpush1.msra.mxu0 0.0
    %4913 = vmatprep.subr.mxu0 0.0
    %4914 = vmatpush1.msra.mxu0 0.0
    %4915 = vmatprep.subr.mxu0 0.0
    %4916 = vmatpush1.msra.mxu0 0.0
    %4917 = vmatprep.subr.mxu0 0.0
    %4918 = vmatpush1.msra.mxu0 0.0
    %4919 = vmatprep.subr.mxu0 0.0
    %4920 = vmatpush1.msra.mxu0 0.0
    %4921 = vmatprep.subr.mxu0 0.0
    %4922 = vmatpush1.msra.mxu0 0.0
    %4923 = vmatprep.subr.mxu0 0.0
    %4924 = vmatpush1.msra.mxu0 0.0
    %4925 = vmatprep.subr.mxu0 0.0
    %4926 = vmatpush1.msra.mxu0 0.0
    %4927 = vmatprep.mubr.f32.mxu0 0.0
    %4928 = vmatmul.mubr.f32.gmra.mrb[0].mxu0 %v4855
    %v4929 = vpop.f32.mrb[0].mxu0
    %v4930 = vadd.f32 0.0, %v4929
    %v4931 = vpop.f32.mrb[0].mxu0
    %4932 = vmatprep.mubr.f32.mxu0 0.0
    %4933 = vmatmul.mubr.f32.gmra.mrb[0].mxu0 %v4858
    %v4934 = vpop.f32.mrb[0].mxu0
    %v4935 = vadd.f32 0.0, %v4934
    %v4936 = vpop.f32.mrb[0].mxu0
    %4937 = vmatprep.mubr.f32.mxu0 0.0
    %4938 = vmatmul.mubr.f32.gmra.mrb[0].mxu0 %v4861
    %v4939 = vpop.f32.mrb[0].mxu0
    %v4940 = vadd.f32 0.0, %v4939
    %v4941 = vpop.f32.mrb[0].mxu0
    %4942 = vdwg.mxu0
    %v4943 = vadd.f32 %v4833, %v4930
    %v4944 = vadd.f32 %v4838, %v4935
    %v4945 = vadd.f32 %v4843, %v4940
    %v4946 = vld [vmem:[#allocation2 + $0x9] sm:$0xff]
    %v4947 = vld [vmem:[#allocation2 + $0x11] sm:$0xff]
    %v4948 = vld [vmem:[#allocation2 + $0x19] sm:$0x3]
    %s4949 = scalar_lea.vmem [#allocation8], 256
    %v4950 = vld [vmem:[%s4949] sm:$0xff]
    %v4951 = vld [vmem:[%s4949 + $0x8] sm:$0xff]
    %v4952 = vld [vmem:[%s4949 + $0x10] sm:$0xff]
    %v4953 = vld [vmem:[%s4949 + $0x18] sm:$0xff]
    %v4955 = vsel %vm118, %v4946, 0
    %v4958 = vsel %vm118, %v4947, 0
    %v4961 = vsel %vm118, %v4948, 0
    %4963 = vmatprep.subr.mxu0 0.0
    %4964 = vmatpush1.msra.mxu0 %v4950
    %4965 = vmatprep.subr.mxu0 0.0
    %4966 = vmatpush1.msra.mxu0 %v4951
    %4967 = vmatprep.subr.mxu0 0.0
    %4968 = vmatpush1.msra.mxu0 %v4952
    %4969 = vmatprep.subr.mxu0 0.0
    %4970 = vmatpush1.msra.mxu0 %v4953
    %4971 = vmatprep.subr.mxu0 0.0
    %4972 = vmatpush1.msra.mxu0 0.0
    %4973 = vmatprep.subr.mxu0 0.0
    %4974 = vmatpush1.msra.mxu0 0.0
    %4975 = vmatprep.subr.mxu0 0.0
    %4976 = vmatpush1.msra.mxu0 0.0
    %4977 = vmatprep.subr.mxu0 0.0
    %4978 = vmatpush1.msra.mxu0 0.0
    %4979 = vmatprep.subr.mxu0 0.0
    %4980 = vmatpush1.msra.mxu0 0.0
    %4981 = vmatprep.subr.mxu0 0.0
    %4982 = vmatpush1.msra.mxu0 0.0
    %4983 = vmatprep.subr.mxu0 0.0
    %4984 = vmatpush1.msra.mxu0 0.0
    %4985 = vmatprep.subr.mxu0 0.0
    %4986 = vmatpush1.msra.mxu0 0.0
    %4987 = vmatprep.subr.mxu0 0.0
    %4988 = vmatpush1.msra.mxu0 0.0
    %4989 = vmatprep.subr.mxu0 0.0
    %4990 = vmatpush1.msra.mxu0 0.0
    %4991 = vmatprep.subr.mxu0 0.0
    %4992 = vmatpush1.msra.mxu0 0.0
    %4993 = vmatprep.subr.mxu0 0.0
    %4994 = vmatpush1.msra.mxu0 0.0
    %4995 = vmatprep.subr.mxu0 0.0
    %4996 = vmatpush1.msra.mxu0 0.0
    %4997 = vmatprep.subr.mxu0 0.0
    %4998 = vmatpush1.msra.mxu0 0.0
    %4999 = vmatprep.subr.mxu0 0.0
    %5000 = vmatpush1.msra.mxu0 0.0
    %5001 = vmatprep.subr.mxu0 0.0
    %5002 = vmatpush1.msra.mxu0 0.0
    %5003 = vmatprep.subr.mxu0 0.0
    %5004 = vmatpush1.msra.mxu0 0.0
    %5005 = vmatprep.subr.mxu0 0.0
    %5006 = vmatpush1.msra.mxu0 0.0
    %5007 = vmatprep.subr.mxu0 0.0
    %5008 = vmatpush1.msra.mxu0 0.0
    %5009 = vmatprep.subr.mxu0 0.0
    %5010 = vmatpush1.msra.mxu0 0.0
    %5011 = vmatprep.subr.mxu0 0.0
    %5012 = vmatpush1.msra.mxu0 0.0
    %5013 = vmatprep.subr.mxu0 0.0
    %5014 = vmatpush1.msra.mxu0 0.0
    %5015 = vmatprep.subr.mxu0 0.0
    %5016 = vmatpush1.msra.mxu0 0.0
    %5017 = vmatprep.subr.mxu0 0.0
    %5018 = vmatpush1.msra.mxu0 0.0
    %5019 = vmatprep.subr.mxu0 0.0
    %5020 = vmatpush1.msra.mxu0 0.0
    %5021 = vmatprep.subr.mxu0 0.0
    %5022 = vmatpush1.msra.mxu0 0.0
    %5023 = vmatprep.subr.mxu0 0.0
    %5024 = vmatpush1.msra.mxu0 0.0
    %5025 = vmatprep.subr.mxu0 0.0
    %5026 = vmatpush1.msra.mxu0 0.0
    %5027 = vmatprep.mubr.f32.mxu0 0.0
    %5028 = vmatmul.mubr.f32.gmra.mrb[0].mxu0 %v4955
    %v5029 = vpop.f32.mrb[0].mxu0
    %v5030 = vadd.f32 0.0, %v5029
    %v5031 = vpop.f32.mrb[0].mxu0
    %5032 = vmatprep.mubr.f32.mxu0 0.0
    %5033 = vmatmul.mubr.f32.gmra.mrb[0].mxu0 %v4958
    %v5034 = vpop.f32.mrb[0].mxu0
    %v5035 = vadd.f32 0.0, %v5034
    %v5036 = vpop.f32.mrb[0].mxu0
    %5037 = vmatprep.mubr.f32.mxu0 0.0
    %5038 = vmatmul.mubr.f32.gmra.mrb[0].mxu0 %v4961
    %v5039 = vpop.f32.mrb[0].mxu0
    %v5040 = vadd.f32 0.0, %v5039
    %v5041 = vpop.f32.mrb[0].mxu0
    %5042 = vdwg.mxu0
    %v5043 = vadd.f32 %v4943, %v5030
    %v5044 = vadd.f32 %v4944, %v5035
    %v5045 = vadd.f32 %v4945, %v5040
    %v5046 = vld [vmem:[#allocation2 + $0xa] sm:$0xff]
    %v5047 = vld [vmem:[#allocation2 + $0x12] sm:$0xff]
    %v5048 = vld [vmem:[#allocation2 + $0x1a] sm:$0x3]
    %s5049 = scalar_lea.vmem [#allocation8], 288
    %v5050 = vld [vmem:[%s5049] sm:$0xff]
    %v5051 = vld [vmem:[%s5049 + $0x8] sm:$0xff]
    %v5052 = vld [vmem:[%s5049 + $0x10] sm:$0xff]
    %v5053 = vld [vmem:[%s5049 + $0x18] sm:$0xff]
    %v5055 = vsel %vm118, %v5046, 0
    %v5058 = vsel %vm118, %v5047, 0
    %v5061 = vsel %vm118, %v5048, 0
    %5063 = vmatprep.subr.mxu0 0.0
    %5064 = vmatpush1.msra.mxu0 %v5050
    %5065 = vmatprep.subr.mxu0 0.0
    %5066 = vmatpush1.msra.mxu0 %v5051
    %5067 = vmatprep.subr.mxu0 0.0
    %5068 = vmatpush1.msra.mxu0 %v5052
    %5069 = vmatprep.subr.mxu0 0.0
    %5070 = vmatpush1.msra.mxu0 %v5053
    %5071 = vmatprep.subr.mxu0 0.0
    %5072 = vmatpush1.msra.mxu0 0.0
    %5073 = vmatprep.subr.mxu0 0.0
    %5074 = vmatpush1.msra.mxu0 0.0
    %5075 = vmatprep.subr.mxu0 0.0
    %5076 = vmatpush1.msra.mxu0 0.0
    %5077 = vmatprep.subr.mxu0 0.0
    %5078 = vmatpush1.msra.mxu0 0.0
    %5079 = vmatprep.subr.mxu0 0.0
    %5080 = vmatpush1.msra.mxu0 0.0
    %5081 = vmatprep.subr.mxu0 0.0
    %5082 = vmatpush1.msra.mxu0 0.0
    %5083 = vmatprep.subr.mxu0 0.0
    %5084 = vmatpush1.msra.mxu0 0.0
    %5085 = vmatprep.subr.mxu0 0.0
    %5086 = vmatpush1.msra.mxu0 0.0
    %5087 = vmatprep.subr.mxu0 0.0
    %5088 = vmatpush1.msra.mxu0 0.0
    %5089 = vmatprep.subr.mxu0 0.0
    %5090 = vmatpush1.msra.mxu0 0.0
    %5091 = vmatprep.subr.mxu0 0.0
    %5092 = vmatpush1.msra.mxu0 0.0
    %5093 = vmatprep.subr.mxu0 0.0
    %5094 = vmatpush1.msra.mxu0 0.0
    %5095 = vmatprep.subr.mxu0 0.0
    %5096 = vmatpush1.msra.mxu0 0.0
    %5097 = vmatprep.subr.mxu0 0.0
    %5098 = vmatpush1.msra.mxu0 0.0
    %5099 = vmatprep.subr.mxu0 0.0
    %5100 = vmatpush1.msra.mxu0 0.0
    %5101 = vmatprep.subr.mxu0 0.0
    %5102 = vmatpush1.msra.mxu0 0.0
    %5103 = vmatprep.subr.mxu0 0.0
    %5104 = vmatpush1.msra.mxu0 0.0
    %5105 = vmatprep.subr.mxu0 0.0
    %5106 = vmatpush1.msra.mxu0 0.0
    %5107 = vmatprep.subr.mxu0 0.0
    %5108 = vmatpush1.msra.mxu0 0.0
    %5109 = vmatprep.subr.mxu0 0.0
    %5110 = vmatpush1.msra.mxu0 0.0
    %5111 = vmatprep.subr.mxu0 0.0
    %5112 = vmatpush1.msra.mxu0 0.0
    %5113 = vmatprep.subr.mxu0 0.0
    %5114 = vmatpush1.msra.mxu0 0.0
    %5115 = vmatprep.subr.mxu0 0.0
    %5116 = vmatpush1.msra.mxu0 0.0
    %5117 = vmatprep.subr.mxu0 0.0
    %5118 = vmatpush1.msra.mxu0 0.0
    %5119 = vmatprep.subr.mxu0 0.0
    %5120 = vmatpush1.msra.mxu0 0.0
    %5121 = vmatprep.subr.mxu0 0.0
    %5122 = vmatpush1.msra.mxu0 0.0
    %5123 = vmatprep.subr.mxu0 0.0
    %5124 = vmatpush1.msra.mxu0 0.0
    %5125 = vmatprep.subr.mxu0 0.0
    %5126 = vmatpush1.msra.mxu0 0.0
    %5127 = vmatprep.mubr.f32.mxu0 0.0
    %5128 = vmatmul.mubr.f32.gmra.mrb[0].mxu0 %v5055
    %v5129 = vpop.f32.mrb[0].mxu0
    %v5130 = vadd.f32 0.0, %v5129
    %v5131 = vpop.f32.mrb[0].mxu0
    %5132 = vmatprep.mubr.f32.mxu0 0.0
    %5133 = vmatmul.mubr.f32.gmra.mrb[0].mxu0 %v5058
    %v5134 = vpop.f32.mrb[0].mxu0
    %v5135 = vadd.f32 0.0, %v5134
    %v5136 = vpop.f32.mrb[0].mxu0
    %5137 = vmatprep.mubr.f32.mxu0 0.0
    %5138 = vmatmul.mubr.f32.gmra.mrb[0].mxu0 %v5061
    %v5139 = vpop.f32.mrb[0].mxu0
    %v5140 = vadd.f32 0.0, %v5139
    %v5141 = vpop.f32.mrb[0].mxu0
    %5142 = vdwg.mxu0
    %v5143 = vadd.f32 %v5043, %v5130
    %v5144 = vadd.f32 %v5044, %v5135
    %v5145 = vadd.f32 %v5045, %v5140
    %s5146 = scalar_lea.vmem %s26, 1
    %v5147 = vld [vmem:[%s5146] sm:$0x1]
    %v5149 = vlaneseq
    %v5150 = vshrl.u32 %v5149, 7
    %v5151 = vsub.s32 0, %v5150
    %v5152 = vrot.slane %v5147, %v5151
    %v5154 = vadd.f32 %v5143, %v5152
    %v5155 = vadd.f32 %v5144, %v5152
    %v5156 = vadd.f32 %v5145, %v5152
    %v5157 = vtanh.pop %v5154
    %v5158 = vtanh.pop %v5155
    %v5159 = vtanh.pop %v5156
    %5160 = vst.msk [vmem:[#allocation2 + $0x8] sm:$0xff] %vm118, %v5157
    %5161 = vst.msk [vmem:[#allocation2 + $0x10] sm:$0xff] %vm118, %v5158
    %5162 = vst.msk [vmem:[#allocation2 + $0x18] sm:$0x3] %vm123, %v5159
    %v5163 = vld [vmem:[#allocation2 + $0x6] sm:$0xff]
    %v5164 = vld [vmem:[#allocation2 + $0xe] sm:$0xff]
    %v5165 = vld [vmem:[#allocation2 + $0x16] sm:$0x3]
    %s5166 = scalar_lea.vmem [#allocation8], 320
    %v5167 = vld [vmem:[%s5166] sm:$0xff]
    %v5168 = vld [vmem:[%s5166 + $0x8] sm:$0xff]
    %v5169 = vld [vmem:[%s5166 + $0x10] sm:$0xff]
    %v5170 = vld [vmem:[%s5166 + $0x18] sm:$0xff]
    %v5171 = vld [vmem:[#allocation2 + $0x7] sm:$0xff]
    %v5172 = vld [vmem:[#allocation2 + $0xf] sm:$0xff]
    %v5173 = vld [vmem:[#allocation2 + $0x17] sm:$0x3]
    %s5174 = scalar_lea.vmem [#allocation8], 352
    %v5175 = vld [vmem:[%s5174] sm:$0xff]
    %v5176 = vld [vmem:[%s5174 + $0x8] sm:$0xff]
    %v5177 = vld [vmem:[%s5174 + $0x10] sm:$0xff]
    %v5178 = vld [vmem:[%s5174 + $0x18] sm:$0xff]
    %v5180 = vsel %vm118, %v5171, 0
    %v5183 = vsel %vm118, %v5172, 0
    %v5186 = vsel %vm118, %v5173, 0
    %5188 = vmatprep.subr.mxu0 0.0
    %5189 = vmatpush1.msra.mxu0 %v5175
    %5190 = vmatprep.subr.mxu0 0.0
    %5191 = vmatpush1.msra.mxu0 %v5176
    %5192 = vmatprep.subr.mxu0 0.0
    %5193 = vmatpush1.msra.mxu0 %v5177
    %5194 = vmatprep.subr.mxu0 0.0
    %5195 = vmatpush1.msra.mxu0 %v5178
    %5196 = vmatprep.subr.mxu0 0.0
    %5197 = vmatpush1.msra.mxu0 0.0
    %5198 = vmatprep.subr.mxu0 0.0
    %5199 = vmatpush1.msra.mxu0 0.0
    %5200 = vmatprep.subr.mxu0 0.0
    %5201 = vmatpush1.msra.mxu0 0.0
    %5202 = vmatprep.subr.mxu0 0.0
    %5203 = vmatpush1.msra.mxu0 0.0
    %5204 = vmatprep.subr.mxu0 0.0
    %5205 = vmatpush1.msra.mxu0 0.0
    %5206 = vmatprep.subr.mxu0 0.0
    %5207 = vmatpush1.msra.mxu0 0.0
    %5208 = vmatprep.subr.mxu0 0.0
    %5209 = vmatpush1.msra.mxu0 0.0
    %5210 = vmatprep.subr.mxu0 0.0
    %5211 = vmatpush1.msra.mxu0 0.0
    %5212 = vmatprep.subr.mxu0 0.0
    %5213 = vmatpush1.msra.mxu0 0.0
    %5214 = vmatprep.subr.mxu0 0.0
    %5215 = vmatpush1.msra.mxu0 0.0
    %5216 = vmatprep.subr.mxu0 0.0
    %5217 = vmatpush1.msra.mxu0 0.0
    %5218 = vmatprep.subr.mxu0 0.0
    %5219 = vmatpush1.msra.mxu0 0.0
    %5220 = vmatprep.subr.mxu0 0.0
    %5221 = vmatpush1.msra.mxu0 0.0
    %5222 = vmatprep.subr.mxu0 0.0
    %5223 = vmatpush1.msra.mxu0 0.0
    %5224 = vmatprep.subr.mxu0 0.0
    %5225 = vmatpush1.msra.mxu0 0.0
    %5226 = vmatprep.subr.mxu0 0.0
    %5227 = vmatpush1.msra.mxu0 0.0
    %5228 = vmatprep.subr.mxu0 0.0
    %5229 = vmatpush1.msra.mxu0 0.0
    %5230 = vmatprep.subr.mxu0 0.0
    %5231 = vmatpush1.msra.mxu0 0.0
    %5232 = vmatprep.subr.mxu0 0.0
    %5233 = vmatpush1.msra.mxu0 0.0
    %5234 = vmatprep.subr.mxu0 0.0
    %5235 = vmatpush1.msra.mxu0 0.0
    %5236 = vmatprep.subr.mxu0 0.0
    %5237 = vmatpush1.msra.mxu0 0.0
    %5238 = vmatprep.subr.mxu0 0.0
    %5239 = vmatpush1.msra.mxu0 0.0
    %5240 = vmatprep.subr.mxu0 0.0
    %5241 = vmatpush1.msra.mxu0 0.0
    %5242 = vmatprep.subr.mxu0 0.0
    %5243 = vmatpush1.msra.mxu0 0.0
    %5244 = vmatprep.subr.mxu0 0.0
    %5245 = vmatpush1.msra.mxu0 0.0
    %5246 = vmatprep.subr.mxu0 0.0
    %5247 = vmatpush1.msra.mxu0 0.0
    %5248 = vmatprep.subr.mxu0 0.0
    %5249 = vmatpush1.msra.mxu0 0.0
    %5250 = vmatprep.subr.mxu0 0.0
    %5251 = vmatpush1.msra.mxu0 0.0
    %5252 = vmatprep.mubr.f32.mxu0 0.0
    %5253 = vmatmul.mubr.f32.gmra.mrb[0].mxu0 %v5180
    %v5254 = vpop.f32.mrb[0].mxu0
    %v5255 = vadd.f32 0.0, %v5254
    %v5256 = vpop.f32.mrb[0].mxu0
    %5257 = vmatprep.mubr.f32.mxu0 0.0
    %5258 = vmatmul.mubr.f32.gmra.mrb[0].mxu0 %v5183
    %v5259 = vpop.f32.mrb[0].mxu0
    %v5260 = vadd.f32 0.0, %v5259
    %v5261 = vpop.f32.mrb[0].mxu0
    %5262 = vmatprep.mubr.f32.mxu0 0.0
    %5263 = vmatmul.mubr.f32.gmra.mrb[0].mxu0 %v5186
    %v5264 = vpop.f32.mrb[0].mxu0
    %v5265 = vadd.f32 0.0, %v5264
    %v5266 = vpop.f32.mrb[0].mxu0
    %5267 = vdwg.mxu0
    %v5269 = vsel %vm118, %v5163, 0
    %v5272 = vsel %vm118, %v5164, 0
    %v5275 = vsel %vm118, %v5165, 0
    %5277 = vmatprep.subr.mxu0 0.0
    %5278 = vmatpush1.msra.mxu0 %v5167
    %5279 = vmatprep.subr.mxu0 0.0
    %5280 = vmatpush1.msra.mxu0 %v5168
    %5281 = vmatprep.subr.mxu0 0.0
    %5282 = vmatpush1.msra.mxu0 %v5169
    %5283 = vmatprep.subr.mxu0 0.0
    %5284 = vmatpush1.msra.mxu0 %v5170
    %5285 = vmatprep.subr.mxu0 0.0
    %5286 = vmatpush1.msra.mxu0 0.0
    %5287 = vmatprep.subr.mxu0 0.0
    %5288 = vmatpush1.msra.mxu0 0.0
    %5289 = vmatprep.subr.mxu0 0.0
    %5290 = vmatpush1.msra.mxu0 0.0
    %5291 = vmatprep.subr.mxu0 0.0
    %5292 = vmatpush1.msra.mxu0 0.0
    %5293 = vmatprep.subr.mxu0 0.0
    %5294 = vmatpush1.msra.mxu0 0.0
    %5295 = vmatprep.subr.mxu0 0.0
    %5296 = vmatpush1.msra.mxu0 0.0
    %5297 = vmatprep.subr.mxu0 0.0
    %5298 = vmatpush1.msra.mxu0 0.0
    %5299 = vmatprep.subr.mxu0 0.0
    %5300 = vmatpush1.msra.mxu0 0.0
    %5301 = vmatprep.subr.mxu0 0.0
    %5302 = vmatpush1.msra.mxu0 0.0
    %5303 = vmatprep.subr.mxu0 0.0
    %5304 = vmatpush1.msra.mxu0 0.0
    %5305 = vmatprep.subr.mxu0 0.0
    %5306 = vmatpush1.msra.mxu0 0.0
    %5307 = vmatprep.subr.mxu0 0.0
    %5308 = vmatpush1.msra.mxu0 0.0
    %5309 = vmatprep.subr.mxu0 0.0
    %5310 = vmatpush1.msra.mxu0 0.0
    %5311 = vmatprep.subr.mxu0 0.0
    %5312 = vmatpush1.msra.mxu0 0.0
    %5313 = vmatprep.subr.mxu0 0.0
    %5314 = vmatpush1.msra.mxu0 0.0
    %5315 = vmatprep.subr.mxu0 0.0
    %5316 = vmatpush1.msra.mxu0 0.0
    %5317 = vmatprep.subr.mxu0 0.0
    %5318 = vmatpush1.msra.mxu0 0.0
    %5319 = vmatprep.subr.mxu0 0.0
    %5320 = vmatpush1.msra.mxu0 0.0
    %5321 = vmatprep.subr.mxu0 0.0
    %5322 = vmatpush1.msra.mxu0 0.0
    %5323 = vmatprep.subr.mxu0 0.0
    %5324 = vmatpush1.msra.mxu0 0.0
    %5325 = vmatprep.subr.mxu0 0.0
    %5326 = vmatpush1.msra.mxu0 0.0
    %5327 = vmatprep.subr.mxu0 0.0
    %5328 = vmatpush1.msra.mxu0 0.0
    %5329 = vmatprep.subr.mxu0 0.0
    %5330 = vmatpush1.msra.mxu0 0.0
    %5331 = vmatprep.subr.mxu0 0.0
    %5332 = vmatpush1.msra.mxu0 0.0
    %5333 = vmatprep.subr.mxu0 0.0
    %5334 = vmatpush1.msra.mxu0 0.0
    %5335 = vmatprep.subr.mxu0 0.0
    %5336 = vmatpush1.msra.mxu0 0.0
    %5337 = vmatprep.subr.mxu0 0.0
    %5338 = vmatpush1.msra.mxu0 0.0
    %5339 = vmatprep.subr.mxu0 0.0
    %5340 = vmatpush1.msra.mxu0 0.0
    %5341 = vmatprep.mubr.f32.mxu0 0.0
    %5342 = vmatmul.mubr.f32.gmra.mrb[0].mxu0 %v5269
    %v5343 = vpop.f32.mrb[0].mxu0
    %v5344 = vadd.f32 %v5255, %v5343
    %v5345 = vpop.f32.mrb[0].mxu0
    %5346 = vmatprep.mubr.f32.mxu0 0.0
    %5347 = vmatmul.mubr.f32.gmra.mrb[0].mxu0 %v5272
    %v5348 = vpop.f32.mrb[0].mxu0
    %v5349 = vadd.f32 %v5260, %v5348
    %v5350 = vpop.f32.mrb[0].mxu0
    %5351 = vmatprep.mubr.f32.mxu0 0.0
    %5352 = vmatmul.mubr.f32.gmra.mrb[0].mxu0 %v5275
    %v5353 = vpop.f32.mrb[0].mxu0
    %v5354 = vadd.f32 %v5265, %v5353
    %v5355 = vpop.f32.mrb[0].mxu0
    %5356 = vdwg.mxu0
    %v5357 = vld [vmem:[#allocation2 + $0x8] sm:$0xff]
    %v5358 = vld [vmem:[#allocation2 + $0x10] sm:$0xff]
    %v5359 = vld [vmem:[#allocation2 + $0x18] sm:$0x3]
    %s5360 = scalar_lea.vmem [#allocation8], 384
    %v5361 = vld [vmem:[%s5360] sm:$0xff]
    %v5362 = vld [vmem:[%s5360 + $0x8] sm:$0xff]
    %v5363 = vld [vmem:[%s5360 + $0x10] sm:$0xff]
    %v5364 = vld [vmem:[%s5360 + $0x18] sm:$0xff]
    %v5366 = vsel %vm118, %v5357, 0
    %v5369 = vsel %vm118, %v5358, 0
    %v5372 = vsel %vm118, %v5359, 0
    %5374 = vmatprep.subr.mxu0 0.0
    %5375 = vmatpush1.msra.mxu0 %v5361
    %5376 = vmatprep.subr.mxu0 0.0
    %5377 = vmatpush1.msra.mxu0 %v5362
    %5378 = vmatprep.subr.mxu0 0.0
    %5379 = vmatpush1.msra.mxu0 %v5363
    %5380 = vmatprep.subr.mxu0 0.0
    %5381 = vmatpush1.msra.mxu0 %v5364
    %5382 = vmatprep.subr.mxu0 0.0
    %5383 = vmatpush1.msra.mxu0 0.0
    %5384 = vmatprep.subr.mxu0 0.0
    %5385 = vmatpush1.msra.mxu0 0.0
    %5386 = vmatprep.subr.mxu0 0.0
    %5387 = vmatpush1.msra.mxu0 0.0
    %5388 = vmatprep.subr.mxu0 0.0
    %5389 = vmatpush1.msra.mxu0 0.0
    %5390 = vmatprep.subr.mxu0 0.0
    %5391 = vmatpush1.msra.mxu0 0.0
    %5392 = vmatprep.subr.mxu0 0.0
    %5393 = vmatpush1.msra.mxu0 0.0
    %5394 = vmatprep.subr.mxu0 0.0
    %5395 = vmatpush1.msra.mxu0 0.0
    %5396 = vmatprep.subr.mxu0 0.0
    %5397 = vmatpush1.msra.mxu0 0.0
    %5398 = vmatprep.subr.mxu0 0.0
    %5399 = vmatpush1.msra.mxu0 0.0
    %5400 = vmatprep.subr.mxu0 0.0
    %5401 = vmatpush1.msra.mxu0 0.0
    %5402 = vmatprep.subr.mxu0 0.0
    %5403 = vmatpush1.msra.mxu0 0.0
    %5404 = vmatprep.subr.mxu0 0.0
    %5405 = vmatpush1.msra.mxu0 0.0
    %5406 = vmatprep.subr.mxu0 0.0
    %5407 = vmatpush1.msra.mxu0 0.0
    %5408 = vmatprep.subr.mxu0 0.0
    %5409 = vmatpush1.msra.mxu0 0.0
    %5410 = vmatprep.subr.mxu0 0.0
    %5411 = vmatpush1.msra.mxu0 0.0
    %5412 = vmatprep.subr.mxu0 0.0
    %5413 = vmatpush1.msra.mxu0 0.0
    %5414 = vmatprep.subr.mxu0 0.0
    %5415 = vmatpush1.msra.mxu0 0.0
    %5416 = vmatprep.subr.mxu0 0.0
    %5417 = vmatpush1.msra.mxu0 0.0
    %5418 = vmatprep.subr.mxu0 0.0
    %5419 = vmatpush1.msra.mxu0 0.0
    %5420 = vmatprep.subr.mxu0 0.0
    %5421 = vmatpush1.msra.mxu0 0.0
    %5422 = vmatprep.subr.mxu0 0.0
    %5423 = vmatpush1.msra.mxu0 0.0
    %5424 = vmatprep.subr.mxu0 0.0
    %5425 = vmatpush1.msra.mxu0 0.0
    %5426 = vmatprep.subr.mxu0 0.0
    %5427 = vmatpush1.msra.mxu0 0.0
    %5428 = vmatprep.subr.mxu0 0.0
    %5429 = vmatpush1.msra.mxu0 0.0
    %5430 = vmatprep.subr.mxu0 0.0
    %5431 = vmatpush1.msra.mxu0 0.0
    %5432 = vmatprep.subr.mxu0 0.0
    %5433 = vmatpush1.msra.mxu0 0.0
    %5434 = vmatprep.subr.mxu0 0.0
    %5435 = vmatpush1.msra.mxu0 0.0
    %5436 = vmatprep.subr.mxu0 0.0
    %5437 = vmatpush1.msra.mxu0 0.0
    %5438 = vmatprep.mubr.f32.mxu0 0.0
    %5439 = vmatmul.mubr.f32.gmra.mrb[0].mxu0 %v5366
    %v5440 = vpop.f32.mrb[0].mxu0
    %v5441 = vadd.f32 0.0, %v5440
    %v5442 = vpop.f32.mrb[0].mxu0
    %5443 = vmatprep.mubr.f32.mxu0 0.0
    %5444 = vmatmul.mubr.f32.gmra.mrb[0].mxu0 %v5369
    %v5445 = vpop.f32.mrb[0].mxu0
    %v5446 = vadd.f32 0.0, %v5445
    %v5447 = vpop.f32.mrb[0].mxu0
    %5448 = vmatprep.mubr.f32.mxu0 0.0
    %5449 = vmatmul.mubr.f32.gmra.mrb[0].mxu0 %v5372
    %v5450 = vpop.f32.mrb[0].mxu0
    %v5451 = vadd.f32 0.0, %v5450
    %v5452 = vpop.f32.mrb[0].mxu0
    %5453 = vdwg.mxu0
    %v5454 = vadd.f32 %v5344, %v5441
    %v5455 = vadd.f32 %v5349, %v5446
    %v5456 = vadd.f32 %v5354, %v5451
    %v5457 = vld [vmem:[#allocation2 + $0x9] sm:$0xff]
    %v5458 = vld [vmem:[#allocation2 + $0x11] sm:$0xff]
    %v5459 = vld [vmem:[#allocation2 + $0x19] sm:$0x3]
    %s5460 = scalar_lea.vmem [#allocation8], 416
    %v5461 = vld [vmem:[%s5460] sm:$0xff]
    %v5462 = vld [vmem:[%s5460 + $0x8] sm:$0xff]
    %v5463 = vld [vmem:[%s5460 + $0x10] sm:$0xff]
    %v5464 = vld [vmem:[%s5460 + $0x18] sm:$0xff]
    %v5466 = vsel %vm118, %v5457, 0
    %v5469 = vsel %vm118, %v5458, 0
    %v5472 = vsel %vm118, %v5459, 0
    %5474 = vmatprep.subr.mxu0 0.0
    %5475 = vmatpush1.msra.mxu0 %v5461
    %5476 = vmatprep.subr.mxu0 0.0
    %5477 = vmatpush1.msra.mxu0 %v5462
    %5478 = vmatprep.subr.mxu0 0.0
    %5479 = vmatpush1.msra.mxu0 %v5463
    %5480 = vmatprep.subr.mxu0 0.0
    %5481 = vmatpush1.msra.mxu0 %v5464
    %5482 = vmatprep.subr.mxu0 0.0
    %5483 = vmatpush1.msra.mxu0 0.0
    %5484 = vmatprep.subr.mxu0 0.0
    %5485 = vmatpush1.msra.mxu0 0.0
    %5486 = vmatprep.subr.mxu0 0.0
    %5487 = vmatpush1.msra.mxu0 0.0
    %5488 = vmatprep.subr.mxu0 0.0
    %5489 = vmatpush1.msra.mxu0 0.0
    %5490 = vmatprep.subr.mxu0 0.0
    %5491 = vmatpush1.msra.mxu0 0.0
    %5492 = vmatprep.subr.mxu0 0.0
    %5493 = vmatpush1.msra.mxu0 0.0
    %5494 = vmatprep.subr.mxu0 0.0
    %5495 = vmatpush1.msra.mxu0 0.0
    %5496 = vmatprep.subr.mxu0 0.0
    %5497 = vmatpush1.msra.mxu0 0.0
    %5498 = vmatprep.subr.mxu0 0.0
    %5499 = vmatpush1.msra.mxu0 0.0
    %5500 = vmatprep.subr.mxu0 0.0
    %5501 = vmatpush1.msra.mxu0 0.0
    %5502 = vmatprep.subr.mxu0 0.0
    %5503 = vmatpush1.msra.mxu0 0.0
    %5504 = vmatprep.subr.mxu0 0.0
    %5505 = vmatpush1.msra.mxu0 0.0
    %5506 = vmatprep.subr.mxu0 0.0
    %5507 = vmatpush1.msra.mxu0 0.0
    %5508 = vmatprep.subr.mxu0 0.0
    %5509 = vmatpush1.msra.mxu0 0.0
    %5510 = vmatprep.subr.mxu0 0.0
    %5511 = vmatpush1.msra.mxu0 0.0
    %5512 = vmatprep.subr.mxu0 0.0
    %5513 = vmatpush1.msra.mxu0 0.0
    %5514 = vmatprep.subr.mxu0 0.0
    %5515 = vmatpush1.msra.mxu0 0.0
    %5516 = vmatprep.subr.mxu0 0.0
    %5517 = vmatpush1.msra.mxu0 0.0
    %5518 = vmatprep.subr.mxu0 0.0
    %5519 = vmatpush1.msra.mxu0 0.0
    %5520 = vmatprep.subr.mxu0 0.0
    %5521 = vmatpush1.msra.mxu0 0.0
    %5522 = vmatprep.subr.mxu0 0.0
    %5523 = vmatpush1.msra.mxu0 0.0
    %5524 = vmatprep.subr.mxu0 0.0
    %5525 = vmatpush1.msra.mxu0 0.0
    %5526 = vmatprep.subr.mxu0 0.0
    %5527 = vmatpush1.msra.mxu0 0.0
    %5528 = vmatprep.subr.mxu0 0.0
    %5529 = vmatpush1.msra.mxu0 0.0
    %5530 = vmatprep.subr.mxu0 0.0
    %5531 = vmatpush1.msra.mxu0 0.0
    %5532 = vmatprep.subr.mxu0 0.0
    %5533 = vmatpush1.msra.mxu0 0.0
    %5534 = vmatprep.subr.mxu0 0.0
    %5535 = vmatpush1.msra.mxu0 0.0
    %5536 = vmatprep.subr.mxu0 0.0
    %5537 = vmatpush1.msra.mxu0 0.0
    %5538 = vmatprep.mubr.f32.mxu0 0.0
    %5539 = vmatmul.mubr.f32.gmra.mrb[0].mxu0 %v5466
    %v5540 = vpop.f32.mrb[0].mxu0
    %v5541 = vadd.f32 0.0, %v5540
    %v5542 = vpop.f32.mrb[0].mxu0
    %5543 = vmatprep.mubr.f32.mxu0 0.0
    %5544 = vmatmul.mubr.f32.gmra.mrb[0].mxu0 %v5469
    %v5545 = vpop.f32.mrb[0].mxu0
    %v5546 = vadd.f32 0.0, %v5545
    %v5547 = vpop.f32.mrb[0].mxu0
    %5548 = vmatprep.mubr.f32.mxu0 0.0
    %5549 = vmatmul.mubr.f32.gmra.mrb[0].mxu0 %v5472
    %v5550 = vpop.f32.mrb[0].mxu0
    %v5551 = vadd.f32 0.0, %v5550
    %v5552 = vpop.f32.mrb[0].mxu0
    %5553 = vdwg.mxu0
    %v5554 = vadd.f32 %v5454, %v5541
    %v5555 = vadd.f32 %v5455, %v5546
    %v5556 = vadd.f32 %v5456, %v5551
    %v5557 = vld [vmem:[#allocation2 + $0xa] sm:$0xff]
    %v5558 = vld [vmem:[#allocation2 + $0x12] sm:$0xff]
    %v5559 = vld [vmem:[#allocation2 + $0x1a] sm:$0x3]
    %s5560 = scalar_lea.vmem [#allocation8], 448
    %v5561 = vld [vmem:[%s5560] sm:$0xff]
    %v5562 = vld [vmem:[%s5560 + $0x8] sm:$0xff]
    %v5563 = vld [vmem:[%s5560 + $0x10] sm:$0xff]
    %v5564 = vld [vmem:[%s5560 + $0x18] sm:$0xff]
    %v5566 = vsel %vm118, %v5557, 0
    %v5569 = vsel %vm118, %v5558, 0
    %v5572 = vsel %vm118, %v5559, 0
    %5574 = vmatprep.subr.mxu0 0.0
    %5575 = vmatpush1.msra.mxu0 %v5561
    %5576 = vmatprep.subr.mxu0 0.0
    %5577 = vmatpush1.msra.mxu0 %v5562
    %5578 = vmatprep.subr.mxu0 0.0
    %5579 = vmatpush1.msra.mxu0 %v5563
    %5580 = vmatprep.subr.mxu0 0.0
    %5581 = vmatpush1.msra.mxu0 %v5564
    %5582 = vmatprep.subr.mxu0 0.0
    %5583 = vmatpush1.msra.mxu0 0.0
    %5584 = vmatprep.subr.mxu0 0.0
    %5585 = vmatpush1.msra.mxu0 0.0
    %5586 = vmatprep.subr.mxu0 0.0
    %5587 = vmatpush1.msra.mxu0 0.0
    %5588 = vmatprep.subr.mxu0 0.0
    %5589 = vmatpush1.msra.mxu0 0.0
    %5590 = vmatprep.subr.mxu0 0.0
    %5591 = vmatpush1.msra.mxu0 0.0
    %5592 = vmatprep.subr.mxu0 0.0
    %5593 = vmatpush1.msra.mxu0 0.0
    %5594 = vmatprep.subr.mxu0 0.0
    %5595 = vmatpush1.msra.mxu0 0.0
    %5596 = vmatprep.subr.mxu0 0.0
    %5597 = vmatpush1.msra.mxu0 0.0
    %5598 = vmatprep.subr.mxu0 0.0
    %5599 = vmatpush1.msra.mxu0 0.0
    %5600 = vmatprep.subr.mxu0 0.0
    %5601 = vmatpush1.msra.mxu0 0.0
    %5602 = vmatprep.subr.mxu0 0.0
    %5603 = vmatpush1.msra.mxu0 0.0
    %5604 = vmatprep.subr.mxu0 0.0
    %5605 = vmatpush1.msra.mxu0 0.0
    %5606 = vmatprep.subr.mxu0 0.0
    %5607 = vmatpush1.msra.mxu0 0.0
    %5608 = vmatprep.subr.mxu0 0.0
    %5609 = vmatpush1.msra.mxu0 0.0
    %5610 = vmatprep.subr.mxu0 0.0
    %5611 = vmatpush1.msra.mxu0 0.0
    %5612 = vmatprep.subr.mxu0 0.0
    %5613 = vmatpush1.msra.mxu0 0.0
    %5614 = vmatprep.subr.mxu0 0.0
    %5615 = vmatpush1.msra.mxu0 0.0
    %5616 = vmatprep.subr.mxu0 0.0
    %5617 = vmatpush1.msra.mxu0 0.0
    %5618 = vmatprep.subr.mxu0 0.0
    %5619 = vmatpush1.msra.mxu0 0.0
    %5620 = vmatprep.subr.mxu0 0.0
    %5621 = vmatpush1.msra.mxu0 0.0
    %5622 = vmatprep.subr.mxu0 0.0
    %5623 = vmatpush1.msra.mxu0 0.0
    %5624 = vmatprep.subr.mxu0 0.0
    %5625 = vmatpush1.msra.mxu0 0.0
    %5626 = vmatprep.subr.mxu0 0.0
    %5627 = vmatpush1.msra.mxu0 0.0
    %5628 = vmatprep.subr.mxu0 0.0
    %5629 = vmatpush1.msra.mxu0 0.0
    %5630 = vmatprep.subr.mxu0 0.0
    %5631 = vmatpush1.msra.mxu0 0.0
    %5632 = vmatprep.subr.mxu0 0.0
    %5633 = vmatpush1.msra.mxu0 0.0
    %5634 = vmatprep.subr.mxu0 0.0
    %5635 = vmatpush1.msra.mxu0 0.0
    %5636 = vmatprep.subr.mxu0 0.0
    %5637 = vmatpush1.msra.mxu0 0.0
    %5638 = vmatprep.mubr.f32.mxu0 0.0
    %5639 = vmatmul.mubr.f32.gmra.mrb[0].mxu0 %v5566
    %v5640 = vpop.f32.mrb[0].mxu0
    %v5641 = vadd.f32 0.0, %v5640
    %v5642 = vpop.f32.mrb[0].mxu0
    %5643 = vmatprep.mubr.f32.mxu0 0.0
    %5644 = vmatmul.mubr.f32.gmra.mrb[0].mxu0 %v5569
    %v5645 = vpop.f32.mrb[0].mxu0
    %v5646 = vadd.f32 0.0, %v5645
    %v5647 = vpop.f32.mrb[0].mxu0
    %5648 = vmatprep.mubr.f32.mxu0 0.0
    %5649 = vmatmul.mubr.f32.gmra.mrb[0].mxu0 %v5572
    %v5650 = vpop.f32.mrb[0].mxu0
    %v5651 = vadd.f32 0.0, %v5650
    %v5652 = vpop.f32.mrb[0].mxu0
    %5653 = vdwg.mxu0
    %v5654 = vadd.f32 %v5554, %v5641
    %v5655 = vadd.f32 %v5555, %v5646
    %v5656 = vadd.f32 %v5556, %v5651
    %s5657 = scalar_lea.vmem %s26, 2
    %v5658 = vld [vmem:[%s5657] sm:$0x1]
    %v5660 = vlaneseq
    %v5661 = vshrl.u32 %v5660, 7
    %v5662 = vsub.s32 0, %v5661
    %v5663 = vrot.slane %v5658, %v5662
    %v5665 = vadd.f32 %v5654, %v5663
    %v5666 = vadd.f32 %v5655, %v5663
    %v5667 = vadd.f32 %v5656, %v5663
    %v5668 = vtanh.pop %v5665
    %v5669 = vtanh.pop %v5666
    %v5670 = vtanh.pop %v5667
    %5671 = vst.msk [vmem:[#allocation2 + $0x8] sm:$0xff] %vm118, %v5668
    %5672 = vst.msk [vmem:[#allocation2 + $0x10] sm:$0xff] %vm118, %v5669
    %5673 = vst.msk [vmem:[#allocation2 + $0x18] sm:$0x3] %vm123, %v5670
    %v5674 = vld [vmem:[#allocation2 + $0x6] sm:$0xff]
    %v5675 = vld [vmem:[#allocation2 + $0xe] sm:$0xff]
    %v5676 = vld [vmem:[#allocation2 + $0x16] sm:$0x3]
    %s5677 = scalar_lea.vmem [#allocation8], 480
    %v5678 = vld [vmem:[%s5677] sm:$0xff]
    %v5679 = vld [vmem:[%s5677 + $0x8] sm:$0xff]
    %v5680 = vld [vmem:[%s5677 + $0x10] sm:$0xff]
    %v5681 = vld [vmem:[%s5677 + $0x18] sm:$0xff]
    %v5682 = vld [vmem:[#allocation2 + $0x7] sm:$0xff]
    %v5683 = vld [vmem:[#allocation2 + $0xf] sm:$0xff]
    %v5684 = vld [vmem:[#allocation2 + $0x17] sm:$0x3]
    %s5685 = scalar_lea.vmem [#allocation8], 512
    %v5686 = vld [vmem:[%s5685] sm:$0xff]
    %v5687 = vld [vmem:[%s5685 + $0x8] sm:$0xff]
    %v5688 = vld [vmem:[%s5685 + $0x10] sm:$0xff]
    %v5689 = vld [vmem:[%s5685 + $0x18] sm:$0xff]
    %v5691 = vsel %vm118, %v5682, 0
    %v5694 = vsel %vm118, %v5683, 0
    %v5697 = vsel %vm118, %v5684, 0
    %5699 = vmatprep.subr.mxu0 0.0
    %5700 = vmatpush1.msra.mxu0 %v5686
    %5701 = vmatprep.subr.mxu0 0.0
    %5702 = vmatpush1.msra.mxu0 %v5687
    %5703 = vmatprep.subr.mxu0 0.0
    %5704 = vmatpush1.msra.mxu0 %v5688
    %5705 = vmatprep.subr.mxu0 0.0
    %5706 = vmatpush1.msra.mxu0 %v5689
    %5707 = vmatprep.subr.mxu0 0.0
    %5708 = vmatpush1.msra.mxu0 0.0
    %5709 = vmatprep.subr.mxu0 0.0
    %5710 = vmatpush1.msra.mxu0 0.0
    %5711 = vmatprep.subr.mxu0 0.0
    %5712 = vmatpush1.msra.mxu0 0.0
    %5713 = vmatprep.subr.mxu0 0.0
    %5714 = vmatpush1.msra.mxu0 0.0
    %5715 = vmatprep.subr.mxu0 0.0
    %5716 = vmatpush1.msra.mxu0 0.0
    %5717 = vmatprep.subr.mxu0 0.0
    %5718 = vmatpush1.msra.mxu0 0.0
    %5719 = vmatprep.subr.mxu0 0.0
    %5720 = vmatpush1.msra.mxu0 0.0
    %5721 = vmatprep.subr.mxu0 0.0
    %5722 = vmatpush1.msra.mxu0 0.0
    %5723 = vmatprep.subr.mxu0 0.0
    %5724 = vmatpush1.msra.mxu0 0.0
    %5725 = vmatprep.subr.mxu0 0.0
    %5726 = vmatpush1.msra.mxu0 0.0
    %5727 = vmatprep.subr.mxu0 0.0
    %5728 = vmatpush1.msra.mxu0 0.0
    %5729 = vmatprep.subr.mxu0 0.0
    %5730 = vmatpush1.msra.mxu0 0.0
    %5731 = vmatprep.subr.mxu0 0.0
    %5732 = vmatpush1.msra.mxu0 0.0
    %5733 = vmatprep.subr.mxu0 0.0
    %5734 = vmatpush1.msra.mxu0 0.0
    %5735 = vmatprep.subr.mxu0 0.0
    %5736 = vmatpush1.msra.mxu0 0.0
    %5737 = vmatprep.subr.mxu0 0.0
    %5738 = vmatpush1.msra.mxu0 0.0
    %5739 = vmatprep.subr.mxu0 0.0
    %5740 = vmatpush1.msra.mxu0 0.0
    %5741 = vmatprep.subr.mxu0 0.0
    %5742 = vmatpush1.msra.mxu0 0.0
    %5743 = vmatprep.subr.mxu0 0.0
    %5744 = vmatpush1.msra.mxu0 0.0
    %5745 = vmatprep.subr.mxu0 0.0
    %5746 = vmatpush1.msra.mxu0 0.0
    %5747 = vmatprep.subr.mxu0 0.0
    %5748 = vmatpush1.msra.mxu0 0.0
    %5749 = vmatprep.subr.mxu0 0.0
    %5750 = vmatpush1.msra.mxu0 0.0
    %5751 = vmatprep.subr.mxu0 0.0
    %5752 = vmatpush1.msra.mxu0 0.0
    %5753 = vmatprep.subr.mxu0 0.0
    %5754 = vmatpush1.msra.mxu0 0.0
    %5755 = vmatprep.subr.mxu0 0.0
    %5756 = vmatpush1.msra.mxu0 0.0
    %5757 = vmatprep.subr.mxu0 0.0
    %5758 = vmatpush1.msra.mxu0 0.0
    %5759 = vmatprep.subr.mxu0 0.0
    %5760 = vmatpush1.msra.mxu0 0.0
    %5761 = vmatprep.subr.mxu0 0.0
    %5762 = vmatpush1.msra.mxu0 0.0
    %5763 = vmatprep.mubr.f32.mxu0 0.0
    %5764 = vmatmul.mubr.f32.gmra.mrb[0].mxu0 %v5691
    %v5765 = vpop.f32.mrb[0].mxu0
    %v5766 = vadd.f32 0.0, %v5765
    %v5767 = vpop.f32.mrb[0].mxu0
    %5768 = vmatprep.mubr.f32.mxu0 0.0
    %5769 = vmatmul.mubr.f32.gmra.mrb[0].mxu0 %v5694
    %v5770 = vpop.f32.mrb[0].mxu0
    %v5771 = vadd.f32 0.0, %v5770
    %v5772 = vpop.f32.mrb[0].mxu0
    %5773 = vmatprep.mubr.f32.mxu0 0.0
    %5774 = vmatmul.mubr.f32.gmra.mrb[0].mxu0 %v5697
    %v5775 = vpop.f32.mrb[0].mxu0
    %v5776 = vadd.f32 0.0, %v5775
    %v5777 = vpop.f32.mrb[0].mxu0
    %5778 = vdwg.mxu0
    %v5780 = vsel %vm118, %v5674, 0
    %v5783 = vsel %vm118, %v5675, 0
    %v5786 = vsel %vm118, %v5676, 0
    %5788 = vmatprep.subr.mxu0 0.0
    %5789 = vmatpush1.msra.mxu0 %v5678
    %5790 = vmatprep.subr.mxu0 0.0
    %5791 = vmatpush1.msra.mxu0 %v5679
    %5792 = vmatprep.subr.mxu0 0.0
    %5793 = vmatpush1.msra.mxu0 %v5680
    %5794 = vmatprep.subr.mxu0 0.0
    %5795 = vmatpush1.msra.mxu0 %v5681
    %5796 = vmatprep.subr.mxu0 0.0
    %5797 = vmatpush1.msra.mxu0 0.0
    %5798 = vmatprep.subr.mxu0 0.0
    %5799 = vmatpush1.msra.mxu0 0.0
    %5800 = vmatprep.subr.mxu0 0.0
    %5801 = vmatpush1.msra.mxu0 0.0
    %5802 = vmatprep.subr.mxu0 0.0
    %5803 = vmatpush1.msra.mxu0 0.0
    %5804 = vmatprep.subr.mxu0 0.0
    %5805 = vmatpush1.msra.mxu0 0.0
    %5806 = vmatprep.subr.mxu0 0.0
    %5807 = vmatpush1.msra.mxu0 0.0
    %5808 = vmatprep.subr.mxu0 0.0
    %5809 = vmatpush1.msra.mxu0 0.0
    %5810 = vmatprep.subr.mxu0 0.0
    %5811 = vmatpush1.msra.mxu0 0.0
    %5812 = vmatprep.subr.mxu0 0.0
    %5813 = vmatpush1.msra.mxu0 0.0
    %5814 = vmatprep.subr.mxu0 0.0
    %5815 = vmatpush1.msra.mxu0 0.0
    %5816 = vmatprep.subr.mxu0 0.0
    %5817 = vmatpush1.msra.mxu0 0.0
    %5818 = vmatprep.subr.mxu0 0.0
    %5819 = vmatpush1.msra.mxu0 0.0
    %5820 = vmatprep.subr.mxu0 0.0
    %5821 = vmatpush1.msra.mxu0 0.0
    %5822 = vmatprep.subr.mxu0 0.0
    %5823 = vmatpush1.msra.mxu0 0.0
    %5824 = vmatprep.subr.mxu0 0.0
    %5825 = vmatpush1.msra.mxu0 0.0
    %5826 = vmatprep.subr.mxu0 0.0
    %5827 = vmatpush1.msra.mxu0 0.0
    %5828 = vmatprep.subr.mxu0 0.0
    %5829 = vmatpush1.msra.mxu0 0.0
    %5830 = vmatprep.subr.mxu0 0.0
    %5831 = vmatpush1.msra.mxu0 0.0
    %5832 = vmatprep.subr.mxu0 0.0
    %5833 = vmatpush1.msra.mxu0 0.0
    %5834 = vmatprep.subr.mxu0 0.0
    %5835 = vmatpush1.msra.mxu0 0.0
    %5836 = vmatprep.subr.mxu0 0.0
    %5837 = vmatpush1.msra.mxu0 0.0
    %5838 = vmatprep.subr.mxu0 0.0
    %5839 = vmatpush1.msra.mxu0 0.0
    %5840 = vmatprep.subr.mxu0 0.0
    %5841 = vmatpush1.msra.mxu0 0.0
    %5842 = vmatprep.subr.mxu0 0.0
    %5843 = vmatpush1.msra.mxu0 0.0
    %5844 = vmatprep.subr.mxu0 0.0
    %5845 = vmatpush1.msra.mxu0 0.0
    %5846 = vmatprep.subr.mxu0 0.0
    %5847 = vmatpush1.msra.mxu0 0.0
    %5848 = vmatprep.subr.mxu0 0.0
    %5849 = vmatpush1.msra.mxu0 0.0
    %5850 = vmatprep.subr.mxu0 0.0
    %5851 = vmatpush1.msra.mxu0 0.0
    %5852 = vmatprep.mubr.f32.mxu0 0.0
    %5853 = vmatmul.mubr.f32.gmra.mrb[0].mxu0 %v5780
    %v5854 = vpop.f32.mrb[0].mxu0
    %v5855 = vadd.f32 %v5766, %v5854
    %v5856 = vpop.f32.mrb[0].mxu0
    %5857 = vmatprep.mubr.f32.mxu0 0.0
    %5858 = vmatmul.mubr.f32.gmra.mrb[0].mxu0 %v5783
    %v5859 = vpop.f32.mrb[0].mxu0
    %v5860 = vadd.f32 %v5771, %v5859
    %v5861 = vpop.f32.mrb[0].mxu0
    %5862 = vmatprep.mubr.f32.mxu0 0.0
    %5863 = vmatmul.mubr.f32.gmra.mrb[0].mxu0 %v5786
    %v5864 = vpop.f32.mrb[0].mxu0
    %v5865 = vadd.f32 %v5776, %v5864
    %v5866 = vpop.f32.mrb[0].mxu0
    %5867 = vdwg.mxu0
    %v5868 = vld [vmem:[#allocation2 + $0x8] sm:$0xff]
    %v5869 = vld [vmem:[#allocation2 + $0x10] sm:$0xff]
    %v5870 = vld [vmem:[#allocation2 + $0x18] sm:$0x3]
    %s5871 = scalar_lea.vmem [#allocation8], 544
    %v5872 = vld [vmem:[%s5871] sm:$0xff]
    %v5873 = vld [vmem:[%s5871 + $0x8] sm:$0xff]
    %v5874 = vld [vmem:[%s5871 + $0x10] sm:$0xff]
    %v5875 = vld [vmem:[%s5871 + $0x18] sm:$0xff]
    %v5877 = vsel %vm118, %v5868, 0
    %v5880 = vsel %vm118, %v5869, 0
    %v5883 = vsel %vm118, %v5870, 0
    %5885 = vmatprep.subr.mxu0 0.0
    %5886 = vmatpush1.msra.mxu0 %v5872
    %5887 = vmatprep.subr.mxu0 0.0
    %5888 = vmatpush1.msra.mxu0 %v5873
    %5889 = vmatprep.subr.mxu0 0.0
    %5890 = vmatpush1.msra.mxu0 %v5874
    %5891 = vmatprep.subr.mxu0 0.0
    %5892 = vmatpush1.msra.mxu0 %v5875
    %5893 = vmatprep.subr.mxu0 0.0
    %5894 = vmatpush1.msra.mxu0 0.0
    %5895 = vmatprep.subr.mxu0 0.0
    %5896 = vmatpush1.msra.mxu0 0.0
    %5897 = vmatprep.subr.mxu0 0.0
    %5898 = vmatpush1.msra.mxu0 0.0
    %5899 = vmatprep.subr.mxu0 0.0
    %5900 = vmatpush1.msra.mxu0 0.0
    %5901 = vmatprep.subr.mxu0 0.0
    %5902 = vmatpush1.msra.mxu0 0.0
    %5903 = vmatprep.subr.mxu0 0.0
    %5904 = vmatpush1.msra.mxu0 0.0
    %5905 = vmatprep.subr.mxu0 0.0
    %5906 = vmatpush1.msra.mxu0 0.0
    %5907 = vmatprep.subr.mxu0 0.0
    %5908 = vmatpush1.msra.mxu0 0.0
    %5909 = vmatprep.subr.mxu0 0.0
    %5910 = vmatpush1.msra.mxu0 0.0
    %5911 = vmatprep.subr.mxu0 0.0
    %5912 = vmatpush1.msra.mxu0 0.0
    %5913 = vmatprep.subr.mxu0 0.0
    %5914 = vmatpush1.msra.mxu0 0.0
    %5915 = vmatprep.subr.mxu0 0.0
    %5916 = vmatpush1.msra.mxu0 0.0
    %5917 = vmatprep.subr.mxu0 0.0
    %5918 = vmatpush1.msra.mxu0 0.0
    %5919 = vmatprep.subr.mxu0 0.0
    %5920 = vmatpush1.msra.mxu0 0.0
    %5921 = vmatprep.subr.mxu0 0.0
    %5922 = vmatpush1.msra.mxu0 0.0
    %5923 = vmatprep.subr.mxu0 0.0
    %5924 = vmatpush1.msra.mxu0 0.0
    %5925 = vmatprep.subr.mxu0 0.0
    %5926 = vmatpush1.msra.mxu0 0.0
    %5927 = vmatprep.subr.mxu0 0.0
    %5928 = vmatpush1.msra.mxu0 0.0
    %5929 = vmatprep.subr.mxu0 0.0
    %5930 = vmatpush1.msra.mxu0 0.0
    %5931 = vmatprep.subr.mxu0 0.0
    %5932 = vmatpush1.msra.mxu0 0.0
    %5933 = vmatprep.subr.mxu0 0.0
    %5934 = vmatpush1.msra.mxu0 0.0
    %5935 = vmatprep.subr.mxu0 0.0
    %5936 = vmatpush1.msra.mxu0 0.0
    %5937 = vmatprep.subr.mxu0 0.0
    %5938 = vmatpush1.msra.mxu0 0.0
    %5939 = vmatprep.subr.mxu0 0.0
    %5940 = vmatpush1.msra.mxu0 0.0
    %5941 = vmatprep.subr.mxu0 0.0
    %5942 = vmatpush1.msra.mxu0 0.0
    %5943 = vmatprep.subr.mxu0 0.0
    %5944 = vmatpush1.msra.mxu0 0.0
    %5945 = vmatprep.subr.mxu0 0.0
    %5946 = vmatpush1.msra.mxu0 0.0
    %5947 = vmatprep.subr.mxu0 0.0
    %5948 = vmatpush1.msra.mxu0 0.0
    %5949 = vmatprep.mubr.f32.mxu0 0.0
    %5950 = vmatmul.mubr.f32.gmra.mrb[0].mxu0 %v5877
    %v5951 = vpop.f32.mrb[0].mxu0
    %v5952 = vadd.f32 0.0, %v5951
    %v5953 = vpop.f32.mrb[0].mxu0
    %5954 = vmatprep.mubr.f32.mxu0 0.0
    %5955 = vmatmul.mubr.f32.gmra.mrb[0].mxu0 %v5880
    %v5956 = vpop.f32.mrb[0].mxu0
    %v5957 = vadd.f32 0.0, %v5956
    %v5958 = vpop.f32.mrb[0].mxu0
    %5959 = vmatprep.mubr.f32.mxu0 0.0
    %5960 = vmatmul.mubr.f32.gmra.mrb[0].mxu0 %v5883
    %v5961 = vpop.f32.mrb[0].mxu0
    %v5962 = vadd.f32 0.0, %v5961
    %v5963 = vpop.f32.mrb[0].mxu0
    %5964 = vdwg.mxu0
    %v5965 = vadd.f32 %v5855, %v5952
    %v5966 = vadd.f32 %v5860, %v5957
    %v5967 = vadd.f32 %v5865, %v5962
    %v5968 = vld [vmem:[#allocation2 + $0x9] sm:$0xff]
    %v5969 = vld [vmem:[#allocation2 + $0x11] sm:$0xff]
    %v5970 = vld [vmem:[#allocation2 + $0x19] sm:$0x3]
    %s5971 = scalar_lea.vmem [#allocation8], 576
    %v5972 = vld [vmem:[%s5971] sm:$0xff]
    %v5973 = vld [vmem:[%s5971 + $0x8] sm:$0xff]
    %v5974 = vld [vmem:[%s5971 + $0x10] sm:$0xff]
    %v5975 = vld [vmem:[%s5971 + $0x18] sm:$0xff]
    %v5977 = vsel %vm118, %v5968, 0
    %v5980 = vsel %vm118, %v5969, 0
    %v5983 = vsel %vm118, %v5970, 0
    %5985 = vmatprep.subr.mxu0 0.0
    %5986 = vmatpush1.msra.mxu0 %v5972
    %5987 = vmatprep.subr.mxu0 0.0
    %5988 = vmatpush1.msra.mxu0 %v5973
    %5989 = vmatprep.subr.mxu0 0.0
    %5990 = vmatpush1.msra.mxu0 %v5974
    %5991 = vmatprep.subr.mxu0 0.0
    %5992 = vmatpush1.msra.mxu0 %v5975
    %5993 = vmatprep.subr.mxu0 0.0
    %5994 = vmatpush1.msra.mxu0 0.0
    %5995 = vmatprep.subr.mxu0 0.0
    %5996 = vmatpush1.msra.mxu0 0.0
    %5997 = vmatprep.subr.mxu0 0.0
    %5998 = vmatpush1.msra.mxu0 0.0
    %5999 = vmatprep.subr.mxu0 0.0
    %6000 = vmatpush1.msra.mxu0 0.0
    %6001 = vmatprep.subr.mxu0 0.0
    %6002 = vmatpush1.msra.mxu0 0.0
    %6003 = vmatprep.subr.mxu0 0.0
    %6004 = vmatpush1.msra.mxu0 0.0
    %6005 = vmatprep.subr.mxu0 0.0
    %6006 = vmatpush1.msra.mxu0 0.0
    %6007 = vmatprep.subr.mxu0 0.0
    %6008 = vmatpush1.msra.mxu0 0.0
    %6009 = vmatprep.subr.mxu0 0.0
    %6010 = vmatpush1.msra.mxu0 0.0
    %6011 = vmatprep.subr.mxu0 0.0
    %6012 = vmatpush1.msra.mxu0 0.0
    %6013 = vmatprep.subr.mxu0 0.0
    %6014 = vmatpush1.msra.mxu0 0.0
    %6015 = vmatprep.subr.mxu0 0.0
    %6016 = vmatpush1.msra.mxu0 0.0
    %6017 = vmatprep.subr.mxu0 0.0
    %6018 = vmatpush1.msra.mxu0 0.0
    %6019 = vmatprep.subr.mxu0 0.0
    %6020 = vmatpush1.msra.mxu0 0.0
    %6021 = vmatprep.subr.mxu0 0.0
    %6022 = vmatpush1.msra.mxu0 0.0
    %6023 = vmatprep.subr.mxu0 0.0
    %6024 = vmatpush1.msra.mxu0 0.0
    %6025 = vmatprep.subr.mxu0 0.0
    %6026 = vmatpush1.msra.mxu0 0.0
    %6027 = vmatprep.subr.mxu0 0.0
    %6028 = vmatpush1.msra.mxu0 0.0
    %6029 = vmatprep.subr.mxu0 0.0
    %6030 = vmatpush1.msra.mxu0 0.0
    %6031 = vmatprep.subr.mxu0 0.0
    %6032 = vmatpush1.msra.mxu0 0.0
    %6033 = vmatprep.subr.mxu0 0.0
    %6034 = vmatpush1.msra.mxu0 0.0
    %6035 = vmatprep.subr.mxu0 0.0
    %6036 = vmatpush1.msra.mxu0 0.0
    %6037 = vmatprep.subr.mxu0 0.0
    %6038 = vmatpush1.msra.mxu0 0.0
    %6039 = vmatprep.subr.mxu0 0.0
    %6040 = vmatpush1.msra.mxu0 0.0
    %6041 = vmatprep.subr.mxu0 0.0
    %6042 = vmatpush1.msra.mxu0 0.0
    %6043 = vmatprep.subr.mxu0 0.0
    %6044 = vmatpush1.msra.mxu0 0.0
    %6045 = vmatprep.subr.mxu0 0.0
    %6046 = vmatpush1.msra.mxu0 0.0
    %6047 = vmatprep.subr.mxu0 0.0
    %6048 = vmatpush1.msra.mxu0 0.0
    %6049 = vmatprep.mubr.f32.mxu0 0.0
    %6050 = vmatmul.mubr.f32.gmra.mrb[0].mxu0 %v5977
    %v6051 = vpop.f32.mrb[0].mxu0
    %v6052 = vadd.f32 0.0, %v6051
    %v6053 = vpop.f32.mrb[0].mxu0
    %6054 = vmatprep.mubr.f32.mxu0 0.0
    %6055 = vmatmul.mubr.f32.gmra.mrb[0].mxu0 %v5980
    %v6056 = vpop.f32.mrb[0].mxu0
    %v6057 = vadd.f32 0.0, %v6056
    %v6058 = vpop.f32.mrb[0].mxu0
    %6059 = vmatprep.mubr.f32.mxu0 0.0
    %6060 = vmatmul.mubr.f32.gmra.mrb[0].mxu0 %v5983
    %v6061 = vpop.f32.mrb[0].mxu0
    %v6062 = vadd.f32 0.0, %v6061
    %v6063 = vpop.f32.mrb[0].mxu0
    %6064 = vdwg.mxu0
    %v6065 = vadd.f32 %v5965, %v6052
    %v6066 = vadd.f32 %v5966, %v6057
    %v6067 = vadd.f32 %v5967, %v6062
    %v6068 = vld [vmem:[#allocation2 + $0xa] sm:$0xff]
    %v6069 = vld [vmem:[#allocation2 + $0x12] sm:$0xff]
    %v6070 = vld [vmem:[#allocation2 + $0x1a] sm:$0x3]
    %s6071 = scalar_lea.vmem [#allocation8], 608
    %v6072 = vld [vmem:[%s6071] sm:$0xff]
    %v6073 = vld [vmem:[%s6071 + $0x8] sm:$0xff]
    %v6074 = vld [vmem:[%s6071 + $0x10] sm:$0xff]
    %v6075 = vld [vmem:[%s6071 + $0x18] sm:$0xff]
    %v6077 = vsel %vm118, %v6068, 0
    %v6080 = vsel %vm118, %v6069, 0
    %v6083 = vsel %vm118, %v6070, 0
    %6085 = vmatprep.subr.mxu0 0.0
    %6086 = vmatpush1.msra.mxu0 %v6072
    %6087 = vmatprep.subr.mxu0 0.0
    %6088 = vmatpush1.msra.mxu0 %v6073
    %6089 = vmatprep.subr.mxu0 0.0
    %6090 = vmatpush1.msra.mxu0 %v6074
    %6091 = vmatprep.subr.mxu0 0.0
    %6092 = vmatpush1.msra.mxu0 %v6075
    %6093 = vmatprep.subr.mxu0 0.0
    %6094 = vmatpush1.msra.mxu0 0.0
    %6095 = vmatprep.subr.mxu0 0.0
    %6096 = vmatpush1.msra.mxu0 0.0
    %6097 = vmatprep.subr.mxu0 0.0
    %6098 = vmatpush1.msra.mxu0 0.0
    %6099 = vmatprep.subr.mxu0 0.0
    %6100 = vmatpush1.msra.mxu0 0.0
    %6101 = vmatprep.subr.mxu0 0.0
    %6102 = vmatpush1.msra.mxu0 0.0
    %6103 = vmatprep.subr.mxu0 0.0
    %6104 = vmatpush1.msra.mxu0 0.0
    %6105 = vmatprep.subr.mxu0 0.0
    %6106 = vmatpush1.msra.mxu0 0.0
    %6107 = vmatprep.subr.mxu0 0.0
    %6108 = vmatpush1.msra.mxu0 0.0
    %6109 = vmatprep.subr.mxu0 0.0
    %6110 = vmatpush1.msra.mxu0 0.0
    %6111 = vmatprep.subr.mxu0 0.0
    %6112 = vmatpush1.msra.mxu0 0.0
    %6113 = vmatprep.subr.mxu0 0.0
    %6114 = vmatpush1.msra.mxu0 0.0
    %6115 = vmatprep.subr.mxu0 0.0
    %6116 = vmatpush1.msra.mxu0 0.0
    %6117 = vmatprep.subr.mxu0 0.0
    %6118 = vmatpush1.msra.mxu0 0.0
    %6119 = vmatprep.subr.mxu0 0.0
    %6120 = vmatpush1.msra.mxu0 0.0
    %6121 = vmatprep.subr.mxu0 0.0
    %6122 = vmatpush1.msra.mxu0 0.0
    %6123 = vmatprep.subr.mxu0 0.0
    %6124 = vmatpush1.msra.mxu0 0.0
    %6125 = vmatprep.subr.mxu0 0.0
    %6126 = vmatpush1.msra.mxu0 0.0
    %6127 = vmatprep.subr.mxu0 0.0
    %6128 = vmatpush1.msra.mxu0 0.0
    %6129 = vmatprep.subr.mxu0 0.0
    %6130 = vmatpush1.msra.mxu0 0.0
    %6131 = vmatprep.subr.mxu0 0.0
    %6132 = vmatpush1.msra.mxu0 0.0
    %6133 = vmatprep.subr.mxu0 0.0
    %6134 = vmatpush1.msra.mxu0 0.0
    %6135 = vmatprep.subr.mxu0 0.0
    %6136 = vmatpush1.msra.mxu0 0.0
    %6137 = vmatprep.subr.mxu0 0.0
    %6138 = vmatpush1.msra.mxu0 0.0
    %6139 = vmatprep.subr.mxu0 0.0
    %6140 = vmatpush1.msra.mxu0 0.0
    %6141 = vmatprep.subr.mxu0 0.0
    %6142 = vmatpush1.msra.mxu0 0.0
    %6143 = vmatprep.subr.mxu0 0.0
    %6144 = vmatpush1.msra.mxu0 0.0
    %6145 = vmatprep.subr.mxu0 0.0
    %6146 = vmatpush1.msra.mxu0 0.0
    %6147 = vmatprep.subr.mxu0 0.0
    %6148 = vmatpush1.msra.mxu0 0.0
    %6149 = vmatprep.mubr.f32.mxu0 0.0
    %6150 = vmatmul.mubr.f32.gmra.mrb[0].mxu0 %v6077
    %v6151 = vpop.f32.mrb[0].mxu0
    %v6152 = vadd.f32 0.0, %v6151
    %v6153 = vpop.f32.mrb[0].mxu0
    %6154 = vmatprep.mubr.f32.mxu0 0.0
    %6155 = vmatmul.mubr.f32.gmra.mrb[0].mxu0 %v6080
    %v6156 = vpop.f32.mrb[0].mxu0
    %v6157 = vadd.f32 0.0, %v6156
    %v6158 = vpop.f32.mrb[0].mxu0
    %6159 = vmatprep.mubr.f32.mxu0 0.0
    %6160 = vmatmul.mubr.f32.gmra.mrb[0].mxu0 %v6083
    %v6161 = vpop.f32.mrb[0].mxu0
    %v6162 = vadd.f32 0.0, %v6161
    %v6163 = vpop.f32.mrb[0].mxu0
    %6164 = vdwg.mxu0
    %v6165 = vadd.f32 %v6065, %v6152
    %v6166 = vadd.f32 %v6066, %v6157
    %v6167 = vadd.f32 %v6067, %v6162
    %s6168 = scalar_lea.vmem %s26, 3
    %v6169 = vld [vmem:[%s6168] sm:$0x1]
    %v6171 = vlaneseq
    %v6172 = vshrl.u32 %v6171, 7
    %v6173 = vsub.s32 0, %v6172
    %v6174 = vrot.slane %v6169, %v6173
    %v6176 = vadd.f32 %v6165, %v6174
    %v6177 = vadd.f32 %v6166, %v6174
    %v6178 = vadd.f32 %v6167, %v6174
    %v6179 = vtanh.pop %v6176
    %v6180 = vtanh.pop %v6177
    %v6181 = vtanh.pop %v6178
    %6182 = vst.msk [vmem:[#allocation2 + $0x8] sm:$0xff] %vm118, %v6179
    %6183 = vst.msk [vmem:[#allocation2 + $0x10] sm:$0xff] %vm118, %v6180
    %6184 = vst.msk [vmem:[#allocation2 + $0x18] sm:$0x3] %vm123, %v6181
    %v6185 = vld [vmem:[#allocation2 + $0x6] sm:$0xff]
    %v6186 = vld [vmem:[#allocation2 + $0xe] sm:$0xff]
    %v6187 = vld [vmem:[#allocation2 + $0x16] sm:$0x3]
    %s6188 = scalar_lea.vmem [#allocation8], 640
    %v6189 = vld [vmem:[%s6188] sm:$0xff]
    %v6190 = vld [vmem:[%s6188 + $0x8] sm:$0xff]
    %v6191 = vld [vmem:[%s6188 + $0x10] sm:$0xff]
    %v6192 = vld [vmem:[%s6188 + $0x18] sm:$0xff]
    %v6193 = vld [vmem:[#allocation2 + $0x7] sm:$0xff]
    %v6194 = vld [vmem:[#allocation2 + $0xf] sm:$0xff]
    %v6195 = vld [vmem:[#allocation2 + $0x17] sm:$0x3]
    %s6196 = scalar_lea.vmem [#allocation8], 672
    %v6197 = vld [vmem:[%s6196] sm:$0xff]
    %v6198 = vld [vmem:[%s6196 + $0x8] sm:$0xff]
    %v6199 = vld [vmem:[%s6196 + $0x10] sm:$0xff]
    %v6200 = vld [vmem:[%s6196 + $0x18] sm:$0xff]
    %v6202 = vsel %vm118, %v6193, 0
    %v6205 = vsel %vm118, %v6194, 0
    %v6208 = vsel %vm118, %v6195, 0
    %6210 = vmatprep.subr.mxu0 0.0
    %6211 = vmatpush1.msra.mxu0 %v6197
    %6212 = vmatprep.subr.mxu0 0.0
    %6213 = vmatpush1.msra.mxu0 %v6198
    %6214 = vmatprep.subr.mxu0 0.0
    %6215 = vmatpush1.msra.mxu0 %v6199
    %6216 = vmatprep.subr.mxu0 0.0
    %6217 = vmatpush1.msra.mxu0 %v6200
    %6218 = vmatprep.subr.mxu0 0.0
    %6219 = vmatpush1.msra.mxu0 0.0
    %6220 = vmatprep.subr.mxu0 0.0
    %6221 = vmatpush1.msra.mxu0 0.0
    %6222 = vmatprep.subr.mxu0 0.0
    %6223 = vmatpush1.msra.mxu0 0.0
    %6224 = vmatprep.subr.mxu0 0.0
    %6225 = vmatpush1.msra.mxu0 0.0
    %6226 = vmatprep.subr.mxu0 0.0
    %6227 = vmatpush1.msra.mxu0 0.0
    %6228 = vmatprep.subr.mxu0 0.0
    %6229 = vmatpush1.msra.mxu0 0.0
    %6230 = vmatprep.subr.mxu0 0.0
    %6231 = vmatpush1.msra.mxu0 0.0
    %6232 = vmatprep.subr.mxu0 0.0
    %6233 = vmatpush1.msra.mxu0 0.0
    %6234 = vmatprep.subr.mxu0 0.0
    %6235 = vmatpush1.msra.mxu0 0.0
    %6236 = vmatprep.subr.mxu0 0.0
    %6237 = vmatpush1.msra.mxu0 0.0
    %6238 = vmatprep.subr.mxu0 0.0
    %6239 = vmatpush1.msra.mxu0 0.0
    %6240 = vmatprep.subr.mxu0 0.0
    %6241 = vmatpush1.msra.mxu0 0.0
    %6242 = vmatprep.subr.mxu0 0.0
    %6243 = vmatpush1.msra.mxu0 0.0
    %6244 = vmatprep.subr.mxu0 0.0
    %6245 = vmatpush1.msra.mxu0 0.0
    %6246 = vmatprep.subr.mxu0 0.0
    %6247 = vmatpush1.msra.mxu0 0.0
    %6248 = vmatprep.subr.mxu0 0.0
    %6249 = vmatpush1.msra.mxu0 0.0
    %6250 = vmatprep.subr.mxu0 0.0
    %6251 = vmatpush1.msra.mxu0 0.0
    %6252 = vmatprep.subr.mxu0 0.0
    %6253 = vmatpush1.msra.mxu0 0.0
    %6254 = vmatprep.subr.mxu0 0.0
    %6255 = vmatpush1.msra.mxu0 0.0
    %6256 = vmatprep.subr.mxu0 0.0
    %6257 = vmatpush1.msra.mxu0 0.0
    %6258 = vmatprep.subr.mxu0 0.0
    %6259 = vmatpush1.msra.mxu0 0.0
    %6260 = vmatprep.subr.mxu0 0.0
    %6261 = vmatpush1.msra.mxu0 0.0
    %6262 = vmatprep.subr.mxu0 0.0
    %6263 = vmatpush1.msra.mxu0 0.0
    %6264 = vmatprep.subr.mxu0 0.0
    %6265 = vmatpush1.msra.mxu0 0.0
    %6266 = vmatprep.subr.mxu0 0.0
    %6267 = vmatpush1.msra.mxu0 0.0
    %6268 = vmatprep.subr.mxu0 0.0
    %6269 = vmatpush1.msra.mxu0 0.0
    %6270 = vmatprep.subr.mxu0 0.0
    %6271 = vmatpush1.msra.mxu0 0.0
    %6272 = vmatprep.subr.mxu0 0.0
    %6273 = vmatpush1.msra.mxu0 0.0
    %6274 = vmatprep.mubr.f32.mxu0 0.0
    %6275 = vmatmul.mubr.f32.gmra.mrb[0].mxu0 %v6202
    %v6276 = vpop.f32.mrb[0].mxu0
    %v6277 = vadd.f32 0.0, %v6276
    %v6278 = vpop.f32.mrb[0].mxu0
    %6279 = vmatprep.mubr.f32.mxu0 0.0
    %6280 = vmatmul.mubr.f32.gmra.mrb[0].mxu0 %v6205
    %v6281 = vpop.f32.mrb[0].mxu0
    %v6282 = vadd.f32 0.0, %v6281
    %v6283 = vpop.f32.mrb[0].mxu0
    %6284 = vmatprep.mubr.f32.mxu0 0.0
    %6285 = vmatmul.mubr.f32.gmra.mrb[0].mxu0 %v6208
    %v6286 = vpop.f32.mrb[0].mxu0
    %v6287 = vadd.f32 0.0, %v6286
    %v6288 = vpop.f32.mrb[0].mxu0
    %6289 = vdwg.mxu0
    %v6291 = vsel %vm118, %v6185, 0
    %v6294 = vsel %vm118, %v6186, 0
    %v6297 = vsel %vm118, %v6187, 0
    %6299 = vmatprep.subr.mxu0 0.0
    %6300 = vmatpush1.msra.mxu0 %v6189
    %6301 = vmatprep.subr.mxu0 0.0
    %6302 = vmatpush1.msra.mxu0 %v6190
    %6303 = vmatprep.subr.mxu0 0.0
    %6304 = vmatpush1.msra.mxu0 %v6191
    %6305 = vmatprep.subr.mxu0 0.0
    %6306 = vmatpush1.msra.mxu0 %v6192
    %6307 = vmatprep.subr.mxu0 0.0
    %6308 = vmatpush1.msra.mxu0 0.0
    %6309 = vmatprep.subr.mxu0 0.0
    %6310 = vmatpush1.msra.mxu0 0.0
    %6311 = vmatprep.subr.mxu0 0.0
    %6312 = vmatpush1.msra.mxu0 0.0
    %6313 = vmatprep.subr.mxu0 0.0
    %6314 = vmatpush1.msra.mxu0 0.0
    %6315 = vmatprep.subr.mxu0 0.0
    %6316 = vmatpush1.msra.mxu0 0.0
    %6317 = vmatprep.subr.mxu0 0.0
    %6318 = vmatpush1.msra.mxu0 0.0
    %6319 = vmatprep.subr.mxu0 0.0
    %6320 = vmatpush1.msra.mxu0 0.0
    %6321 = vmatprep.subr.mxu0 0.0
    %6322 = vmatpush1.msra.mxu0 0.0
    %6323 = vmatprep.subr.mxu0 0.0
    %6324 = vmatpush1.msra.mxu0 0.0
    %6325 = vmatprep.subr.mxu0 0.0
    %6326 = vmatpush1.msra.mxu0 0.0
    %6327 = vmatprep.subr.mxu0 0.0
    %6328 = vmatpush1.msra.mxu0 0.0
    %6329 = vmatprep.subr.mxu0 0.0
    %6330 = vmatpush1.msra.mxu0 0.0
    %6331 = vmatprep.subr.mxu0 0.0
    %6332 = vmatpush1.msra.mxu0 0.0
    %6333 = vmatprep.subr.mxu0 0.0
    %6334 = vmatpush1.msra.mxu0 0.0
    %6335 = vmatprep.subr.mxu0 0.0
    %6336 = vmatpush1.msra.mxu0 0.0
    %6337 = vmatprep.subr.mxu0 0.0
    %6338 = vmatpush1.msra.mxu0 0.0
    %6339 = vmatprep.subr.mxu0 0.0
    %6340 = vmatpush1.msra.mxu0 0.0
    %6341 = vmatprep.subr.mxu0 0.0
    %6342 = vmatpush1.msra.mxu0 0.0
    %6343 = vmatprep.subr.mxu0 0.0
    %6344 = vmatpush1.msra.mxu0 0.0
    %6345 = vmatprep.subr.mxu0 0.0
    %6346 = vmatpush1.msra.mxu0 0.0
    %6347 = vmatprep.subr.mxu0 0.0
    %6348 = vmatpush1.msra.mxu0 0.0
    %6349 = vmatprep.subr.mxu0 0.0
    %6350 = vmatpush1.msra.mxu0 0.0
    %6351 = vmatprep.subr.mxu0 0.0
    %6352 = vmatpush1.msra.mxu0 0.0
    %6353 = vmatprep.subr.mxu0 0.0
    %6354 = vmatpush1.msra.mxu0 0.0
    %6355 = vmatprep.subr.mxu0 0.0
    %6356 = vmatpush1.msra.mxu0 0.0
    %6357 = vmatprep.subr.mxu0 0.0
    %6358 = vmatpush1.msra.mxu0 0.0
    %6359 = vmatprep.subr.mxu0 0.0
    %6360 = vmatpush1.msra.mxu0 0.0
    %6361 = vmatprep.subr.mxu0 0.0
    %6362 = vmatpush1.msra.mxu0 0.0
    %6363 = vmatprep.mubr.f32.mxu0 0.0
    %6364 = vmatmul.mubr.f32.gmra.mrb[0].mxu0 %v6291
    %v6365 = vpop.f32.mrb[0].mxu0
    %v6366 = vadd.f32 %v6277, %v6365
    %v6367 = vpop.f32.mrb[0].mxu0
    %6368 = vmatprep.mubr.f32.mxu0 0.0
    %6369 = vmatmul.mubr.f32.gmra.mrb[0].mxu0 %v6294
    %v6370 = vpop.f32.mrb[0].mxu0
    %v6371 = vadd.f32 %v6282, %v6370
    %v6372 = vpop.f32.mrb[0].mxu0
    %6373 = vmatprep.mubr.f32.mxu0 0.0
    %6374 = vmatmul.mubr.f32.gmra.mrb[0].mxu0 %v6297
    %v6375 = vpop.f32.mrb[0].mxu0
    %v6376 = vadd.f32 %v6287, %v6375
    %v6377 = vpop.f32.mrb[0].mxu0
    %6378 = vdwg.mxu0
    %v6379 = vld [vmem:[#allocation2 + $0x8] sm:$0xff]
    %v6380 = vld [vmem:[#allocation2 + $0x10] sm:$0xff]
    %v6381 = vld [vmem:[#allocation2 + $0x18] sm:$0x3]
    %s6382 = scalar_lea.vmem [#allocation8], 704
    %v6383 = vld [vmem:[%s6382] sm:$0xff]
    %v6384 = vld [vmem:[%s6382 + $0x8] sm:$0xff]
    %v6385 = vld [vmem:[%s6382 + $0x10] sm:$0xff]
    %v6386 = vld [vmem:[%s6382 + $0x18] sm:$0xff]
    %v6388 = vsel %vm118, %v6379, 0
    %v6391 = vsel %vm118, %v6380, 0
    %v6394 = vsel %vm118, %v6381, 0
    %6396 = vmatprep.subr.mxu0 0.0
    %6397 = vmatpush1.msra.mxu0 %v6383
    %6398 = vmatprep.subr.mxu0 0.0
    %6399 = vmatpush1.msra.mxu0 %v6384
    %6400 = vmatprep.subr.mxu0 0.0
    %6401 = vmatpush1.msra.mxu0 %v6385
    %6402 = vmatprep.subr.mxu0 0.0
    %6403 = vmatpush1.msra.mxu0 %v6386
    %6404 = vmatprep.subr.mxu0 0.0
    %6405 = vmatpush1.msra.mxu0 0.0
    %6406 = vmatprep.subr.mxu0 0.0
    %6407 = vmatpush1.msra.mxu0 0.0
    %6408 = vmatprep.subr.mxu0 0.0
    %6409 = vmatpush1.msra.mxu0 0.0
    %6410 = vmatprep.subr.mxu0 0.0
    %6411 = vmatpush1.msra.mxu0 0.0
    %6412 = vmatprep.subr.mxu0 0.0
    %6413 = vmatpush1.msra.mxu0 0.0
    %6414 = vmatprep.subr.mxu0 0.0
    %6415 = vmatpush1.msra.mxu0 0.0
    %6416 = vmatprep.subr.mxu0 0.0
    %6417 = vmatpush1.msra.mxu0 0.0
    %6418 = vmatprep.subr.mxu0 0.0
    %6419 = vmatpush1.msra.mxu0 0.0
    %6420 = vmatprep.subr.mxu0 0.0
    %6421 = vmatpush1.msra.mxu0 0.0
    %6422 = vmatprep.subr.mxu0 0.0
    %6423 = vmatpush1.msra.mxu0 0.0
    %6424 = vmatprep.subr.mxu0 0.0
    %6425 = vmatpush1.msra.mxu0 0.0
    %6426 = vmatprep.subr.mxu0 0.0
    %6427 = vmatpush1.msra.mxu0 0.0
    %6428 = vmatprep.subr.mxu0 0.0
    %6429 = vmatpush1.msra.mxu0 0.0
    %6430 = vmatprep.subr.mxu0 0.0
    %6431 = vmatpush1.msra.mxu0 0.0
    %6432 = vmatprep.subr.mxu0 0.0
    %6433 = vmatpush1.msra.mxu0 0.0
    %6434 = vmatprep.subr.mxu0 0.0
    %6435 = vmatpush1.msra.mxu0 0.0
    %6436 = vmatprep.subr.mxu0 0.0
    %6437 = vmatpush1.msra.mxu0 0.0
    %6438 = vmatprep.subr.mxu0 0.0
    %6439 = vmatpush1.msra.mxu0 0.0
    %6440 = vmatprep.subr.mxu0 0.0
    %6441 = vmatpush1.msra.mxu0 0.0
    %6442 = vmatprep.subr.mxu0 0.0
    %6443 = vmatpush1.msra.mxu0 0.0
    %6444 = vmatprep.subr.mxu0 0.0
    %6445 = vmatpush1.msra.mxu0 0.0
    %6446 = vmatprep.subr.mxu0 0.0
    %6447 = vmatpush1.msra.mxu0 0.0
    %6448 = vmatprep.subr.mxu0 0.0
    %6449 = vmatpush1.msra.mxu0 0.0
    %6450 = vmatprep.subr.mxu0 0.0
    %6451 = vmatpush1.msra.mxu0 0.0
    %6452 = vmatprep.subr.mxu0 0.0
    %6453 = vmatpush1.msra.mxu0 0.0
    %6454 = vmatprep.subr.mxu0 0.0
    %6455 = vmatpush1.msra.mxu0 0.0
    %6456 = vmatprep.subr.mxu0 0.0
    %6457 = vmatpush1.msra.mxu0 0.0
    %6458 = vmatprep.subr.mxu0 0.0
    %6459 = vmatpush1.msra.mxu0 0.0
    %6460 = vmatprep.mubr.f32.mxu0 0.0
    %6461 = vmatmul.mubr.f32.gmra.mrb[0].mxu0 %v6388
    %v6462 = vpop.f32.mrb[0].mxu0
    %v6463 = vadd.f32 0.0, %v6462
    %v6464 = vpop.f32.mrb[0].mxu0
    %6465 = vmatprep.mubr.f32.mxu0 0.0
    %6466 = vmatmul.mubr.f32.gmra.mrb[0].mxu0 %v6391
    %v6467 = vpop.f32.mrb[0].mxu0
    %v6468 = vadd.f32 0.0, %v6467
    %v6469 = vpop.f32.mrb[0].mxu0
    %6470 = vmatprep.mubr.f32.mxu0 0.0
    %6471 = vmatmul.mubr.f32.gmra.mrb[0].mxu0 %v6394
    %v6472 = vpop.f32.mrb[0].mxu0
    %v6473 = vadd.f32 0.0, %v6472
    %v6474 = vpop.f32.mrb[0].mxu0
    %6475 = vdwg.mxu0
    %v6476 = vadd.f32 %v6366, %v6463
    %v6477 = vadd.f32 %v6371, %v6468
    %v6478 = vadd.f32 %v6376, %v6473
    %v6479 = vld [vmem:[#allocation2 + $0x9] sm:$0xff]
    %v6480 = vld [vmem:[#allocation2 + $0x11] sm:$0xff]
    %v6481 = vld [vmem:[#allocation2 + $0x19] sm:$0x3]
    %s6482 = scalar_lea.vmem [#allocation8], 736
    %v6483 = vld [vmem:[%s6482] sm:$0xff]
    %v6484 = vld [vmem:[%s6482 + $0x8] sm:$0xff]
    %v6485 = vld [vmem:[%s6482 + $0x10] sm:$0xff]
    %v6486 = vld [vmem:[%s6482 + $0x18] sm:$0xff]
    %v6488 = vsel %vm118, %v6479, 0
    %v6491 = vsel %vm118, %v6480, 0
    %v6494 = vsel %vm118, %v6481, 0
    %6496 = vmatprep.subr.mxu0 0.0
    %6497 = vmatpush1.msra.mxu0 %v6483
    %6498 = vmatprep.subr.mxu0 0.0
    %6499 = vmatpush1.msra.mxu0 %v6484
    %6500 = vmatprep.subr.mxu0 0.0
    %6501 = vmatpush1.msra.mxu0 %v6485
    %6502 = vmatprep.subr.mxu0 0.0
    %6503 = vmatpush1.msra.mxu0 %v6486
    %6504 = vmatprep.subr.mxu0 0.0
    %6505 = vmatpush1.msra.mxu0 0.0
    %6506 = vmatprep.subr.mxu0 0.0
    %6507 = vmatpush1.msra.mxu0 0.0
    %6508 = vmatprep.subr.mxu0 0.0
    %6509 = vmatpush1.msra.mxu0 0.0
    %6510 = vmatprep.subr.mxu0 0.0
    %6511 = vmatpush1.msra.mxu0 0.0
    %6512 = vmatprep.subr.mxu0 0.0
    %6513 = vmatpush1.msra.mxu0 0.0
    %6514 = vmatprep.subr.mxu0 0.0
    %6515 = vmatpush1.msra.mxu0 0.0
    %6516 = vmatprep.subr.mxu0 0.0
    %6517 = vmatpush1.msra.mxu0 0.0
    %6518 = vmatprep.subr.mxu0 0.0
    %6519 = vmatpush1.msra.mxu0 0.0
    %6520 = vmatprep.subr.mxu0 0.0
    %6521 = vmatpush1.msra.mxu0 0.0
    %6522 = vmatprep.subr.mxu0 0.0
    %6523 = vmatpush1.msra.mxu0 0.0
    %6524 = vmatprep.subr.mxu0 0.0
    %6525 = vmatpush1.msra.mxu0 0.0
    %6526 = vmatprep.subr.mxu0 0.0
    %6527 = vmatpush1.msra.mxu0 0.0
    %6528 = vmatprep.subr.mxu0 0.0
    %6529 = vmatpush1.msra.mxu0 0.0
    %6530 = vmatprep.subr.mxu0 0.0
    %6531 = vmatpush1.msra.mxu0 0.0
    %6532 = vmatprep.subr.mxu0 0.0
    %6533 = vmatpush1.msra.mxu0 0.0
    %6534 = vmatprep.subr.mxu0 0.0
    %6535 = vmatpush1.msra.mxu0 0.0
    %6536 = vmatprep.subr.mxu0 0.0
    %6537 = vmatpush1.msra.mxu0 0.0
    %6538 = vmatprep.subr.mxu0 0.0
    %6539 = vmatpush1.msra.mxu0 0.0
    %6540 = vmatprep.subr.mxu0 0.0
    %6541 = vmatpush1.msra.mxu0 0.0
    %6542 = vmatprep.subr.mxu0 0.0
    %6543 = vmatpush1.msra.mxu0 0.0
    %6544 = vmatprep.subr.mxu0 0.0
    %6545 = vmatpush1.msra.mxu0 0.0
    %6546 = vmatprep.subr.mxu0 0.0
    %6547 = vmatpush1.msra.mxu0 0.0
    %6548 = vmatprep.subr.mxu0 0.0
    %6549 = vmatpush1.msra.mxu0 0.0
    %6550 = vmatprep.subr.mxu0 0.0
    %6551 = vmatpush1.msra.mxu0 0.0
    %6552 = vmatprep.subr.mxu0 0.0
    %6553 = vmatpush1.msra.mxu0 0.0
    %6554 = vmatprep.subr.mxu0 0.0
    %6555 = vmatpush1.msra.mxu0 0.0
    %6556 = vmatprep.subr.mxu0 0.0
    %6557 = vmatpush1.msra.mxu0 0.0
    %6558 = vmatprep.subr.mxu0 0.0
    %6559 = vmatpush1.msra.mxu0 0.0
    %6560 = vmatprep.mubr.f32.mxu0 0.0
    %6561 = vmatmul.mubr.f32.gmra.mrb[0].mxu0 %v6488
    %v6562 = vpop.f32.mrb[0].mxu0
    %v6563 = vadd.f32 0.0, %v6562
    %v6564 = vpop.f32.mrb[0].mxu0
    %6565 = vmatprep.mubr.f32.mxu0 0.0
    %6566 = vmatmul.mubr.f32.gmra.mrb[0].mxu0 %v6491
    %v6567 = vpop.f32.mrb[0].mxu0
    %v6568 = vadd.f32 0.0, %v6567
    %v6569 = vpop.f32.mrb[0].mxu0
    %6570 = vmatprep.mubr.f32.mxu0 0.0
    %6571 = vmatmul.mubr.f32.gmra.mrb[0].mxu0 %v6494
    %v6572 = vpop.f32.mrb[0].mxu0
    %v6573 = vadd.f32 0.0, %v6572
    %v6574 = vpop.f32.mrb[0].mxu0
    %6575 = vdwg.mxu0
    %v6576 = vadd.f32 %v6476, %v6563
    %v6577 = vadd.f32 %v6477, %v6568
    %v6578 = vadd.f32 %v6478, %v6573
    %v6579 = vld [vmem:[#allocation2 + $0xa] sm:$0xff]
    %v6580 = vld [vmem:[#allocation2 + $0x12] sm:$0xff]
    %v6581 = vld [vmem:[#allocation2 + $0x1a] sm:$0x3]
    %s6582 = scalar_lea.vmem [#allocation8], 768
    %v6583 = vld [vmem:[%s6582] sm:$0xff]
    %v6584 = vld [vmem:[%s6582 + $0x8] sm:$0xff]
    %v6585 = vld [vmem:[%s6582 + $0x10] sm:$0xff]
    %v6586 = vld [vmem:[%s6582 + $0x18] sm:$0xff]
    %v6588 = vsel %vm118, %v6579, 0
    %v6591 = vsel %vm118, %v6580, 0
    %v6594 = vsel %vm118, %v6581, 0
    %6596 = vmatprep.subr.mxu0 0.0
    %6597 = vmatpush1.msra.mxu0 %v6583
    %6598 = vmatprep.subr.mxu0 0.0
    %6599 = vmatpush1.msra.mxu0 %v6584
    %6600 = vmatprep.subr.mxu0 0.0
    %6601 = vmatpush1.msra.mxu0 %v6585
    %6602 = vmatprep.subr.mxu0 0.0
    %6603 = vmatpush1.msra.mxu0 %v6586
    %6604 = vmatprep.subr.mxu0 0.0
    %6605 = vmatpush1.msra.mxu0 0.0
    %6606 = vmatprep.subr.mxu0 0.0
    %6607 = vmatpush1.msra.mxu0 0.0
    %6608 = vmatprep.subr.mxu0 0.0
    %6609 = vmatpush1.msra.mxu0 0.0
    %6610 = vmatprep.subr.mxu0 0.0
    %6611 = vmatpush1.msra.mxu0 0.0
    %6612 = vmatprep.subr.mxu0 0.0
    %6613 = vmatpush1.msra.mxu0 0.0
    %6614 = vmatprep.subr.mxu0 0.0
    %6615 = vmatpush1.msra.mxu0 0.0
    %6616 = vmatprep.subr.mxu0 0.0
    %6617 = vmatpush1.msra.mxu0 0.0
    %6618 = vmatprep.subr.mxu0 0.0
    %6619 = vmatpush1.msra.mxu0 0.0
    %6620 = vmatprep.subr.mxu0 0.0
    %6621 = vmatpush1.msra.mxu0 0.0
    %6622 = vmatprep.subr.mxu0 0.0
    %6623 = vmatpush1.msra.mxu0 0.0
    %6624 = vmatprep.subr.mxu0 0.0
    %6625 = vmatpush1.msra.mxu0 0.0
    %6626 = vmatprep.subr.mxu0 0.0
    %6627 = vmatpush1.msra.mxu0 0.0
    %6628 = vmatprep.subr.mxu0 0.0
    %6629 = vmatpush1.msra.mxu0 0.0
    %6630 = vmatprep.subr.mxu0 0.0
    %6631 = vmatpush1.msra.mxu0 0.0
    %6632 = vmatprep.subr.mxu0 0.0
    %6633 = vmatpush1.msra.mxu0 0.0
    %6634 = vmatprep.subr.mxu0 0.0
    %6635 = vmatpush1.msra.mxu0 0.0
    %6636 = vmatprep.subr.mxu0 0.0
    %6637 = vmatpush1.msra.mxu0 0.0
    %6638 = vmatprep.subr.mxu0 0.0
    %6639 = vmatpush1.msra.mxu0 0.0
    %6640 = vmatprep.subr.mxu0 0.0
    %6641 = vmatpush1.msra.mxu0 0.0
    %6642 = vmatprep.subr.mxu0 0.0
    %6643 = vmatpush1.msra.mxu0 0.0
    %6644 = vmatprep.subr.mxu0 0.0
    %6645 = vmatpush1.msra.mxu0 0.0
    %6646 = vmatprep.subr.mxu0 0.0
    %6647 = vmatpush1.msra.mxu0 0.0
    %6648 = vmatprep.subr.mxu0 0.0
    %6649 = vmatpush1.msra.mxu0 0.0
    %6650 = vmatprep.subr.mxu0 0.0
    %6651 = vmatpush1.msra.mxu0 0.0
    %6652 = vmatprep.subr.mxu0 0.0
    %6653 = vmatpush1.msra.mxu0 0.0
    %6654 = vmatprep.subr.mxu0 0.0
    %6655 = vmatpush1.msra.mxu0 0.0
    %6656 = vmatprep.subr.mxu0 0.0
    %6657 = vmatpush1.msra.mxu0 0.0
    %6658 = vmatprep.subr.mxu0 0.0
    %6659 = vmatpush1.msra.mxu0 0.0
    %6660 = vmatprep.mubr.f32.mxu0 0.0
    %6661 = vmatmul.mubr.f32.gmra.mrb[0].mxu0 %v6588
    %v6662 = vpop.f32.mrb[0].mxu0
    %v6663 = vadd.f32 0.0, %v6662
    %v6664 = vpop.f32.mrb[0].mxu0
    %6665 = vmatprep.mubr.f32.mxu0 0.0
    %6666 = vmatmul.mubr.f32.gmra.mrb[0].mxu0 %v6591
    %v6667 = vpop.f32.mrb[0].mxu0
    %v6668 = vadd.f32 0.0, %v6667
    %v6669 = vpop.f32.mrb[0].mxu0
    %6670 = vmatprep.mubr.f32.mxu0 0.0
    %6671 = vmatmul.mubr.f32.gmra.mrb[0].mxu0 %v6594
    %v6672 = vpop.f32.mrb[0].mxu0
    %v6673 = vadd.f32 0.0, %v6672
    %v6674 = vpop.f32.mrb[0].mxu0
    %6675 = vdwg.mxu0
    %v6676 = vadd.f32 %v6576, %v6663
    %v6677 = vadd.f32 %v6577, %v6668
    %v6678 = vadd.f32 %v6578, %v6673
    %s6679 = scalar_lea.vmem %s26, 4
    %v6680 = vld [vmem:[%s6679] sm:$0x1]
    %v6682 = vlaneseq
    %v6683 = vshrl.u32 %v6682, 7
    %v6684 = vsub.s32 0, %v6683
    %v6685 = vrot.slane %v6680, %v6684
    %v6687 = vadd.f32 %v6676, %v6685
    %v6688 = vadd.f32 %v6677, %v6685
    %v6689 = vadd.f32 %v6678, %v6685
    %v6690 = vadd.f32 %v4135, %v6687
    %v6691 = vadd.f32 %v4136, %v6688
    %v6692 = vadd.f32 %v4137, %v6689
    %6693 = vst.msk [vmem:[%s27] sm:$0xff] %vm4138, %v6690
    %6694 = vst.msk [vmem:[%s27 + $0x8] sm:$0xff] %vm4138, %v6691
    %6695 = vst.msk [vmem:[%s27 + $0x10] sm:$0x3] %vm4141, %v6692
    // Predicated region
    $region125: #{tacotron2_forward.1} parent=1 // pred_check
      _
    $region126: #{tacotron2_forward.1} parent=1 // pred_check_branch
      %6697 = sbr.rel (0) target = $region128
    $region127: #{tacotron2_forward.1} parent=1 // pred_region
      _
    $region128: #{tacotron2_forward.1} parent=1 // pred_fallthru
      _
    // Predicated region
    $region129: #{tacotron2_forward.1} parent=1 // pred_check
      _
    $region130: #{tacotron2_forward.1} parent=1 // pred_check_branch
      %6699 = sbr.rel (0) target = $region132
    $region131: #{tacotron2_forward.1} parent=1 // pred_region
      _
    $region132: #{tacotron2_forward.1} parent=1 // pred_fallthru
      _
    %6700 = vsyncpa [#allocation7], 1
    %6701 = vsyncpa [#allocation9], 1

</llo_original>
